<compile_context>
chip_gen: v6e
topology: v6e:2x2x1
jax: 0.10.0
libtpu: 0.0.40
codegen_flags: <defaults>
</compile_context>

<pallas_src>
import functools
import math
from collections import OrderedDict

import numpy as np
import jax
import jax.numpy as jnp
from jax.experimental import pallas as pl
from jax.experimental.pallas import tpu as pltpu


_TARGET_BLOCK_BYTES = 4 << 20   # ~4 MiB stage-1 input blocks (review: 4-8 MiB v6e/v7x)
_FUSE_MAX_BYTES = 4 << 20       # whole-image slab small enough to fuse stage 2


def _rmac_regions(H, W, L):
    """Static R-MAC region grid [(hi, wi, hsize, wsize), ...], mirroring cirtorch LF.rmac."""
    ovr = 0.4
    steps = np.array([2, 3, 4, 5, 6, 7], dtype=np.float32)
    w = min(W, H)
    b = (max(H, W) - w) / (steps - 1)
    idx = int(np.argmin(np.abs(((w * w - w * b) / float(w * w)) - ovr)))
    Wd, Hd = 0, 0
    if H < W:
        Wd = idx + 1
    elif H > W:
        Hd = idx + 1

    regions = [(0, 0, H, W)]  # global max-pool region
    for l in range(1, L + 1):
        wl = int(math.floor(2 * w / (l + 1)))
        if wl == 0:
            continue
        wl2 = int(math.floor(wl / 2 - 1))
        bW = 0.0 if (l + Wd) == 1 else (W - wl) / (l + Wd - 1)
        bH = 0.0 if (l + Hd) == 1 else (H - wl) / (l + Hd - 1)
        cenW = [int(np.floor(np.float32(wl2) + np.float32(k) * np.float32(bW))) - wl2
                for k in range(l - 1 + Wd + 1)]
        cenH = [int(np.floor(np.float32(wl2) + np.float32(k) * np.float32(bH))) - wl2
                for k in range(l - 1 + Hd + 1)]
        for i_ in cenH:
            for j_ in cenW:
                regions.append((i_, j_, wl, wl))
    return regions


def _group_regions(regions):
    """Group regions by shared H-band (hi, hs) and, within a band, by column window
    (wi, ws) -> [((hi, hs), [((wi, ws), [row_idx, ...]), ...]), ...].
    The kernel computes each band max once, each unique region once, and writes the
    result to every duplicate row (so the reference's duplicate-sum is preserved)."""
    bands = OrderedDict()
    for r, (hi, wi, hs, ws) in enumerate(regions):
        bands.setdefault((hi, hs), OrderedDict()).setdefault((wi, ws), []).append(r)
    return [(bk, list(cols.items())) for bk, cols in bands.items()]


def _pick_block_c(N, Cp, H, W, itemsize):
    """Channel tile: whole C (fused path) when the slab is small, else ~4 MiB blocks."""
    spatial = H * W * itemsize
    slab = Cp * spatial
    if slab <= _FUSE_MAX_BYTES and not (N == 1 and Cp >= 256):
        return Cp                                   # fused single-block path
    bc = max(128, (_TARGET_BLOCK_BYTES // spatial) // 128 * 128)
    bc = int(min(bc, Cp))
    if N == 1 and bc >= Cp and Cp >= 256:           # keep both v7x TCs busy at N == 1
        bc = (Cp // 2) // 128 * 128
    while Cp % bc:
        bc -= 128
    return bc


# ---------------------------------------------------------------------------
# Kernels
# ---------------------------------------------------------------------------
def _transpose_tile(x_ref, xt_ref, H):
    # x_ref: (1, block_c, H, W) NCHW tile;  xt_ref: (H, W, block_c) VMEM scratch.
    # One small 2-D transpose per feature-map row puts C on the lane axis so every
    # later reduce is a VPU / sublane op and every store is lane-dense.
    for h in range(H):
        xt_ref[h] = x_ref[0, :, h, :].T            # (block_c, W) -> (W, block_c)


def _band_max(xt_ref, hi, hs):
    # Max over the H-band [hi, hi+hs): elementwise max of hs (W, block_c) slabs (VPU).
    band = xt_ref[hi]
    for j in range(1, hs):
        band = jnp.maximum(band, xt_ref[hi + j])
    return band                                    # (W, block_c)


def _region_max_kernel(x_ref, o_ref, xt_ref, *, H, band_groups):
    # Stage 1 (tiled path): per-region channel-wise max -> o_ref (1, R, block_c) f32.
    _transpose_tile(x_ref, xt_ref, H)
    for (hi, hs), col_groups in band_groups:
        band = _band_max(xt_ref, hi, hs)
        for (wi, ws), rows in col_groups:
            v = jnp.max(band[wi:wi + ws, :], axis=0, keepdims=True)   # (1, block_c)
            v = v.astype(jnp.float32)
            for r in rows:                         # stream rows straight to the output
                o_ref[0, r:r + 1, :] = v


def _rmac_fused_kernel(x_ref, o_ref, xt_ref, *, H, band_groups, eps):
    # Fused path (whole C in one block): region maxes + per-region L2 normalization
    # over C + sum over regions, all in one kernel.  o_ref: (1, 1, C).
    _transpose_tile(x_ref, xt_ref, H)
    C = x_ref.shape[1]
    acc = jnp.zeros((1, C), jnp.float32)
    for (hi, hs), col_groups in band_groups:
        band = _band_max(xt_ref, hi, hs)
        for (wi, ws), rows in col_groups:
            v = jnp.max(band[wi:wi + ws, :], axis=0, keepdims=True).astype(jnp.float32)
            nrm = jnp.sqrt(jnp.sum(v * v, axis=1, keepdims=True))      # (1, 1)
            acc = acc + v * (jnp.float32(len(rows)) / (nrm + eps))     # duplicates summed
    o_ref[0] = acc.astype(o_ref.dtype)


def _norm_sum_kernel(v_ref, o_ref, *, eps):
    # Stage 2 (tiled path, tiny): L2-normalize each region descriptor over C, sum regions.
    v = v_ref[0]                                                       # (R, C) f32
    norm = jnp.sqrt(jnp.sum(v * v, axis=1, keepdims=True))             # (R, 1)
    o_ref[0] = jnp.sum(v / (norm + eps), axis=0, keepdims=True).astype(o_ref.dtype)


# ---------------------------------------------------------------------------
# Wrapper
# ---------------------------------------------------------------------------
def rmac(x, L=3, eps=1e-6, block_c=None):
    """Pallas RMAC descriptor. x: (N, C, H, W) -> (N, C, 1, 1)."""
    N, C, H, W = x.shape
    regions = _rmac_regions(H, W, L)
    band_groups = _group_regions(regions)
    R = len(regions)
    itemsize = x.dtype.itemsize

    # Lane-align C with zero padding (exact: zero channels have region max 0 and
    # contribute 0 to every L2 norm); slice the pad off at the end.
    Cp = ((C + 127) // 128) * 128
    xp = jnp.pad(x, ((0, 0), (0, Cp - C), (0, 0), (0, 0))) if Cp != C else x

    if block_c is None:
        block_c = _pick_block_c(N, Cp, H, W, itemsize)
    assert Cp % block_c == 0 and block_c % 128 == 0, (Cp, block_c)

    block_bytes = block_c * H * W * itemsize
    vmem_limit = int(min(64 << 20,
                         max(32 << 20, 3 * block_bytes + 2 * R * block_c * 4 + (2 << 20))))

    if block_c == Cp:
        # Fused single pallas_call: grid (N,), whole-C block, stage 2 in the epilogue.
        out = pl.pallas_call(
            functools.partial(_rmac_fused_kernel, H=H, band_groups=band_groups,
                              eps=float(eps)),
            out_shape=jax.ShapeDtypeStruct((N, 1, Cp), x.dtype),
            grid_spec=pltpu.PrefetchScalarGridSpec(
                num_scalar_prefetch=0,
                grid=(N,),
                in_specs=[pl.BlockSpec((1, Cp, H, W), lambda n: (n, 0, 0, 0))],
                out_specs=pl.BlockSpec((1, 1, Cp), lambda n: (n, 0, 0)),
                scratch_shapes=[pltpu.VMEM((H, W, Cp), x.dtype)]),
            compiler_params=pltpu.CompilerParams(
                dimension_semantics=("parallel",),
                vmem_limit_bytes=vmem_limit),
        )(xp)
    else:
        # Stage 1: HBM-bound pass over x; both grid axes parallel (v7x megacore).
        v = pl.pallas_call(
            functools.partial(_region_max_kernel, H=H, band_groups=band_groups),
            out_shape=jax.ShapeDtypeStruct((N, R, Cp), jnp.float32),
            grid_spec=pltpu.PrefetchScalarGridSpec(
                num_scalar_prefetch=0,
                grid=(N, Cp // block_c),
                in_specs=[pl.BlockSpec((1, block_c, H, W), lambda n, c: (n, c, 0, 0))],
                out_specs=pl.BlockSpec((1, R, block_c), lambda n, c: (n, 0, c)),
                scratch_shapes=[pltpu.VMEM((H, W, block_c), x.dtype)]),
            compiler_params=pltpu.CompilerParams(
                dimension_semantics=("parallel", "parallel"),
                vmem_limit_bytes=vmem_limit),
        )(xp)

        # Stage 2 (tiny, N*R*Cp elements): normalize each region over C and sum.
        out = pl.pallas_call(
            functools.partial(_norm_sum_kernel, eps=float(eps)),
            out_shape=jax.ShapeDtypeStruct((N, 1, Cp), x.dtype),
            grid_spec=pltpu.PrefetchScalarGridSpec(
                num_scalar_prefetch=0,
                grid=(N,),
                in_specs=[pl.BlockSpec((1, R, Cp), lambda n: (n, 0, 0))],
                out_specs=pl.BlockSpec((1, 1, Cp), lambda n: (n, 0, 0))),
            compiler_params=pltpu.CompilerParams(
                dimension_semantics=("parallel",)),
        )(v)

    if Cp != C:
        out = out[:, :, :C]
    return out.reshape(N, C, 1, 1)


def rmac_reference(x, L=3, eps=1e-6):
    """Plain-JAX reference implementing the same math as the PyTorch module."""
    N, C, H, W = x.shape
    regions = _rmac_regions(H, W, L)
    v = jnp.zeros((N, C), dtype=jnp.float32)
    for (hi, wi, hs, ws) in regions:
        r = jnp.max(x[:, :, hi:hi + hs, wi:wi + ws].astype(jnp.float32), axis=(2, 3))
        nrm = jnp.sqrt(jnp.sum(r * r, axis=1, keepdims=True))
        v = v + r / (nrm + eps)
    return v.astype(x.dtype).reshape(N, C, 1, 1)


if __name__ == "__main__":
    key = jax.random.PRNGKey(0)

    # Test 1: module-sized input (N=2, C=4, H=W=16) -> padded-C, fused single-kernel path.
    x = jax.random.normal(key, (2, 4, 16, 16), dtype=jnp.float32)
    y = jax.block_until_ready(rmac(x, L=3, eps=1e-6))
    y_ref = rmac_reference(x, L=3, eps=1e-6)
    assert y.shape == (2, 4, 1, 1), y.shape
    assert jnp.allclose(y, y_ref, atol=1e-5, rtol=1e-5), float(jnp.max(jnp.abs(y - y_ref)))

    # Test 2: exercise the channel-tiled two-stage path (multi-block grid, block_c=128).
    k2 = jax.random.PRNGKey(1)
    x2 = jax.random.normal(k2, (2, 256, 16, 16), dtype=jnp.float32)
    y2 = jax.block_until_ready(rmac(x2, L=3, eps=1e-6, block_c=128))
    y2_ref = rmac_reference(x2, L=3, eps=1e-6)
    assert y2.shape == (2, 256, 1, 1), y2.shape
    assert jnp.allclose(y2, y2_ref, atol=1e-5, rtol=1e-5), float(jnp.max(jnp.abs(y2 - y2_ref)))

    print("KERNEL_OK")
</pallas_src>

<mosaic_0001>
module attributes {stable_mosaic.version = 11 : i64} {
  func.func @_rmac_fused_kernel(%arg0: i32, %arg1: memref<1x128x16x16xf32, #tpu.memory_space<vmem>>, %arg2: memref<1x1x128xf32, #tpu.memory_space<vmem>>, %arg3: memref<16x16x128xf32, #tpu.memory_space<vmem>>) attributes {dimension_semantics = [#tpu.dimension_semantics<parallel>], iteration_bounds = array<i64: 2>, scalar_prefetch = 0 : i64, scratch_operands = 1 : i64, tpu.core_type = #tpu.core_type<tc>, window_params = [{transform_indices = @transform_0, window_bounds = array<i64: 1, 128, 16, 16>}, {transform_indices = @transform_1, window_bounds = array<i64: 1, 1, 128>}]} {
    %c0 = arith.constant 0 : index
    %c0_0 = arith.constant 0 : index
    %c0_1 = arith.constant 0 : index
    %c0_2 = arith.constant 0 : index
    %0 = vector.load %arg1[%c0, %c0_0, %c0_1, %c0_2] : memref<1x128x16x16xf32, #tpu.memory_space<vmem>>, vector<1x128x1x16xf32>
    %1 = vector.shape_cast %0 : vector<1x128x1x16xf32> to vector<128x16xf32>
    %2 = tpu.transpose %1, [1, 0] : vector<128x16xf32> -> vector<16x128xf32>
    %c0_3 = arith.constant 0 : index
    %c0_4 = arith.constant 0 : index
    %c0_5 = arith.constant 0 : index
    %3 = vector.load %arg3[%c0_3, %c0_4, %c0_5] : memref<16x16x128xf32, #tpu.memory_space<vmem>>, vector<1x16x128xf32>
    %4 = vector.shape_cast %3 : vector<1x16x128xf32> to vector<16x128xf32>
    %5 = vector.shape_cast %2 : vector<16x128xf32> to vector<1x16x128xf32>
    tpu.vector_store %arg3[%c0_3, %c0_4, %c0_5], %5 {strides = array<i32>} : memref<16x16x128xf32, #tpu.memory_space<vmem>>, vector<1x16x128xf32>,
    %c0_6 = arith.constant 0 : index
    %c0_7 = arith.constant 0 : index
    %c1 = arith.constant 1 : index
    %c0_8 = arith.constant 0 : index
    %6 = vector.load %arg1[%c0_6, %c0_7, %c1, %c0_8] : memref<1x128x16x16xf32, #tpu.memory_space<vmem>>, vector<1x128x1x16xf32>
    %7 = vector.shape_cast %6 : vector<1x128x1x16xf32> to vector<128x16xf32>
    %8 = tpu.transpose %7, [1, 0] : vector<128x16xf32> -> vector<16x128xf32>
    %c1_9 = arith.constant 1 : index
    %c0_10 = arith.constant 0 : index
    %c0_11 = arith.constant 0 : index
    %9 = vector.load %arg3[%c1_9, %c0_10, %c0_11] : memref<16x16x128xf32, #tpu.memory_space<vmem>>, vector<1x16x128xf32>
    %10 = vector.shape_cast %9 : vector<1x16x128xf32> to vector<16x128xf32>
    %11 = vector.shape_cast %8 : vector<16x128xf32> to vector<1x16x128xf32>
    tpu.vector_store %arg3[%c1_9, %c0_10, %c0_11], %11 {strides = array<i32>} : memref<16x16x128xf32, #tpu.memory_space<vmem>>, vector<1x16x128xf32>,
    %c0_12 = arith.constant 0 : index
    %c0_13 = arith.constant 0 : index
    %c2 = arith.constant 2 : index
    %c0_14 = arith.constant 0 : index
    %12 = vector.load %arg1[%c0_12, %c0_13, %c2, %c0_14] : memref<1x128x16x16xf32, #tpu.memory_space<vmem>>, vector<1x128x1x16xf32>
    %13 = vector.shape_cast %12 : vector<1x128x1x16xf32> to vector<128x16xf32>
    %14 = tpu.transpose %13, [1, 0] : vector<128x16xf32> -> vector<16x128xf32>
    %c2_15 = arith.constant 2 : index
    %c0_16 = arith.constant 0 : index
    %c0_17 = arith.constant 0 : index
    %15 = vector.load %arg3[%c2_15, %c0_16, %c0_17] : memref<16x16x128xf32, #tpu.memory_space<vmem>>, vector<1x16x128xf32>
    %16 = vector.shape_cast %15 : vector<1x16x128xf32> to vector<16x128xf32>
    %17 = vector.shape_cast %14 : vector<16x128xf32> to vector<1x16x128xf32>
    tpu.vector_store %arg3[%c2_15, %c0_16, %c0_17], %17 {strides = array<i32>} : memref<16x16x128xf32, #tpu.memory_space<vmem>>, vector<1x16x128xf32>,
    %c0_18 = arith.constant 0 : index
    %c0_19 = arith.constant 0 : index
    %c3 = arith.constant 3 : index
    %c0_20 = arith.constant 0 : index
    %18 = vector.load %arg1[%c0_18, %c0_19, %c3, %c0_20] : memref<1x128x16x16xf32, #tpu.memory_space<vmem>>, vector<1x128x1x16xf32>
    %19 = vector.shape_cast %18 : vector<1x128x1x16xf32> to vector<128x16xf32>
    %20 = tpu.transpose %19, [1, 0] : vector<128x16xf32> -> vector<16x128xf32>
    %c3_21 = arith.constant 3 : index
    %c0_22 = arith.constant 0 : index
    %c0_23 = arith.constant 0 : index
    %21 = vector.load %arg3[%c3_21, %c0_22, %c0_23] : memref<16x16x128xf32, #tpu.memory_space<vmem>>, vector<1x16x128xf32>
    %22 = vector.shape_cast %21 : vector<1x16x128xf32> to vector<16x128xf32>
    %23 = vector.shape_cast %20 : vector<16x128xf32> to vector<1x16x128xf32>
    tpu.vector_store %arg3[%c3_21, %c0_22, %c0_23], %23 {strides = array<i32>} : memref<16x16x128xf32, #tpu.memory_space<vmem>>, vector<1x16x128xf32>,
    %c0_24 = arith.constant 0 : index
    %c0_25 = arith.constant 0 : index
    %c4 = arith.constant 4 : index
    %c0_26 = arith.constant 0 : index
    %24 = vector.load %arg1[%c0_24, %c0_25, %c4, %c0_26] : memref<1x128x16x16xf32, #tpu.memory_space<vmem>>, vector<1x128x1x16xf32>
    %25 = vector.shape_cast %24 : vector<1x128x1x16xf32> to vector<128x16xf32>
    %26 = tpu.transpose %25, [1, 0] : vector<128x16xf32> -> vector<16x128xf32>
    %c4_27 = arith.constant 4 : index
    %c0_28 = arith.constant 0 : index
    %c0_29 = arith.constant 0 : index
    %27 = vector.load %arg3[%c4_27, %c0_28, %c0_29] : memref<16x16x128xf32, #tpu.memory_space<vmem>>, vector<1x16x128xf32>
    %28 = vector.shape_cast %27 : vector<1x16x128xf32> to vector<16x128xf32>
    %29 = vector.shape_cast %26 : vector<16x128xf32> to vector<1x16x128xf32>
    tpu.vector_store %arg3[%c4_27, %c0_28, %c0_29], %29 {strides = array<i32>} : memref<16x16x128xf32, #tpu.memory_space<vmem>>, vector<1x16x128xf32>,
    %c0_30 = arith.constant 0 : index
    %c0_31 = arith.constant 0 : index
    %c5 = arith.constant 5 : index
    %c0_32 = arith.constant 0 : index
    %30 = vector.load %arg1[%c0_30, %c0_31, %c5, %c0_32] : memref<1x128x16x16xf32, #tpu.memory_space<vmem>>, vector<1x128x1x16xf32>
    %31 = vector.shape_cast %30 : vector<1x128x1x16xf32> to vector<128x16xf32>
    %32 = tpu.transpose %31, [1, 0] : vector<128x16xf32> -> vector<16x128xf32>
    %c5_33 = arith.constant 5 : index
    %c0_34 = arith.constant 0 : index
    %c0_35 = arith.constant 0 : index
    %33 = vector.load %arg3[%c5_33, %c0_34, %c0_35] : memref<16x16x128xf32, #tpu.memory_space<vmem>>, vector<1x16x128xf32>
    %34 = vector.shape_cast %33 : vector<1x16x128xf32> to vector<16x128xf32>
    %35 = vector.shape_cast %32 : vector<16x128xf32> to vector<1x16x128xf32>
    tpu.vector_store %arg3[%c5_33, %c0_34, %c0_35], %35 {strides = array<i32>} : memref<16x16x128xf32, #tpu.memory_space<vmem>>, vector<1x16x128xf32>,
    %c0_36 = arith.constant 0 : index
    %c0_37 = arith.constant 0 : index
    %c6 = arith.constant 6 : index
    %c0_38 = arith.constant 0 : index
    %36 = vector.load %arg1[%c0_36, %c0_37, %c6, %c0_38] : memref<1x128x16x16xf32, #tpu.memory_space<vmem>>, vector<1x128x1x16xf32>
    %37 = vector.shape_cast %36 : vector<1x128x1x16xf32> to vector<128x16xf32>
    %38 = tpu.transpose %37, [1, 0] : vector<128x16xf32> -> vector<16x128xf32>
    %c6_39 = arith.constant 6 : index
    %c0_40 = arith.constant 0 : index
    %c0_41 = arith.constant 0 : index
    %39 = vector.load %arg3[%c6_39, %c0_40, %c0_41] : memref<16x16x128xf32, #tpu.memory_space<vmem>>, vector<1x16x128xf32>
    %40 = vector.shape_cast %39 : vector<1x16x128xf32> to vector<16x128xf32>
    %41 = vector.shape_cast %38 : vector<16x128xf32> to vector<1x16x128xf32>
    tpu.vector_store %arg3[%c6_39, %c0_40, %c0_41], %41 {strides = array<i32>} : memref<16x16x128xf32, #tpu.memory_space<vmem>>, vector<1x16x128xf32>,
    %c0_42 = arith.constant 0 : index
    %c0_43 = arith.constant 0 : index
    %c7 = arith.constant 7 : index
    %c0_44 = arith.constant 0 : index
    %42 = vector.load %arg1[%c0_42, %c0_43, %c7, %c0_44] : memref<1x128x16x16xf32, #tpu.memory_space<vmem>>, vector<1x128x1x16xf32>
    %43 = vector.shape_cast %42 : vector<1x128x1x16xf32> to vector<128x16xf32>
    %44 = tpu.transpose %43, [1, 0] : vector<128x16xf32> -> vector<16x128xf32>
    %c7_45 = arith.constant 7 : index
    %c0_46 = arith.constant 0 : index
    %c0_47 = arith.constant 0 : index
    %45 = vector.load %arg3[%c7_45, %c0_46, %c0_47] : memref<16x16x128xf32, #tpu.memory_space<vmem>>, vector<1x16x128xf32>
    %46 = vector.shape_cast %45 : vector<1x16x128xf32> to vector<16x128xf32>
    %47 = vector.shape_cast %44 : vector<16x128xf32> to vector<1x16x128xf32>
    tpu.vector_store %arg3[%c7_45, %c0_46, %c0_47], %47 {strides = array<i32>} : memref<16x16x128xf32, #tpu.memory_space<vmem>>, vector<1x16x128xf32>,
    %c0_48 = arith.constant 0 : index
    %c0_49 = arith.constant 0 : index
    %c8 = arith.constant 8 : index
    %c0_50 = arith.constant 0 : index
    %48 = vector.load %arg1[%c0_48, %c0_49, %c8, %c0_50] : memref<1x128x16x16xf32, #tpu.memory_space<vmem>>, vector<1x128x1x16xf32>
    %49 = vector.shape_cast %48 : vector<1x128x1x16xf32> to vector<128x16xf32>
    %50 = tpu.transpose %49, [1, 0] : vector<128x16xf32> -> vector<16x128xf32>
    %c8_51 = arith.constant 8 : index
    %c0_52 = arith.constant 0 : index
    %c0_53 = arith.constant 0 : index
    %51 = vector.load %arg3[%c8_51, %c0_52, %c0_53] : memref<16x16x128xf32, #tpu.memory_space<vmem>>, vector<1x16x128xf32>
    %52 = vector.shape_cast %51 : vector<1x16x128xf32> to vector<16x128xf32>
    %53 = vector.shape_cast %50 : vector<16x128xf32> to vector<1x16x128xf32>
    tpu.vector_store %arg3[%c8_51, %c0_52, %c0_53], %53 {strides = array<i32>} : memref<16x16x128xf32, #tpu.memory_space<vmem>>, vector<1x16x128xf32>,
    %c0_54 = arith.constant 0 : index
    %c0_55 = arith.constant 0 : index
    %c9 = arith.constant 9 : index
    %c0_56 = arith.constant 0 : index
    %54 = vector.load %arg1[%c0_54, %c0_55, %c9, %c0_56] : memref<1x128x16x16xf32, #tpu.memory_space<vmem>>, vector<1x128x1x16xf32>
    %55 = vector.shape_cast %54 : vector<1x128x1x16xf32> to vector<128x16xf32>
    %56 = tpu.transpose %55, [1, 0] : vector<128x16xf32> -> vector<16x128xf32>
    %c9_57 = arith.constant 9 : index
    %c0_58 = arith.constant 0 : index
    %c0_59 = arith.constant 0 : index
    %57 = vector.load %arg3[%c9_57, %c0_58, %c0_59] : memref<16x16x128xf32, #tpu.memory_space<vmem>>, vector<1x16x128xf32>
    %58 = vector.shape_cast %57 : vector<1x16x128xf32> to vector<16x128xf32>
    %59 = vector.shape_cast %56 : vector<16x128xf32> to vector<1x16x128xf32>
    tpu.vector_store %arg3[%c9_57, %c0_58, %c0_59], %59 {strides = array<i32>} : memref<16x16x128xf32, #tpu.memory_space<vmem>>, vector<1x16x128xf32>,
    %c0_60 = arith.constant 0 : index
    %c0_61 = arith.constant 0 : index
    %c10 = arith.constant 10 : index
    %c0_62 = arith.constant 0 : index
    %60 = vector.load %arg1[%c0_60, %c0_61, %c10, %c0_62] : memref<1x128x16x16xf32, #tpu.memory_space<vmem>>, vector<1x128x1x16xf32>
    %61 = vector.shape_cast %60 : vector<1x128x1x16xf32> to vector<128x16xf32>
    %62 = tpu.transpose %61, [1, 0] : vector<128x16xf32> -> vector<16x128xf32>
    %c10_63 = arith.constant 10 : index
    %c0_64 = arith.constant 0 : index
    %c0_65 = arith.constant 0 : index
    %63 = vector.load %arg3[%c10_63, %c0_64, %c0_65] : memref<16x16x128xf32, #tpu.memory_space<vmem>>, vector<1x16x128xf32>
    %64 = vector.shape_cast %63 : vector<1x16x128xf32> to vector<16x128xf32>
    %65 = vector.shape_cast %62 : vector<16x128xf32> to vector<1x16x128xf32>
    tpu.vector_store %arg3[%c10_63, %c0_64, %c0_65], %65 {strides = array<i32>} : memref<16x16x128xf32, #tpu.memory_space<vmem>>, vector<1x16x128xf32>,
    %c0_66 = arith.constant 0 : index
    %c0_67 = arith.constant 0 : index
    %c11 = arith.constant 11 : index
    %c0_68 = arith.constant 0 : index
    %66 = vector.load %arg1[%c0_66, %c0_67, %c11, %c0_68] : memref<1x128x16x16xf32, #tpu.memory_space<vmem>>, vector<1x128x1x16xf32>
    %67 = vector.shape_cast %66 : vector<1x128x1x16xf32> to vector<128x16xf32>
    %68 = tpu.transpose %67, [1, 0] : vector<128x16xf32> -> vector<16x128xf32>
    %c11_69 = arith.constant 11 : index
    %c0_70 = arith.constant 0 : index
    %c0_71 = arith.constant 0 : index
    %69 = vector.load %arg3[%c11_69, %c0_70, %c0_71] : memref<16x16x128xf32, #tpu.memory_space<vmem>>, vector<1x16x128xf32>
    %70 = vector.shape_cast %69 : vector<1x16x128xf32> to vector<16x128xf32>
    %71 = vector.shape_cast %68 : vector<16x128xf32> to vector<1x16x128xf32>
    tpu.vector_store %arg3[%c11_69, %c0_70, %c0_71], %71 {strides = array<i32>} : memref<16x16x128xf32, #tpu.memory_space<vmem>>, vector<1x16x128xf32>,
    %c0_72 = arith.constant 0 : index
    %c0_73 = arith.constant 0 : index
    %c12 = arith.constant 12 : index
    %c0_74 = arith.constant 0 : index
    %72 = vector.load %arg1[%c0_72, %c0_73, %c12, %c0_74] : memref<1x128x16x16xf32, #tpu.memory_space<vmem>>, vector<1x128x1x16xf32>
    %73 = vector.shape_cast %72 : vector<1x128x1x16xf32> to vector<128x16xf32>
    %74 = tpu.transpose %73, [1, 0] : vector<128x16xf32> -> vector<16x128xf32>
    %c12_75 = arith.constant 12 : index
    %c0_76 = arith.constant 0 : index
    %c0_77 = arith.constant 0 : index
    %75 = vector.load %arg3[%c12_75, %c0_76, %c0_77] : memref<16x16x128xf32, #tpu.memory_space<vmem>>, vector<1x16x128xf32>
    %76 = vector.shape_cast %75 : vector<1x16x128xf32> to vector<16x128xf32>
    %77 = vector.shape_cast %74 : vector<16x128xf32> to vector<1x16x128xf32>
    tpu.vector_store %arg3[%c12_75, %c0_76, %c0_77], %77 {strides = array<i32>} : memref<16x16x128xf32, #tpu.memory_space<vmem>>, vector<1x16x128xf32>,
    %c0_78 = arith.constant 0 : index
    %c0_79 = arith.constant 0 : index
    %c13 = arith.constant 13 : index
    %c0_80 = arith.constant 0 : index
    %78 = vector.load %arg1[%c0_78, %c0_79, %c13, %c0_80] : memref<1x128x16x16xf32, #tpu.memory_space<vmem>>, vector<1x128x1x16xf32>
    %79 = vector.shape_cast %78 : vector<1x128x1x16xf32> to vector<128x16xf32>
    %80 = tpu.transpose %79, [1, 0] : vector<128x16xf32> -> vector<16x128xf32>
    %c13_81 = arith.constant 13 : index
    %c0_82 = arith.constant 0 : index
    %c0_83 = arith.constant 0 : index
    %81 = vector.load %arg3[%c13_81, %c0_82, %c0_83] : memref<16x16x128xf32, #tpu.memory_space<vmem>>, vector<1x16x128xf32>
    %82 = vector.shape_cast %81 : vector<1x16x128xf32> to vector<16x128xf32>
    %83 = vector.shape_cast %80 : vector<16x128xf32> to vector<1x16x128xf32>
    tpu.vector_store %arg3[%c13_81, %c0_82, %c0_83], %83 {strides = array<i32>} : memref<16x16x128xf32, #tpu.memory_space<vmem>>, vector<1x16x128xf32>,
    %c0_84 = arith.constant 0 : index
    %c0_85 = arith.constant 0 : index
    %c14 = arith.constant 14 : index
    %c0_86 = arith.constant 0 : index
    %84 = vector.load %arg1[%c0_84, %c0_85, %c14, %c0_86] : memref<1x128x16x16xf32, #tpu.memory_space<vmem>>, vector<1x128x1x16xf32>
    %85 = vector.shape_cast %84 : vector<1x128x1x16xf32> to vector<128x16xf32>
    %86 = tpu.transpose %85, [1, 0] : vector<128x16xf32> -> vector<16x128xf32>
    %c14_87 = arith.constant 14 : index
    %c0_88 = arith.constant 0 : index
    %c0_89 = arith.constant 0 : index
    %87 = vector.load %arg3[%c14_87, %c0_88, %c0_89] : memref<16x16x128xf32, #tpu.memory_space<vmem>>, vector<1x16x128xf32>
    %88 = vector.shape_cast %87 : vector<1x16x128xf32> to vector<16x128xf32>
    %89 = vector.shape_cast %86 : vector<16x128xf32> to vector<1x16x128xf32>
    tpu.vector_store %arg3[%c14_87, %c0_88, %c0_89], %89 {strides = array<i32>} : memref<16x16x128xf32, #tpu.memory_space<vmem>>, vector<1x16x128xf32>,
    %c0_90 = arith.constant 0 : index
    %c0_91 = arith.constant 0 : index
    %c15 = arith.constant 15 : index
    %c0_92 = arith.constant 0 : index
    %90 = vector.load %arg1[%c0_90, %c0_91, %c15, %c0_92] : memref<1x128x16x16xf32, #tpu.memory_space<vmem>>, vector<1x128x1x16xf32>
    %91 = vector.shape_cast %90 : vector<1x128x1x16xf32> to vector<128x16xf32>
    %92 = tpu.transpose %91, [1, 0] : vector<128x16xf32> -> vector<16x128xf32>
    %c15_93 = arith.constant 15 : index
    %c0_94 = arith.constant 0 : index
    %c0_95 = arith.constant 0 : index
    %93 = vector.load %arg3[%c15_93, %c0_94, %c0_95] : memref<16x16x128xf32, #tpu.memory_space<vmem>>, vector<1x16x128xf32>
    %94 = vector.shape_cast %93 : vector<1x16x128xf32> to vector<16x128xf32>
    %95 = vector.shape_cast %92 : vector<16x128xf32> to vector<1x16x128xf32>
    tpu.vector_store %arg3[%c15_93, %c0_94, %c0_95], %95 {strides = array<i32>} : memref<16x16x128xf32, #tpu.memory_space<vmem>>, vector<1x16x128xf32>,
    %cst = arith.constant 0.000000e+00 : f32
    %96 = vector.broadcast %cst : f32 to vector<1x128xf32>
    %c0_96 = arith.constant 0 : index
    %c0_97 = arith.constant 0 : index
    %c0_98 = arith.constant 0 : index
    %97 = vector.load %arg3[%c0_96, %c0_97, %c0_98] : memref<16x16x128xf32, #tpu.memory_space<vmem>>, vector<1x16x128xf32>
    %98 = vector.shape_cast %97 : vector<1x16x128xf32> to vector<16x128xf32>
    %c1_99 = arith.constant 1 : index
    %c0_100 = arith.constant 0 : index
    %c0_101 = arith.constant 0 : index
    %99 = vector.load %arg3[%c1_99, %c0_100, %c0_101] : memref<16x16x128xf32, #tpu.memory_space<vmem>>, vector<1x16x128xf32>
    %100 = vector.shape_cast %99 : vector<1x16x128xf32> to vector<16x128xf32>
    %101 = arith.maximumf %98, %100 : vector<16x128xf32>
    %c2_102 = arith.constant 2 : index
    %c0_103 = arith.constant 0 : index
    %c0_104 = arith.constant 0 : index
    %102 = vector.load %arg3[%c2_102, %c0_103, %c0_104] : memref<16x16x128xf32, #tpu.memory_space<vmem>>, vector<1x16x128xf32>
    %103 = vector.shape_cast %102 : vector<1x16x128xf32> to vector<16x128xf32>
    %104 = arith.maximumf %101, %103 : vector<16x128xf32>
    %c3_105 = arith.constant 3 : index
    %c0_106 = arith.constant 0 : index
    %c0_107 = arith.constant 0 : index
    %105 = vector.load %arg3[%c3_105, %c0_106, %c0_107] : memref<16x16x128xf32, #tpu.memory_space<vmem>>, vector<1x16x128xf32>
    %106 = vector.shape_cast %105 : vector<1x16x128xf32> to vector<16x128xf32>
    %107 = arith.maximumf %104, %106 : vector<16x128xf32>
    %c4_108 = arith.constant 4 : index
    %c0_109 = arith.constant 0 : index
    %c0_110 = arith.constant 0 : index
    %108 = vector.load %arg3[%c4_108, %c0_109, %c0_110] : memref<16x16x128xf32, #tpu.memory_space<vmem>>, vector<1x16x128xf32>
    %109 = vector.shape_cast %108 : vector<1x16x128xf32> to vector<16x128xf32>
    %110 = arith.maximumf %107, %109 : vector<16x128xf32>
    %c5_111 = arith.constant 5 : index
    %c0_112 = arith.constant 0 : index
    %c0_113 = arith.constant 0 : index
    %111 = vector.load %arg3[%c5_111, %c0_112, %c0_113] : memref<16x16x128xf32, #tpu.memory_space<vmem>>, vector<1x16x128xf32>
    %112 = vector.shape_cast %111 : vector<1x16x128xf32> to vector<16x128xf32>
    %113 = arith.maximumf %110, %112 : vector<16x128xf32>
    %c6_114 = arith.constant 6 : index
    %c0_115 = arith.constant 0 : index
    %c0_116 = arith.constant 0 : index
    %114 = vector.load %arg3[%c6_114, %c0_115, %c0_116] : memref<16x16x128xf32, #tpu.memory_space<vmem>>, vector<1x16x128xf32>
    %115 = vector.shape_cast %114 : vector<1x16x128xf32> to vector<16x128xf32>
    %116 = arith.maximumf %113, %115 : vector<16x128xf32>
    %c7_117 = arith.constant 7 : index
    %c0_118 = arith.constant 0 : index
    %c0_119 = arith.constant 0 : index
    %117 = vector.load %arg3[%c7_117, %c0_118, %c0_119] : memref<16x16x128xf32, #tpu.memory_space<vmem>>, vector<1x16x128xf32>
    %118 = vector.shape_cast %117 : vector<1x16x128xf32> to vector<16x128xf32>
    %119 = arith.maximumf %116, %118 : vector<16x128xf32>
    %c8_120 = arith.constant 8 : index
    %c0_121 = arith.constant 0 : index
    %c0_122 = arith.constant 0 : index
    %120 = vector.load %arg3[%c8_120, %c0_121, %c0_122] : memref<16x16x128xf32, #tpu.memory_space<vmem>>, vector<1x16x128xf32>
    %121 = vector.shape_cast %120 : vector<1x16x128xf32> to vector<16x128xf32>
    %122 = arith.maximumf %119, %121 : vector<16x128xf32>
    %c9_123 = arith.constant 9 : index
    %c0_124 = arith.constant 0 : index
    %c0_125 = arith.constant 0 : index
    %123 = vector.load %arg3[%c9_123, %c0_124, %c0_125] : memref<16x16x128xf32, #tpu.memory_space<vmem>>, vector<1x16x128xf32>
    %124 = vector.shape_cast %123 : vector<1x16x128xf32> to vector<16x128xf32>
    %125 = arith.maximumf %122, %124 : vector<16x128xf32>
    %c10_126 = arith.constant 10 : index
    %c0_127 = arith.constant 0 : index
    %c0_128 = arith.constant 0 : index
    %126 = vector.load %arg3[%c10_126, %c0_127, %c0_128] : memref<16x16x128xf32, #tpu.memory_space<vmem>>, vector<1x16x128xf32>
    %127 = vector.shape_cast %126 : vector<1x16x128xf32> to vector<16x128xf32>
    %128 = arith.maximumf %125, %127 : vector<16x128xf32>
    %c11_129 = arith.constant 11 : index
    %c0_130 = arith.constant 0 : index
    %c0_131 = arith.constant 0 : index
    %129 = vector.load %arg3[%c11_129, %c0_130, %c0_131] : memref<16x16x128xf32, #tpu.memory_space<vmem>>, vector<1x16x128xf32>
    %130 = vector.shape_cast %129 : vector<1x16x128xf32> to vector<16x128xf32>
    %131 = arith.maximumf %128, %130 : vector<16x128xf32>
    %c12_132 = arith.constant 12 : index
    %c0_133 = arith.constant 0 : index
    %c0_134 = arith.constant 0 : index
    %132 = vector.load %arg3[%c12_132, %c0_133, %c0_134] : memref<16x16x128xf32, #tpu.memory_space<vmem>>, vector<1x16x128xf32>
    %133 = vector.shape_cast %132 : vector<1x16x128xf32> to vector<16x128xf32>
    %134 = arith.maximumf %131, %133 : vector<16x128xf32>
    %c13_135 = arith.constant 13 : index
    %c0_136 = arith.constant 0 : index
    %c0_137 = arith.constant 0 : index
    %135 = vector.load %arg3[%c13_135, %c0_136, %c0_137] : memref<16x16x128xf32, #tpu.memory_space<vmem>>, vector<1x16x128xf32>
    %136 = vector.shape_cast %135 : vector<1x16x128xf32> to vector<16x128xf32>
    %137 = arith.maximumf %134, %136 : vector<16x128xf32>
    %c14_138 = arith.constant 14 : index
    %c0_139 = arith.constant 0 : index
    %c0_140 = arith.constant 0 : index
    %138 = vector.load %arg3[%c14_138, %c0_139, %c0_140] : memref<16x16x128xf32, #tpu.memory_space<vmem>>, vector<1x16x128xf32>
    %139 = vector.shape_cast %138 : vector<1x16x128xf32> to vector<16x128xf32>
    %140 = arith.maximumf %137, %139 : vector<16x128xf32>
    %c15_141 = arith.constant 15 : index
    %c0_142 = arith.constant 0 : index
    %c0_143 = arith.constant 0 : index
    %141 = vector.load %arg3[%c15_141, %c0_142, %c0_143] : memref<16x16x128xf32, #tpu.memory_space<vmem>>, vector<1x16x128xf32>
    %142 = vector.shape_cast %141 : vector<1x16x128xf32> to vector<16x128xf32>
    %143 = arith.maximumf %140, %142 : vector<16x128xf32>
    %cst_144 = arith.constant dense<0xFF800000> : vector<128xf32>
    %144 = vector.multi_reduction <maximumf>, %143, %cst_144 [0] : vector<16x128xf32> to vector<128xf32>
    %145 = vector.shape_cast %144 : vector<128xf32> to vector<1x128xf32>
    %146 = arith.mulf %145, %145 : vector<1x128xf32>
    %cst_145 = arith.constant dense<0.000000e+00> : vector<1xf32>
    %147 = vector.multi_reduction <add>, %146, %cst_145 [1] : vector<1x128xf32> to vector<1xf32>
    %148 = vector.shape_cast %147 : vector<1xf32> to vector<1x1xf32>
    %149 = math.sqrt %148 : vector<1x1xf32>
    %cst_146 = arith.constant 9.99999997E-7 : f32
    %150 = vector.broadcast %cst_146 : f32 to vector<1x1xf32>
    %151 = arith.addf %149, %150 : vector<1x1xf32>
    %cst_147 = arith.constant 2.000000e+00 : f32
    %152 = vector.broadcast %cst_147 : f32 to vector<1x1xf32>
    %153 = arith.divf %152, %151 : vector<1x1xf32>
    %154 = vector.broadcast %153 : vector<1x1xf32> to vector<1x128xf32>
    %155 = arith.mulf %145, %154 : vector<1x128xf32>
    %156 = arith.addf %96, %155 : vector<1x128xf32>
    %c0_148 = arith.constant 0 : index
    %c0_149 = arith.constant 0 : index
    %c0_150 = arith.constant 0 : index
    %157 = vector.load %arg3[%c0_148, %c0_149, %c0_150] : memref<16x16x128xf32, #tpu.memory_space<vmem>>, vector<1x16x128xf32>
    %158 = vector.shape_cast %157 : vector<1x16x128xf32> to vector<16x128xf32>
    %c1_151 = arith.constant 1 : index
    %c0_152 = arith.constant 0 : index
    %c0_153 = arith.constant 0 : index
    %159 = vector.load %arg3[%c1_151, %c0_152, %c0_153] : memref<16x16x128xf32, #tpu.memory_space<vmem>>, vector<1x16x128xf32>
    %160 = vector.shape_cast %159 : vector<1x16x128xf32> to vector<16x128xf32>
    %161 = arith.maximumf %158, %160 : vector<16x128xf32>
    %c2_154 = arith.constant 2 : index
    %c0_155 = arith.constant 0 : index
    %c0_156 = arith.constant 0 : index
    %162 = vector.load %arg3[%c2_154, %c0_155, %c0_156] : memref<16x16x128xf32, #tpu.memory_space<vmem>>, vector<1x16x128xf32>
    %163 = vector.shape_cast %162 : vector<1x16x128xf32> to vector<16x128xf32>
    %164 = arith.maximumf %161, %163 : vector<16x128xf32>
    %c3_157 = arith.constant 3 : index
    %c0_158 = arith.constant 0 : index
    %c0_159 = arith.constant 0 : index
    %165 = vector.load %arg3[%c3_157, %c0_158, %c0_159] : memref<16x16x128xf32, #tpu.memory_space<vmem>>, vector<1x16x128xf32>
    %166 = vector.shape_cast %165 : vector<1x16x128xf32> to vector<16x128xf32>
    %167 = arith.maximumf %164, %166 : vector<16x128xf32>
    %c4_160 = arith.constant 4 : index
    %c0_161 = arith.constant 0 : index
    %c0_162 = arith.constant 0 : index
    %168 = vector.load %arg3[%c4_160, %c0_161, %c0_162] : memref<16x16x128xf32, #tpu.memory_space<vmem>>, vector<1x16x128xf32>
    %169 = vector.shape_cast %168 : vector<1x16x128xf32> to vector<16x128xf32>
    %170 = arith.maximumf %167, %169 : vector<16x128xf32>
    %c5_163 = arith.constant 5 : index
    %c0_164 = arith.constant 0 : index
    %c0_165 = arith.constant 0 : index
    %171 = vector.load %arg3[%c5_163, %c0_164, %c0_165] : memref<16x16x128xf32, #tpu.memory_space<vmem>>, vector<1x16x128xf32>
    %172 = vector.shape_cast %171 : vector<1x16x128xf32> to vector<16x128xf32>
    %173 = arith.maximumf %170, %172 : vector<16x128xf32>
    %c6_166 = arith.constant 6 : index
    %c0_167 = arith.constant 0 : index
    %c0_168 = arith.constant 0 : index
    %174 = vector.load %arg3[%c6_166, %c0_167, %c0_168] : memref<16x16x128xf32, #tpu.memory_space<vmem>>, vector<1x16x128xf32>
    %175 = vector.shape_cast %174 : vector<1x16x128xf32> to vector<16x128xf32>
    %176 = arith.maximumf %173, %175 : vector<16x128xf32>
    %c7_169 = arith.constant 7 : index
    %c0_170 = arith.constant 0 : index
    %c0_171 = arith.constant 0 : index
    %177 = vector.load %arg3[%c7_169, %c0_170, %c0_171] : memref<16x16x128xf32, #tpu.memory_space<vmem>>, vector<1x16x128xf32>
    %178 = vector.shape_cast %177 : vector<1x16x128xf32> to vector<16x128xf32>
    %179 = arith.maximumf %176, %178 : vector<16x128xf32>
    %c8_172 = arith.constant 8 : index
    %c0_173 = arith.constant 0 : index
    %c0_174 = arith.constant 0 : index
    %180 = vector.load %arg3[%c8_172, %c0_173, %c0_174] : memref<16x16x128xf32, #tpu.memory_space<vmem>>, vector<1x16x128xf32>
    %181 = vector.shape_cast %180 : vector<1x16x128xf32> to vector<16x128xf32>
    %182 = arith.maximumf %179, %181 : vector<16x128xf32>
    %c9_175 = arith.constant 9 : index
    %c0_176 = arith.constant 0 : index
    %c0_177 = arith.constant 0 : index
    %183 = vector.load %arg3[%c9_175, %c0_176, %c0_177] : memref<16x16x128xf32, #tpu.memory_space<vmem>>, vector<1x16x128xf32>
    %184 = vector.shape_cast %183 : vector<1x16x128xf32> to vector<16x128xf32>
    %185 = arith.maximumf %182, %184 : vector<16x128xf32>
    %186 = vector.extract_strided_slice %185 {offsets = [0, 0], sizes = [10, 128], strides = [1, 1]} : vector<16x128xf32> to vector<10x128xf32>
    %cst_178 = arith.constant dense<0xFF800000> : vector<128xf32>
    %187 = vector.multi_reduction <maximumf>, %186, %cst_178 [0] : vector<10x128xf32> to vector<128xf32>
    %188 = vector.shape_cast %187 : vector<128xf32> to vector<1x128xf32>
    %189 = arith.mulf %188, %188 : vector<1x128xf32>
    %cst_179 = arith.constant dense<0.000000e+00> : vector<1xf32>
    %190 = vector.multi_reduction <add>, %189, %cst_179 [1] : vector<1x128xf32> to vector<1xf32>
    %191 = vector.shape_cast %190 : vector<1xf32> to vector<1x1xf32>
    %192 = math.sqrt %191 : vector<1x1xf32>
    %cst_180 = arith.constant 9.99999997E-7 : f32
    %193 = vector.broadcast %cst_180 : f32 to vector<1x1xf32>
    %194 = arith.addf %192, %193 : vector<1x1xf32>
    %cst_181 = arith.constant 1.000000e+00 : f32
    %195 = vector.broadcast %cst_181 : f32 to vector<1x1xf32>
    %196 = arith.divf %195, %194 : vector<1x1xf32>
    %197 = vector.broadcast %196 : vector<1x1xf32> to vector<1x128xf32>
    %198 = arith.mulf %188, %197 : vector<1x128xf32>
    %199 = arith.addf %156, %198 : vector<1x128xf32>
    %200 = vector.extract_strided_slice %185 {offsets = [6, 0], sizes = [10, 128], strides = [1, 1]} : vector<16x128xf32> to vector<10x128xf32>
    %cst_182 = arith.constant dense<0xFF800000> : vector<128xf32>
    %201 = vector.multi_reduction <maximumf>, %200, %cst_182 [0] : vector<10x128xf32> to vector<128xf32>
    %202 = vector.shape_cast %201 : vector<128xf32> to vector<1x128xf32>
    %203 = arith.mulf %202, %202 : vector<1x128xf32>
    %cst_183 = arith.constant dense<0.000000e+00> : vector<1xf32>
    %204 = vector.multi_reduction <add>, %203, %cst_183 [1] : vector<1x128xf32> to vector<1xf32>
    %205 = vector.shape_cast %204 : vector<1xf32> to vector<1x1xf32>
    %206 = math.sqrt %205 : vector<1x1xf32>
    %cst_184 = arith.constant 9.99999997E-7 : f32
    %207 = vector.broadcast %cst_184 : f32 to vector<1x1xf32>
    %208 = arith.addf %206, %207 : vector<1x1xf32>
    %cst_185 = arith.constant 1.000000e+00 : f32
    %209 = vector.broadcast %cst_185 : f32 to vector<1x1xf32>
    %210 = arith.divf %209, %208 : vector<1x1xf32>
    %211 = vector.broadcast %210 : vector<1x1xf32> to vector<1x128xf32>
    %212 = arith.mulf %202, %211 : vector<1x128xf32>
    %213 = arith.addf %199, %212 : vector<1x128xf32>
    %c6_186 = arith.constant 6 : index
    %c0_187 = arith.constant 0 : index
    %c0_188 = arith.constant 0 : index
    %214 = vector.load %arg3[%c6_186, %c0_187, %c0_188] : memref<16x16x128xf32, #tpu.memory_space<vmem>>, vector<1x16x128xf32>
    %215 = vector.shape_cast %214 : vector<1x16x128xf32> to vector<16x128xf32>
    %c7_189 = arith.constant 7 : index
    %c0_190 = arith.constant 0 : index
    %c0_191 = arith.constant 0 : index
    %216 = vector.load %arg3[%c7_189, %c0_190, %c0_191] : memref<16x16x128xf32, #tpu.memory_space<vmem>>, vector<1x16x128xf32>
    %217 = vector.shape_cast %216 : vector<1x16x128xf32> to vector<16x128xf32>
    %218 = arith.maximumf %215, %217 : vector<16x128xf32>
    %c8_192 = arith.constant 8 : index
    %c0_193 = arith.constant 0 : index
    %c0_194 = arith.constant 0 : index
    %219 = vector.load %arg3[%c8_192, %c0_193, %c0_194] : memref<16x16x128xf32, #tpu.memory_space<vmem>>, vector<1x16x128xf32>
    %220 = vector.shape_cast %219 : vector<1x16x128xf32> to vector<16x128xf32>
    %221 = arith.maximumf %218, %220 : vector<16x128xf32>
    %c9_195 = arith.constant 9 : index
    %c0_196 = arith.constant 0 : index
    %c0_197 = arith.constant 0 : index
    %222 = vector.load %arg3[%c9_195, %c0_196, %c0_197] : memref<16x16x128xf32, #tpu.memory_space<vmem>>, vector<1x16x128xf32>
    %223 = vector.shape_cast %222 : vector<1x16x128xf32> to vector<16x128xf32>
    %224 = arith.maximumf %221, %223 : vector<16x128xf32>
    %c10_198 = arith.constant 10 : index
    %c0_199 = arith.constant 0 : index
    %c0_200 = arith.constant 0 : index
    %225 = vector.load %arg3[%c10_198, %c0_199, %c0_200] : memref<16x16x128xf32, #tpu.memory_space<vmem>>, vector<1x16x128xf32>
    %226 = vector.shape_cast %225 : vector<1x16x128xf32> to vector<16x128xf32>
    %227 = arith.maximumf %224, %226 : vector<16x128xf32>
    %c11_201 = arith.constant 11 : index
    %c0_202 = arith.constant 0 : index
    %c0_203 = arith.constant 0 : index
    %228 = vector.load %arg3[%c11_201, %c0_202, %c0_203] : memref<16x16x128xf32, #tpu.memory_space<vmem>>, vector<1x16x128xf32>
    %229 = vector.shape_cast %228 : vector<1x16x128xf32> to vector<16x128xf32>
    %230 = arith.maximumf %227, %229 : vector<16x128xf32>
    %c12_204 = arith.constant 12 : index
    %c0_205 = arith.constant 0 : index
    %c0_206 = arith.constant 0 : index
    %231 = vector.load %arg3[%c12_204, %c0_205, %c0_206] : memref<16x16x128xf32, #tpu.memory_space<vmem>>, vector<1x16x128xf32>
    %232 = vector.shape_cast %231 : vector<1x16x128xf32> to vector<16x128xf32>
    %233 = arith.maximumf %230, %232 : vector<16x128xf32>
    %c13_207 = arith.constant 13 : index
    %c0_208 = arith.constant 0 : index
    %c0_209 = arith.constant 0 : index
    %234 = vector.load %arg3[%c13_207, %c0_208, %c0_209] : memref<16x16x128xf32, #tpu.memory_space<vmem>>, vector<1x16x128xf32>
    %235 = vector.shape_cast %234 : vector<1x16x128xf32> to vector<16x128xf32>
    %236 = arith.maximumf %233, %235 : vector<16x128xf32>
    %c14_210 = arith.constant 14 : index
    %c0_211 = arith.constant 0 : index
    %c0_212 = arith.constant 0 : index
    %237 = vector.load %arg3[%c14_210, %c0_211, %c0_212] : memref<16x16x128xf32, #tpu.memory_space<vmem>>, vector<1x16x128xf32>
    %238 = vector.shape_cast %237 : vector<1x16x128xf32> to vector<16x128xf32>
    %239 = arith.maximumf %236, %238 : vector<16x128xf32>
    %c15_213 = arith.constant 15 : index
    %c0_214 = arith.constant 0 : index
    %c0_215 = arith.constant 0 : index
    %240 = vector.load %arg3[%c15_213, %c0_214, %c0_215] : memref<16x16x128xf32, #tpu.memory_space<vmem>>, vector<1x16x128xf32>
    %241 = vector.shape_cast %240 : vector<1x16x128xf32> to vector<16x128xf32>
    %242 = arith.maximumf %239, %241 : vector<16x128xf32>
    %243 = vector.extract_strided_slice %242 {offsets = [0, 0], sizes = [10, 128], strides = [1, 1]} : vector<16x128xf32> to vector<10x128xf32>
    %cst_216 = arith.constant dense<0xFF800000> : vector<128xf32>
    %244 = vector.multi_reduction <maximumf>, %243, %cst_216 [0] : vector<10x128xf32> to vector<128xf32>
    %245 = vector.shape_cast %244 : vector<128xf32> to vector<1x128xf32>
    %246 = arith.mulf %245, %245 : vector<1x128xf32>
    %cst_217 = arith.constant dense<0.000000e+00> : vector<1xf32>
    %247 = vector.multi_reduction <add>, %246, %cst_217 [1] : vector<1x128xf32> to vector<1xf32>
    %248 = vector.shape_cast %247 : vector<1xf32> to vector<1x1xf32>
    %249 = math.sqrt %248 : vector<1x1xf32>
    %cst_218 = arith.constant 9.99999997E-7 : f32
    %250 = vector.broadcast %cst_218 : f32 to vector<1x1xf32>
    %251 = arith.addf %249, %250 : vector<1x1xf32>
    %cst_219 = arith.constant 1.000000e+00 : f32
    %252 = vector.broadcast %cst_219 : f32 to vector<1x1xf32>
    %253 = arith.divf %252, %251 : vector<1x1xf32>
    %254 = vector.broadcast %253 : vector<1x1xf32> to vector<1x128xf32>
    %255 = arith.mulf %245, %254 : vector<1x128xf32>
    %256 = arith.addf %213, %255 : vector<1x128xf32>
    %257 = vector.extract_strided_slice %242 {offsets = [6, 0], sizes = [10, 128], strides = [1, 1]} : vector<16x128xf32> to vector<10x128xf32>
    %cst_220 = arith.constant dense<0xFF800000> : vector<128xf32>
    %258 = vector.multi_reduction <maximumf>, %257, %cst_220 [0] : vector<10x128xf32> to vector<128xf32>
    %259 = vector.shape_cast %258 : vector<128xf32> to vector<1x128xf32>
    %260 = arith.mulf %259, %259 : vector<1x128xf32>
    %cst_221 = arith.constant dense<0.000000e+00> : vector<1xf32>
    %261 = vector.multi_reduction <add>, %260, %cst_221 [1] : vector<1x128xf32> to vector<1xf32>
    %262 = vector.shape_cast %261 : vector<1xf32> to vector<1x1xf32>
    %263 = math.sqrt %262 : vector<1x1xf32>
    %cst_222 = arith.constant 9.99999997E-7 : f32
    %264 = vector.broadcast %cst_222 : f32 to vector<1x1xf32>
    %265 = arith.addf %263, %264 : vector<1x1xf32>
    %cst_223 = arith.constant 1.000000e+00 : f32
    %266 = vector.broadcast %cst_223 : f32 to vector<1x1xf32>
    %267 = arith.divf %266, %265 : vector<1x1xf32>
    %268 = vector.broadcast %267 : vector<1x1xf32> to vector<1x128xf32>
    %269 = arith.mulf %259, %268 : vector<1x128xf32>
    %270 = arith.addf %256, %269 : vector<1x128xf32>
    %c0_224 = arith.constant 0 : index
    %c0_225 = arith.constant 0 : index
    %c0_226 = arith.constant 0 : index
    %271 = vector.load %arg3[%c0_224, %c0_225, %c0_226] : memref<16x16x128xf32, #tpu.memory_space<vmem>>, vector<1x16x128xf32>
    %272 = vector.shape_cast %271 : vector<1x16x128xf32> to vector<16x128xf32>
    %c1_227 = arith.constant 1 : index
    %c0_228 = arith.constant 0 : index
    %c0_229 = arith.constant 0 : index
    %273 = vector.load %arg3[%c1_227, %c0_228, %c0_229] : memref<16x16x128xf32, #tpu.memory_space<vmem>>, vector<1x16x128xf32>
    %274 = vector.shape_cast %273 : vector<1x16x128xf32> to vector<16x128xf32>
    %275 = arith.maximumf %272, %274 : vector<16x128xf32>
    %c2_230 = arith.constant 2 : index
    %c0_231 = arith.constant 0 : index
    %c0_232 = arith.constant 0 : index
    %276 = vector.load %arg3[%c2_230, %c0_231, %c0_232] : memref<16x16x128xf32, #tpu.memory_space<vmem>>, vector<1x16x128xf32>
    %277 = vector.shape_cast %276 : vector<1x16x128xf32> to vector<16x128xf32>
    %278 = arith.maximumf %275, %277 : vector<16x128xf32>
    %c3_233 = arith.constant 3 : index
    %c0_234 = arith.constant 0 : index
    %c0_235 = arith.constant 0 : index
    %279 = vector.load %arg3[%c3_233, %c0_234, %c0_235] : memref<16x16x128xf32, #tpu.memory_space<vmem>>, vector<1x16x128xf32>
    %280 = vector.shape_cast %279 : vector<1x16x128xf32> to vector<16x128xf32>
    %281 = arith.maximumf %278, %280 : vector<16x128xf32>
    %c4_236 = arith.constant 4 : index
    %c0_237 = arith.constant 0 : index
    %c0_238 = arith.constant 0 : index
    %282 = vector.load %arg3[%c4_236, %c0_237, %c0_238] : memref<16x16x128xf32, #tpu.memory_space<vmem>>, vector<1x16x128xf32>
    %283 = vector.shape_cast %282 : vector<1x16x128xf32> to vector<16x128xf32>
    %284 = arith.maximumf %281, %283 : vector<16x128xf32>
    %c5_239 = arith.constant 5 : index
    %c0_240 = arith.constant 0 : index
    %c0_241 = arith.constant 0 : index
    %285 = vector.load %arg3[%c5_239, %c0_240, %c0_241] : memref<16x16x128xf32, #tpu.memory_space<vmem>>, vector<1x16x128xf32>
    %286 = vector.shape_cast %285 : vector<1x16x128xf32> to vector<16x128xf32>
    %287 = arith.maximumf %284, %286 : vector<16x128xf32>
    %c6_242 = arith.constant 6 : index
    %c0_243 = arith.constant 0 : index
    %c0_244 = arith.constant 0 : index
    %288 = vector.load %arg3[%c6_242, %c0_243, %c0_244] : memref<16x16x128xf32, #tpu.memory_space<vmem>>, vector<1x16x128xf32>
    %289 = vector.shape_cast %288 : vector<1x16x128xf32> to vector<16x128xf32>
    %290 = arith.maximumf %287, %289 : vector<16x128xf32>
    %c7_245 = arith.constant 7 : index
    %c0_246 = arith.constant 0 : index
    %c0_247 = arith.constant 0 : index
    %291 = vector.load %arg3[%c7_245, %c0_246, %c0_247] : memref<16x16x128xf32, #tpu.memory_space<vmem>>, vector<1x16x128xf32>
    %292 = vector.shape_cast %291 : vector<1x16x128xf32> to vector<16x128xf32>
    %293 = arith.maximumf %290, %292 : vector<16x128xf32>
    %294 = vector.extract_strided_slice %293 {offsets = [0, 0], sizes = [8, 128], strides = [1, 1]} : vector<16x128xf32> to vector<8x128xf32>
    %cst_248 = arith.constant dense<0xFF800000> : vector<128xf32>
    %295 = vector.multi_reduction <maximumf>, %294, %cst_248 [0] : vector<8x128xf32> to vector<128xf32>
    %296 = vector.shape_cast %295 : vector<128xf32> to vector<1x128xf32>
    %297 = arith.mulf %296, %296 : vector<1x128xf32>
    %cst_249 = arith.constant dense<0.000000e+00> : vector<1xf32>
    %298 = vector.multi_reduction <add>, %297, %cst_249 [1] : vector<1x128xf32> to vector<1xf32>
    %299 = vector.shape_cast %298 : vector<1xf32> to vector<1x1xf32>
    %300 = math.sqrt %299 : vector<1x1xf32>
    %cst_250 = arith.constant 9.99999997E-7 : f32
    %301 = vector.broadcast %cst_250 : f32 to vector<1x1xf32>
    %302 = arith.addf %300, %301 : vector<1x1xf32>
    %cst_251 = arith.constant 1.000000e+00 : f32
    %303 = vector.broadcast %cst_251 : f32 to vector<1x1xf32>
    %304 = arith.divf %303, %302 : vector<1x1xf32>
    %305 = vector.broadcast %304 : vector<1x1xf32> to vector<1x128xf32>
    %306 = arith.mulf %296, %305 : vector<1x128xf32>
    %307 = arith.addf %270, %306 : vector<1x128xf32>
    %308 = vector.extract_strided_slice %293 {offsets = [4, 0], sizes = [8, 128], strides = [1, 1]} : vector<16x128xf32> to vector<8x128xf32>
    %cst_252 = arith.constant dense<0xFF800000> : vector<128xf32>
    %309 = vector.multi_reduction <maximumf>, %308, %cst_252 [0] : vector<8x128xf32> to vector<128xf32>
    %310 = vector.shape_cast %309 : vector<128xf32> to vector<1x128xf32>
    %311 = arith.mulf %310, %310 : vector<1x128xf32>
    %cst_253 = arith.constant dense<0.000000e+00> : vector<1xf32>
    %312 = vector.multi_reduction <add>, %311, %cst_253 [1] : vector<1x128xf32> to vector<1xf32>
    %313 = vector.shape_cast %312 : vector<1xf32> to vector<1x1xf32>
    %314 = math.sqrt %313 : vector<1x1xf32>
    %cst_254 = arith.constant 9.99999997E-7 : f32
    %315 = vector.broadcast %cst_254 : f32 to vector<1x1xf32>
    %316 = arith.addf %314, %315 : vector<1x1xf32>
    %cst_255 = arith.constant 1.000000e+00 : f32
    %317 = vector.broadcast %cst_255 : f32 to vector<1x1xf32>
    %318 = arith.divf %317, %316 : vector<1x1xf32>
    %319 = vector.broadcast %318 : vector<1x1xf32> to vector<1x128xf32>
    %320 = arith.mulf %310, %319 : vector<1x128xf32>
    %321 = arith.addf %307, %320 : vector<1x128xf32>
    %322 = vector.extract_strided_slice %293 {offsets = [8, 0], sizes = [8, 128], strides = [1, 1]} : vector<16x128xf32> to vector<8x128xf32>
    %cst_256 = arith.constant dense<0xFF800000> : vector<128xf32>
    %323 = vector.multi_reduction <maximumf>, %322, %cst_256 [0] : vector<8x128xf32> to vector<128xf32>
    %324 = vector.shape_cast %323 : vector<128xf32> to vector<1x128xf32>
    %325 = arith.mulf %324, %324 : vector<1x128xf32>
    %cst_257 = arith.constant dense<0.000000e+00> : vector<1xf32>
    %326 = vector.multi_reduction <add>, %325, %cst_257 [1] : vector<1x128xf32> to vector<1xf32>
    %327 = vector.shape_cast %326 : vector<1xf32> to vector<1x1xf32>
    %328 = math.sqrt %327 : vector<1x1xf32>
    %cst_258 = arith.constant 9.99999997E-7 : f32
    %329 = vector.broadcast %cst_258 : f32 to vector<1x1xf32>
    %330 = arith.addf %328, %329 : vector<1x1xf32>
    %cst_259 = arith.constant 1.000000e+00 : f32
    %331 = vector.broadcast %cst_259 : f32 to vector<1x1xf32>
    %332 = arith.divf %331, %330 : vector<1x1xf32>
    %333 = vector.broadcast %332 : vector<1x1xf32> to vector<1x128xf32>
    %334 = arith.mulf %324, %333 : vector<1x128xf32>
    %335 = arith.addf %321, %334 : vector<1x128xf32>
    %c4_260 = arith.constant 4 : index
    %c0_261 = arith.constant 0 : index
    %c0_262 = arith.constant 0 : index
    %336 = vector.load %arg3[%c4_260, %c0_261, %c0_262] : memref<16x16x128xf32, #tpu.memory_space<vmem>>, vector<1x16x128xf32>
    %337 = vector.shape_cast %336 : vector<1x16x128xf32> to vector<16x128xf32>
    %c5_263 = arith.constant 5 : index
    %c0_264 = arith.constant 0 : index
    %c0_265 = arith.constant 0 : index
    %338 = vector.load %arg3[%c5_263, %c0_264, %c0_265] : memref<16x16x128xf32, #tpu.memory_space<vmem>>, vector<1x16x128xf32>
    %339 = vector.shape_cast %338 : vector<1x16x128xf32> to vector<16x128xf32>
    %340 = arith.maximumf %337, %339 : vector<16x128xf32>
    %c6_266 = arith.constant 6 : index
    %c0_267 = arith.constant 0 : index
    %c0_268 = arith.constant 0 : index
    %341 = vector.load %arg3[%c6_266, %c0_267, %c0_268] : memref<16x16x128xf32, #tpu.memory_space<vmem>>, vector<1x16x128xf32>
    %342 = vector.shape_cast %341 : vector<1x16x128xf32> to vector<16x128xf32>
    %343 = arith.maximumf %340, %342 : vector<16x128xf32>
    %c7_269 = arith.constant 7 : index
    %c0_270 = arith.constant 0 : index
    %c0_271 = arith.constant 0 : index
    %344 = vector.load %arg3[%c7_269, %c0_270, %c0_271] : memref<16x16x128xf32, #tpu.memory_space<vmem>>, vector<1x16x128xf32>
    %345 = vector.shape_cast %344 : vector<1x16x128xf32> to vector<16x128xf32>
    %346 = arith.maximumf %343, %345 : vector<16x128xf32>
    %c8_272 = arith.constant 8 : index
    %c0_273 = arith.constant 0 : index
    %c0_274 = arith.constant 0 : index
    %347 = vector.load %arg3[%c8_272, %c0_273, %c0_274] : memref<16x16x128xf32, #tpu.memory_space<vmem>>, vector<1x16x128xf32>
    %348 = vector.shape_cast %347 : vector<1x16x128xf32> to vector<16x128xf32>
    %349 = arith.maximumf %346, %348 : vector<16x128xf32>
    %c9_275 = arith.constant 9 : index
    %c0_276 = arith.constant 0 : index
    %c0_277 = arith.constant 0 : index
    %350 = vector.load %arg3[%c9_275, %c0_276, %c0_277] : memref<16x16x128xf32, #tpu.memory_space<vmem>>, vector<1x16x128xf32>
    %351 = vector.shape_cast %350 : vector<1x16x128xf32> to vector<16x128xf32>
    %352 = arith.maximumf %349, %351 : vector<16x128xf32>
    %c10_278 = arith.constant 10 : index
    %c0_279 = arith.constant 0 : index
    %c0_280 = arith.constant 0 : index
    %353 = vector.load %arg3[%c10_278, %c0_279, %c0_280] : memref<16x16x128xf32, #tpu.memory_space<vmem>>, vector<1x16x128xf32>
    %354 = vector.shape_cast %353 : vector<1x16x128xf32> to vector<16x128xf32>
    %355 = arith.maximumf %352, %354 : vector<16x128xf32>
    %c11_281 = arith.constant 11 : index
    %c0_282 = arith.constant 0 : index
    %c0_283 = arith.constant 0 : index
    %356 = vector.load %arg3[%c11_281, %c0_282, %c0_283] : memref<16x16x128xf32, #tpu.memory_space<vmem>>, vector<1x16x128xf32>
    %357 = vector.shape_cast %356 : vector<1x16x128xf32> to vector<16x128xf32>
    %358 = arith.maximumf %355, %357 : vector<16x128xf32>
    %359 = vector.extract_strided_slice %358 {offsets = [0, 0], sizes = [8, 128], strides = [1, 1]} : vector<16x128xf32> to vector<8x128xf32>
    %cst_284 = arith.constant dense<0xFF800000> : vector<128xf32>
    %360 = vector.multi_reduction <maximumf>, %359, %cst_284 [0] : vector<8x128xf32> to vector<128xf32>
    %361 = vector.shape_cast %360 : vector<128xf32> to vector<1x128xf32>
    %362 = arith.mulf %361, %361 : vector<1x128xf32>
    %cst_285 = arith.constant dense<0.000000e+00> : vector<1xf32>
    %363 = vector.multi_reduction <add>, %362, %cst_285 [1] : vector<1x128xf32> to vector<1xf32>
    %364 = vector.shape_cast %363 : vector<1xf32> to vector<1x1xf32>
    %365 = math.sqrt %364 : vector<1x1xf32>
    %cst_286 = arith.constant 9.99999997E-7 : f32
    %366 = vector.broadcast %cst_286 : f32 to vector<1x1xf32>
    %367 = arith.addf %365, %366 : vector<1x1xf32>
    %cst_287 = arith.constant 1.000000e+00 : f32
    %368 = vector.broadcast %cst_287 : f32 to vector<1x1xf32>
    %369 = arith.divf %368, %367 : vector<1x1xf32>
    %370 = vector.broadcast %369 : vector<1x1xf32> to vector<1x128xf32>
    %371 = arith.mulf %361, %370 : vector<1x128xf32>
    %372 = arith.addf %335, %371 : vector<1x128xf32>
    %373 = vector.extract_strided_slice %358 {offsets = [4, 0], sizes = [8, 128], strides = [1, 1]} : vector<16x128xf32> to vector<8x128xf32>
    %cst_288 = arith.constant dense<0xFF800000> : vector<128xf32>
    %374 = vector.multi_reduction <maximumf>, %373, %cst_288 [0] : vector<8x128xf32> to vector<128xf32>
    %375 = vector.shape_cast %374 : vector<128xf32> to vector<1x128xf32>
    %376 = arith.mulf %375, %375 : vector<1x128xf32>
    %cst_289 = arith.constant dense<0.000000e+00> : vector<1xf32>
    %377 = vector.multi_reduction <add>, %376, %cst_289 [1] : vector<1x128xf32> to vector<1xf32>
    %378 = vector.shape_cast %377 : vector<1xf32> to vector<1x1xf32>
    %379 = math.sqrt %378 : vector<1x1xf32>
    %cst_290 = arith.constant 9.99999997E-7 : f32
    %380 = vector.broadcast %cst_290 : f32 to vector<1x1xf32>
    %381 = arith.addf %379, %380 : vector<1x1xf32>
    %cst_291 = arith.constant 1.000000e+00 : f32
    %382 = vector.broadcast %cst_291 : f32 to vector<1x1xf32>
    %383 = arith.divf %382, %381 : vector<1x1xf32>
    %384 = vector.broadcast %383 : vector<1x1xf32> to vector<1x128xf32>
    %385 = arith.mulf %375, %384 : vector<1x128xf32>
    %386 = arith.addf %372, %385 : vector<1x128xf32>
    %387 = vector.extract_strided_slice %358 {offsets = [8, 0], sizes = [8, 128], strides = [1, 1]} : vector<16x128xf32> to vector<8x128xf32>
    %cst_292 = arith.constant dense<0xFF800000> : vector<128xf32>
    %388 = vector.multi_reduction <maximumf>, %387, %cst_292 [0] : vector<8x128xf32> to vector<128xf32>
    %389 = vector.shape_cast %388 : vector<128xf32> to vector<1x128xf32>
    %390 = arith.mulf %389, %389 : vector<1x128xf32>
    %cst_293 = arith.constant dense<0.000000e+00> : vector<1xf32>
    %391 = vector.multi_reduction <add>, %390, %cst_293 [1] : vector<1x128xf32> to vector<1xf32>
    %392 = vector.shape_cast %391 : vector<1xf32> to vector<1x1xf32>
    %393 = math.sqrt %392 : vector<1x1xf32>
    %cst_294 = arith.constant 9.99999997E-7 : f32
    %394 = vector.broadcast %cst_294 : f32 to vector<1x1xf32>
    %395 = arith.addf %393, %394 : vector<1x1xf32>
    %cst_295 = arith.constant 1.000000e+00 : f32
    %396 = vector.broadcast %cst_295 : f32 to vector<1x1xf32>
    %397 = arith.divf %396, %395 : vector<1x1xf32>
    %398 = vector.broadcast %397 : vector<1x1xf32> to vector<1x128xf32>
    %399 = arith.mulf %389, %398 : vector<1x128xf32>
    %400 = arith.addf %386, %399 : vector<1x128xf32>
    %c8_296 = arith.constant 8 : index
    %c0_297 = arith.constant 0 : index
    %c0_298 = arith.constant 0 : index
    %401 = vector.load %arg3[%c8_296, %c0_297, %c0_298] : memref<16x16x128xf32, #tpu.memory_space<vmem>>, vector<1x16x128xf32>
    %402 = vector.shape_cast %401 : vector<1x16x128xf32> to vector<16x128xf32>
    %c9_299 = arith.constant 9 : index
    %c0_300 = arith.constant 0 : index
    %c0_301 = arith.constant 0 : index
    %403 = vector.load %arg3[%c9_299, %c0_300, %c0_301] : memref<16x16x128xf32, #tpu.memory_space<vmem>>, vector<1x16x128xf32>
    %404 = vector.shape_cast %403 : vector<1x16x128xf32> to vector<16x128xf32>
    %405 = arith.maximumf %402, %404 : vector<16x128xf32>
    %c10_302 = arith.constant 10 : index
    %c0_303 = arith.constant 0 : index
    %c0_304 = arith.constant 0 : index
    %406 = vector.load %arg3[%c10_302, %c0_303, %c0_304] : memref<16x16x128xf32, #tpu.memory_space<vmem>>, vector<1x16x128xf32>
    %407 = vector.shape_cast %406 : vector<1x16x128xf32> to vector<16x128xf32>
    %408 = arith.maximumf %405, %407 : vector<16x128xf32>
    %c11_305 = arith.constant 11 : index
    %c0_306 = arith.constant 0 : index
    %c0_307 = arith.constant 0 : index
    %409 = vector.load %arg3[%c11_305, %c0_306, %c0_307] : memref<16x16x128xf32, #tpu.memory_space<vmem>>, vector<1x16x128xf32>
    %410 = vector.shape_cast %409 : vector<1x16x128xf32> to vector<16x128xf32>
    %411 = arith.maximumf %408, %410 : vector<16x128xf32>
    %c12_308 = arith.constant 12 : index
    %c0_309 = arith.constant 0 : index
    %c0_310 = arith.constant 0 : index
    %412 = vector.load %arg3[%c12_308, %c0_309, %c0_310] : memref<16x16x128xf32, #tpu.memory_space<vmem>>, vector<1x16x128xf32>
    %413 = vector.shape_cast %412 : vector<1x16x128xf32> to vector<16x128xf32>
    %414 = arith.maximumf %411, %413 : vector<16x128xf32>
    %c13_311 = arith.constant 13 : index
    %c0_312 = arith.constant 0 : index
    %c0_313 = arith.constant 0 : index
    %415 = vector.load %arg3[%c13_311, %c0_312, %c0_313] : memref<16x16x128xf32, #tpu.memory_space<vmem>>, vector<1x16x128xf32>
    %416 = vector.shape_cast %415 : vector<1x16x128xf32> to vector<16x128xf32>
    %417 = arith.maximumf %414, %416 : vector<16x128xf32>
    %c14_314 = arith.constant 14 : index
    %c0_315 = arith.constant 0 : index
    %c0_316 = arith.constant 0 : index
    %418 = vector.load %arg3[%c14_314, %c0_315, %c0_316] : memref<16x16x128xf32, #tpu.memory_space<vmem>>, vector<1x16x128xf32>
    %419 = vector.shape_cast %418 : vector<1x16x128xf32> to vector<16x128xf32>
    %420 = arith.maximumf %417, %419 : vector<16x128xf32>
    %c15_317 = arith.constant 15 : index
    %c0_318 = arith.constant 0 : index
    %c0_319 = arith.constant 0 : index
    %421 = vector.load %arg3[%c15_317, %c0_318, %c0_319] : memref<16x16x128xf32, #tpu.memory_space<vmem>>, vector<1x16x128xf32>
    %422 = vector.shape_cast %421 : vector<1x16x128xf32> to vector<16x128xf32>
    %423 = arith.maximumf %420, %422 : vector<16x128xf32>
    %424 = vector.extract_strided_slice %423 {offsets = [0, 0], sizes = [8, 128], strides = [1, 1]} : vector<16x128xf32> to vector<8x128xf32>
    %cst_320 = arith.constant dense<0xFF800000> : vector<128xf32>
    %425 = vector.multi_reduction <maximumf>, %424, %cst_320 [0] : vector<8x128xf32> to vector<128xf32>
    %426 = vector.shape_cast %425 : vector<128xf32> to vector<1x128xf32>
    %427 = arith.mulf %426, %426 : vector<1x128xf32>
    %cst_321 = arith.constant dense<0.000000e+00> : vector<1xf32>
    %428 = vector.multi_reduction <add>, %427, %cst_321 [1] : vector<1x128xf32> to vector<1xf32>
    %429 = vector.shape_cast %428 : vector<1xf32> to vector<1x1xf32>
    %430 = math.sqrt %429 : vector<1x1xf32>
    %cst_322 = arith.constant 9.99999997E-7 : f32
    %431 = vector.broadcast %cst_322 : f32 to vector<1x1xf32>
    %432 = arith.addf %430, %431 : vector<1x1xf32>
    %cst_323 = arith.constant 1.000000e+00 : f32
    %433 = vector.broadcast %cst_323 : f32 to vector<1x1xf32>
    %434 = arith.divf %433, %432 : vector<1x1xf32>
    %435 = vector.broadcast %434 : vector<1x1xf32> to vector<1x128xf32>
    %436 = arith.mulf %426, %435 : vector<1x128xf32>
    %437 = arith.addf %400, %436 : vector<1x128xf32>
    %438 = vector.extract_strided_slice %423 {offsets = [4, 0], sizes = [8, 128], strides = [1, 1]} : vector<16x128xf32> to vector<8x128xf32>
    %cst_324 = arith.constant dense<0xFF800000> : vector<128xf32>
    %439 = vector.multi_reduction <maximumf>, %438, %cst_324 [0] : vector<8x128xf32> to vector<128xf32>
    %440 = vector.shape_cast %439 : vector<128xf32> to vector<1x128xf32>
    %441 = arith.mulf %440, %440 : vector<1x128xf32>
    %cst_325 = arith.constant dense<0.000000e+00> : vector<1xf32>
    %442 = vector.multi_reduction <add>, %441, %cst_325 [1] : vector<1x128xf32> to vector<1xf32>
    %443 = vector.shape_cast %442 : vector<1xf32> to vector<1x1xf32>
    %444 = math.sqrt %443 : vector<1x1xf32>
    %cst_326 = arith.constant 9.99999997E-7 : f32
    %445 = vector.broadcast %cst_326 : f32 to vector<1x1xf32>
    %446 = arith.addf %444, %445 : vector<1x1xf32>
    %cst_327 = arith.constant 1.000000e+00 : f32
    %447 = vector.broadcast %cst_327 : f32 to vector<1x1xf32>
    %448 = arith.divf %447, %446 : vector<1x1xf32>
    %449 = vector.broadcast %448 : vector<1x1xf32> to vector<1x128xf32>
    %450 = arith.mulf %440, %449 : vector<1x128xf32>
    %451 = arith.addf %437, %450 : vector<1x128xf32>
    %452 = vector.extract_strided_slice %423 {offsets = [8, 0], sizes = [8, 128], strides = [1, 1]} : vector<16x128xf32> to vector<8x128xf32>
    %cst_328 = arith.constant dense<0xFF800000> : vector<128xf32>
    %453 = vector.multi_reduction <maximumf>, %452, %cst_328 [0] : vector<8x128xf32> to vector<128xf32>
    %454 = vector.shape_cast %453 : vector<128xf32> to vector<1x128xf32>
    %455 = arith.mulf %454, %454 : vector<1x128xf32>
    %cst_329 = arith.constant dense<0.000000e+00> : vector<1xf32>
    %456 = vector.multi_reduction <add>, %455, %cst_329 [1] : vector<1x128xf32> to vector<1xf32>
    %457 = vector.shape_cast %456 : vector<1xf32> to vector<1x1xf32>
    %458 = math.sqrt %457 : vector<1x1xf32>
    %cst_330 = arith.constant 9.99999997E-7 : f32
    %459 = vector.broadcast %cst_330 : f32 to vector<1x1xf32>
    %460 = arith.addf %458, %459 : vector<1x1xf32>
    %cst_331 = arith.constant 1.000000e+00 : f32
    %461 = vector.broadcast %cst_331 : f32 to vector<1x1xf32>
    %462 = arith.divf %461, %460 : vector<1x1xf32>
    %463 = vector.broadcast %462 : vector<1x1xf32> to vector<1x128xf32>
    %464 = arith.mulf %454, %463 : vector<1x128xf32>
    %465 = arith.addf %451, %464 : vector<1x128xf32>
    %c0_332 = arith.constant 0 : index
    %c0_333 = arith.constant 0 : index
    %c0_334 = arith.constant 0 : index
    %466 = vector.load %arg2[%c0_332, %c0_333, %c0_334] : memref<1x1x128xf32, #tpu.memory_space<vmem>>, vector<1x1x128xf32>
    %467 = vector.shape_cast %466 : vector<1x1x128xf32> to vector<1x128xf32>
    %468 = vector.shape_cast %465 : vector<1x128xf32> to vector<1x1x128xf32>
    tpu.vector_store %arg2[%c0_332, %c0_333, %c0_334], %468 {strides = array<i32>} : memref<1x1x128xf32, #tpu.memory_space<vmem>>, vector<1x1x128xf32>,
    return
  }
  func.func @transform_0(%arg0: i32) -> (i32, i32, i32, i32) {
    %c0_i32 = arith.constant 0 : i32
    %c0_i32_0 = arith.constant 0 : i32
    %c0_i32_1 = arith.constant 0 : i32
    %c0_i32_2 = arith.constant 0 : i32
    return %arg0, %c0_i32, %c0_i32_0, %c0_i32_1 : i32, i32, i32, i32
  }
  func.func @transform_1(%arg0: i32) -> (i32, i32, i32) {
    %c0_i32 = arith.constant 0 : i32
    %c0_i32_0 = arith.constant 0 : i32
    %c0_i32_1 = arith.constant 0 : i32
    return %arg0, %c0_i32, %c0_i32_0 : i32, i32, i32
  }
}

</mosaic_0001>

<llo_original>
// kernel: tpu_custom_call.1
$region0: #{tpu_custom_call.1}
  #allocation0 [shape = 'u32[]', space=smem, size = 0x4, offset = 0x4, fixed_abs, tag = 'smem constant byte address 0x4 - core index']
  #allocation1 [shape = 'u32[144,128]{1,0:T(1,128)}', space=vmem, size = 0x12000, scoped, tag = 'internal scratch']
  #allocation2 [shape = 'f32[16,16,128]{2,1,0:T(8,128)}', space=vmem, size = 0x20000, scoped, tag = 'scratch operand']
  %s0 = inlined_call_operand.vmem [shape: f32[2,128,16,16], index: 0, kind: input, shape index: {}]
  %s1 = inlined_call_operand.hbm [shape: f32[2,1,128], index: 1, kind: output, shape index: {}]
  %s2 = sld [smem:[#allocation0]]
  $region37: #{tpu_custom_call.1} parent=0
    _
  %s4 = ssub.s32 1, %s2
  %s5 = scalar_select 0, %s4, %s2
  $region1: #{tpu_custom_call.1} parent=0
    #allocation3 [shape = 'u8[1024]{0}', space=vmem, size = 0x400, scoped, tag = 'output window, operand 0']
    #allocation4 [shape = 's32[2]{0}', space=sflag, size = 0x8, scoped, tag = 'scoped memory for tpu_custom_call.1']
    %6 = vsyncpa [#allocation4], 0
    %s7 = scalar_lea.sflag [#allocation4], 1
    %8 = vsyncpa %s7, 0
    loop: start=0, step=1, limit=4
    $region2: #{tpu_custom_call.1} parent=1 // loop_pre_header
      _
    $region3: #{tpu_custom_call.1} parent=1 // loop_header
      %s10 = sphi 0, %s14
      %p11 = scmp.ge.s32.totalorder %s10, 4
      %s20 = sphi 0, %s22
      %s23 = sphi 0, %s20
      %s24 = sphi 0, %s23
      %s40 = sphi 0, %s24
      %s46 = sphi 0, %s48
      %s49 = sphi 0, %s46
      %s50 = sphi 0, %s49
      %s66 = sphi 0, %s50
    $region4: #{tpu_custom_call.1} parent=1 // loop_header_branch
      %13 = sbr.rel (%p11) target = $region8
    $region5: #{tpu_custom_call.1} parent=1 // loop_body
      %s15 = ssub.s32 %s10, 1
      %s16 = ssub.s32 %s10, 2
      %s17 = sadd.s32 %s10, 1
      %s18 = ssub.s32 %s10, %s17
      %p19 = scmp.eq.s32.totalorder %s18, 0
      %s21 = sadd.s32 %s20, 1
      %s22 = scalar_select %p19, %s20, %s21
      %p25 = pneg %p19
      %p26 = scmp.eq.s32.totalorder %s10, 1
      %p27 = por %p25, %p26
      %p28 = scmp.ne.s32.totalorder %s20, %s23
      %p29 = scmp.eq.s32.totalorder %s10, 0
      %p30 = por %p28, %p29
      %p31 = scmp.ne.s32.totalorder %s20, %s23
      %p32 = scmp.eq.s32.totalorder %s15, 1
      %p33 = por %p31, %p32
      %p34 = scmp.ne.s32.totalorder %s23, %s24
      %p35 = scmp.eq.s32.totalorder %s15, 0
      %p36 = por %p34, %p35
      %p37 = scmp.ne.s32.totalorder %s23, %s24
      %p38 = scmp.eq.s32.totalorder %s16, 1
      %p39 = por %p37, %p38
      %p41 = scmp.ne.s32.totalorder %s24, %s40
      %p42 = scmp.eq.s32.totalorder %s16, 0
      %p43 = por %p41, %p42
      %s44 = ssub.s32 %s10, %s17
      %p45 = scmp.eq.s32.totalorder %s44, 0
      %s47 = sadd.s32 %s46, 1
      %s48 = scalar_select %p45, %s46, %s47
      %p51 = pneg %p45
      %p52 = scmp.eq.s32.totalorder %s10, 1
      %p53 = por %p51, %p52
      %p54 = scmp.ne.s32.totalorder %s46, %s49
      %p55 = scmp.eq.s32.totalorder %s10, 0
      %p56 = por %p54, %p55
      %p57 = scmp.ne.s32.totalorder %s46, %s49
      %p58 = scmp.eq.s32.totalorder %s15, 1
      %p59 = por %p57, %p58
      %p60 = scmp.ne.s32.totalorder %s49, %s50
      %p61 = scmp.eq.s32.totalorder %s15, 0
      %p62 = por %p60, %p61
      %p63 = scmp.ne.s32.totalorder %s49, %s50
      %p64 = scmp.eq.s32.totalorder %s16, 1
      %p65 = por %p63, %p64
      %p67 = scmp.ne.s32.totalorder %s50, %s66
      %p68 = scmp.eq.s32.totalorder %s16, 0
      %p69 = por %p67, %p68
      %p70 = scmp.le.s32.totalorder 1, %s10
      %p71 = scmp.lt.s32.totalorder %s10, 3
      %p72 = pnand %p70, %p71
      %p73 = pneg %p72
      // Predicated region
      $region9: #{tpu_custom_call.1} parent=5 // pred_check
        _
      $region10: #{tpu_custom_call.1} parent=5 // pred_check_branch
        %75 = sbr.rel (%p72) target = $region12
      $region11: #{tpu_custom_call.1} parent=5 // pred_region
        %s76 = ssub.s32 %s10, 1
      $region12: #{tpu_custom_call.1} parent=5 // pred_fallthru
        _
      %p77 = scmp.lt.s32.totalorder %s10, 2
      // Predicated region
      $region13: #{tpu_custom_call.1} parent=5 // pred_check
        %p78 = pneg %p77
      $region14: #{tpu_custom_call.1} parent=5 // pred_check_branch
        %80 = sbr.rel (%p78) target = $region16
      $region15: #{tpu_custom_call.1} parent=5 // pred_region
        // Predicated region
        $region17: #{tpu_custom_call.1} parent=15 // pred_check
          %p81 = pneg %p30
        $region18: #{tpu_custom_call.1} parent=15 // pred_check_branch
          %83 = sbr.rel (%p81) target = $region20
        $region19: #{tpu_custom_call.1} parent=15 // pred_region
          %p84 = scmp.lt.s32.totalorder %s10, 1
          %s85 = scalar_select %p84, %s10, 1
          %s86 = smul.addr %s85, 256
          %s87 = smul.addr %s86, 8
          %s88 = scalar_lea.vmem %s0, %s87
        $region20: #{tpu_custom_call.1} parent=15 // pred_fallthru
          _
      $region16: #{tpu_custom_call.1} parent=5 // pred_fallthru
        _
      %p89 = scmp.le.s32.totalorder 1, %s10
      %p90 = scmp.lt.s32.totalorder %s10, 3
      %p91 = pnand %p89, %p90
      %p92 = pneg %p91
      // Predicated region
      $region21: #{tpu_custom_call.1} parent=5 // pred_check
        _
      $region22: #{tpu_custom_call.1} parent=5 // pred_check_branch
        %94 = sbr.rel (%p91) target = $region24
      $region23: #{tpu_custom_call.1} parent=5 // pred_region
        %s95 = ssub.s32 %s10, 1
        %p96 = scmp.lt.s32.totalorder %s15, 1
        %s97 = scalar_select %p96, %s15, 1
        %s98 = smul.addr %s97, 256
        %s99 = smul.addr %s98, 8
        %s100 = scalar_lea.vmem %s0, %s99
        %p101 = pneg %p36
        %p102 = pneg %p33
        %p103 = pneg %p62
        %p104 = pneg %p59
        %s105 = sand.u32 %s49, 1
        %s106 = scalar_lea.sflag [#allocation4], %s105
        %s107 = sand.u32 %s49, 1
        %s108 = scalar_lea.vmem [#allocation3], %s107
        %p109 = scmp.lt.s32.totalorder %s15, 1
        %s110 = scalar_select %p109, %s15, 1
        %s111 = smul.addr %s110, 256
        %s112 = smul.addr %s111, 8
        %s113 = scalar_lea.vmem %s0, %s112
        %v114 = vld [vmem:[%s113] sm:$0x1]
        %v115 = vld [vmem:[%s113 + $0x10] sm:$0x1]
        %v116 = vld [vmem:[%s113 + $0x20] sm:$0x1]
        %v117 = vld [vmem:[%s113 + $0x30] sm:$0x1]
        %v118 = vld [vmem:[%s113 + $0x40] sm:$0x1]
        %v119 = vld [vmem:[%s113 + $0x50] sm:$0x1]
        %v120 = vld [vmem:[%s113 + $0x60] sm:$0x1]
        %v121 = vld [vmem:[%s113 + $0x70] sm:$0x1]
        %v122 = vld [vmem:[%s113 + $0x80] sm:$0x1]
        %v123 = vld [vmem:[%s113 + $0x90] sm:$0x1]
        %v124 = vld [vmem:[%s113 + $0xa0] sm:$0x1]
        %v125 = vld [vmem:[%s113 + $0xb0] sm:$0x1]
        %v126 = vld [vmem:[%s113 + $0xc0] sm:$0x1]
        %v127 = vld [vmem:[%s113 + $0xd0] sm:$0x1]
        %v128 = vld [vmem:[%s113 + $0xe0] sm:$0x1]
        %v129 = vld [vmem:[%s113 + $0xf0] sm:$0x1]
        %v130 = vld [vmem:[%s113 + $0x100] sm:$0x1]
        %v131 = vld [vmem:[%s113 + $0x110] sm:$0x1]
        %v132 = vld [vmem:[%s113 + $0x120] sm:$0x1]
        %v133 = vld [vmem:[%s113 + $0x130] sm:$0x1]
        %v134 = vld [vmem:[%s113 + $0x140] sm:$0x1]
        %v135 = vld [vmem:[%s113 + $0x150] sm:$0x1]
        %v136 = vld [vmem:[%s113 + $0x160] sm:$0x1]
        %v137 = vld [vmem:[%s113 + $0x170] sm:$0x1]
        %v138 = vld [vmem:[%s113 + $0x180] sm:$0x1]
        %v139 = vld [vmem:[%s113 + $0x190] sm:$0x1]
        %v140 = vld [vmem:[%s113 + $0x1a0] sm:$0x1]
        %v141 = vld [vmem:[%s113 + $0x1b0] sm:$0x1]
        %v142 = vld [vmem:[%s113 + $0x1c0] sm:$0x1]
        %v143 = vld [vmem:[%s113 + $0x1d0] sm:$0x1]
        %v144 = vld [vmem:[%s113 + $0x1e0] sm:$0x1]
        %v145 = vld [vmem:[%s113 + $0x1f0] sm:$0x1]
        %v146 = vld [vmem:[%s113 + $0x200] sm:$0x1]
        %v147 = vld [vmem:[%s113 + $0x210] sm:$0x1]
        %v148 = vld [vmem:[%s113 + $0x220] sm:$0x1]
        %v149 = vld [vmem:[%s113 + $0x230] sm:$0x1]
        %v150 = vld [vmem:[%s113 + $0x240] sm:$0x1]
        %v151 = vld [vmem:[%s113 + $0x250] sm:$0x1]
        %v152 = vld [vmem:[%s113 + $0x260] sm:$0x1]
        %v153 = vld [vmem:[%s113 + $0x270] sm:$0x1]
        %v154 = vld [vmem:[%s113 + $0x280] sm:$0x1]
        %v155 = vld [vmem:[%s113 + $0x290] sm:$0x1]
        %v156 = vld [vmem:[%s113 + $0x2a0] sm:$0x1]
        %v157 = vld [vmem:[%s113 + $0x2b0] sm:$0x1]
        %v158 = vld [vmem:[%s113 + $0x2c0] sm:$0x1]
        %v159 = vld [vmem:[%s113 + $0x2d0] sm:$0x1]
        %v160 = vld [vmem:[%s113 + $0x2e0] sm:$0x1]
        %v161 = vld [vmem:[%s113 + $0x2f0] sm:$0x1]
        %v162 = vld [vmem:[%s113 + $0x300] sm:$0x1]
        %v163 = vld [vmem:[%s113 + $0x310] sm:$0x1]
        %v164 = vld [vmem:[%s113 + $0x320] sm:$0x1]
        %v165 = vld [vmem:[%s113 + $0x330] sm:$0x1]
        %v166 = vld [vmem:[%s113 + $0x340] sm:$0x1]
        %v167 = vld [vmem:[%s113 + $0x350] sm:$0x1]
        %v168 = vld [vmem:[%s113 + $0x360] sm:$0x1]
        %v169 = vld [vmem:[%s113 + $0x370] sm:$0x1]
        %v170 = vld [vmem:[%s113 + $0x380] sm:$0x1]
        %v171 = vld [vmem:[%s113 + $0x390] sm:$0x1]
        %v172 = vld [vmem:[%s113 + $0x3a0] sm:$0x1]
        %v173 = vld [vmem:[%s113 + $0x3b0] sm:$0x1]
        %v174 = vld [vmem:[%s113 + $0x3c0] sm:$0x1]
        %v175 = vld [vmem:[%s113 + $0x3d0] sm:$0x1]
        %v176 = vld [vmem:[%s113 + $0x3e0] sm:$0x1]
        %v177 = vld [vmem:[%s113 + $0x3f0] sm:$0x1]
        %v178 = vld [vmem:[%s113 + $0x400] sm:$0x1]
        %v179 = vld [vmem:[%s113 + $0x410] sm:$0x1]
        %v180 = vld [vmem:[%s113 + $0x420] sm:$0x1]
        %v181 = vld [vmem:[%s113 + $0x430] sm:$0x1]
        %v182 = vld [vmem:[%s113 + $0x440] sm:$0x1]
        %v183 = vld [vmem:[%s113 + $0x450] sm:$0x1]
        %v184 = vld [vmem:[%s113 + $0x460] sm:$0x1]
        %v185 = vld [vmem:[%s113 + $0x470] sm:$0x1]
        %v186 = vld [vmem:[%s113 + $0x480] sm:$0x1]
        %v187 = vld [vmem:[%s113 + $0x490] sm:$0x1]
        %v188 = vld [vmem:[%s113 + $0x4a0] sm:$0x1]
        %v189 = vld [vmem:[%s113 + $0x4b0] sm:$0x1]
        %v190 = vld [vmem:[%s113 + $0x4c0] sm:$0x1]
        %v191 = vld [vmem:[%s113 + $0x4d0] sm:$0x1]
        %v192 = vld [vmem:[%s113 + $0x4e0] sm:$0x1]
        %v193 = vld [vmem:[%s113 + $0x4f0] sm:$0x1]
        %v194 = vld [vmem:[%s113 + $0x500] sm:$0x1]
        %v195 = vld [vmem:[%s113 + $0x510] sm:$0x1]
        %v196 = vld [vmem:[%s113 + $0x520] sm:$0x1]
        %v197 = vld [vmem:[%s113 + $0x530] sm:$0x1]
        %v198 = vld [vmem:[%s113 + $0x540] sm:$0x1]
        %v199 = vld [vmem:[%s113 + $0x550] sm:$0x1]
        %v200 = vld [vmem:[%s113 + $0x560] sm:$0x1]
        %v201 = vld [vmem:[%s113 + $0x570] sm:$0x1]
        %v202 = vld [vmem:[%s113 + $0x580] sm:$0x1]
        %v203 = vld [vmem:[%s113 + $0x590] sm:$0x1]
        %v204 = vld [vmem:[%s113 + $0x5a0] sm:$0x1]
        %v205 = vld [vmem:[%s113 + $0x5b0] sm:$0x1]
        %v206 = vld [vmem:[%s113 + $0x5c0] sm:$0x1]
        %v207 = vld [vmem:[%s113 + $0x5d0] sm:$0x1]
        %v208 = vld [vmem:[%s113 + $0x5e0] sm:$0x1]
        %v209 = vld [vmem:[%s113 + $0x5f0] sm:$0x1]
        %v210 = vld [vmem:[%s113 + $0x600] sm:$0x1]
        %v211 = vld [vmem:[%s113 + $0x610] sm:$0x1]
        %v212 = vld [vmem:[%s113 + $0x620] sm:$0x1]
        %v213 = vld [vmem:[%s113 + $0x630] sm:$0x1]
        %v214 = vld [vmem:[%s113 + $0x640] sm:$0x1]
        %v215 = vld [vmem:[%s113 + $0x650] sm:$0x1]
        %v216 = vld [vmem:[%s113 + $0x660] sm:$0x1]
        %v217 = vld [vmem:[%s113 + $0x670] sm:$0x1]
        %v218 = vld [vmem:[%s113 + $0x680] sm:$0x1]
        %v219 = vld [vmem:[%s113 + $0x690] sm:$0x1]
        %v220 = vld [vmem:[%s113 + $0x6a0] sm:$0x1]
        %v221 = vld [vmem:[%s113 + $0x6b0] sm:$0x1]
        %v222 = vld [vmem:[%s113 + $0x6c0] sm:$0x1]
        %v223 = vld [vmem:[%s113 + $0x6d0] sm:$0x1]
        %v224 = vld [vmem:[%s113 + $0x6e0] sm:$0x1]
        %v225 = vld [vmem:[%s113 + $0x6f0] sm:$0x1]
        %v226 = vld [vmem:[%s113 + $0x700] sm:$0x1]
        %v227 = vld [vmem:[%s113 + $0x710] sm:$0x1]
        %v228 = vld [vmem:[%s113 + $0x720] sm:$0x1]
        %v229 = vld [vmem:[%s113 + $0x730] sm:$0x1]
        %v230 = vld [vmem:[%s113 + $0x740] sm:$0x1]
        %v231 = vld [vmem:[%s113 + $0x750] sm:$0x1]
        %v232 = vld [vmem:[%s113 + $0x760] sm:$0x1]
        %v233 = vld [vmem:[%s113 + $0x770] sm:$0x1]
        %v234 = vld [vmem:[%s113 + $0x780] sm:$0x1]
        %v235 = vld [vmem:[%s113 + $0x790] sm:$0x1]
        %v236 = vld [vmem:[%s113 + $0x7a0] sm:$0x1]
        %v237 = vld [vmem:[%s113 + $0x7b0] sm:$0x1]
        %v238 = vld [vmem:[%s113 + $0x7c0] sm:$0x1]
        %v239 = vld [vmem:[%s113 + $0x7d0] sm:$0x1]
        %v240 = vld [vmem:[%s113 + $0x7e0] sm:$0x1]
        %v241 = vld [vmem:[%s113 + $0x7f0] sm:$0x1]
        %v370 = vrot.slane %v115, 7
        %vm371 = vcmask 1041409
        %v372 = vsel %vm371, %v370, %v114
        %v373 = vrot.slane %v116, 6
        %vm374 = vcmask 1042434
        %v375 = vsel %vm374, %v373, %v372
        %v376 = vrot.slane %v117, 5
        %vm377 = vcmask 1043459
        %v378 = vsel %vm377, %v376, %v375
        %v379 = vrot.slane %v118, 4
        %vm380 = vcmask 1044484
        %v381 = vsel %vm380, %v379, %v378
        %v382 = vrot.slane %v119, 3
        %vm383 = vcmask 1045509
        %v384 = vsel %vm383, %v382, %v381
        %v385 = vrot.slane %v120, 2
        %vm386 = vcmask 1046534
        %v387 = vsel %vm386, %v385, %v384
        %v388 = vrot.slane %v121, 1
        %vm389 = vcmask 1047559
        %v390 = vsel %vm389, %v388, %v387
        %v391 = vrot.slane %v123, 7
        %v392 = vsel %vm371, %v391, %v122
        %v393 = vrot.slane %v124, 6
        %v394 = vsel %vm374, %v393, %v392
        %v395 = vrot.slane %v125, 5
        %v396 = vsel %vm377, %v395, %v394
        %v397 = vrot.slane %v126, 4
        %v398 = vsel %vm380, %v397, %v396
        %v399 = vrot.slane %v127, 3
        %v400 = vsel %vm383, %v399, %v398
        %v401 = vrot.slane %v128, 2
        %v402 = vsel %vm386, %v401, %v400
        %v403 = vrot.slane %v129, 1
        %v404 = vsel %vm389, %v403, %v402
        %v405 = vrot.slane %v131, 7
        %v406 = vsel %vm371, %v405, %v130
        %v407 = vrot.slane %v132, 6
        %v408 = vsel %vm374, %v407, %v406
        %v409 = vrot.slane %v133, 5
        %v410 = vsel %vm377, %v409, %v408
        %v411 = vrot.slane %v134, 4
        %v412 = vsel %vm380, %v411, %v410
        %v413 = vrot.slane %v135, 3
        %v414 = vsel %vm383, %v413, %v412
        %v415 = vrot.slane %v136, 2
        %v416 = vsel %vm386, %v415, %v414
        %v417 = vrot.slane %v137, 1
        %v418 = vsel %vm389, %v417, %v416
        %v419 = vrot.slane %v139, 7
        %v420 = vsel %vm371, %v419, %v138
        %v421 = vrot.slane %v140, 6
        %v422 = vsel %vm374, %v421, %v420
        %v423 = vrot.slane %v141, 5
        %v424 = vsel %vm377, %v423, %v422
        %v425 = vrot.slane %v142, 4
        %v426 = vsel %vm380, %v425, %v424
        %v427 = vrot.slane %v143, 3
        %v428 = vsel %vm383, %v427, %v426
        %v429 = vrot.slane %v144, 2
        %v430 = vsel %vm386, %v429, %v428
        %v431 = vrot.slane %v145, 1
        %v432 = vsel %vm389, %v431, %v430
        %v433 = vrot.slane %v147, 7
        %v434 = vsel %vm371, %v433, %v146
        %v435 = vrot.slane %v148, 6
        %v436 = vsel %vm374, %v435, %v434
        %v437 = vrot.slane %v149, 5
        %v438 = vsel %vm377, %v437, %v436
        %v439 = vrot.slane %v150, 4
        %v440 = vsel %vm380, %v439, %v438
        %v441 = vrot.slane %v151, 3
        %v442 = vsel %vm383, %v441, %v440
        %v443 = vrot.slane %v152, 2
        %v444 = vsel %vm386, %v443, %v442
        %v445 = vrot.slane %v153, 1
        %v446 = vsel %vm389, %v445, %v444
        %v447 = vrot.slane %v155, 7
        %v448 = vsel %vm371, %v447, %v154
        %v449 = vrot.slane %v156, 6
        %v450 = vsel %vm374, %v449, %v448
        %v451 = vrot.slane %v157, 5
        %v452 = vsel %vm377, %v451, %v450
        %v453 = vrot.slane %v158, 4
        %v454 = vsel %vm380, %v453, %v452
        %v455 = vrot.slane %v159, 3
        %v456 = vsel %vm383, %v455, %v454
        %v457 = vrot.slane %v160, 2
        %v458 = vsel %vm386, %v457, %v456
        %v459 = vrot.slane %v161, 1
        %v460 = vsel %vm389, %v459, %v458
        %v461 = vrot.slane %v163, 7
        %v462 = vsel %vm371, %v461, %v162
        %v463 = vrot.slane %v164, 6
        %v464 = vsel %vm374, %v463, %v462
        %v465 = vrot.slane %v165, 5
        %v466 = vsel %vm377, %v465, %v464
        %v467 = vrot.slane %v166, 4
        %v468 = vsel %vm380, %v467, %v466
        %v469 = vrot.slane %v167, 3
        %v470 = vsel %vm383, %v469, %v468
        %v471 = vrot.slane %v168, 2
        %v472 = vsel %vm386, %v471, %v470
        %v473 = vrot.slane %v169, 1
        %v474 = vsel %vm389, %v473, %v472
        %v475 = vrot.slane %v171, 7
        %v476 = vsel %vm371, %v475, %v170
        %v477 = vrot.slane %v172, 6
        %v478 = vsel %vm374, %v477, %v476
        %v479 = vrot.slane %v173, 5
        %v480 = vsel %vm377, %v479, %v478
        %v481 = vrot.slane %v174, 4
        %v482 = vsel %vm380, %v481, %v480
        %v483 = vrot.slane %v175, 3
        %v484 = vsel %vm383, %v483, %v482
        %v485 = vrot.slane %v176, 2
        %v486 = vsel %vm386, %v485, %v484
        %v487 = vrot.slane %v177, 1
        %v488 = vsel %vm389, %v487, %v486
        %v489 = vrot.slane %v179, 7
        %v490 = vsel %vm371, %v489, %v178
        %v491 = vrot.slane %v180, 6
        %v492 = vsel %vm374, %v491, %v490
        %v493 = vrot.slane %v181, 5
        %v494 = vsel %vm377, %v493, %v492
        %v495 = vrot.slane %v182, 4
        %v496 = vsel %vm380, %v495, %v494
        %v497 = vrot.slane %v183, 3
        %v498 = vsel %vm383, %v497, %v496
        %v499 = vrot.slane %v184, 2
        %v500 = vsel %vm386, %v499, %v498
        %v501 = vrot.slane %v185, 1
        %v502 = vsel %vm389, %v501, %v500
        %v503 = vrot.slane %v187, 7
        %v504 = vsel %vm371, %v503, %v186
        %v505 = vrot.slane %v188, 6
        %v506 = vsel %vm374, %v505, %v504
        %v507 = vrot.slane %v189, 5
        %v508 = vsel %vm377, %v507, %v506
        %v509 = vrot.slane %v190, 4
        %v510 = vsel %vm380, %v509, %v508
        %v511 = vrot.slane %v191, 3
        %v512 = vsel %vm383, %v511, %v510
        %v513 = vrot.slane %v192, 2
        %v514 = vsel %vm386, %v513, %v512
        %v515 = vrot.slane %v193, 1
        %v516 = vsel %vm389, %v515, %v514
        %v517 = vrot.slane %v195, 7
        %v518 = vsel %vm371, %v517, %v194
        %v519 = vrot.slane %v196, 6
        %v520 = vsel %vm374, %v519, %v518
        %v521 = vrot.slane %v197, 5
        %v522 = vsel %vm377, %v521, %v520
        %v523 = vrot.slane %v198, 4
        %v524 = vsel %vm380, %v523, %v522
        %v525 = vrot.slane %v199, 3
        %v526 = vsel %vm383, %v525, %v524
        %v527 = vrot.slane %v200, 2
        %v528 = vsel %vm386, %v527, %v526
        %v529 = vrot.slane %v201, 1
        %v530 = vsel %vm389, %v529, %v528
        %v531 = vrot.slane %v203, 7
        %v532 = vsel %vm371, %v531, %v202
        %v533 = vrot.slane %v204, 6
        %v534 = vsel %vm374, %v533, %v532
        %v535 = vrot.slane %v205, 5
        %v536 = vsel %vm377, %v535, %v534
        %v537 = vrot.slane %v206, 4
        %v538 = vsel %vm380, %v537, %v536
        %v539 = vrot.slane %v207, 3
        %v540 = vsel %vm383, %v539, %v538
        %v541 = vrot.slane %v208, 2
        %v542 = vsel %vm386, %v541, %v540
        %v543 = vrot.slane %v209, 1
        %v544 = vsel %vm389, %v543, %v542
        %v545 = vrot.slane %v211, 7
        %v546 = vsel %vm371, %v545, %v210
        %v547 = vrot.slane %v212, 6
        %v548 = vsel %vm374, %v547, %v546
        %v549 = vrot.slane %v213, 5
        %v550 = vsel %vm377, %v549, %v548
        %v551 = vrot.slane %v214, 4
        %v552 = vsel %vm380, %v551, %v550
        %v553 = vrot.slane %v215, 3
        %v554 = vsel %vm383, %v553, %v552
        %v555 = vrot.slane %v216, 2
        %v556 = vsel %vm386, %v555, %v554
        %v557 = vrot.slane %v217, 1
        %v558 = vsel %vm389, %v557, %v556
        %v559 = vrot.slane %v219, 7
        %v560 = vsel %vm371, %v559, %v218
        %v561 = vrot.slane %v220, 6
        %v562 = vsel %vm374, %v561, %v560
        %v563 = vrot.slane %v221, 5
        %v564 = vsel %vm377, %v563, %v562
        %v565 = vrot.slane %v222, 4
        %v566 = vsel %vm380, %v565, %v564
        %v567 = vrot.slane %v223, 3
        %v568 = vsel %vm383, %v567, %v566
        %v569 = vrot.slane %v224, 2
        %v570 = vsel %vm386, %v569, %v568
        %v571 = vrot.slane %v225, 1
        %v572 = vsel %vm389, %v571, %v570
        %v573 = vrot.slane %v227, 7
        %v574 = vsel %vm371, %v573, %v226
        %v575 = vrot.slane %v228, 6
        %v576 = vsel %vm374, %v575, %v574
        %v577 = vrot.slane %v229, 5
        %v578 = vsel %vm377, %v577, %v576
        %v579 = vrot.slane %v230, 4
        %v580 = vsel %vm380, %v579, %v578
        %v581 = vrot.slane %v231, 3
        %v582 = vsel %vm383, %v581, %v580
        %v583 = vrot.slane %v232, 2
        %v584 = vsel %vm386, %v583, %v582
        %v585 = vrot.slane %v233, 1
        %v586 = vsel %vm389, %v585, %v584
        %v587 = vrot.slane %v235, 7
        %v588 = vsel %vm371, %v587, %v234
        %v589 = vrot.slane %v236, 6
        %v590 = vsel %vm374, %v589, %v588
        %v591 = vrot.slane %v237, 5
        %v592 = vsel %vm377, %v591, %v590
        %v593 = vrot.slane %v238, 4
        %v594 = vsel %vm380, %v593, %v592
        %v595 = vrot.slane %v239, 3
        %v596 = vsel %vm383, %v595, %v594
        %v597 = vrot.slane %v240, 2
        %v598 = vsel %vm386, %v597, %v596
        %v599 = vrot.slane %v241, 1
        %v600 = vsel %vm389, %v599, %v598
        %617 = vxpose.xlu0.b32.start [1/16] %v390, 128
        %618 = vxpose.xlu0.b32.cont [2/16] %v404, 128
        %619 = vxpose.xlu0.b32.cont [3/16] %v418, 128
        %620 = vxpose.xlu0.b32.cont [4/16] %v432, 128
        %621 = vxpose.xlu0.b32.cont [5/16] %v446, 128
        %622 = vxpose.xlu0.b32.cont [6/16] %v460, 128
        %623 = vxpose.xlu0.b32.cont [7/16] %v474, 128
        %624 = vxpose.xlu0.b32.cont [8/16] %v488, 128
        %625 = vxpose.xlu0.b32.cont [9/16] %v502, 128
        %626 = vxpose.xlu0.b32.cont [10/16] %v516, 128
        %627 = vxpose.xlu0.b32.cont [11/16] %v530, 128
        %628 = vxpose.xlu0.b32.cont [12/16] %v544, 128
        %629 = vxpose.xlu0.b32.cont [13/16] %v558, 128
        %630 = vxpose.xlu0.b32.cont [14/16] %v572, 128
        %631 = vxpose.xlu0.b32.cont [15/16] %v586, 128
        %632 = vxpose.xlu0.b32.end [16/16] %v600, 128
        %v633 = vpop.trf.xlu0
        %v634 = vpop.trf.xlu0
        %v635 = vpop.trf.xlu0
        %v636 = vpop.trf.xlu0
        %v637 = vpop.trf.xlu0
        %v638 = vpop.trf.xlu0
        %v639 = vpop.trf.xlu0
        %v640 = vpop.trf.xlu0
        %v641 = vpop.trf.xlu0
        %v642 = vpop.trf.xlu0
        %v643 = vpop.trf.xlu0
        %v644 = vpop.trf.xlu0
        %v645 = vpop.trf.xlu0
        %v646 = vpop.trf.xlu0
        %v647 = vpop.trf.xlu0
        %v648 = vpop.trf.xlu0
        %649 = vst [vmem:[#allocation2] sm:$0xff] %v633
        %650 = vst [vmem:[#allocation2 + $0x8] sm:$0xff] %v634
        %v651 = vld [vmem:[%s113 + $0x1] sm:$0x1]
        %v652 = vld [vmem:[%s113 + $0x11] sm:$0x1]
        %v653 = vld [vmem:[%s113 + $0x21] sm:$0x1]
        %v654 = vld [vmem:[%s113 + $0x31] sm:$0x1]
        %v655 = vld [vmem:[%s113 + $0x41] sm:$0x1]
        %v656 = vld [vmem:[%s113 + $0x51] sm:$0x1]
        %v657 = vld [vmem:[%s113 + $0x61] sm:$0x1]
        %v658 = vld [vmem:[%s113 + $0x71] sm:$0x1]
        %v659 = vld [vmem:[%s113 + $0x81] sm:$0x1]
        %v660 = vld [vmem:[%s113 + $0x91] sm:$0x1]
        %v661 = vld [vmem:[%s113 + $0xa1] sm:$0x1]
        %v662 = vld [vmem:[%s113 + $0xb1] sm:$0x1]
        %v663 = vld [vmem:[%s113 + $0xc1] sm:$0x1]
        %v664 = vld [vmem:[%s113 + $0xd1] sm:$0x1]
        %v665 = vld [vmem:[%s113 + $0xe1] sm:$0x1]
        %v666 = vld [vmem:[%s113 + $0xf1] sm:$0x1]
        %v667 = vld [vmem:[%s113 + $0x101] sm:$0x1]
        %v668 = vld [vmem:[%s113 + $0x111] sm:$0x1]
        %v669 = vld [vmem:[%s113 + $0x121] sm:$0x1]
        %v670 = vld [vmem:[%s113 + $0x131] sm:$0x1]
        %v671 = vld [vmem:[%s113 + $0x141] sm:$0x1]
        %v672 = vld [vmem:[%s113 + $0x151] sm:$0x1]
        %v673 = vld [vmem:[%s113 + $0x161] sm:$0x1]
        %v674 = vld [vmem:[%s113 + $0x171] sm:$0x1]
        %v675 = vld [vmem:[%s113 + $0x181] sm:$0x1]
        %v676 = vld [vmem:[%s113 + $0x191] sm:$0x1]
        %v677 = vld [vmem:[%s113 + $0x1a1] sm:$0x1]
        %v678 = vld [vmem:[%s113 + $0x1b1] sm:$0x1]
        %v679 = vld [vmem:[%s113 + $0x1c1] sm:$0x1]
        %v680 = vld [vmem:[%s113 + $0x1d1] sm:$0x1]
        %v681 = vld [vmem:[%s113 + $0x1e1] sm:$0x1]
        %v682 = vld [vmem:[%s113 + $0x1f1] sm:$0x1]
        %v683 = vld [vmem:[%s113 + $0x201] sm:$0x1]
        %v684 = vld [vmem:[%s113 + $0x211] sm:$0x1]
        %v685 = vld [vmem:[%s113 + $0x221] sm:$0x1]
        %v686 = vld [vmem:[%s113 + $0x231] sm:$0x1]
        %v687 = vld [vmem:[%s113 + $0x241] sm:$0x1]
        %v688 = vld [vmem:[%s113 + $0x251] sm:$0x1]
        %v689 = vld [vmem:[%s113 + $0x261] sm:$0x1]
        %v690 = vld [vmem:[%s113 + $0x271] sm:$0x1]
        %v691 = vld [vmem:[%s113 + $0x281] sm:$0x1]
        %v692 = vld [vmem:[%s113 + $0x291] sm:$0x1]
        %v693 = vld [vmem:[%s113 + $0x2a1] sm:$0x1]
        %v694 = vld [vmem:[%s113 + $0x2b1] sm:$0x1]
        %v695 = vld [vmem:[%s113 + $0x2c1] sm:$0x1]
        %v696 = vld [vmem:[%s113 + $0x2d1] sm:$0x1]
        %v697 = vld [vmem:[%s113 + $0x2e1] sm:$0x1]
        %v698 = vld [vmem:[%s113 + $0x2f1] sm:$0x1]
        %v699 = vld [vmem:[%s113 + $0x301] sm:$0x1]
        %v700 = vld [vmem:[%s113 + $0x311] sm:$0x1]
        %v701 = vld [vmem:[%s113 + $0x321] sm:$0x1]
        %v702 = vld [vmem:[%s113 + $0x331] sm:$0x1]
        %v703 = vld [vmem:[%s113 + $0x341] sm:$0x1]
        %v704 = vld [vmem:[%s113 + $0x351] sm:$0x1]
        %v705 = vld [vmem:[%s113 + $0x361] sm:$0x1]
        %v706 = vld [vmem:[%s113 + $0x371] sm:$0x1]
        %v707 = vld [vmem:[%s113 + $0x381] sm:$0x1]
        %v708 = vld [vmem:[%s113 + $0x391] sm:$0x1]
        %v709 = vld [vmem:[%s113 + $0x3a1] sm:$0x1]
        %v710 = vld [vmem:[%s113 + $0x3b1] sm:$0x1]
        %v711 = vld [vmem:[%s113 + $0x3c1] sm:$0x1]
        %v712 = vld [vmem:[%s113 + $0x3d1] sm:$0x1]
        %v713 = vld [vmem:[%s113 + $0x3e1] sm:$0x1]
        %v714 = vld [vmem:[%s113 + $0x3f1] sm:$0x1]
        %v715 = vld [vmem:[%s113 + $0x401] sm:$0x1]
        %v716 = vld [vmem:[%s113 + $0x411] sm:$0x1]
        %v717 = vld [vmem:[%s113 + $0x421] sm:$0x1]
        %v718 = vld [vmem:[%s113 + $0x431] sm:$0x1]
        %v719 = vld [vmem:[%s113 + $0x441] sm:$0x1]
        %v720 = vld [vmem:[%s113 + $0x451] sm:$0x1]
        %v721 = vld [vmem:[%s113 + $0x461] sm:$0x1]
        %v722 = vld [vmem:[%s113 + $0x471] sm:$0x1]
        %v723 = vld [vmem:[%s113 + $0x481] sm:$0x1]
        %v724 = vld [vmem:[%s113 + $0x491] sm:$0x1]
        %v725 = vld [vmem:[%s113 + $0x4a1] sm:$0x1]
        %v726 = vld [vmem:[%s113 + $0x4b1] sm:$0x1]
        %v727 = vld [vmem:[%s113 + $0x4c1] sm:$0x1]
        %v728 = vld [vmem:[%s113 + $0x4d1] sm:$0x1]
        %v729 = vld [vmem:[%s113 + $0x4e1] sm:$0x1]
        %v730 = vld [vmem:[%s113 + $0x4f1] sm:$0x1]
        %v731 = vld [vmem:[%s113 + $0x501] sm:$0x1]
        %v732 = vld [vmem:[%s113 + $0x511] sm:$0x1]
        %v733 = vld [vmem:[%s113 + $0x521] sm:$0x1]
        %v734 = vld [vmem:[%s113 + $0x531] sm:$0x1]
        %v735 = vld [vmem:[%s113 + $0x541] sm:$0x1]
        %v736 = vld [vmem:[%s113 + $0x551] sm:$0x1]
        %v737 = vld [vmem:[%s113 + $0x561] sm:$0x1]
        %v738 = vld [vmem:[%s113 + $0x571] sm:$0x1]
        %v739 = vld [vmem:[%s113 + $0x581] sm:$0x1]
        %v740 = vld [vmem:[%s113 + $0x591] sm:$0x1]
        %v741 = vld [vmem:[%s113 + $0x5a1] sm:$0x1]
        %v742 = vld [vmem:[%s113 + $0x5b1] sm:$0x1]
        %v743 = vld [vmem:[%s113 + $0x5c1] sm:$0x1]
        %v744 = vld [vmem:[%s113 + $0x5d1] sm:$0x1]
        %v745 = vld [vmem:[%s113 + $0x5e1] sm:$0x1]
        %v746 = vld [vmem:[%s113 + $0x5f1] sm:$0x1]
        %v747 = vld [vmem:[%s113 + $0x601] sm:$0x1]
        %v748 = vld [vmem:[%s113 + $0x611] sm:$0x1]
        %v749 = vld [vmem:[%s113 + $0x621] sm:$0x1]
        %v750 = vld [vmem:[%s113 + $0x631] sm:$0x1]
        %v751 = vld [vmem:[%s113 + $0x641] sm:$0x1]
        %v752 = vld [vmem:[%s113 + $0x651] sm:$0x1]
        %v753 = vld [vmem:[%s113 + $0x661] sm:$0x1]
        %v754 = vld [vmem:[%s113 + $0x671] sm:$0x1]
        %v755 = vld [vmem:[%s113 + $0x681] sm:$0x1]
        %v756 = vld [vmem:[%s113 + $0x691] sm:$0x1]
        %v757 = vld [vmem:[%s113 + $0x6a1] sm:$0x1]
        %v758 = vld [vmem:[%s113 + $0x6b1] sm:$0x1]
        %v759 = vld [vmem:[%s113 + $0x6c1] sm:$0x1]
        %v760 = vld [vmem:[%s113 + $0x6d1] sm:$0x1]
        %v761 = vld [vmem:[%s113 + $0x6e1] sm:$0x1]
        %v762 = vld [vmem:[%s113 + $0x6f1] sm:$0x1]
        %v763 = vld [vmem:[%s113 + $0x701] sm:$0x1]
        %v764 = vld [vmem:[%s113 + $0x711] sm:$0x1]
        %v765 = vld [vmem:[%s113 + $0x721] sm:$0x1]
        %v766 = vld [vmem:[%s113 + $0x731] sm:$0x1]
        %v767 = vld [vmem:[%s113 + $0x741] sm:$0x1]
        %v768 = vld [vmem:[%s113 + $0x751] sm:$0x1]
        %v769 = vld [vmem:[%s113 + $0x761] sm:$0x1]
        %v770 = vld [vmem:[%s113 + $0x771] sm:$0x1]
        %v771 = vld [vmem:[%s113 + $0x781] sm:$0x1]
        %v772 = vld [vmem:[%s113 + $0x791] sm:$0x1]
        %v773 = vld [vmem:[%s113 + $0x7a1] sm:$0x1]
        %v774 = vld [vmem:[%s113 + $0x7b1] sm:$0x1]
        %v775 = vld [vmem:[%s113 + $0x7c1] sm:$0x1]
        %v776 = vld [vmem:[%s113 + $0x7d1] sm:$0x1]
        %v777 = vld [vmem:[%s113 + $0x7e1] sm:$0x1]
        %v778 = vld [vmem:[%s113 + $0x7f1] sm:$0x1]
        %v907 = vrot.slane %v652, 7
        %v908 = vsel %vm371, %v907, %v651
        %v909 = vrot.slane %v653, 6
        %v910 = vsel %vm374, %v909, %v908
        %v911 = vrot.slane %v654, 5
        %v912 = vsel %vm377, %v911, %v910
        %v913 = vrot.slane %v655, 4
        %v914 = vsel %vm380, %v913, %v912
        %v915 = vrot.slane %v656, 3
        %v916 = vsel %vm383, %v915, %v914
        %v917 = vrot.slane %v657, 2
        %v918 = vsel %vm386, %v917, %v916
        %v919 = vrot.slane %v658, 1
        %v920 = vsel %vm389, %v919, %v918
        %v921 = vrot.slane %v660, 7
        %v922 = vsel %vm371, %v921, %v659
        %v923 = vrot.slane %v661, 6
        %v924 = vsel %vm374, %v923, %v922
        %v925 = vrot.slane %v662, 5
        %v926 = vsel %vm377, %v925, %v924
        %v927 = vrot.slane %v663, 4
        %v928 = vsel %vm380, %v927, %v926
        %v929 = vrot.slane %v664, 3
        %v930 = vsel %vm383, %v929, %v928
        %v931 = vrot.slane %v665, 2
        %v932 = vsel %vm386, %v931, %v930
        %v933 = vrot.slane %v666, 1
        %v934 = vsel %vm389, %v933, %v932
        %v935 = vrot.slane %v668, 7
        %v936 = vsel %vm371, %v935, %v667
        %v937 = vrot.slane %v669, 6
        %v938 = vsel %vm374, %v937, %v936
        %v939 = vrot.slane %v670, 5
        %v940 = vsel %vm377, %v939, %v938
        %v941 = vrot.slane %v671, 4
        %v942 = vsel %vm380, %v941, %v940
        %v943 = vrot.slane %v672, 3
        %v944 = vsel %vm383, %v943, %v942
        %v945 = vrot.slane %v673, 2
        %v946 = vsel %vm386, %v945, %v944
        %v947 = vrot.slane %v674, 1
        %v948 = vsel %vm389, %v947, %v946
        %v949 = vrot.slane %v676, 7
        %v950 = vsel %vm371, %v949, %v675
        %v951 = vrot.slane %v677, 6
        %v952 = vsel %vm374, %v951, %v950
        %v953 = vrot.slane %v678, 5
        %v954 = vsel %vm377, %v953, %v952
        %v955 = vrot.slane %v679, 4
        %v956 = vsel %vm380, %v955, %v954
        %v957 = vrot.slane %v680, 3
        %v958 = vsel %vm383, %v957, %v956
        %v959 = vrot.slane %v681, 2
        %v960 = vsel %vm386, %v959, %v958
        %v961 = vrot.slane %v682, 1
        %v962 = vsel %vm389, %v961, %v960
        %v963 = vrot.slane %v684, 7
        %v964 = vsel %vm371, %v963, %v683
        %v965 = vrot.slane %v685, 6
        %v966 = vsel %vm374, %v965, %v964
        %v967 = vrot.slane %v686, 5
        %v968 = vsel %vm377, %v967, %v966
        %v969 = vrot.slane %v687, 4
        %v970 = vsel %vm380, %v969, %v968
        %v971 = vrot.slane %v688, 3
        %v972 = vsel %vm383, %v971, %v970
        %v973 = vrot.slane %v689, 2
        %v974 = vsel %vm386, %v973, %v972
        %v975 = vrot.slane %v690, 1
        %v976 = vsel %vm389, %v975, %v974
        %v977 = vrot.slane %v692, 7
        %v978 = vsel %vm371, %v977, %v691
        %v979 = vrot.slane %v693, 6
        %v980 = vsel %vm374, %v979, %v978
        %v981 = vrot.slane %v694, 5
        %v982 = vsel %vm377, %v981, %v980
        %v983 = vrot.slane %v695, 4
        %v984 = vsel %vm380, %v983, %v982
        %v985 = vrot.slane %v696, 3
        %v986 = vsel %vm383, %v985, %v984
        %v987 = vrot.slane %v697, 2
        %v988 = vsel %vm386, %v987, %v986
        %v989 = vrot.slane %v698, 1
        %v990 = vsel %vm389, %v989, %v988
        %v991 = vrot.slane %v700, 7
        %v992 = vsel %vm371, %v991, %v699
        %v993 = vrot.slane %v701, 6
        %v994 = vsel %vm374, %v993, %v992
        %v995 = vrot.slane %v702, 5
        %v996 = vsel %vm377, %v995, %v994
        %v997 = vrot.slane %v703, 4
        %v998 = vsel %vm380, %v997, %v996
        %v999 = vrot.slane %v704, 3
        %v1000 = vsel %vm383, %v999, %v998
        %v1001 = vrot.slane %v705, 2
        %v1002 = vsel %vm386, %v1001, %v1000
        %v1003 = vrot.slane %v706, 1
        %v1004 = vsel %vm389, %v1003, %v1002
        %v1005 = vrot.slane %v708, 7
        %v1006 = vsel %vm371, %v1005, %v707
        %v1007 = vrot.slane %v709, 6
        %v1008 = vsel %vm374, %v1007, %v1006
        %v1009 = vrot.slane %v710, 5
        %v1010 = vsel %vm377, %v1009, %v1008
        %v1011 = vrot.slane %v711, 4
        %v1012 = vsel %vm380, %v1011, %v1010
        %v1013 = vrot.slane %v712, 3
        %v1014 = vsel %vm383, %v1013, %v1012
        %v1015 = vrot.slane %v713, 2
        %v1016 = vsel %vm386, %v1015, %v1014
        %v1017 = vrot.slane %v714, 1
        %v1018 = vsel %vm389, %v1017, %v1016
        %v1019 = vrot.slane %v716, 7
        %v1020 = vsel %vm371, %v1019, %v715
        %v1021 = vrot.slane %v717, 6
        %v1022 = vsel %vm374, %v1021, %v1020
        %v1023 = vrot.slane %v718, 5
        %v1024 = vsel %vm377, %v1023, %v1022
        %v1025 = vrot.slane %v719, 4
        %v1026 = vsel %vm380, %v1025, %v1024
        %v1027 = vrot.slane %v720, 3
        %v1028 = vsel %vm383, %v1027, %v1026
        %v1029 = vrot.slane %v721, 2
        %v1030 = vsel %vm386, %v1029, %v1028
        %v1031 = vrot.slane %v722, 1
        %v1032 = vsel %vm389, %v1031, %v1030
        %v1033 = vrot.slane %v724, 7
        %v1034 = vsel %vm371, %v1033, %v723
        %v1035 = vrot.slane %v725, 6
        %v1036 = vsel %vm374, %v1035, %v1034
        %v1037 = vrot.slane %v726, 5
        %v1038 = vsel %vm377, %v1037, %v1036
        %v1039 = vrot.slane %v727, 4
        %v1040 = vsel %vm380, %v1039, %v1038
        %v1041 = vrot.slane %v728, 3
        %v1042 = vsel %vm383, %v1041, %v1040
        %v1043 = vrot.slane %v729, 2
        %v1044 = vsel %vm386, %v1043, %v1042
        %v1045 = vrot.slane %v730, 1
        %v1046 = vsel %vm389, %v1045, %v1044
        %v1047 = vrot.slane %v732, 7
        %v1048 = vsel %vm371, %v1047, %v731
        %v1049 = vrot.slane %v733, 6
        %v1050 = vsel %vm374, %v1049, %v1048
        %v1051 = vrot.slane %v734, 5
        %v1052 = vsel %vm377, %v1051, %v1050
        %v1053 = vrot.slane %v735, 4
        %v1054 = vsel %vm380, %v1053, %v1052
        %v1055 = vrot.slane %v736, 3
        %v1056 = vsel %vm383, %v1055, %v1054
        %v1057 = vrot.slane %v737, 2
        %v1058 = vsel %vm386, %v1057, %v1056
        %v1059 = vrot.slane %v738, 1
        %v1060 = vsel %vm389, %v1059, %v1058
        %v1061 = vrot.slane %v740, 7
        %v1062 = vsel %vm371, %v1061, %v739
        %v1063 = vrot.slane %v741, 6
        %v1064 = vsel %vm374, %v1063, %v1062
        %v1065 = vrot.slane %v742, 5
        %v1066 = vsel %vm377, %v1065, %v1064
        %v1067 = vrot.slane %v743, 4
        %v1068 = vsel %vm380, %v1067, %v1066
        %v1069 = vrot.slane %v744, 3
        %v1070 = vsel %vm383, %v1069, %v1068
        %v1071 = vrot.slane %v745, 2
        %v1072 = vsel %vm386, %v1071, %v1070
        %v1073 = vrot.slane %v746, 1
        %v1074 = vsel %vm389, %v1073, %v1072
        %v1075 = vrot.slane %v748, 7
        %v1076 = vsel %vm371, %v1075, %v747
        %v1077 = vrot.slane %v749, 6
        %v1078 = vsel %vm374, %v1077, %v1076
        %v1079 = vrot.slane %v750, 5
        %v1080 = vsel %vm377, %v1079, %v1078
        %v1081 = vrot.slane %v751, 4
        %v1082 = vsel %vm380, %v1081, %v1080
        %v1083 = vrot.slane %v752, 3
        %v1084 = vsel %vm383, %v1083, %v1082
        %v1085 = vrot.slane %v753, 2
        %v1086 = vsel %vm386, %v1085, %v1084
        %v1087 = vrot.slane %v754, 1
        %v1088 = vsel %vm389, %v1087, %v1086
        %v1089 = vrot.slane %v756, 7
        %v1090 = vsel %vm371, %v1089, %v755
        %v1091 = vrot.slane %v757, 6
        %v1092 = vsel %vm374, %v1091, %v1090
        %v1093 = vrot.slane %v758, 5
        %v1094 = vsel %vm377, %v1093, %v1092
        %v1095 = vrot.slane %v759, 4
        %v1096 = vsel %vm380, %v1095, %v1094
        %v1097 = vrot.slane %v760, 3
        %v1098 = vsel %vm383, %v1097, %v1096
        %v1099 = vrot.slane %v761, 2
        %v1100 = vsel %vm386, %v1099, %v1098
        %v1101 = vrot.slane %v762, 1
        %v1102 = vsel %vm389, %v1101, %v1100
        %v1103 = vrot.slane %v764, 7
        %v1104 = vsel %vm371, %v1103, %v763
        %v1105 = vrot.slane %v765, 6
        %v1106 = vsel %vm374, %v1105, %v1104
        %v1107 = vrot.slane %v766, 5
        %v1108 = vsel %vm377, %v1107, %v1106
        %v1109 = vrot.slane %v767, 4
        %v1110 = vsel %vm380, %v1109, %v1108
        %v1111 = vrot.slane %v768, 3
        %v1112 = vsel %vm383, %v1111, %v1110
        %v1113 = vrot.slane %v769, 2
        %v1114 = vsel %vm386, %v1113, %v1112
        %v1115 = vrot.slane %v770, 1
        %v1116 = vsel %vm389, %v1115, %v1114
        %v1117 = vrot.slane %v772, 7
        %v1118 = vsel %vm371, %v1117, %v771
        %v1119 = vrot.slane %v773, 6
        %v1120 = vsel %vm374, %v1119, %v1118
        %v1121 = vrot.slane %v774, 5
        %v1122 = vsel %vm377, %v1121, %v1120
        %v1123 = vrot.slane %v775, 4
        %v1124 = vsel %vm380, %v1123, %v1122
        %v1125 = vrot.slane %v776, 3
        %v1126 = vsel %vm383, %v1125, %v1124
        %v1127 = vrot.slane %v777, 2
        %v1128 = vsel %vm386, %v1127, %v1126
        %v1129 = vrot.slane %v778, 1
        %v1130 = vsel %vm389, %v1129, %v1128
        %1147 = vxpose.xlu0.b32.start [1/16] %v920, 128
        %1148 = vxpose.xlu0.b32.cont [2/16] %v934, 128
        %1149 = vxpose.xlu0.b32.cont [3/16] %v948, 128
        %1150 = vxpose.xlu0.b32.cont [4/16] %v962, 128
        %1151 = vxpose.xlu0.b32.cont [5/16] %v976, 128
        %1152 = vxpose.xlu0.b32.cont [6/16] %v990, 128
        %1153 = vxpose.xlu0.b32.cont [7/16] %v1004, 128
        %1154 = vxpose.xlu0.b32.cont [8/16] %v1018, 128
        %1155 = vxpose.xlu0.b32.cont [9/16] %v1032, 128
        %1156 = vxpose.xlu0.b32.cont [10/16] %v1046, 128
        %1157 = vxpose.xlu0.b32.cont [11/16] %v1060, 128
        %1158 = vxpose.xlu0.b32.cont [12/16] %v1074, 128
        %1159 = vxpose.xlu0.b32.cont [13/16] %v1088, 128
        %1160 = vxpose.xlu0.b32.cont [14/16] %v1102, 128
        %1161 = vxpose.xlu0.b32.cont [15/16] %v1116, 128
        %1162 = vxpose.xlu0.b32.end [16/16] %v1130, 128
        %v1163 = vpop.trf.xlu0
        %v1164 = vpop.trf.xlu0
        %v1165 = vpop.trf.xlu0
        %v1166 = vpop.trf.xlu0
        %v1167 = vpop.trf.xlu0
        %v1168 = vpop.trf.xlu0
        %v1169 = vpop.trf.xlu0
        %v1170 = vpop.trf.xlu0
        %v1171 = vpop.trf.xlu0
        %v1172 = vpop.trf.xlu0
        %v1173 = vpop.trf.xlu0
        %v1174 = vpop.trf.xlu0
        %v1175 = vpop.trf.xlu0
        %v1176 = vpop.trf.xlu0
        %v1177 = vpop.trf.xlu0
        %v1178 = vpop.trf.xlu0
        %s1179 = scalar_lea.vmem [#allocation2], 16
        %1180 = vst [vmem:[%s1179] sm:$0xff] %v1163
        %1181 = vst [vmem:[%s1179 + $0x8] sm:$0xff] %v1164
        %v1182 = vld [vmem:[%s113 + $0x2] sm:$0x1]
        %v1183 = vld [vmem:[%s113 + $0x12] sm:$0x1]
        %v1184 = vld [vmem:[%s113 + $0x22] sm:$0x1]
        %v1185 = vld [vmem:[%s113 + $0x32] sm:$0x1]
        %v1186 = vld [vmem:[%s113 + $0x42] sm:$0x1]
        %v1187 = vld [vmem:[%s113 + $0x52] sm:$0x1]
        %v1188 = vld [vmem:[%s113 + $0x62] sm:$0x1]
        %v1189 = vld [vmem:[%s113 + $0x72] sm:$0x1]
        %v1190 = vld [vmem:[%s113 + $0x82] sm:$0x1]
        %v1191 = vld [vmem:[%s113 + $0x92] sm:$0x1]
        %v1192 = vld [vmem:[%s113 + $0xa2] sm:$0x1]
        %v1193 = vld [vmem:[%s113 + $0xb2] sm:$0x1]
        %v1194 = vld [vmem:[%s113 + $0xc2] sm:$0x1]
        %v1195 = vld [vmem:[%s113 + $0xd2] sm:$0x1]
        %v1196 = vld [vmem:[%s113 + $0xe2] sm:$0x1]
        %v1197 = vld [vmem:[%s113 + $0xf2] sm:$0x1]
        %v1198 = vld [vmem:[%s113 + $0x102] sm:$0x1]
        %v1199 = vld [vmem:[%s113 + $0x112] sm:$0x1]
        %v1200 = vld [vmem:[%s113 + $0x122] sm:$0x1]
        %v1201 = vld [vmem:[%s113 + $0x132] sm:$0x1]
        %v1202 = vld [vmem:[%s113 + $0x142] sm:$0x1]
        %v1203 = vld [vmem:[%s113 + $0x152] sm:$0x1]
        %v1204 = vld [vmem:[%s113 + $0x162] sm:$0x1]
        %v1205 = vld [vmem:[%s113 + $0x172] sm:$0x1]
        %v1206 = vld [vmem:[%s113 + $0x182] sm:$0x1]
        %v1207 = vld [vmem:[%s113 + $0x192] sm:$0x1]
        %v1208 = vld [vmem:[%s113 + $0x1a2] sm:$0x1]
        %v1209 = vld [vmem:[%s113 + $0x1b2] sm:$0x1]
        %v1210 = vld [vmem:[%s113 + $0x1c2] sm:$0x1]
        %v1211 = vld [vmem:[%s113 + $0x1d2] sm:$0x1]
        %v1212 = vld [vmem:[%s113 + $0x1e2] sm:$0x1]
        %v1213 = vld [vmem:[%s113 + $0x1f2] sm:$0x1]
        %v1214 = vld [vmem:[%s113 + $0x202] sm:$0x1]
        %v1215 = vld [vmem:[%s113 + $0x212] sm:$0x1]
        %v1216 = vld [vmem:[%s113 + $0x222] sm:$0x1]
        %v1217 = vld [vmem:[%s113 + $0x232] sm:$0x1]
        %v1218 = vld [vmem:[%s113 + $0x242] sm:$0x1]
        %v1219 = vld [vmem:[%s113 + $0x252] sm:$0x1]
        %v1220 = vld [vmem:[%s113 + $0x262] sm:$0x1]
        %v1221 = vld [vmem:[%s113 + $0x272] sm:$0x1]
        %v1222 = vld [vmem:[%s113 + $0x282] sm:$0x1]
        %v1223 = vld [vmem:[%s113 + $0x292] sm:$0x1]
        %v1224 = vld [vmem:[%s113 + $0x2a2] sm:$0x1]
        %v1225 = vld [vmem:[%s113 + $0x2b2] sm:$0x1]
        %v1226 = vld [vmem:[%s113 + $0x2c2] sm:$0x1]
        %v1227 = vld [vmem:[%s113 + $0x2d2] sm:$0x1]
        %v1228 = vld [vmem:[%s113 + $0x2e2] sm:$0x1]
        %v1229 = vld [vmem:[%s113 + $0x2f2] sm:$0x1]
        %v1230 = vld [vmem:[%s113 + $0x302] sm:$0x1]
        %v1231 = vld [vmem:[%s113 + $0x312] sm:$0x1]
        %v1232 = vld [vmem:[%s113 + $0x322] sm:$0x1]
        %v1233 = vld [vmem:[%s113 + $0x332] sm:$0x1]
        %v1234 = vld [vmem:[%s113 + $0x342] sm:$0x1]
        %v1235 = vld [vmem:[%s113 + $0x352] sm:$0x1]
        %v1236 = vld [vmem:[%s113 + $0x362] sm:$0x1]
        %v1237 = vld [vmem:[%s113 + $0x372] sm:$0x1]
        %v1238 = vld [vmem:[%s113 + $0x382] sm:$0x1]
        %v1239 = vld [vmem:[%s113 + $0x392] sm:$0x1]
        %v1240 = vld [vmem:[%s113 + $0x3a2] sm:$0x1]
        %v1241 = vld [vmem:[%s113 + $0x3b2] sm:$0x1]
        %v1242 = vld [vmem:[%s113 + $0x3c2] sm:$0x1]
        %v1243 = vld [vmem:[%s113 + $0x3d2] sm:$0x1]
        %v1244 = vld [vmem:[%s113 + $0x3e2] sm:$0x1]
        %v1245 = vld [vmem:[%s113 + $0x3f2] sm:$0x1]
        %v1246 = vld [vmem:[%s113 + $0x402] sm:$0x1]
        %v1247 = vld [vmem:[%s113 + $0x412] sm:$0x1]
        %v1248 = vld [vmem:[%s113 + $0x422] sm:$0x1]
        %v1249 = vld [vmem:[%s113 + $0x432] sm:$0x1]
        %v1250 = vld [vmem:[%s113 + $0x442] sm:$0x1]
        %v1251 = vld [vmem:[%s113 + $0x452] sm:$0x1]
        %v1252 = vld [vmem:[%s113 + $0x462] sm:$0x1]
        %v1253 = vld [vmem:[%s113 + $0x472] sm:$0x1]
        %v1254 = vld [vmem:[%s113 + $0x482] sm:$0x1]
        %v1255 = vld [vmem:[%s113 + $0x492] sm:$0x1]
        %v1256 = vld [vmem:[%s113 + $0x4a2] sm:$0x1]
        %v1257 = vld [vmem:[%s113 + $0x4b2] sm:$0x1]
        %v1258 = vld [vmem:[%s113 + $0x4c2] sm:$0x1]
        %v1259 = vld [vmem:[%s113 + $0x4d2] sm:$0x1]
        %v1260 = vld [vmem:[%s113 + $0x4e2] sm:$0x1]
        %v1261 = vld [vmem:[%s113 + $0x4f2] sm:$0x1]
        %v1262 = vld [vmem:[%s113 + $0x502] sm:$0x1]
        %v1263 = vld [vmem:[%s113 + $0x512] sm:$0x1]
        %v1264 = vld [vmem:[%s113 + $0x522] sm:$0x1]
        %v1265 = vld [vmem:[%s113 + $0x532] sm:$0x1]
        %v1266 = vld [vmem:[%s113 + $0x542] sm:$0x1]
        %v1267 = vld [vmem:[%s113 + $0x552] sm:$0x1]
        %v1268 = vld [vmem:[%s113 + $0x562] sm:$0x1]
        %v1269 = vld [vmem:[%s113 + $0x572] sm:$0x1]
        %v1270 = vld [vmem:[%s113 + $0x582] sm:$0x1]
        %v1271 = vld [vmem:[%s113 + $0x592] sm:$0x1]
        %v1272 = vld [vmem:[%s113 + $0x5a2] sm:$0x1]
        %v1273 = vld [vmem:[%s113 + $0x5b2] sm:$0x1]
        %v1274 = vld [vmem:[%s113 + $0x5c2] sm:$0x1]
        %v1275 = vld [vmem:[%s113 + $0x5d2] sm:$0x1]
        %v1276 = vld [vmem:[%s113 + $0x5e2] sm:$0x1]
        %v1277 = vld [vmem:[%s113 + $0x5f2] sm:$0x1]
        %v1278 = vld [vmem:[%s113 + $0x602] sm:$0x1]
        %v1279 = vld [vmem:[%s113 + $0x612] sm:$0x1]
        %v1280 = vld [vmem:[%s113 + $0x622] sm:$0x1]
        %v1281 = vld [vmem:[%s113 + $0x632] sm:$0x1]
        %v1282 = vld [vmem:[%s113 + $0x642] sm:$0x1]
        %v1283 = vld [vmem:[%s113 + $0x652] sm:$0x1]
        %v1284 = vld [vmem:[%s113 + $0x662] sm:$0x1]
        %v1285 = vld [vmem:[%s113 + $0x672] sm:$0x1]
        %v1286 = vld [vmem:[%s113 + $0x682] sm:$0x1]
        %v1287 = vld [vmem:[%s113 + $0x692] sm:$0x1]
        %v1288 = vld [vmem:[%s113 + $0x6a2] sm:$0x1]
        %v1289 = vld [vmem:[%s113 + $0x6b2] sm:$0x1]
        %v1290 = vld [vmem:[%s113 + $0x6c2] sm:$0x1]
        %v1291 = vld [vmem:[%s113 + $0x6d2] sm:$0x1]
        %v1292 = vld [vmem:[%s113 + $0x6e2] sm:$0x1]
        %v1293 = vld [vmem:[%s113 + $0x6f2] sm:$0x1]
        %v1294 = vld [vmem:[%s113 + $0x702] sm:$0x1]
        %v1295 = vld [vmem:[%s113 + $0x712] sm:$0x1]
        %v1296 = vld [vmem:[%s113 + $0x722] sm:$0x1]
        %v1297 = vld [vmem:[%s113 + $0x732] sm:$0x1]
        %v1298 = vld [vmem:[%s113 + $0x742] sm:$0x1]
        %v1299 = vld [vmem:[%s113 + $0x752] sm:$0x1]
        %v1300 = vld [vmem:[%s113 + $0x762] sm:$0x1]
        %v1301 = vld [vmem:[%s113 + $0x772] sm:$0x1]
        %v1302 = vld [vmem:[%s113 + $0x782] sm:$0x1]
        %v1303 = vld [vmem:[%s113 + $0x792] sm:$0x1]
        %v1304 = vld [vmem:[%s113 + $0x7a2] sm:$0x1]
        %v1305 = vld [vmem:[%s113 + $0x7b2] sm:$0x1]
        %v1306 = vld [vmem:[%s113 + $0x7c2] sm:$0x1]
        %v1307 = vld [vmem:[%s113 + $0x7d2] sm:$0x1]
        %v1308 = vld [vmem:[%s113 + $0x7e2] sm:$0x1]
        %v1309 = vld [vmem:[%s113 + $0x7f2] sm:$0x1]
        %v1438 = vrot.slane %v1183, 7
        %v1439 = vsel %vm371, %v1438, %v1182
        %v1440 = vrot.slane %v1184, 6
        %v1441 = vsel %vm374, %v1440, %v1439
        %v1442 = vrot.slane %v1185, 5
        %v1443 = vsel %vm377, %v1442, %v1441
        %v1444 = vrot.slane %v1186, 4
        %v1445 = vsel %vm380, %v1444, %v1443
        %v1446 = vrot.slane %v1187, 3
        %v1447 = vsel %vm383, %v1446, %v1445
        %v1448 = vrot.slane %v1188, 2
        %v1449 = vsel %vm386, %v1448, %v1447
        %v1450 = vrot.slane %v1189, 1
        %v1451 = vsel %vm389, %v1450, %v1449
        %v1452 = vrot.slane %v1191, 7
        %v1453 = vsel %vm371, %v1452, %v1190
        %v1454 = vrot.slane %v1192, 6
        %v1455 = vsel %vm374, %v1454, %v1453
        %v1456 = vrot.slane %v1193, 5
        %v1457 = vsel %vm377, %v1456, %v1455
        %v1458 = vrot.slane %v1194, 4
        %v1459 = vsel %vm380, %v1458, %v1457
        %v1460 = vrot.slane %v1195, 3
        %v1461 = vsel %vm383, %v1460, %v1459
        %v1462 = vrot.slane %v1196, 2
        %v1463 = vsel %vm386, %v1462, %v1461
        %v1464 = vrot.slane %v1197, 1
        %v1465 = vsel %vm389, %v1464, %v1463
        %v1466 = vrot.slane %v1199, 7
        %v1467 = vsel %vm371, %v1466, %v1198
        %v1468 = vrot.slane %v1200, 6
        %v1469 = vsel %vm374, %v1468, %v1467
        %v1470 = vrot.slane %v1201, 5
        %v1471 = vsel %vm377, %v1470, %v1469
        %v1472 = vrot.slane %v1202, 4
        %v1473 = vsel %vm380, %v1472, %v1471
        %v1474 = vrot.slane %v1203, 3
        %v1475 = vsel %vm383, %v1474, %v1473
        %v1476 = vrot.slane %v1204, 2
        %v1477 = vsel %vm386, %v1476, %v1475
        %v1478 = vrot.slane %v1205, 1
        %v1479 = vsel %vm389, %v1478, %v1477
        %v1480 = vrot.slane %v1207, 7
        %v1481 = vsel %vm371, %v1480, %v1206
        %v1482 = vrot.slane %v1208, 6
        %v1483 = vsel %vm374, %v1482, %v1481
        %v1484 = vrot.slane %v1209, 5
        %v1485 = vsel %vm377, %v1484, %v1483
        %v1486 = vrot.slane %v1210, 4
        %v1487 = vsel %vm380, %v1486, %v1485
        %v1488 = vrot.slane %v1211, 3
        %v1489 = vsel %vm383, %v1488, %v1487
        %v1490 = vrot.slane %v1212, 2
        %v1491 = vsel %vm386, %v1490, %v1489
        %v1492 = vrot.slane %v1213, 1
        %v1493 = vsel %vm389, %v1492, %v1491
        %v1494 = vrot.slane %v1215, 7
        %v1495 = vsel %vm371, %v1494, %v1214
        %v1496 = vrot.slane %v1216, 6
        %v1497 = vsel %vm374, %v1496, %v1495
        %v1498 = vrot.slane %v1217, 5
        %v1499 = vsel %vm377, %v1498, %v1497
        %v1500 = vrot.slane %v1218, 4
        %v1501 = vsel %vm380, %v1500, %v1499
        %v1502 = vrot.slane %v1219, 3
        %v1503 = vsel %vm383, %v1502, %v1501
        %v1504 = vrot.slane %v1220, 2
        %v1505 = vsel %vm386, %v1504, %v1503
        %v1506 = vrot.slane %v1221, 1
        %v1507 = vsel %vm389, %v1506, %v1505
        %v1508 = vrot.slane %v1223, 7
        %v1509 = vsel %vm371, %v1508, %v1222
        %v1510 = vrot.slane %v1224, 6
        %v1511 = vsel %vm374, %v1510, %v1509
        %v1512 = vrot.slane %v1225, 5
        %v1513 = vsel %vm377, %v1512, %v1511
        %v1514 = vrot.slane %v1226, 4
        %v1515 = vsel %vm380, %v1514, %v1513
        %v1516 = vrot.slane %v1227, 3
        %v1517 = vsel %vm383, %v1516, %v1515
        %v1518 = vrot.slane %v1228, 2
        %v1519 = vsel %vm386, %v1518, %v1517
        %v1520 = vrot.slane %v1229, 1
        %v1521 = vsel %vm389, %v1520, %v1519
        %v1522 = vrot.slane %v1231, 7
        %v1523 = vsel %vm371, %v1522, %v1230
        %v1524 = vrot.slane %v1232, 6
        %v1525 = vsel %vm374, %v1524, %v1523
        %v1526 = vrot.slane %v1233, 5
        %v1527 = vsel %vm377, %v1526, %v1525
        %v1528 = vrot.slane %v1234, 4
        %v1529 = vsel %vm380, %v1528, %v1527
        %v1530 = vrot.slane %v1235, 3
        %v1531 = vsel %vm383, %v1530, %v1529
        %v1532 = vrot.slane %v1236, 2
        %v1533 = vsel %vm386, %v1532, %v1531
        %v1534 = vrot.slane %v1237, 1
        %v1535 = vsel %vm389, %v1534, %v1533
        %v1536 = vrot.slane %v1239, 7
        %v1537 = vsel %vm371, %v1536, %v1238
        %v1538 = vrot.slane %v1240, 6
        %v1539 = vsel %vm374, %v1538, %v1537
        %v1540 = vrot.slane %v1241, 5
        %v1541 = vsel %vm377, %v1540, %v1539
        %v1542 = vrot.slane %v1242, 4
        %v1543 = vsel %vm380, %v1542, %v1541
        %v1544 = vrot.slane %v1243, 3
        %v1545 = vsel %vm383, %v1544, %v1543
        %v1546 = vrot.slane %v1244, 2
        %v1547 = vsel %vm386, %v1546, %v1545
        %v1548 = vrot.slane %v1245, 1
        %v1549 = vsel %vm389, %v1548, %v1547
        %v1550 = vrot.slane %v1247, 7
        %v1551 = vsel %vm371, %v1550, %v1246
        %v1552 = vrot.slane %v1248, 6
        %v1553 = vsel %vm374, %v1552, %v1551
        %v1554 = vrot.slane %v1249, 5
        %v1555 = vsel %vm377, %v1554, %v1553
        %v1556 = vrot.slane %v1250, 4
        %v1557 = vsel %vm380, %v1556, %v1555
        %v1558 = vrot.slane %v1251, 3
        %v1559 = vsel %vm383, %v1558, %v1557
        %v1560 = vrot.slane %v1252, 2
        %v1561 = vsel %vm386, %v1560, %v1559
        %v1562 = vrot.slane %v1253, 1
        %v1563 = vsel %vm389, %v1562, %v1561
        %v1564 = vrot.slane %v1255, 7
        %v1565 = vsel %vm371, %v1564, %v1254
        %v1566 = vrot.slane %v1256, 6
        %v1567 = vsel %vm374, %v1566, %v1565
        %v1568 = vrot.slane %v1257, 5
        %v1569 = vsel %vm377, %v1568, %v1567
        %v1570 = vrot.slane %v1258, 4
        %v1571 = vsel %vm380, %v1570, %v1569
        %v1572 = vrot.slane %v1259, 3
        %v1573 = vsel %vm383, %v1572, %v1571
        %v1574 = vrot.slane %v1260, 2
        %v1575 = vsel %vm386, %v1574, %v1573
        %v1576 = vrot.slane %v1261, 1
        %v1577 = vsel %vm389, %v1576, %v1575
        %v1578 = vrot.slane %v1263, 7
        %v1579 = vsel %vm371, %v1578, %v1262
        %v1580 = vrot.slane %v1264, 6
        %v1581 = vsel %vm374, %v1580, %v1579
        %v1582 = vrot.slane %v1265, 5
        %v1583 = vsel %vm377, %v1582, %v1581
        %v1584 = vrot.slane %v1266, 4
        %v1585 = vsel %vm380, %v1584, %v1583
        %v1586 = vrot.slane %v1267, 3
        %v1587 = vsel %vm383, %v1586, %v1585
        %v1588 = vrot.slane %v1268, 2
        %v1589 = vsel %vm386, %v1588, %v1587
        %v1590 = vrot.slane %v1269, 1
        %v1591 = vsel %vm389, %v1590, %v1589
        %v1592 = vrot.slane %v1271, 7
        %v1593 = vsel %vm371, %v1592, %v1270
        %v1594 = vrot.slane %v1272, 6
        %v1595 = vsel %vm374, %v1594, %v1593
        %v1596 = vrot.slane %v1273, 5
        %v1597 = vsel %vm377, %v1596, %v1595
        %v1598 = vrot.slane %v1274, 4
        %v1599 = vsel %vm380, %v1598, %v1597
        %v1600 = vrot.slane %v1275, 3
        %v1601 = vsel %vm383, %v1600, %v1599
        %v1602 = vrot.slane %v1276, 2
        %v1603 = vsel %vm386, %v1602, %v1601
        %v1604 = vrot.slane %v1277, 1
        %v1605 = vsel %vm389, %v1604, %v1603
        %v1606 = vrot.slane %v1279, 7
        %v1607 = vsel %vm371, %v1606, %v1278
        %v1608 = vrot.slane %v1280, 6
        %v1609 = vsel %vm374, %v1608, %v1607
        %v1610 = vrot.slane %v1281, 5
        %v1611 = vsel %vm377, %v1610, %v1609
        %v1612 = vrot.slane %v1282, 4
        %v1613 = vsel %vm380, %v1612, %v1611
        %v1614 = vrot.slane %v1283, 3
        %v1615 = vsel %vm383, %v1614, %v1613
        %v1616 = vrot.slane %v1284, 2
        %v1617 = vsel %vm386, %v1616, %v1615
        %v1618 = vrot.slane %v1285, 1
        %v1619 = vsel %vm389, %v1618, %v1617
        %v1620 = vrot.slane %v1287, 7
        %v1621 = vsel %vm371, %v1620, %v1286
        %v1622 = vrot.slane %v1288, 6
        %v1623 = vsel %vm374, %v1622, %v1621
        %v1624 = vrot.slane %v1289, 5
        %v1625 = vsel %vm377, %v1624, %v1623
        %v1626 = vrot.slane %v1290, 4
        %v1627 = vsel %vm380, %v1626, %v1625
        %v1628 = vrot.slane %v1291, 3
        %v1629 = vsel %vm383, %v1628, %v1627
        %v1630 = vrot.slane %v1292, 2
        %v1631 = vsel %vm386, %v1630, %v1629
        %v1632 = vrot.slane %v1293, 1
        %v1633 = vsel %vm389, %v1632, %v1631
        %v1634 = vrot.slane %v1295, 7
        %v1635 = vsel %vm371, %v1634, %v1294
        %v1636 = vrot.slane %v1296, 6
        %v1637 = vsel %vm374, %v1636, %v1635
        %v1638 = vrot.slane %v1297, 5
        %v1639 = vsel %vm377, %v1638, %v1637
        %v1640 = vrot.slane %v1298, 4
        %v1641 = vsel %vm380, %v1640, %v1639
        %v1642 = vrot.slane %v1299, 3
        %v1643 = vsel %vm383, %v1642, %v1641
        %v1644 = vrot.slane %v1300, 2
        %v1645 = vsel %vm386, %v1644, %v1643
        %v1646 = vrot.slane %v1301, 1
        %v1647 = vsel %vm389, %v1646, %v1645
        %v1648 = vrot.slane %v1303, 7
        %v1649 = vsel %vm371, %v1648, %v1302
        %v1650 = vrot.slane %v1304, 6
        %v1651 = vsel %vm374, %v1650, %v1649
        %v1652 = vrot.slane %v1305, 5
        %v1653 = vsel %vm377, %v1652, %v1651
        %v1654 = vrot.slane %v1306, 4
        %v1655 = vsel %vm380, %v1654, %v1653
        %v1656 = vrot.slane %v1307, 3
        %v1657 = vsel %vm383, %v1656, %v1655
        %v1658 = vrot.slane %v1308, 2
        %v1659 = vsel %vm386, %v1658, %v1657
        %v1660 = vrot.slane %v1309, 1
        %v1661 = vsel %vm389, %v1660, %v1659
        %1678 = vxpose.xlu0.b32.start [1/16] %v1451, 128
        %1679 = vxpose.xlu0.b32.cont [2/16] %v1465, 128
        %1680 = vxpose.xlu0.b32.cont [3/16] %v1479, 128
        %1681 = vxpose.xlu0.b32.cont [4/16] %v1493, 128
        %1682 = vxpose.xlu0.b32.cont [5/16] %v1507, 128
        %1683 = vxpose.xlu0.b32.cont [6/16] %v1521, 128
        %1684 = vxpose.xlu0.b32.cont [7/16] %v1535, 128
        %1685 = vxpose.xlu0.b32.cont [8/16] %v1549, 128
        %1686 = vxpose.xlu0.b32.cont [9/16] %v1563, 128
        %1687 = vxpose.xlu0.b32.cont [10/16] %v1577, 128
        %1688 = vxpose.xlu0.b32.cont [11/16] %v1591, 128
        %1689 = vxpose.xlu0.b32.cont [12/16] %v1605, 128
        %1690 = vxpose.xlu0.b32.cont [13/16] %v1619, 128
        %1691 = vxpose.xlu0.b32.cont [14/16] %v1633, 128
        %1692 = vxpose.xlu0.b32.cont [15/16] %v1647, 128
        %1693 = vxpose.xlu0.b32.end [16/16] %v1661, 128
        %v1694 = vpop.trf.xlu0
        %v1695 = vpop.trf.xlu0
        %v1696 = vpop.trf.xlu0
        %v1697 = vpop.trf.xlu0
        %v1698 = vpop.trf.xlu0
        %v1699 = vpop.trf.xlu0
        %v1700 = vpop.trf.xlu0
        %v1701 = vpop.trf.xlu0
        %v1702 = vpop.trf.xlu0
        %v1703 = vpop.trf.xlu0
        %v1704 = vpop.trf.xlu0
        %v1705 = vpop.trf.xlu0
        %v1706 = vpop.trf.xlu0
        %v1707 = vpop.trf.xlu0
        %v1708 = vpop.trf.xlu0
        %v1709 = vpop.trf.xlu0
        %s1710 = scalar_lea.vmem [#allocation2], 32
        %1711 = vst [vmem:[%s1710] sm:$0xff] %v1694
        %1712 = vst [vmem:[%s1710 + $0x8] sm:$0xff] %v1695
        %v1713 = vld [vmem:[%s113 + $0x3] sm:$0x1]
        %v1714 = vld [vmem:[%s113 + $0x13] sm:$0x1]
        %v1715 = vld [vmem:[%s113 + $0x23] sm:$0x1]
        %v1716 = vld [vmem:[%s113 + $0x33] sm:$0x1]
        %v1717 = vld [vmem:[%s113 + $0x43] sm:$0x1]
        %v1718 = vld [vmem:[%s113 + $0x53] sm:$0x1]
        %v1719 = vld [vmem:[%s113 + $0x63] sm:$0x1]
        %v1720 = vld [vmem:[%s113 + $0x73] sm:$0x1]
        %v1721 = vld [vmem:[%s113 + $0x83] sm:$0x1]
        %v1722 = vld [vmem:[%s113 + $0x93] sm:$0x1]
        %v1723 = vld [vmem:[%s113 + $0xa3] sm:$0x1]
        %v1724 = vld [vmem:[%s113 + $0xb3] sm:$0x1]
        %v1725 = vld [vmem:[%s113 + $0xc3] sm:$0x1]
        %v1726 = vld [vmem:[%s113 + $0xd3] sm:$0x1]
        %v1727 = vld [vmem:[%s113 + $0xe3] sm:$0x1]
        %v1728 = vld [vmem:[%s113 + $0xf3] sm:$0x1]
        %v1729 = vld [vmem:[%s113 + $0x103] sm:$0x1]
        %v1730 = vld [vmem:[%s113 + $0x113] sm:$0x1]
        %v1731 = vld [vmem:[%s113 + $0x123] sm:$0x1]
        %v1732 = vld [vmem:[%s113 + $0x133] sm:$0x1]
        %v1733 = vld [vmem:[%s113 + $0x143] sm:$0x1]
        %v1734 = vld [vmem:[%s113 + $0x153] sm:$0x1]
        %v1735 = vld [vmem:[%s113 + $0x163] sm:$0x1]
        %v1736 = vld [vmem:[%s113 + $0x173] sm:$0x1]
        %v1737 = vld [vmem:[%s113 + $0x183] sm:$0x1]
        %v1738 = vld [vmem:[%s113 + $0x193] sm:$0x1]
        %v1739 = vld [vmem:[%s113 + $0x1a3] sm:$0x1]
        %v1740 = vld [vmem:[%s113 + $0x1b3] sm:$0x1]
        %v1741 = vld [vmem:[%s113 + $0x1c3] sm:$0x1]
        %v1742 = vld [vmem:[%s113 + $0x1d3] sm:$0x1]
        %v1743 = vld [vmem:[%s113 + $0x1e3] sm:$0x1]
        %v1744 = vld [vmem:[%s113 + $0x1f3] sm:$0x1]
        %v1745 = vld [vmem:[%s113 + $0x203] sm:$0x1]
        %v1746 = vld [vmem:[%s113 + $0x213] sm:$0x1]
        %v1747 = vld [vmem:[%s113 + $0x223] sm:$0x1]
        %v1748 = vld [vmem:[%s113 + $0x233] sm:$0x1]
        %v1749 = vld [vmem:[%s113 + $0x243] sm:$0x1]
        %v1750 = vld [vmem:[%s113 + $0x253] sm:$0x1]
        %v1751 = vld [vmem:[%s113 + $0x263] sm:$0x1]
        %v1752 = vld [vmem:[%s113 + $0x273] sm:$0x1]
        %v1753 = vld [vmem:[%s113 + $0x283] sm:$0x1]
        %v1754 = vld [vmem:[%s113 + $0x293] sm:$0x1]
        %v1755 = vld [vmem:[%s113 + $0x2a3] sm:$0x1]
        %v1756 = vld [vmem:[%s113 + $0x2b3] sm:$0x1]
        %v1757 = vld [vmem:[%s113 + $0x2c3] sm:$0x1]
        %v1758 = vld [vmem:[%s113 + $0x2d3] sm:$0x1]
        %v1759 = vld [vmem:[%s113 + $0x2e3] sm:$0x1]
        %v1760 = vld [vmem:[%s113 + $0x2f3] sm:$0x1]
        %v1761 = vld [vmem:[%s113 + $0x303] sm:$0x1]
        %v1762 = vld [vmem:[%s113 + $0x313] sm:$0x1]
        %v1763 = vld [vmem:[%s113 + $0x323] sm:$0x1]
        %v1764 = vld [vmem:[%s113 + $0x333] sm:$0x1]
        %v1765 = vld [vmem:[%s113 + $0x343] sm:$0x1]
        %v1766 = vld [vmem:[%s113 + $0x353] sm:$0x1]
        %v1767 = vld [vmem:[%s113 + $0x363] sm:$0x1]
        %v1768 = vld [vmem:[%s113 + $0x373] sm:$0x1]
        %v1769 = vld [vmem:[%s113 + $0x383] sm:$0x1]
        %v1770 = vld [vmem:[%s113 + $0x393] sm:$0x1]
        %v1771 = vld [vmem:[%s113 + $0x3a3] sm:$0x1]
        %v1772 = vld [vmem:[%s113 + $0x3b3] sm:$0x1]
        %v1773 = vld [vmem:[%s113 + $0x3c3] sm:$0x1]
        %v1774 = vld [vmem:[%s113 + $0x3d3] sm:$0x1]
        %v1775 = vld [vmem:[%s113 + $0x3e3] sm:$0x1]
        %v1776 = vld [vmem:[%s113 + $0x3f3] sm:$0x1]
        %v1777 = vld [vmem:[%s113 + $0x403] sm:$0x1]
        %v1778 = vld [vmem:[%s113 + $0x413] sm:$0x1]
        %v1779 = vld [vmem:[%s113 + $0x423] sm:$0x1]
        %v1780 = vld [vmem:[%s113 + $0x433] sm:$0x1]
        %v1781 = vld [vmem:[%s113 + $0x443] sm:$0x1]
        %v1782 = vld [vmem:[%s113 + $0x453] sm:$0x1]
        %v1783 = vld [vmem:[%s113 + $0x463] sm:$0x1]
        %v1784 = vld [vmem:[%s113 + $0x473] sm:$0x1]
        %v1785 = vld [vmem:[%s113 + $0x483] sm:$0x1]
        %v1786 = vld [vmem:[%s113 + $0x493] sm:$0x1]
        %v1787 = vld [vmem:[%s113 + $0x4a3] sm:$0x1]
        %v1788 = vld [vmem:[%s113 + $0x4b3] sm:$0x1]
        %v1789 = vld [vmem:[%s113 + $0x4c3] sm:$0x1]
        %v1790 = vld [vmem:[%s113 + $0x4d3] sm:$0x1]
        %v1791 = vld [vmem:[%s113 + $0x4e3] sm:$0x1]
        %v1792 = vld [vmem:[%s113 + $0x4f3] sm:$0x1]
        %v1793 = vld [vmem:[%s113 + $0x503] sm:$0x1]
        %v1794 = vld [vmem:[%s113 + $0x513] sm:$0x1]
        %v1795 = vld [vmem:[%s113 + $0x523] sm:$0x1]
        %v1796 = vld [vmem:[%s113 + $0x533] sm:$0x1]
        %v1797 = vld [vmem:[%s113 + $0x543] sm:$0x1]
        %v1798 = vld [vmem:[%s113 + $0x553] sm:$0x1]
        %v1799 = vld [vmem:[%s113 + $0x563] sm:$0x1]
        %v1800 = vld [vmem:[%s113 + $0x573] sm:$0x1]
        %v1801 = vld [vmem:[%s113 + $0x583] sm:$0x1]
        %v1802 = vld [vmem:[%s113 + $0x593] sm:$0x1]
        %v1803 = vld [vmem:[%s113 + $0x5a3] sm:$0x1]
        %v1804 = vld [vmem:[%s113 + $0x5b3] sm:$0x1]
        %v1805 = vld [vmem:[%s113 + $0x5c3] sm:$0x1]
        %v1806 = vld [vmem:[%s113 + $0x5d3] sm:$0x1]
        %v1807 = vld [vmem:[%s113 + $0x5e3] sm:$0x1]
        %v1808 = vld [vmem:[%s113 + $0x5f3] sm:$0x1]
        %v1809 = vld [vmem:[%s113 + $0x603] sm:$0x1]
        %v1810 = vld [vmem:[%s113 + $0x613] sm:$0x1]
        %v1811 = vld [vmem:[%s113 + $0x623] sm:$0x1]
        %v1812 = vld [vmem:[%s113 + $0x633] sm:$0x1]
        %v1813 = vld [vmem:[%s113 + $0x643] sm:$0x1]
        %v1814 = vld [vmem:[%s113 + $0x653] sm:$0x1]
        %v1815 = vld [vmem:[%s113 + $0x663] sm:$0x1]
        %v1816 = vld [vmem:[%s113 + $0x673] sm:$0x1]
        %v1817 = vld [vmem:[%s113 + $0x683] sm:$0x1]
        %v1818 = vld [vmem:[%s113 + $0x693] sm:$0x1]
        %v1819 = vld [vmem:[%s113 + $0x6a3] sm:$0x1]
        %v1820 = vld [vmem:[%s113 + $0x6b3] sm:$0x1]
        %v1821 = vld [vmem:[%s113 + $0x6c3] sm:$0x1]
        %v1822 = vld [vmem:[%s113 + $0x6d3] sm:$0x1]
        %v1823 = vld [vmem:[%s113 + $0x6e3] sm:$0x1]
        %v1824 = vld [vmem:[%s113 + $0x6f3] sm:$0x1]
        %v1825 = vld [vmem:[%s113 + $0x703] sm:$0x1]
        %v1826 = vld [vmem:[%s113 + $0x713] sm:$0x1]
        %v1827 = vld [vmem:[%s113 + $0x723] sm:$0x1]
        %v1828 = vld [vmem:[%s113 + $0x733] sm:$0x1]
        %v1829 = vld [vmem:[%s113 + $0x743] sm:$0x1]
        %v1830 = vld [vmem:[%s113 + $0x753] sm:$0x1]
        %v1831 = vld [vmem:[%s113 + $0x763] sm:$0x1]
        %v1832 = vld [vmem:[%s113 + $0x773] sm:$0x1]
        %v1833 = vld [vmem:[%s113 + $0x783] sm:$0x1]
        %v1834 = vld [vmem:[%s113 + $0x793] sm:$0x1]
        %v1835 = vld [vmem:[%s113 + $0x7a3] sm:$0x1]
        %v1836 = vld [vmem:[%s113 + $0x7b3] sm:$0x1]
        %v1837 = vld [vmem:[%s113 + $0x7c3] sm:$0x1]
        %v1838 = vld [vmem:[%s113 + $0x7d3] sm:$0x1]
        %v1839 = vld [vmem:[%s113 + $0x7e3] sm:$0x1]
        %v1840 = vld [vmem:[%s113 + $0x7f3] sm:$0x1]
        %v1969 = vrot.slane %v1714, 7
        %v1970 = vsel %vm371, %v1969, %v1713
        %v1971 = vrot.slane %v1715, 6
        %v1972 = vsel %vm374, %v1971, %v1970
        %v1973 = vrot.slane %v1716, 5
        %v1974 = vsel %vm377, %v1973, %v1972
        %v1975 = vrot.slane %v1717, 4
        %v1976 = vsel %vm380, %v1975, %v1974
        %v1977 = vrot.slane %v1718, 3
        %v1978 = vsel %vm383, %v1977, %v1976
        %v1979 = vrot.slane %v1719, 2
        %v1980 = vsel %vm386, %v1979, %v1978
        %v1981 = vrot.slane %v1720, 1
        %v1982 = vsel %vm389, %v1981, %v1980
        %v1983 = vrot.slane %v1722, 7
        %v1984 = vsel %vm371, %v1983, %v1721
        %v1985 = vrot.slane %v1723, 6
        %v1986 = vsel %vm374, %v1985, %v1984
        %v1987 = vrot.slane %v1724, 5
        %v1988 = vsel %vm377, %v1987, %v1986
        %v1989 = vrot.slane %v1725, 4
        %v1990 = vsel %vm380, %v1989, %v1988
        %v1991 = vrot.slane %v1726, 3
        %v1992 = vsel %vm383, %v1991, %v1990
        %v1993 = vrot.slane %v1727, 2
        %v1994 = vsel %vm386, %v1993, %v1992
        %v1995 = vrot.slane %v1728, 1
        %v1996 = vsel %vm389, %v1995, %v1994
        %v1997 = vrot.slane %v1730, 7
        %v1998 = vsel %vm371, %v1997, %v1729
        %v1999 = vrot.slane %v1731, 6
        %v2000 = vsel %vm374, %v1999, %v1998
        %v2001 = vrot.slane %v1732, 5
        %v2002 = vsel %vm377, %v2001, %v2000
        %v2003 = vrot.slane %v1733, 4
        %v2004 = vsel %vm380, %v2003, %v2002
        %v2005 = vrot.slane %v1734, 3
        %v2006 = vsel %vm383, %v2005, %v2004
        %v2007 = vrot.slane %v1735, 2
        %v2008 = vsel %vm386, %v2007, %v2006
        %v2009 = vrot.slane %v1736, 1
        %v2010 = vsel %vm389, %v2009, %v2008
        %v2011 = vrot.slane %v1738, 7
        %v2012 = vsel %vm371, %v2011, %v1737
        %v2013 = vrot.slane %v1739, 6
        %v2014 = vsel %vm374, %v2013, %v2012
        %v2015 = vrot.slane %v1740, 5
        %v2016 = vsel %vm377, %v2015, %v2014
        %v2017 = vrot.slane %v1741, 4
        %v2018 = vsel %vm380, %v2017, %v2016
        %v2019 = vrot.slane %v1742, 3
        %v2020 = vsel %vm383, %v2019, %v2018
        %v2021 = vrot.slane %v1743, 2
        %v2022 = vsel %vm386, %v2021, %v2020
        %v2023 = vrot.slane %v1744, 1
        %v2024 = vsel %vm389, %v2023, %v2022
        %v2025 = vrot.slane %v1746, 7
        %v2026 = vsel %vm371, %v2025, %v1745
        %v2027 = vrot.slane %v1747, 6
        %v2028 = vsel %vm374, %v2027, %v2026
        %v2029 = vrot.slane %v1748, 5
        %v2030 = vsel %vm377, %v2029, %v2028
        %v2031 = vrot.slane %v1749, 4
        %v2032 = vsel %vm380, %v2031, %v2030
        %v2033 = vrot.slane %v1750, 3
        %v2034 = vsel %vm383, %v2033, %v2032
        %v2035 = vrot.slane %v1751, 2
        %v2036 = vsel %vm386, %v2035, %v2034
        %v2037 = vrot.slane %v1752, 1
        %v2038 = vsel %vm389, %v2037, %v2036
        %v2039 = vrot.slane %v1754, 7
        %v2040 = vsel %vm371, %v2039, %v1753
        %v2041 = vrot.slane %v1755, 6
        %v2042 = vsel %vm374, %v2041, %v2040
        %v2043 = vrot.slane %v1756, 5
        %v2044 = vsel %vm377, %v2043, %v2042
        %v2045 = vrot.slane %v1757, 4
        %v2046 = vsel %vm380, %v2045, %v2044
        %v2047 = vrot.slane %v1758, 3
        %v2048 = vsel %vm383, %v2047, %v2046
        %v2049 = vrot.slane %v1759, 2
        %v2050 = vsel %vm386, %v2049, %v2048
        %v2051 = vrot.slane %v1760, 1
        %v2052 = vsel %vm389, %v2051, %v2050
        %v2053 = vrot.slane %v1762, 7
        %v2054 = vsel %vm371, %v2053, %v1761
        %v2055 = vrot.slane %v1763, 6
        %v2056 = vsel %vm374, %v2055, %v2054
        %v2057 = vrot.slane %v1764, 5
        %v2058 = vsel %vm377, %v2057, %v2056
        %v2059 = vrot.slane %v1765, 4
        %v2060 = vsel %vm380, %v2059, %v2058
        %v2061 = vrot.slane %v1766, 3
        %v2062 = vsel %vm383, %v2061, %v2060
        %v2063 = vrot.slane %v1767, 2
        %v2064 = vsel %vm386, %v2063, %v2062
        %v2065 = vrot.slane %v1768, 1
        %v2066 = vsel %vm389, %v2065, %v2064
        %v2067 = vrot.slane %v1770, 7
        %v2068 = vsel %vm371, %v2067, %v1769
        %v2069 = vrot.slane %v1771, 6
        %v2070 = vsel %vm374, %v2069, %v2068
        %v2071 = vrot.slane %v1772, 5
        %v2072 = vsel %vm377, %v2071, %v2070
        %v2073 = vrot.slane %v1773, 4
        %v2074 = vsel %vm380, %v2073, %v2072
        %v2075 = vrot.slane %v1774, 3
        %v2076 = vsel %vm383, %v2075, %v2074
        %v2077 = vrot.slane %v1775, 2
        %v2078 = vsel %vm386, %v2077, %v2076
        %v2079 = vrot.slane %v1776, 1
        %v2080 = vsel %vm389, %v2079, %v2078
        %v2081 = vrot.slane %v1778, 7
        %v2082 = vsel %vm371, %v2081, %v1777
        %v2083 = vrot.slane %v1779, 6
        %v2084 = vsel %vm374, %v2083, %v2082
        %v2085 = vrot.slane %v1780, 5
        %v2086 = vsel %vm377, %v2085, %v2084
        %v2087 = vrot.slane %v1781, 4
        %v2088 = vsel %vm380, %v2087, %v2086
        %v2089 = vrot.slane %v1782, 3
        %v2090 = vsel %vm383, %v2089, %v2088
        %v2091 = vrot.slane %v1783, 2
        %v2092 = vsel %vm386, %v2091, %v2090
        %v2093 = vrot.slane %v1784, 1
        %v2094 = vsel %vm389, %v2093, %v2092
        %v2095 = vrot.slane %v1786, 7
        %v2096 = vsel %vm371, %v2095, %v1785
        %v2097 = vrot.slane %v1787, 6
        %v2098 = vsel %vm374, %v2097, %v2096
        %v2099 = vrot.slane %v1788, 5
        %v2100 = vsel %vm377, %v2099, %v2098
        %v2101 = vrot.slane %v1789, 4
        %v2102 = vsel %vm380, %v2101, %v2100
        %v2103 = vrot.slane %v1790, 3
        %v2104 = vsel %vm383, %v2103, %v2102
        %v2105 = vrot.slane %v1791, 2
        %v2106 = vsel %vm386, %v2105, %v2104
        %v2107 = vrot.slane %v1792, 1
        %v2108 = vsel %vm389, %v2107, %v2106
        %v2109 = vrot.slane %v1794, 7
        %v2110 = vsel %vm371, %v2109, %v1793
        %v2111 = vrot.slane %v1795, 6
        %v2112 = vsel %vm374, %v2111, %v2110
        %v2113 = vrot.slane %v1796, 5
        %v2114 = vsel %vm377, %v2113, %v2112
        %v2115 = vrot.slane %v1797, 4
        %v2116 = vsel %vm380, %v2115, %v2114
        %v2117 = vrot.slane %v1798, 3
        %v2118 = vsel %vm383, %v2117, %v2116
        %v2119 = vrot.slane %v1799, 2
        %v2120 = vsel %vm386, %v2119, %v2118
        %v2121 = vrot.slane %v1800, 1
        %v2122 = vsel %vm389, %v2121, %v2120
        %v2123 = vrot.slane %v1802, 7
        %v2124 = vsel %vm371, %v2123, %v1801
        %v2125 = vrot.slane %v1803, 6
        %v2126 = vsel %vm374, %v2125, %v2124
        %v2127 = vrot.slane %v1804, 5
        %v2128 = vsel %vm377, %v2127, %v2126
        %v2129 = vrot.slane %v1805, 4
        %v2130 = vsel %vm380, %v2129, %v2128
        %v2131 = vrot.slane %v1806, 3
        %v2132 = vsel %vm383, %v2131, %v2130
        %v2133 = vrot.slane %v1807, 2
        %v2134 = vsel %vm386, %v2133, %v2132
        %v2135 = vrot.slane %v1808, 1
        %v2136 = vsel %vm389, %v2135, %v2134
        %v2137 = vrot.slane %v1810, 7
        %v2138 = vsel %vm371, %v2137, %v1809
        %v2139 = vrot.slane %v1811, 6
        %v2140 = vsel %vm374, %v2139, %v2138
        %v2141 = vrot.slane %v1812, 5
        %v2142 = vsel %vm377, %v2141, %v2140
        %v2143 = vrot.slane %v1813, 4
        %v2144 = vsel %vm380, %v2143, %v2142
        %v2145 = vrot.slane %v1814, 3
        %v2146 = vsel %vm383, %v2145, %v2144
        %v2147 = vrot.slane %v1815, 2
        %v2148 = vsel %vm386, %v2147, %v2146
        %v2149 = vrot.slane %v1816, 1
        %v2150 = vsel %vm389, %v2149, %v2148
        %v2151 = vrot.slane %v1818, 7
        %v2152 = vsel %vm371, %v2151, %v1817
        %v2153 = vrot.slane %v1819, 6
        %v2154 = vsel %vm374, %v2153, %v2152
        %v2155 = vrot.slane %v1820, 5
        %v2156 = vsel %vm377, %v2155, %v2154
        %v2157 = vrot.slane %v1821, 4
        %v2158 = vsel %vm380, %v2157, %v2156
        %v2159 = vrot.slane %v1822, 3
        %v2160 = vsel %vm383, %v2159, %v2158
        %v2161 = vrot.slane %v1823, 2
        %v2162 = vsel %vm386, %v2161, %v2160
        %v2163 = vrot.slane %v1824, 1
        %v2164 = vsel %vm389, %v2163, %v2162
        %v2165 = vrot.slane %v1826, 7
        %v2166 = vsel %vm371, %v2165, %v1825
        %v2167 = vrot.slane %v1827, 6
        %v2168 = vsel %vm374, %v2167, %v2166
        %v2169 = vrot.slane %v1828, 5
        %v2170 = vsel %vm377, %v2169, %v2168
        %v2171 = vrot.slane %v1829, 4
        %v2172 = vsel %vm380, %v2171, %v2170
        %v2173 = vrot.slane %v1830, 3
        %v2174 = vsel %vm383, %v2173, %v2172
        %v2175 = vrot.slane %v1831, 2
        %v2176 = vsel %vm386, %v2175, %v2174
        %v2177 = vrot.slane %v1832, 1
        %v2178 = vsel %vm389, %v2177, %v2176
        %v2179 = vrot.slane %v1834, 7
        %v2180 = vsel %vm371, %v2179, %v1833
        %v2181 = vrot.slane %v1835, 6
        %v2182 = vsel %vm374, %v2181, %v2180
        %v2183 = vrot.slane %v1836, 5
        %v2184 = vsel %vm377, %v2183, %v2182
        %v2185 = vrot.slane %v1837, 4
        %v2186 = vsel %vm380, %v2185, %v2184
        %v2187 = vrot.slane %v1838, 3
        %v2188 = vsel %vm383, %v2187, %v2186
        %v2189 = vrot.slane %v1839, 2
        %v2190 = vsel %vm386, %v2189, %v2188
        %v2191 = vrot.slane %v1840, 1
        %v2192 = vsel %vm389, %v2191, %v2190
        %2209 = vxpose.xlu0.b32.start [1/16] %v1982, 128
        %2210 = vxpose.xlu0.b32.cont [2/16] %v1996, 128
        %2211 = vxpose.xlu0.b32.cont [3/16] %v2010, 128
        %2212 = vxpose.xlu0.b32.cont [4/16] %v2024, 128
        %2213 = vxpose.xlu0.b32.cont [5/16] %v2038, 128
        %2214 = vxpose.xlu0.b32.cont [6/16] %v2052, 128
        %2215 = vxpose.xlu0.b32.cont [7/16] %v2066, 128
        %2216 = vxpose.xlu0.b32.cont [8/16] %v2080, 128
        %2217 = vxpose.xlu0.b32.cont [9/16] %v2094, 128
        %2218 = vxpose.xlu0.b32.cont [10/16] %v2108, 128
        %2219 = vxpose.xlu0.b32.cont [11/16] %v2122, 128
        %2220 = vxpose.xlu0.b32.cont [12/16] %v2136, 128
        %2221 = vxpose.xlu0.b32.cont [13/16] %v2150, 128
        %2222 = vxpose.xlu0.b32.cont [14/16] %v2164, 128
        %2223 = vxpose.xlu0.b32.cont [15/16] %v2178, 128
        %2224 = vxpose.xlu0.b32.end [16/16] %v2192, 128
        %v2225 = vpop.trf.xlu0
        %v2226 = vpop.trf.xlu0
        %v2227 = vpop.trf.xlu0
        %v2228 = vpop.trf.xlu0
        %v2229 = vpop.trf.xlu0
        %v2230 = vpop.trf.xlu0
        %v2231 = vpop.trf.xlu0
        %v2232 = vpop.trf.xlu0
        %v2233 = vpop.trf.xlu0
        %v2234 = vpop.trf.xlu0
        %v2235 = vpop.trf.xlu0
        %v2236 = vpop.trf.xlu0
        %v2237 = vpop.trf.xlu0
        %v2238 = vpop.trf.xlu0
        %v2239 = vpop.trf.xlu0
        %v2240 = vpop.trf.xlu0
        %s2241 = scalar_lea.vmem [#allocation2], 48
        %2242 = vst [vmem:[%s2241] sm:$0xff] %v2225
        %2243 = vst [vmem:[%s2241 + $0x8] sm:$0xff] %v2226
        %v2244 = vld [vmem:[%s113 + $0x4] sm:$0x1]
        %v2245 = vld [vmem:[%s113 + $0x14] sm:$0x1]
        %v2246 = vld [vmem:[%s113 + $0x24] sm:$0x1]
        %v2247 = vld [vmem:[%s113 + $0x34] sm:$0x1]
        %v2248 = vld [vmem:[%s113 + $0x44] sm:$0x1]
        %v2249 = vld [vmem:[%s113 + $0x54] sm:$0x1]
        %v2250 = vld [vmem:[%s113 + $0x64] sm:$0x1]
        %v2251 = vld [vmem:[%s113 + $0x74] sm:$0x1]
        %v2252 = vld [vmem:[%s113 + $0x84] sm:$0x1]
        %v2253 = vld [vmem:[%s113 + $0x94] sm:$0x1]
        %v2254 = vld [vmem:[%s113 + $0xa4] sm:$0x1]
        %v2255 = vld [vmem:[%s113 + $0xb4] sm:$0x1]
        %v2256 = vld [vmem:[%s113 + $0xc4] sm:$0x1]
        %v2257 = vld [vmem:[%s113 + $0xd4] sm:$0x1]
        %v2258 = vld [vmem:[%s113 + $0xe4] sm:$0x1]
        %v2259 = vld [vmem:[%s113 + $0xf4] sm:$0x1]
        %v2260 = vld [vmem:[%s113 + $0x104] sm:$0x1]
        %v2261 = vld [vmem:[%s113 + $0x114] sm:$0x1]
        %v2262 = vld [vmem:[%s113 + $0x124] sm:$0x1]
        %v2263 = vld [vmem:[%s113 + $0x134] sm:$0x1]
        %v2264 = vld [vmem:[%s113 + $0x144] sm:$0x1]
        %v2265 = vld [vmem:[%s113 + $0x154] sm:$0x1]
        %v2266 = vld [vmem:[%s113 + $0x164] sm:$0x1]
        %v2267 = vld [vmem:[%s113 + $0x174] sm:$0x1]
        %v2268 = vld [vmem:[%s113 + $0x184] sm:$0x1]
        %v2269 = vld [vmem:[%s113 + $0x194] sm:$0x1]
        %v2270 = vld [vmem:[%s113 + $0x1a4] sm:$0x1]
        %v2271 = vld [vmem:[%s113 + $0x1b4] sm:$0x1]
        %v2272 = vld [vmem:[%s113 + $0x1c4] sm:$0x1]
        %v2273 = vld [vmem:[%s113 + $0x1d4] sm:$0x1]
        %v2274 = vld [vmem:[%s113 + $0x1e4] sm:$0x1]
        %v2275 = vld [vmem:[%s113 + $0x1f4] sm:$0x1]
        %v2276 = vld [vmem:[%s113 + $0x204] sm:$0x1]
        %v2277 = vld [vmem:[%s113 + $0x214] sm:$0x1]
        %v2278 = vld [vmem:[%s113 + $0x224] sm:$0x1]
        %v2279 = vld [vmem:[%s113 + $0x234] sm:$0x1]
        %v2280 = vld [vmem:[%s113 + $0x244] sm:$0x1]
        %v2281 = vld [vmem:[%s113 + $0x254] sm:$0x1]
        %v2282 = vld [vmem:[%s113 + $0x264] sm:$0x1]
        %v2283 = vld [vmem:[%s113 + $0x274] sm:$0x1]
        %v2284 = vld [vmem:[%s113 + $0x284] sm:$0x1]
        %v2285 = vld [vmem:[%s113 + $0x294] sm:$0x1]
        %v2286 = vld [vmem:[%s113 + $0x2a4] sm:$0x1]
        %v2287 = vld [vmem:[%s113 + $0x2b4] sm:$0x1]
        %v2288 = vld [vmem:[%s113 + $0x2c4] sm:$0x1]
        %v2289 = vld [vmem:[%s113 + $0x2d4] sm:$0x1]
        %v2290 = vld [vmem:[%s113 + $0x2e4] sm:$0x1]
        %v2291 = vld [vmem:[%s113 + $0x2f4] sm:$0x1]
        %v2292 = vld [vmem:[%s113 + $0x304] sm:$0x1]
        %v2293 = vld [vmem:[%s113 + $0x314] sm:$0x1]
        %v2294 = vld [vmem:[%s113 + $0x324] sm:$0x1]
        %v2295 = vld [vmem:[%s113 + $0x334] sm:$0x1]
        %v2296 = vld [vmem:[%s113 + $0x344] sm:$0x1]
        %v2297 = vld [vmem:[%s113 + $0x354] sm:$0x1]
        %v2298 = vld [vmem:[%s113 + $0x364] sm:$0x1]
        %v2299 = vld [vmem:[%s113 + $0x374] sm:$0x1]
        %v2300 = vld [vmem:[%s113 + $0x384] sm:$0x1]
        %v2301 = vld [vmem:[%s113 + $0x394] sm:$0x1]
        %v2302 = vld [vmem:[%s113 + $0x3a4] sm:$0x1]
        %v2303 = vld [vmem:[%s113 + $0x3b4] sm:$0x1]
        %v2304 = vld [vmem:[%s113 + $0x3c4] sm:$0x1]
        %v2305 = vld [vmem:[%s113 + $0x3d4] sm:$0x1]
        %v2306 = vld [vmem:[%s113 + $0x3e4] sm:$0x1]
        %v2307 = vld [vmem:[%s113 + $0x3f4] sm:$0x1]
        %v2308 = vld [vmem:[%s113 + $0x404] sm:$0x1]
        %v2309 = vld [vmem:[%s113 + $0x414] sm:$0x1]
        %v2310 = vld [vmem:[%s113 + $0x424] sm:$0x1]
        %v2311 = vld [vmem:[%s113 + $0x434] sm:$0x1]
        %v2312 = vld [vmem:[%s113 + $0x444] sm:$0x1]
        %v2313 = vld [vmem:[%s113 + $0x454] sm:$0x1]
        %v2314 = vld [vmem:[%s113 + $0x464] sm:$0x1]
        %v2315 = vld [vmem:[%s113 + $0x474] sm:$0x1]
        %v2316 = vld [vmem:[%s113 + $0x484] sm:$0x1]
        %v2317 = vld [vmem:[%s113 + $0x494] sm:$0x1]
        %v2318 = vld [vmem:[%s113 + $0x4a4] sm:$0x1]
        %v2319 = vld [vmem:[%s113 + $0x4b4] sm:$0x1]
        %v2320 = vld [vmem:[%s113 + $0x4c4] sm:$0x1]
        %v2321 = vld [vmem:[%s113 + $0x4d4] sm:$0x1]
        %v2322 = vld [vmem:[%s113 + $0x4e4] sm:$0x1]
        %v2323 = vld [vmem:[%s113 + $0x4f4] sm:$0x1]
        %v2324 = vld [vmem:[%s113 + $0x504] sm:$0x1]
        %v2325 = vld [vmem:[%s113 + $0x514] sm:$0x1]
        %v2326 = vld [vmem:[%s113 + $0x524] sm:$0x1]
        %v2327 = vld [vmem:[%s113 + $0x534] sm:$0x1]
        %v2328 = vld [vmem:[%s113 + $0x544] sm:$0x1]
        %v2329 = vld [vmem:[%s113 + $0x554] sm:$0x1]
        %v2330 = vld [vmem:[%s113 + $0x564] sm:$0x1]
        %v2331 = vld [vmem:[%s113 + $0x574] sm:$0x1]
        %v2332 = vld [vmem:[%s113 + $0x584] sm:$0x1]
        %v2333 = vld [vmem:[%s113 + $0x594] sm:$0x1]
        %v2334 = vld [vmem:[%s113 + $0x5a4] sm:$0x1]
        %v2335 = vld [vmem:[%s113 + $0x5b4] sm:$0x1]
        %v2336 = vld [vmem:[%s113 + $0x5c4] sm:$0x1]
        %v2337 = vld [vmem:[%s113 + $0x5d4] sm:$0x1]
        %v2338 = vld [vmem:[%s113 + $0x5e4] sm:$0x1]
        %v2339 = vld [vmem:[%s113 + $0x5f4] sm:$0x1]
        %v2340 = vld [vmem:[%s113 + $0x604] sm:$0x1]
        %v2341 = vld [vmem:[%s113 + $0x614] sm:$0x1]
        %v2342 = vld [vmem:[%s113 + $0x624] sm:$0x1]
        %v2343 = vld [vmem:[%s113 + $0x634] sm:$0x1]
        %v2344 = vld [vmem:[%s113 + $0x644] sm:$0x1]
        %v2345 = vld [vmem:[%s113 + $0x654] sm:$0x1]
        %v2346 = vld [vmem:[%s113 + $0x664] sm:$0x1]
        %v2347 = vld [vmem:[%s113 + $0x674] sm:$0x1]
        %v2348 = vld [vmem:[%s113 + $0x684] sm:$0x1]
        %v2349 = vld [vmem:[%s113 + $0x694] sm:$0x1]
        %v2350 = vld [vmem:[%s113 + $0x6a4] sm:$0x1]
        %v2351 = vld [vmem:[%s113 + $0x6b4] sm:$0x1]
        %v2352 = vld [vmem:[%s113 + $0x6c4] sm:$0x1]
        %v2353 = vld [vmem:[%s113 + $0x6d4] sm:$0x1]
        %v2354 = vld [vmem:[%s113 + $0x6e4] sm:$0x1]
        %v2355 = vld [vmem:[%s113 + $0x6f4] sm:$0x1]
        %v2356 = vld [vmem:[%s113 + $0x704] sm:$0x1]
        %v2357 = vld [vmem:[%s113 + $0x714] sm:$0x1]
        %v2358 = vld [vmem:[%s113 + $0x724] sm:$0x1]
        %v2359 = vld [vmem:[%s113 + $0x734] sm:$0x1]
        %v2360 = vld [vmem:[%s113 + $0x744] sm:$0x1]
        %v2361 = vld [vmem:[%s113 + $0x754] sm:$0x1]
        %v2362 = vld [vmem:[%s113 + $0x764] sm:$0x1]
        %v2363 = vld [vmem:[%s113 + $0x774] sm:$0x1]
        %v2364 = vld [vmem:[%s113 + $0x784] sm:$0x1]
        %v2365 = vld [vmem:[%s113 + $0x794] sm:$0x1]
        %v2366 = vld [vmem:[%s113 + $0x7a4] sm:$0x1]
        %v2367 = vld [vmem:[%s113 + $0x7b4] sm:$0x1]
        %v2368 = vld [vmem:[%s113 + $0x7c4] sm:$0x1]
        %v2369 = vld [vmem:[%s113 + $0x7d4] sm:$0x1]
        %v2370 = vld [vmem:[%s113 + $0x7e4] sm:$0x1]
        %v2371 = vld [vmem:[%s113 + $0x7f4] sm:$0x1]
        %v2500 = vrot.slane %v2245, 7
        %v2501 = vsel %vm371, %v2500, %v2244
        %v2502 = vrot.slane %v2246, 6
        %v2503 = vsel %vm374, %v2502, %v2501
        %v2504 = vrot.slane %v2247, 5
        %v2505 = vsel %vm377, %v2504, %v2503
        %v2506 = vrot.slane %v2248, 4
        %v2507 = vsel %vm380, %v2506, %v2505
        %v2508 = vrot.slane %v2249, 3
        %v2509 = vsel %vm383, %v2508, %v2507
        %v2510 = vrot.slane %v2250, 2
        %v2511 = vsel %vm386, %v2510, %v2509
        %v2512 = vrot.slane %v2251, 1
        %v2513 = vsel %vm389, %v2512, %v2511
        %v2514 = vrot.slane %v2253, 7
        %v2515 = vsel %vm371, %v2514, %v2252
        %v2516 = vrot.slane %v2254, 6
        %v2517 = vsel %vm374, %v2516, %v2515
        %v2518 = vrot.slane %v2255, 5
        %v2519 = vsel %vm377, %v2518, %v2517
        %v2520 = vrot.slane %v2256, 4
        %v2521 = vsel %vm380, %v2520, %v2519
        %v2522 = vrot.slane %v2257, 3
        %v2523 = vsel %vm383, %v2522, %v2521
        %v2524 = vrot.slane %v2258, 2
        %v2525 = vsel %vm386, %v2524, %v2523
        %v2526 = vrot.slane %v2259, 1
        %v2527 = vsel %vm389, %v2526, %v2525
        %v2528 = vrot.slane %v2261, 7
        %v2529 = vsel %vm371, %v2528, %v2260
        %v2530 = vrot.slane %v2262, 6
        %v2531 = vsel %vm374, %v2530, %v2529
        %v2532 = vrot.slane %v2263, 5
        %v2533 = vsel %vm377, %v2532, %v2531
        %v2534 = vrot.slane %v2264, 4
        %v2535 = vsel %vm380, %v2534, %v2533
        %v2536 = vrot.slane %v2265, 3
        %v2537 = vsel %vm383, %v2536, %v2535
        %v2538 = vrot.slane %v2266, 2
        %v2539 = vsel %vm386, %v2538, %v2537
        %v2540 = vrot.slane %v2267, 1
        %v2541 = vsel %vm389, %v2540, %v2539
        %v2542 = vrot.slane %v2269, 7
        %v2543 = vsel %vm371, %v2542, %v2268
        %v2544 = vrot.slane %v2270, 6
        %v2545 = vsel %vm374, %v2544, %v2543
        %v2546 = vrot.slane %v2271, 5
        %v2547 = vsel %vm377, %v2546, %v2545
        %v2548 = vrot.slane %v2272, 4
        %v2549 = vsel %vm380, %v2548, %v2547
        %v2550 = vrot.slane %v2273, 3
        %v2551 = vsel %vm383, %v2550, %v2549
        %v2552 = vrot.slane %v2274, 2
        %v2553 = vsel %vm386, %v2552, %v2551
        %v2554 = vrot.slane %v2275, 1
        %v2555 = vsel %vm389, %v2554, %v2553
        %v2556 = vrot.slane %v2277, 7
        %v2557 = vsel %vm371, %v2556, %v2276
        %v2558 = vrot.slane %v2278, 6
        %v2559 = vsel %vm374, %v2558, %v2557
        %v2560 = vrot.slane %v2279, 5
        %v2561 = vsel %vm377, %v2560, %v2559
        %v2562 = vrot.slane %v2280, 4
        %v2563 = vsel %vm380, %v2562, %v2561
        %v2564 = vrot.slane %v2281, 3
        %v2565 = vsel %vm383, %v2564, %v2563
        %v2566 = vrot.slane %v2282, 2
        %v2567 = vsel %vm386, %v2566, %v2565
        %v2568 = vrot.slane %v2283, 1
        %v2569 = vsel %vm389, %v2568, %v2567
        %v2570 = vrot.slane %v2285, 7
        %v2571 = vsel %vm371, %v2570, %v2284
        %v2572 = vrot.slane %v2286, 6
        %v2573 = vsel %vm374, %v2572, %v2571
        %v2574 = vrot.slane %v2287, 5
        %v2575 = vsel %vm377, %v2574, %v2573
        %v2576 = vrot.slane %v2288, 4
        %v2577 = vsel %vm380, %v2576, %v2575
        %v2578 = vrot.slane %v2289, 3
        %v2579 = vsel %vm383, %v2578, %v2577
        %v2580 = vrot.slane %v2290, 2
        %v2581 = vsel %vm386, %v2580, %v2579
        %v2582 = vrot.slane %v2291, 1
        %v2583 = vsel %vm389, %v2582, %v2581
        %v2584 = vrot.slane %v2293, 7
        %v2585 = vsel %vm371, %v2584, %v2292
        %v2586 = vrot.slane %v2294, 6
        %v2587 = vsel %vm374, %v2586, %v2585
        %v2588 = vrot.slane %v2295, 5
        %v2589 = vsel %vm377, %v2588, %v2587
        %v2590 = vrot.slane %v2296, 4
        %v2591 = vsel %vm380, %v2590, %v2589
        %v2592 = vrot.slane %v2297, 3
        %v2593 = vsel %vm383, %v2592, %v2591
        %v2594 = vrot.slane %v2298, 2
        %v2595 = vsel %vm386, %v2594, %v2593
        %v2596 = vrot.slane %v2299, 1
        %v2597 = vsel %vm389, %v2596, %v2595
        %v2598 = vrot.slane %v2301, 7
        %v2599 = vsel %vm371, %v2598, %v2300
        %v2600 = vrot.slane %v2302, 6
        %v2601 = vsel %vm374, %v2600, %v2599
        %v2602 = vrot.slane %v2303, 5
        %v2603 = vsel %vm377, %v2602, %v2601
        %v2604 = vrot.slane %v2304, 4
        %v2605 = vsel %vm380, %v2604, %v2603
        %v2606 = vrot.slane %v2305, 3
        %v2607 = vsel %vm383, %v2606, %v2605
        %v2608 = vrot.slane %v2306, 2
        %v2609 = vsel %vm386, %v2608, %v2607
        %v2610 = vrot.slane %v2307, 1
        %v2611 = vsel %vm389, %v2610, %v2609
        %v2612 = vrot.slane %v2309, 7
        %v2613 = vsel %vm371, %v2612, %v2308
        %v2614 = vrot.slane %v2310, 6
        %v2615 = vsel %vm374, %v2614, %v2613
        %v2616 = vrot.slane %v2311, 5
        %v2617 = vsel %vm377, %v2616, %v2615
        %v2618 = vrot.slane %v2312, 4
        %v2619 = vsel %vm380, %v2618, %v2617
        %v2620 = vrot.slane %v2313, 3
        %v2621 = vsel %vm383, %v2620, %v2619
        %v2622 = vrot.slane %v2314, 2
        %v2623 = vsel %vm386, %v2622, %v2621
        %v2624 = vrot.slane %v2315, 1
        %v2625 = vsel %vm389, %v2624, %v2623
        %v2626 = vrot.slane %v2317, 7
        %v2627 = vsel %vm371, %v2626, %v2316
        %v2628 = vrot.slane %v2318, 6
        %v2629 = vsel %vm374, %v2628, %v2627
        %v2630 = vrot.slane %v2319, 5
        %v2631 = vsel %vm377, %v2630, %v2629
        %v2632 = vrot.slane %v2320, 4
        %v2633 = vsel %vm380, %v2632, %v2631
        %v2634 = vrot.slane %v2321, 3
        %v2635 = vsel %vm383, %v2634, %v2633
        %v2636 = vrot.slane %v2322, 2
        %v2637 = vsel %vm386, %v2636, %v2635
        %v2638 = vrot.slane %v2323, 1
        %v2639 = vsel %vm389, %v2638, %v2637
        %v2640 = vrot.slane %v2325, 7
        %v2641 = vsel %vm371, %v2640, %v2324
        %v2642 = vrot.slane %v2326, 6
        %v2643 = vsel %vm374, %v2642, %v2641
        %v2644 = vrot.slane %v2327, 5
        %v2645 = vsel %vm377, %v2644, %v2643
        %v2646 = vrot.slane %v2328, 4
        %v2647 = vsel %vm380, %v2646, %v2645
        %v2648 = vrot.slane %v2329, 3
        %v2649 = vsel %vm383, %v2648, %v2647
        %v2650 = vrot.slane %v2330, 2
        %v2651 = vsel %vm386, %v2650, %v2649
        %v2652 = vrot.slane %v2331, 1
        %v2653 = vsel %vm389, %v2652, %v2651
        %v2654 = vrot.slane %v2333, 7
        %v2655 = vsel %vm371, %v2654, %v2332
        %v2656 = vrot.slane %v2334, 6
        %v2657 = vsel %vm374, %v2656, %v2655
        %v2658 = vrot.slane %v2335, 5
        %v2659 = vsel %vm377, %v2658, %v2657
        %v2660 = vrot.slane %v2336, 4
        %v2661 = vsel %vm380, %v2660, %v2659
        %v2662 = vrot.slane %v2337, 3
        %v2663 = vsel %vm383, %v2662, %v2661
        %v2664 = vrot.slane %v2338, 2
        %v2665 = vsel %vm386, %v2664, %v2663
        %v2666 = vrot.slane %v2339, 1
        %v2667 = vsel %vm389, %v2666, %v2665
        %v2668 = vrot.slane %v2341, 7
        %v2669 = vsel %vm371, %v2668, %v2340
        %v2670 = vrot.slane %v2342, 6
        %v2671 = vsel %vm374, %v2670, %v2669
        %v2672 = vrot.slane %v2343, 5
        %v2673 = vsel %vm377, %v2672, %v2671
        %v2674 = vrot.slane %v2344, 4
        %v2675 = vsel %vm380, %v2674, %v2673
        %v2676 = vrot.slane %v2345, 3
        %v2677 = vsel %vm383, %v2676, %v2675
        %v2678 = vrot.slane %v2346, 2
        %v2679 = vsel %vm386, %v2678, %v2677
        %v2680 = vrot.slane %v2347, 1
        %v2681 = vsel %vm389, %v2680, %v2679
        %v2682 = vrot.slane %v2349, 7
        %v2683 = vsel %vm371, %v2682, %v2348
        %v2684 = vrot.slane %v2350, 6
        %v2685 = vsel %vm374, %v2684, %v2683
        %v2686 = vrot.slane %v2351, 5
        %v2687 = vsel %vm377, %v2686, %v2685
        %v2688 = vrot.slane %v2352, 4
        %v2689 = vsel %vm380, %v2688, %v2687
        %v2690 = vrot.slane %v2353, 3
        %v2691 = vsel %vm383, %v2690, %v2689
        %v2692 = vrot.slane %v2354, 2
        %v2693 = vsel %vm386, %v2692, %v2691
        %v2694 = vrot.slane %v2355, 1
        %v2695 = vsel %vm389, %v2694, %v2693
        %v2696 = vrot.slane %v2357, 7
        %v2697 = vsel %vm371, %v2696, %v2356
        %v2698 = vrot.slane %v2358, 6
        %v2699 = vsel %vm374, %v2698, %v2697
        %v2700 = vrot.slane %v2359, 5
        %v2701 = vsel %vm377, %v2700, %v2699
        %v2702 = vrot.slane %v2360, 4
        %v2703 = vsel %vm380, %v2702, %v2701
        %v2704 = vrot.slane %v2361, 3
        %v2705 = vsel %vm383, %v2704, %v2703
        %v2706 = vrot.slane %v2362, 2
        %v2707 = vsel %vm386, %v2706, %v2705
        %v2708 = vrot.slane %v2363, 1
        %v2709 = vsel %vm389, %v2708, %v2707
        %v2710 = vrot.slane %v2365, 7
        %v2711 = vsel %vm371, %v2710, %v2364
        %v2712 = vrot.slane %v2366, 6
        %v2713 = vsel %vm374, %v2712, %v2711
        %v2714 = vrot.slane %v2367, 5
        %v2715 = vsel %vm377, %v2714, %v2713
        %v2716 = vrot.slane %v2368, 4
        %v2717 = vsel %vm380, %v2716, %v2715
        %v2718 = vrot.slane %v2369, 3
        %v2719 = vsel %vm383, %v2718, %v2717
        %v2720 = vrot.slane %v2370, 2
        %v2721 = vsel %vm386, %v2720, %v2719
        %v2722 = vrot.slane %v2371, 1
        %v2723 = vsel %vm389, %v2722, %v2721
        %2740 = vxpose.xlu0.b32.start [1/16] %v2513, 128
        %2741 = vxpose.xlu0.b32.cont [2/16] %v2527, 128
        %2742 = vxpose.xlu0.b32.cont [3/16] %v2541, 128
        %2743 = vxpose.xlu0.b32.cont [4/16] %v2555, 128
        %2744 = vxpose.xlu0.b32.cont [5/16] %v2569, 128
        %2745 = vxpose.xlu0.b32.cont [6/16] %v2583, 128
        %2746 = vxpose.xlu0.b32.cont [7/16] %v2597, 128
        %2747 = vxpose.xlu0.b32.cont [8/16] %v2611, 128
        %2748 = vxpose.xlu0.b32.cont [9/16] %v2625, 128
        %2749 = vxpose.xlu0.b32.cont [10/16] %v2639, 128
        %2750 = vxpose.xlu0.b32.cont [11/16] %v2653, 128
        %2751 = vxpose.xlu0.b32.cont [12/16] %v2667, 128
        %2752 = vxpose.xlu0.b32.cont [13/16] %v2681, 128
        %2753 = vxpose.xlu0.b32.cont [14/16] %v2695, 128
        %2754 = vxpose.xlu0.b32.cont [15/16] %v2709, 128
        %2755 = vxpose.xlu0.b32.end [16/16] %v2723, 128
        %v2756 = vpop.trf.xlu0
        %v2757 = vpop.trf.xlu0
        %v2758 = vpop.trf.xlu0
        %v2759 = vpop.trf.xlu0
        %v2760 = vpop.trf.xlu0
        %v2761 = vpop.trf.xlu0
        %v2762 = vpop.trf.xlu0
        %v2763 = vpop.trf.xlu0
        %v2764 = vpop.trf.xlu0
        %v2765 = vpop.trf.xlu0
        %v2766 = vpop.trf.xlu0
        %v2767 = vpop.trf.xlu0
        %v2768 = vpop.trf.xlu0
        %v2769 = vpop.trf.xlu0
        %v2770 = vpop.trf.xlu0
        %v2771 = vpop.trf.xlu0
        %s2772 = scalar_lea.vmem [#allocation2], 64
        %2773 = vst [vmem:[%s2772] sm:$0xff] %v2756
        %2774 = vst [vmem:[%s2772 + $0x8] sm:$0xff] %v2757
        %v2775 = vld [vmem:[%s113 + $0x5] sm:$0x1]
        %v2776 = vld [vmem:[%s113 + $0x15] sm:$0x1]
        %v2777 = vld [vmem:[%s113 + $0x25] sm:$0x1]
        %v2778 = vld [vmem:[%s113 + $0x35] sm:$0x1]
        %v2779 = vld [vmem:[%s113 + $0x45] sm:$0x1]
        %v2780 = vld [vmem:[%s113 + $0x55] sm:$0x1]
        %v2781 = vld [vmem:[%s113 + $0x65] sm:$0x1]
        %v2782 = vld [vmem:[%s113 + $0x75] sm:$0x1]
        %v2783 = vld [vmem:[%s113 + $0x85] sm:$0x1]
        %v2784 = vld [vmem:[%s113 + $0x95] sm:$0x1]
        %v2785 = vld [vmem:[%s113 + $0xa5] sm:$0x1]
        %v2786 = vld [vmem:[%s113 + $0xb5] sm:$0x1]
        %v2787 = vld [vmem:[%s113 + $0xc5] sm:$0x1]
        %v2788 = vld [vmem:[%s113 + $0xd5] sm:$0x1]
        %v2789 = vld [vmem:[%s113 + $0xe5] sm:$0x1]
        %v2790 = vld [vmem:[%s113 + $0xf5] sm:$0x1]
        %v2791 = vld [vmem:[%s113 + $0x105] sm:$0x1]
        %v2792 = vld [vmem:[%s113 + $0x115] sm:$0x1]
        %v2793 = vld [vmem:[%s113 + $0x125] sm:$0x1]
        %v2794 = vld [vmem:[%s113 + $0x135] sm:$0x1]
        %v2795 = vld [vmem:[%s113 + $0x145] sm:$0x1]
        %v2796 = vld [vmem:[%s113 + $0x155] sm:$0x1]
        %v2797 = vld [vmem:[%s113 + $0x165] sm:$0x1]
        %v2798 = vld [vmem:[%s113 + $0x175] sm:$0x1]
        %v2799 = vld [vmem:[%s113 + $0x185] sm:$0x1]
        %v2800 = vld [vmem:[%s113 + $0x195] sm:$0x1]
        %v2801 = vld [vmem:[%s113 + $0x1a5] sm:$0x1]
        %v2802 = vld [vmem:[%s113 + $0x1b5] sm:$0x1]
        %v2803 = vld [vmem:[%s113 + $0x1c5] sm:$0x1]
        %v2804 = vld [vmem:[%s113 + $0x1d5] sm:$0x1]
        %v2805 = vld [vmem:[%s113 + $0x1e5] sm:$0x1]
        %v2806 = vld [vmem:[%s113 + $0x1f5] sm:$0x1]
        %v2807 = vld [vmem:[%s113 + $0x205] sm:$0x1]
        %v2808 = vld [vmem:[%s113 + $0x215] sm:$0x1]
        %v2809 = vld [vmem:[%s113 + $0x225] sm:$0x1]
        %v2810 = vld [vmem:[%s113 + $0x235] sm:$0x1]
        %v2811 = vld [vmem:[%s113 + $0x245] sm:$0x1]
        %v2812 = vld [vmem:[%s113 + $0x255] sm:$0x1]
        %v2813 = vld [vmem:[%s113 + $0x265] sm:$0x1]
        %v2814 = vld [vmem:[%s113 + $0x275] sm:$0x1]
        %v2815 = vld [vmem:[%s113 + $0x285] sm:$0x1]
        %v2816 = vld [vmem:[%s113 + $0x295] sm:$0x1]
        %v2817 = vld [vmem:[%s113 + $0x2a5] sm:$0x1]
        %v2818 = vld [vmem:[%s113 + $0x2b5] sm:$0x1]
        %v2819 = vld [vmem:[%s113 + $0x2c5] sm:$0x1]
        %v2820 = vld [vmem:[%s113 + $0x2d5] sm:$0x1]
        %v2821 = vld [vmem:[%s113 + $0x2e5] sm:$0x1]
        %v2822 = vld [vmem:[%s113 + $0x2f5] sm:$0x1]
        %v2823 = vld [vmem:[%s113 + $0x305] sm:$0x1]
        %v2824 = vld [vmem:[%s113 + $0x315] sm:$0x1]
        %v2825 = vld [vmem:[%s113 + $0x325] sm:$0x1]
        %v2826 = vld [vmem:[%s113 + $0x335] sm:$0x1]
        %v2827 = vld [vmem:[%s113 + $0x345] sm:$0x1]
        %v2828 = vld [vmem:[%s113 + $0x355] sm:$0x1]
        %v2829 = vld [vmem:[%s113 + $0x365] sm:$0x1]
        %v2830 = vld [vmem:[%s113 + $0x375] sm:$0x1]
        %v2831 = vld [vmem:[%s113 + $0x385] sm:$0x1]
        %v2832 = vld [vmem:[%s113 + $0x395] sm:$0x1]
        %v2833 = vld [vmem:[%s113 + $0x3a5] sm:$0x1]
        %v2834 = vld [vmem:[%s113 + $0x3b5] sm:$0x1]
        %v2835 = vld [vmem:[%s113 + $0x3c5] sm:$0x1]
        %v2836 = vld [vmem:[%s113 + $0x3d5] sm:$0x1]
        %v2837 = vld [vmem:[%s113 + $0x3e5] sm:$0x1]
        %v2838 = vld [vmem:[%s113 + $0x3f5] sm:$0x1]
        %v2839 = vld [vmem:[%s113 + $0x405] sm:$0x1]
        %v2840 = vld [vmem:[%s113 + $0x415] sm:$0x1]
        %v2841 = vld [vmem:[%s113 + $0x425] sm:$0x1]
        %v2842 = vld [vmem:[%s113 + $0x435] sm:$0x1]
        %v2843 = vld [vmem:[%s113 + $0x445] sm:$0x1]
        %v2844 = vld [vmem:[%s113 + $0x455] sm:$0x1]
        %v2845 = vld [vmem:[%s113 + $0x465] sm:$0x1]
        %v2846 = vld [vmem:[%s113 + $0x475] sm:$0x1]
        %v2847 = vld [vmem:[%s113 + $0x485] sm:$0x1]
        %v2848 = vld [vmem:[%s113 + $0x495] sm:$0x1]
        %v2849 = vld [vmem:[%s113 + $0x4a5] sm:$0x1]
        %v2850 = vld [vmem:[%s113 + $0x4b5] sm:$0x1]
        %v2851 = vld [vmem:[%s113 + $0x4c5] sm:$0x1]
        %v2852 = vld [vmem:[%s113 + $0x4d5] sm:$0x1]
        %v2853 = vld [vmem:[%s113 + $0x4e5] sm:$0x1]
        %v2854 = vld [vmem:[%s113 + $0x4f5] sm:$0x1]
        %v2855 = vld [vmem:[%s113 + $0x505] sm:$0x1]
        %v2856 = vld [vmem:[%s113 + $0x515] sm:$0x1]
        %v2857 = vld [vmem:[%s113 + $0x525] sm:$0x1]
        %v2858 = vld [vmem:[%s113 + $0x535] sm:$0x1]
        %v2859 = vld [vmem:[%s113 + $0x545] sm:$0x1]
        %v2860 = vld [vmem:[%s113 + $0x555] sm:$0x1]
        %v2861 = vld [vmem:[%s113 + $0x565] sm:$0x1]
        %v2862 = vld [vmem:[%s113 + $0x575] sm:$0x1]
        %v2863 = vld [vmem:[%s113 + $0x585] sm:$0x1]
        %v2864 = vld [vmem:[%s113 + $0x595] sm:$0x1]
        %v2865 = vld [vmem:[%s113 + $0x5a5] sm:$0x1]
        %v2866 = vld [vmem:[%s113 + $0x5b5] sm:$0x1]
        %v2867 = vld [vmem:[%s113 + $0x5c5] sm:$0x1]
        %v2868 = vld [vmem:[%s113 + $0x5d5] sm:$0x1]
        %v2869 = vld [vmem:[%s113 + $0x5e5] sm:$0x1]
        %v2870 = vld [vmem:[%s113 + $0x5f5] sm:$0x1]
        %v2871 = vld [vmem:[%s113 + $0x605] sm:$0x1]
        %v2872 = vld [vmem:[%s113 + $0x615] sm:$0x1]
        %v2873 = vld [vmem:[%s113 + $0x625] sm:$0x1]
        %v2874 = vld [vmem:[%s113 + $0x635] sm:$0x1]
        %v2875 = vld [vmem:[%s113 + $0x645] sm:$0x1]
        %v2876 = vld [vmem:[%s113 + $0x655] sm:$0x1]
        %v2877 = vld [vmem:[%s113 + $0x665] sm:$0x1]
        %v2878 = vld [vmem:[%s113 + $0x675] sm:$0x1]
        %v2879 = vld [vmem:[%s113 + $0x685] sm:$0x1]
        %v2880 = vld [vmem:[%s113 + $0x695] sm:$0x1]
        %v2881 = vld [vmem:[%s113 + $0x6a5] sm:$0x1]
        %v2882 = vld [vmem:[%s113 + $0x6b5] sm:$0x1]
        %v2883 = vld [vmem:[%s113 + $0x6c5] sm:$0x1]
        %v2884 = vld [vmem:[%s113 + $0x6d5] sm:$0x1]
        %v2885 = vld [vmem:[%s113 + $0x6e5] sm:$0x1]
        %v2886 = vld [vmem:[%s113 + $0x6f5] sm:$0x1]
        %v2887 = vld [vmem:[%s113 + $0x705] sm:$0x1]
        %v2888 = vld [vmem:[%s113 + $0x715] sm:$0x1]
        %v2889 = vld [vmem:[%s113 + $0x725] sm:$0x1]
        %v2890 = vld [vmem:[%s113 + $0x735] sm:$0x1]
        %v2891 = vld [vmem:[%s113 + $0x745] sm:$0x1]
        %v2892 = vld [vmem:[%s113 + $0x755] sm:$0x1]
        %v2893 = vld [vmem:[%s113 + $0x765] sm:$0x1]
        %v2894 = vld [vmem:[%s113 + $0x775] sm:$0x1]
        %v2895 = vld [vmem:[%s113 + $0x785] sm:$0x1]
        %v2896 = vld [vmem:[%s113 + $0x795] sm:$0x1]
        %v2897 = vld [vmem:[%s113 + $0x7a5] sm:$0x1]
        %v2898 = vld [vmem:[%s113 + $0x7b5] sm:$0x1]
        %v2899 = vld [vmem:[%s113 + $0x7c5] sm:$0x1]
        %v2900 = vld [vmem:[%s113 + $0x7d5] sm:$0x1]
        %v2901 = vld [vmem:[%s113 + $0x7e5] sm:$0x1]
        %v2902 = vld [vmem:[%s113 + $0x7f5] sm:$0x1]
        %v3031 = vrot.slane %v2776, 7
        %v3032 = vsel %vm371, %v3031, %v2775
        %v3033 = vrot.slane %v2777, 6
        %v3034 = vsel %vm374, %v3033, %v3032
        %v3035 = vrot.slane %v2778, 5
        %v3036 = vsel %vm377, %v3035, %v3034
        %v3037 = vrot.slane %v2779, 4
        %v3038 = vsel %vm380, %v3037, %v3036
        %v3039 = vrot.slane %v2780, 3
        %v3040 = vsel %vm383, %v3039, %v3038
        %v3041 = vrot.slane %v2781, 2
        %v3042 = vsel %vm386, %v3041, %v3040
        %v3043 = vrot.slane %v2782, 1
        %v3044 = vsel %vm389, %v3043, %v3042
        %v3045 = vrot.slane %v2784, 7
        %v3046 = vsel %vm371, %v3045, %v2783
        %v3047 = vrot.slane %v2785, 6
        %v3048 = vsel %vm374, %v3047, %v3046
        %v3049 = vrot.slane %v2786, 5
        %v3050 = vsel %vm377, %v3049, %v3048
        %v3051 = vrot.slane %v2787, 4
        %v3052 = vsel %vm380, %v3051, %v3050
        %v3053 = vrot.slane %v2788, 3
        %v3054 = vsel %vm383, %v3053, %v3052
        %v3055 = vrot.slane %v2789, 2
        %v3056 = vsel %vm386, %v3055, %v3054
        %v3057 = vrot.slane %v2790, 1
        %v3058 = vsel %vm389, %v3057, %v3056
        %v3059 = vrot.slane %v2792, 7
        %v3060 = vsel %vm371, %v3059, %v2791
        %v3061 = vrot.slane %v2793, 6
        %v3062 = vsel %vm374, %v3061, %v3060
        %v3063 = vrot.slane %v2794, 5
        %v3064 = vsel %vm377, %v3063, %v3062
        %v3065 = vrot.slane %v2795, 4
        %v3066 = vsel %vm380, %v3065, %v3064
        %v3067 = vrot.slane %v2796, 3
        %v3068 = vsel %vm383, %v3067, %v3066
        %v3069 = vrot.slane %v2797, 2
        %v3070 = vsel %vm386, %v3069, %v3068
        %v3071 = vrot.slane %v2798, 1
        %v3072 = vsel %vm389, %v3071, %v3070
        %v3073 = vrot.slane %v2800, 7
        %v3074 = vsel %vm371, %v3073, %v2799
        %v3075 = vrot.slane %v2801, 6
        %v3076 = vsel %vm374, %v3075, %v3074
        %v3077 = vrot.slane %v2802, 5
        %v3078 = vsel %vm377, %v3077, %v3076
        %v3079 = vrot.slane %v2803, 4
        %v3080 = vsel %vm380, %v3079, %v3078
        %v3081 = vrot.slane %v2804, 3
        %v3082 = vsel %vm383, %v3081, %v3080
        %v3083 = vrot.slane %v2805, 2
        %v3084 = vsel %vm386, %v3083, %v3082
        %v3085 = vrot.slane %v2806, 1
        %v3086 = vsel %vm389, %v3085, %v3084
        %v3087 = vrot.slane %v2808, 7
        %v3088 = vsel %vm371, %v3087, %v2807
        %v3089 = vrot.slane %v2809, 6
        %v3090 = vsel %vm374, %v3089, %v3088
        %v3091 = vrot.slane %v2810, 5
        %v3092 = vsel %vm377, %v3091, %v3090
        %v3093 = vrot.slane %v2811, 4
        %v3094 = vsel %vm380, %v3093, %v3092
        %v3095 = vrot.slane %v2812, 3
        %v3096 = vsel %vm383, %v3095, %v3094
        %v3097 = vrot.slane %v2813, 2
        %v3098 = vsel %vm386, %v3097, %v3096
        %v3099 = vrot.slane %v2814, 1
        %v3100 = vsel %vm389, %v3099, %v3098
        %v3101 = vrot.slane %v2816, 7
        %v3102 = vsel %vm371, %v3101, %v2815
        %v3103 = vrot.slane %v2817, 6
        %v3104 = vsel %vm374, %v3103, %v3102
        %v3105 = vrot.slane %v2818, 5
        %v3106 = vsel %vm377, %v3105, %v3104
        %v3107 = vrot.slane %v2819, 4
        %v3108 = vsel %vm380, %v3107, %v3106
        %v3109 = vrot.slane %v2820, 3
        %v3110 = vsel %vm383, %v3109, %v3108
        %v3111 = vrot.slane %v2821, 2
        %v3112 = vsel %vm386, %v3111, %v3110
        %v3113 = vrot.slane %v2822, 1
        %v3114 = vsel %vm389, %v3113, %v3112
        %v3115 = vrot.slane %v2824, 7
        %v3116 = vsel %vm371, %v3115, %v2823
        %v3117 = vrot.slane %v2825, 6
        %v3118 = vsel %vm374, %v3117, %v3116
        %v3119 = vrot.slane %v2826, 5
        %v3120 = vsel %vm377, %v3119, %v3118
        %v3121 = vrot.slane %v2827, 4
        %v3122 = vsel %vm380, %v3121, %v3120
        %v3123 = vrot.slane %v2828, 3
        %v3124 = vsel %vm383, %v3123, %v3122
        %v3125 = vrot.slane %v2829, 2
        %v3126 = vsel %vm386, %v3125, %v3124
        %v3127 = vrot.slane %v2830, 1
        %v3128 = vsel %vm389, %v3127, %v3126
        %v3129 = vrot.slane %v2832, 7
        %v3130 = vsel %vm371, %v3129, %v2831
        %v3131 = vrot.slane %v2833, 6
        %v3132 = vsel %vm374, %v3131, %v3130
        %v3133 = vrot.slane %v2834, 5
        %v3134 = vsel %vm377, %v3133, %v3132
        %v3135 = vrot.slane %v2835, 4
        %v3136 = vsel %vm380, %v3135, %v3134
        %v3137 = vrot.slane %v2836, 3
        %v3138 = vsel %vm383, %v3137, %v3136
        %v3139 = vrot.slane %v2837, 2
        %v3140 = vsel %vm386, %v3139, %v3138
        %v3141 = vrot.slane %v2838, 1
        %v3142 = vsel %vm389, %v3141, %v3140
        %v3143 = vrot.slane %v2840, 7
        %v3144 = vsel %vm371, %v3143, %v2839
        %v3145 = vrot.slane %v2841, 6
        %v3146 = vsel %vm374, %v3145, %v3144
        %v3147 = vrot.slane %v2842, 5
        %v3148 = vsel %vm377, %v3147, %v3146
        %v3149 = vrot.slane %v2843, 4
        %v3150 = vsel %vm380, %v3149, %v3148
        %v3151 = vrot.slane %v2844, 3
        %v3152 = vsel %vm383, %v3151, %v3150
        %v3153 = vrot.slane %v2845, 2
        %v3154 = vsel %vm386, %v3153, %v3152
        %v3155 = vrot.slane %v2846, 1
        %v3156 = vsel %vm389, %v3155, %v3154
        %v3157 = vrot.slane %v2848, 7
        %v3158 = vsel %vm371, %v3157, %v2847
        %v3159 = vrot.slane %v2849, 6
        %v3160 = vsel %vm374, %v3159, %v3158
        %v3161 = vrot.slane %v2850, 5
        %v3162 = vsel %vm377, %v3161, %v3160
        %v3163 = vrot.slane %v2851, 4
        %v3164 = vsel %vm380, %v3163, %v3162
        %v3165 = vrot.slane %v2852, 3
        %v3166 = vsel %vm383, %v3165, %v3164
        %v3167 = vrot.slane %v2853, 2
        %v3168 = vsel %vm386, %v3167, %v3166
        %v3169 = vrot.slane %v2854, 1
        %v3170 = vsel %vm389, %v3169, %v3168
        %v3171 = vrot.slane %v2856, 7
        %v3172 = vsel %vm371, %v3171, %v2855
        %v3173 = vrot.slane %v2857, 6
        %v3174 = vsel %vm374, %v3173, %v3172
        %v3175 = vrot.slane %v2858, 5
        %v3176 = vsel %vm377, %v3175, %v3174
        %v3177 = vrot.slane %v2859, 4
        %v3178 = vsel %vm380, %v3177, %v3176
        %v3179 = vrot.slane %v2860, 3
        %v3180 = vsel %vm383, %v3179, %v3178
        %v3181 = vrot.slane %v2861, 2
        %v3182 = vsel %vm386, %v3181, %v3180
        %v3183 = vrot.slane %v2862, 1
        %v3184 = vsel %vm389, %v3183, %v3182
        %v3185 = vrot.slane %v2864, 7
        %v3186 = vsel %vm371, %v3185, %v2863
        %v3187 = vrot.slane %v2865, 6
        %v3188 = vsel %vm374, %v3187, %v3186
        %v3189 = vrot.slane %v2866, 5
        %v3190 = vsel %vm377, %v3189, %v3188
        %v3191 = vrot.slane %v2867, 4
        %v3192 = vsel %vm380, %v3191, %v3190
        %v3193 = vrot.slane %v2868, 3
        %v3194 = vsel %vm383, %v3193, %v3192
        %v3195 = vrot.slane %v2869, 2
        %v3196 = vsel %vm386, %v3195, %v3194
        %v3197 = vrot.slane %v2870, 1
        %v3198 = vsel %vm389, %v3197, %v3196
        %v3199 = vrot.slane %v2872, 7
        %v3200 = vsel %vm371, %v3199, %v2871
        %v3201 = vrot.slane %v2873, 6
        %v3202 = vsel %vm374, %v3201, %v3200
        %v3203 = vrot.slane %v2874, 5
        %v3204 = vsel %vm377, %v3203, %v3202
        %v3205 = vrot.slane %v2875, 4
        %v3206 = vsel %vm380, %v3205, %v3204
        %v3207 = vrot.slane %v2876, 3
        %v3208 = vsel %vm383, %v3207, %v3206
        %v3209 = vrot.slane %v2877, 2
        %v3210 = vsel %vm386, %v3209, %v3208
        %v3211 = vrot.slane %v2878, 1
        %v3212 = vsel %vm389, %v3211, %v3210
        %v3213 = vrot.slane %v2880, 7
        %v3214 = vsel %vm371, %v3213, %v2879
        %v3215 = vrot.slane %v2881, 6
        %v3216 = vsel %vm374, %v3215, %v3214
        %v3217 = vrot.slane %v2882, 5
        %v3218 = vsel %vm377, %v3217, %v3216
        %v3219 = vrot.slane %v2883, 4
        %v3220 = vsel %vm380, %v3219, %v3218
        %v3221 = vrot.slane %v2884, 3
        %v3222 = vsel %vm383, %v3221, %v3220
        %v3223 = vrot.slane %v2885, 2
        %v3224 = vsel %vm386, %v3223, %v3222
        %v3225 = vrot.slane %v2886, 1
        %v3226 = vsel %vm389, %v3225, %v3224
        %v3227 = vrot.slane %v2888, 7
        %v3228 = vsel %vm371, %v3227, %v2887
        %v3229 = vrot.slane %v2889, 6
        %v3230 = vsel %vm374, %v3229, %v3228
        %v3231 = vrot.slane %v2890, 5
        %v3232 = vsel %vm377, %v3231, %v3230
        %v3233 = vrot.slane %v2891, 4
        %v3234 = vsel %vm380, %v3233, %v3232
        %v3235 = vrot.slane %v2892, 3
        %v3236 = vsel %vm383, %v3235, %v3234
        %v3237 = vrot.slane %v2893, 2
        %v3238 = vsel %vm386, %v3237, %v3236
        %v3239 = vrot.slane %v2894, 1
        %v3240 = vsel %vm389, %v3239, %v3238
        %v3241 = vrot.slane %v2896, 7
        %v3242 = vsel %vm371, %v3241, %v2895
        %v3243 = vrot.slane %v2897, 6
        %v3244 = vsel %vm374, %v3243, %v3242
        %v3245 = vrot.slane %v2898, 5
        %v3246 = vsel %vm377, %v3245, %v3244
        %v3247 = vrot.slane %v2899, 4
        %v3248 = vsel %vm380, %v3247, %v3246
        %v3249 = vrot.slane %v2900, 3
        %v3250 = vsel %vm383, %v3249, %v3248
        %v3251 = vrot.slane %v2901, 2
        %v3252 = vsel %vm386, %v3251, %v3250
        %v3253 = vrot.slane %v2902, 1
        %v3254 = vsel %vm389, %v3253, %v3252
        %3271 = vxpose.xlu0.b32.start [1/16] %v3044, 128
        %3272 = vxpose.xlu0.b32.cont [2/16] %v3058, 128
        %3273 = vxpose.xlu0.b32.cont [3/16] %v3072, 128
        %3274 = vxpose.xlu0.b32.cont [4/16] %v3086, 128
        %3275 = vxpose.xlu0.b32.cont [5/16] %v3100, 128
        %3276 = vxpose.xlu0.b32.cont [6/16] %v3114, 128
        %3277 = vxpose.xlu0.b32.cont [7/16] %v3128, 128
        %3278 = vxpose.xlu0.b32.cont [8/16] %v3142, 128
        %3279 = vxpose.xlu0.b32.cont [9/16] %v3156, 128
        %3280 = vxpose.xlu0.b32.cont [10/16] %v3170, 128
        %3281 = vxpose.xlu0.b32.cont [11/16] %v3184, 128
        %3282 = vxpose.xlu0.b32.cont [12/16] %v3198, 128
        %3283 = vxpose.xlu0.b32.cont [13/16] %v3212, 128
        %3284 = vxpose.xlu0.b32.cont [14/16] %v3226, 128
        %3285 = vxpose.xlu0.b32.cont [15/16] %v3240, 128
        %3286 = vxpose.xlu0.b32.end [16/16] %v3254, 128
        %v3287 = vpop.trf.xlu0
        %v3288 = vpop.trf.xlu0
        %v3289 = vpop.trf.xlu0
        %v3290 = vpop.trf.xlu0
        %v3291 = vpop.trf.xlu0
        %v3292 = vpop.trf.xlu0
        %v3293 = vpop.trf.xlu0
        %v3294 = vpop.trf.xlu0
        %v3295 = vpop.trf.xlu0
        %v3296 = vpop.trf.xlu0
        %v3297 = vpop.trf.xlu0
        %v3298 = vpop.trf.xlu0
        %v3299 = vpop.trf.xlu0
        %v3300 = vpop.trf.xlu0
        %v3301 = vpop.trf.xlu0
        %v3302 = vpop.trf.xlu0
        %s3303 = scalar_lea.vmem [#allocation2], 80
        %3304 = vst [vmem:[%s3303] sm:$0xff] %v3287
        %3305 = vst [vmem:[%s3303 + $0x8] sm:$0xff] %v3288
        %v3306 = vld [vmem:[%s113 + $0x6] sm:$0x1]
        %v3307 = vld [vmem:[%s113 + $0x16] sm:$0x1]
        %v3308 = vld [vmem:[%s113 + $0x26] sm:$0x1]
        %v3309 = vld [vmem:[%s113 + $0x36] sm:$0x1]
        %v3310 = vld [vmem:[%s113 + $0x46] sm:$0x1]
        %v3311 = vld [vmem:[%s113 + $0x56] sm:$0x1]
        %v3312 = vld [vmem:[%s113 + $0x66] sm:$0x1]
        %v3313 = vld [vmem:[%s113 + $0x76] sm:$0x1]
        %v3314 = vld [vmem:[%s113 + $0x86] sm:$0x1]
        %v3315 = vld [vmem:[%s113 + $0x96] sm:$0x1]
        %v3316 = vld [vmem:[%s113 + $0xa6] sm:$0x1]
        %v3317 = vld [vmem:[%s113 + $0xb6] sm:$0x1]
        %v3318 = vld [vmem:[%s113 + $0xc6] sm:$0x1]
        %v3319 = vld [vmem:[%s113 + $0xd6] sm:$0x1]
        %v3320 = vld [vmem:[%s113 + $0xe6] sm:$0x1]
        %v3321 = vld [vmem:[%s113 + $0xf6] sm:$0x1]
        %v3322 = vld [vmem:[%s113 + $0x106] sm:$0x1]
        %v3323 = vld [vmem:[%s113 + $0x116] sm:$0x1]
        %v3324 = vld [vmem:[%s113 + $0x126] sm:$0x1]
        %v3325 = vld [vmem:[%s113 + $0x136] sm:$0x1]
        %v3326 = vld [vmem:[%s113 + $0x146] sm:$0x1]
        %v3327 = vld [vmem:[%s113 + $0x156] sm:$0x1]
        %v3328 = vld [vmem:[%s113 + $0x166] sm:$0x1]
        %v3329 = vld [vmem:[%s113 + $0x176] sm:$0x1]
        %v3330 = vld [vmem:[%s113 + $0x186] sm:$0x1]
        %v3331 = vld [vmem:[%s113 + $0x196] sm:$0x1]
        %v3332 = vld [vmem:[%s113 + $0x1a6] sm:$0x1]
        %v3333 = vld [vmem:[%s113 + $0x1b6] sm:$0x1]
        %v3334 = vld [vmem:[%s113 + $0x1c6] sm:$0x1]
        %v3335 = vld [vmem:[%s113 + $0x1d6] sm:$0x1]
        %v3336 = vld [vmem:[%s113 + $0x1e6] sm:$0x1]
        %v3337 = vld [vmem:[%s113 + $0x1f6] sm:$0x1]
        %v3338 = vld [vmem:[%s113 + $0x206] sm:$0x1]
        %v3339 = vld [vmem:[%s113 + $0x216] sm:$0x1]
        %v3340 = vld [vmem:[%s113 + $0x226] sm:$0x1]
        %v3341 = vld [vmem:[%s113 + $0x236] sm:$0x1]
        %v3342 = vld [vmem:[%s113 + $0x246] sm:$0x1]
        %v3343 = vld [vmem:[%s113 + $0x256] sm:$0x1]
        %v3344 = vld [vmem:[%s113 + $0x266] sm:$0x1]
        %v3345 = vld [vmem:[%s113 + $0x276] sm:$0x1]
        %v3346 = vld [vmem:[%s113 + $0x286] sm:$0x1]
        %v3347 = vld [vmem:[%s113 + $0x296] sm:$0x1]
        %v3348 = vld [vmem:[%s113 + $0x2a6] sm:$0x1]
        %v3349 = vld [vmem:[%s113 + $0x2b6] sm:$0x1]
        %v3350 = vld [vmem:[%s113 + $0x2c6] sm:$0x1]
        %v3351 = vld [vmem:[%s113 + $0x2d6] sm:$0x1]
        %v3352 = vld [vmem:[%s113 + $0x2e6] sm:$0x1]
        %v3353 = vld [vmem:[%s113 + $0x2f6] sm:$0x1]
        %v3354 = vld [vmem:[%s113 + $0x306] sm:$0x1]
        %v3355 = vld [vmem:[%s113 + $0x316] sm:$0x1]
        %v3356 = vld [vmem:[%s113 + $0x326] sm:$0x1]
        %v3357 = vld [vmem:[%s113 + $0x336] sm:$0x1]
        %v3358 = vld [vmem:[%s113 + $0x346] sm:$0x1]
        %v3359 = vld [vmem:[%s113 + $0x356] sm:$0x1]
        %v3360 = vld [vmem:[%s113 + $0x366] sm:$0x1]
        %v3361 = vld [vmem:[%s113 + $0x376] sm:$0x1]
        %v3362 = vld [vmem:[%s113 + $0x386] sm:$0x1]
        %v3363 = vld [vmem:[%s113 + $0x396] sm:$0x1]
        %v3364 = vld [vmem:[%s113 + $0x3a6] sm:$0x1]
        %v3365 = vld [vmem:[%s113 + $0x3b6] sm:$0x1]
        %v3366 = vld [vmem:[%s113 + $0x3c6] sm:$0x1]
        %v3367 = vld [vmem:[%s113 + $0x3d6] sm:$0x1]
        %v3368 = vld [vmem:[%s113 + $0x3e6] sm:$0x1]
        %v3369 = vld [vmem:[%s113 + $0x3f6] sm:$0x1]
        %v3370 = vld [vmem:[%s113 + $0x406] sm:$0x1]
        %v3371 = vld [vmem:[%s113 + $0x416] sm:$0x1]
        %v3372 = vld [vmem:[%s113 + $0x426] sm:$0x1]
        %v3373 = vld [vmem:[%s113 + $0x436] sm:$0x1]
        %v3374 = vld [vmem:[%s113 + $0x446] sm:$0x1]
        %v3375 = vld [vmem:[%s113 + $0x456] sm:$0x1]
        %v3376 = vld [vmem:[%s113 + $0x466] sm:$0x1]
        %v3377 = vld [vmem:[%s113 + $0x476] sm:$0x1]
        %v3378 = vld [vmem:[%s113 + $0x486] sm:$0x1]
        %v3379 = vld [vmem:[%s113 + $0x496] sm:$0x1]
        %v3380 = vld [vmem:[%s113 + $0x4a6] sm:$0x1]
        %v3381 = vld [vmem:[%s113 + $0x4b6] sm:$0x1]
        %v3382 = vld [vmem:[%s113 + $0x4c6] sm:$0x1]
        %v3383 = vld [vmem:[%s113 + $0x4d6] sm:$0x1]
        %v3384 = vld [vmem:[%s113 + $0x4e6] sm:$0x1]
        %v3385 = vld [vmem:[%s113 + $0x4f6] sm:$0x1]
        %v3386 = vld [vmem:[%s113 + $0x506] sm:$0x1]
        %v3387 = vld [vmem:[%s113 + $0x516] sm:$0x1]
        %v3388 = vld [vmem:[%s113 + $0x526] sm:$0x1]
        %v3389 = vld [vmem:[%s113 + $0x536] sm:$0x1]
        %v3390 = vld [vmem:[%s113 + $0x546] sm:$0x1]
        %v3391 = vld [vmem:[%s113 + $0x556] sm:$0x1]
        %v3392 = vld [vmem:[%s113 + $0x566] sm:$0x1]
        %v3393 = vld [vmem:[%s113 + $0x576] sm:$0x1]
        %v3394 = vld [vmem:[%s113 + $0x586] sm:$0x1]
        %v3395 = vld [vmem:[%s113 + $0x596] sm:$0x1]
        %v3396 = vld [vmem:[%s113 + $0x5a6] sm:$0x1]
        %v3397 = vld [vmem:[%s113 + $0x5b6] sm:$0x1]
        %v3398 = vld [vmem:[%s113 + $0x5c6] sm:$0x1]
        %v3399 = vld [vmem:[%s113 + $0x5d6] sm:$0x1]
        %v3400 = vld [vmem:[%s113 + $0x5e6] sm:$0x1]
        %v3401 = vld [vmem:[%s113 + $0x5f6] sm:$0x1]
        %v3402 = vld [vmem:[%s113 + $0x606] sm:$0x1]
        %v3403 = vld [vmem:[%s113 + $0x616] sm:$0x1]
        %v3404 = vld [vmem:[%s113 + $0x626] sm:$0x1]
        %v3405 = vld [vmem:[%s113 + $0x636] sm:$0x1]
        %v3406 = vld [vmem:[%s113 + $0x646] sm:$0x1]
        %v3407 = vld [vmem:[%s113 + $0x656] sm:$0x1]
        %v3408 = vld [vmem:[%s113 + $0x666] sm:$0x1]
        %v3409 = vld [vmem:[%s113 + $0x676] sm:$0x1]
        %v3410 = vld [vmem:[%s113 + $0x686] sm:$0x1]
        %v3411 = vld [vmem:[%s113 + $0x696] sm:$0x1]
        %v3412 = vld [vmem:[%s113 + $0x6a6] sm:$0x1]
        %v3413 = vld [vmem:[%s113 + $0x6b6] sm:$0x1]
        %v3414 = vld [vmem:[%s113 + $0x6c6] sm:$0x1]
        %v3415 = vld [vmem:[%s113 + $0x6d6] sm:$0x1]
        %v3416 = vld [vmem:[%s113 + $0x6e6] sm:$0x1]
        %v3417 = vld [vmem:[%s113 + $0x6f6] sm:$0x1]
        %v3418 = vld [vmem:[%s113 + $0x706] sm:$0x1]
        %v3419 = vld [vmem:[%s113 + $0x716] sm:$0x1]
        %v3420 = vld [vmem:[%s113 + $0x726] sm:$0x1]
        %v3421 = vld [vmem:[%s113 + $0x736] sm:$0x1]
        %v3422 = vld [vmem:[%s113 + $0x746] sm:$0x1]
        %v3423 = vld [vmem:[%s113 + $0x756] sm:$0x1]
        %v3424 = vld [vmem:[%s113 + $0x766] sm:$0x1]
        %v3425 = vld [vmem:[%s113 + $0x776] sm:$0x1]
        %v3426 = vld [vmem:[%s113 + $0x786] sm:$0x1]
        %v3427 = vld [vmem:[%s113 + $0x796] sm:$0x1]
        %v3428 = vld [vmem:[%s113 + $0x7a6] sm:$0x1]
        %v3429 = vld [vmem:[%s113 + $0x7b6] sm:$0x1]
        %v3430 = vld [vmem:[%s113 + $0x7c6] sm:$0x1]
        %v3431 = vld [vmem:[%s113 + $0x7d6] sm:$0x1]
        %v3432 = vld [vmem:[%s113 + $0x7e6] sm:$0x1]
        %v3433 = vld [vmem:[%s113 + $0x7f6] sm:$0x1]
        %v3562 = vrot.slane %v3307, 7
        %v3563 = vsel %vm371, %v3562, %v3306
        %v3564 = vrot.slane %v3308, 6
        %v3565 = vsel %vm374, %v3564, %v3563
        %v3566 = vrot.slane %v3309, 5
        %v3567 = vsel %vm377, %v3566, %v3565
        %v3568 = vrot.slane %v3310, 4
        %v3569 = vsel %vm380, %v3568, %v3567
        %v3570 = vrot.slane %v3311, 3
        %v3571 = vsel %vm383, %v3570, %v3569
        %v3572 = vrot.slane %v3312, 2
        %v3573 = vsel %vm386, %v3572, %v3571
        %v3574 = vrot.slane %v3313, 1
        %v3575 = vsel %vm389, %v3574, %v3573
        %v3576 = vrot.slane %v3315, 7
        %v3577 = vsel %vm371, %v3576, %v3314
        %v3578 = vrot.slane %v3316, 6
        %v3579 = vsel %vm374, %v3578, %v3577
        %v3580 = vrot.slane %v3317, 5
        %v3581 = vsel %vm377, %v3580, %v3579
        %v3582 = vrot.slane %v3318, 4
        %v3583 = vsel %vm380, %v3582, %v3581
        %v3584 = vrot.slane %v3319, 3
        %v3585 = vsel %vm383, %v3584, %v3583
        %v3586 = vrot.slane %v3320, 2
        %v3587 = vsel %vm386, %v3586, %v3585
        %v3588 = vrot.slane %v3321, 1
        %v3589 = vsel %vm389, %v3588, %v3587
        %v3590 = vrot.slane %v3323, 7
        %v3591 = vsel %vm371, %v3590, %v3322
        %v3592 = vrot.slane %v3324, 6
        %v3593 = vsel %vm374, %v3592, %v3591
        %v3594 = vrot.slane %v3325, 5
        %v3595 = vsel %vm377, %v3594, %v3593
        %v3596 = vrot.slane %v3326, 4
        %v3597 = vsel %vm380, %v3596, %v3595
        %v3598 = vrot.slane %v3327, 3
        %v3599 = vsel %vm383, %v3598, %v3597
        %v3600 = vrot.slane %v3328, 2
        %v3601 = vsel %vm386, %v3600, %v3599
        %v3602 = vrot.slane %v3329, 1
        %v3603 = vsel %vm389, %v3602, %v3601
        %v3604 = vrot.slane %v3331, 7
        %v3605 = vsel %vm371, %v3604, %v3330
        %v3606 = vrot.slane %v3332, 6
        %v3607 = vsel %vm374, %v3606, %v3605
        %v3608 = vrot.slane %v3333, 5
        %v3609 = vsel %vm377, %v3608, %v3607
        %v3610 = vrot.slane %v3334, 4
        %v3611 = vsel %vm380, %v3610, %v3609
        %v3612 = vrot.slane %v3335, 3
        %v3613 = vsel %vm383, %v3612, %v3611
        %v3614 = vrot.slane %v3336, 2
        %v3615 = vsel %vm386, %v3614, %v3613
        %v3616 = vrot.slane %v3337, 1
        %v3617 = vsel %vm389, %v3616, %v3615
        %v3618 = vrot.slane %v3339, 7
        %v3619 = vsel %vm371, %v3618, %v3338
        %v3620 = vrot.slane %v3340, 6
        %v3621 = vsel %vm374, %v3620, %v3619
        %v3622 = vrot.slane %v3341, 5
        %v3623 = vsel %vm377, %v3622, %v3621
        %v3624 = vrot.slane %v3342, 4
        %v3625 = vsel %vm380, %v3624, %v3623
        %v3626 = vrot.slane %v3343, 3
        %v3627 = vsel %vm383, %v3626, %v3625
        %v3628 = vrot.slane %v3344, 2
        %v3629 = vsel %vm386, %v3628, %v3627
        %v3630 = vrot.slane %v3345, 1
        %v3631 = vsel %vm389, %v3630, %v3629
        %v3632 = vrot.slane %v3347, 7
        %v3633 = vsel %vm371, %v3632, %v3346
        %v3634 = vrot.slane %v3348, 6
        %v3635 = vsel %vm374, %v3634, %v3633
        %v3636 = vrot.slane %v3349, 5
        %v3637 = vsel %vm377, %v3636, %v3635
        %v3638 = vrot.slane %v3350, 4
        %v3639 = vsel %vm380, %v3638, %v3637
        %v3640 = vrot.slane %v3351, 3
        %v3641 = vsel %vm383, %v3640, %v3639
        %v3642 = vrot.slane %v3352, 2
        %v3643 = vsel %vm386, %v3642, %v3641
        %v3644 = vrot.slane %v3353, 1
        %v3645 = vsel %vm389, %v3644, %v3643
        %v3646 = vrot.slane %v3355, 7
        %v3647 = vsel %vm371, %v3646, %v3354
        %v3648 = vrot.slane %v3356, 6
        %v3649 = vsel %vm374, %v3648, %v3647
        %v3650 = vrot.slane %v3357, 5
        %v3651 = vsel %vm377, %v3650, %v3649
        %v3652 = vrot.slane %v3358, 4
        %v3653 = vsel %vm380, %v3652, %v3651
        %v3654 = vrot.slane %v3359, 3
        %v3655 = vsel %vm383, %v3654, %v3653
        %v3656 = vrot.slane %v3360, 2
        %v3657 = vsel %vm386, %v3656, %v3655
        %v3658 = vrot.slane %v3361, 1
        %v3659 = vsel %vm389, %v3658, %v3657
        %v3660 = vrot.slane %v3363, 7
        %v3661 = vsel %vm371, %v3660, %v3362
        %v3662 = vrot.slane %v3364, 6
        %v3663 = vsel %vm374, %v3662, %v3661
        %v3664 = vrot.slane %v3365, 5
        %v3665 = vsel %vm377, %v3664, %v3663
        %v3666 = vrot.slane %v3366, 4
        %v3667 = vsel %vm380, %v3666, %v3665
        %v3668 = vrot.slane %v3367, 3
        %v3669 = vsel %vm383, %v3668, %v3667
        %v3670 = vrot.slane %v3368, 2
        %v3671 = vsel %vm386, %v3670, %v3669
        %v3672 = vrot.slane %v3369, 1
        %v3673 = vsel %vm389, %v3672, %v3671
        %v3674 = vrot.slane %v3371, 7
        %v3675 = vsel %vm371, %v3674, %v3370
        %v3676 = vrot.slane %v3372, 6
        %v3677 = vsel %vm374, %v3676, %v3675
        %v3678 = vrot.slane %v3373, 5
        %v3679 = vsel %vm377, %v3678, %v3677
        %v3680 = vrot.slane %v3374, 4
        %v3681 = vsel %vm380, %v3680, %v3679
        %v3682 = vrot.slane %v3375, 3
        %v3683 = vsel %vm383, %v3682, %v3681
        %v3684 = vrot.slane %v3376, 2
        %v3685 = vsel %vm386, %v3684, %v3683
        %v3686 = vrot.slane %v3377, 1
        %v3687 = vsel %vm389, %v3686, %v3685
        %v3688 = vrot.slane %v3379, 7
        %v3689 = vsel %vm371, %v3688, %v3378
        %v3690 = vrot.slane %v3380, 6
        %v3691 = vsel %vm374, %v3690, %v3689
        %v3692 = vrot.slane %v3381, 5
        %v3693 = vsel %vm377, %v3692, %v3691
        %v3694 = vrot.slane %v3382, 4
        %v3695 = vsel %vm380, %v3694, %v3693
        %v3696 = vrot.slane %v3383, 3
        %v3697 = vsel %vm383, %v3696, %v3695
        %v3698 = vrot.slane %v3384, 2
        %v3699 = vsel %vm386, %v3698, %v3697
        %v3700 = vrot.slane %v3385, 1
        %v3701 = vsel %vm389, %v3700, %v3699
        %v3702 = vrot.slane %v3387, 7
        %v3703 = vsel %vm371, %v3702, %v3386
        %v3704 = vrot.slane %v3388, 6
        %v3705 = vsel %vm374, %v3704, %v3703
        %v3706 = vrot.slane %v3389, 5
        %v3707 = vsel %vm377, %v3706, %v3705
        %v3708 = vrot.slane %v3390, 4
        %v3709 = vsel %vm380, %v3708, %v3707
        %v3710 = vrot.slane %v3391, 3
        %v3711 = vsel %vm383, %v3710, %v3709
        %v3712 = vrot.slane %v3392, 2
        %v3713 = vsel %vm386, %v3712, %v3711
        %v3714 = vrot.slane %v3393, 1
        %v3715 = vsel %vm389, %v3714, %v3713
        %v3716 = vrot.slane %v3395, 7
        %v3717 = vsel %vm371, %v3716, %v3394
        %v3718 = vrot.slane %v3396, 6
        %v3719 = vsel %vm374, %v3718, %v3717
        %v3720 = vrot.slane %v3397, 5
        %v3721 = vsel %vm377, %v3720, %v3719
        %v3722 = vrot.slane %v3398, 4
        %v3723 = vsel %vm380, %v3722, %v3721
        %v3724 = vrot.slane %v3399, 3
        %v3725 = vsel %vm383, %v3724, %v3723
        %v3726 = vrot.slane %v3400, 2
        %v3727 = vsel %vm386, %v3726, %v3725
        %v3728 = vrot.slane %v3401, 1
        %v3729 = vsel %vm389, %v3728, %v3727
        %v3730 = vrot.slane %v3403, 7
        %v3731 = vsel %vm371, %v3730, %v3402
        %v3732 = vrot.slane %v3404, 6
        %v3733 = vsel %vm374, %v3732, %v3731
        %v3734 = vrot.slane %v3405, 5
        %v3735 = vsel %vm377, %v3734, %v3733
        %v3736 = vrot.slane %v3406, 4
        %v3737 = vsel %vm380, %v3736, %v3735
        %v3738 = vrot.slane %v3407, 3
        %v3739 = vsel %vm383, %v3738, %v3737
        %v3740 = vrot.slane %v3408, 2
        %v3741 = vsel %vm386, %v3740, %v3739
        %v3742 = vrot.slane %v3409, 1
        %v3743 = vsel %vm389, %v3742, %v3741
        %v3744 = vrot.slane %v3411, 7
        %v3745 = vsel %vm371, %v3744, %v3410
        %v3746 = vrot.slane %v3412, 6
        %v3747 = vsel %vm374, %v3746, %v3745
        %v3748 = vrot.slane %v3413, 5
        %v3749 = vsel %vm377, %v3748, %v3747
        %v3750 = vrot.slane %v3414, 4
        %v3751 = vsel %vm380, %v3750, %v3749
        %v3752 = vrot.slane %v3415, 3
        %v3753 = vsel %vm383, %v3752, %v3751
        %v3754 = vrot.slane %v3416, 2
        %v3755 = vsel %vm386, %v3754, %v3753
        %v3756 = vrot.slane %v3417, 1
        %v3757 = vsel %vm389, %v3756, %v3755
        %v3758 = vrot.slane %v3419, 7
        %v3759 = vsel %vm371, %v3758, %v3418
        %v3760 = vrot.slane %v3420, 6
        %v3761 = vsel %vm374, %v3760, %v3759
        %v3762 = vrot.slane %v3421, 5
        %v3763 = vsel %vm377, %v3762, %v3761
        %v3764 = vrot.slane %v3422, 4
        %v3765 = vsel %vm380, %v3764, %v3763
        %v3766 = vrot.slane %v3423, 3
        %v3767 = vsel %vm383, %v3766, %v3765
        %v3768 = vrot.slane %v3424, 2
        %v3769 = vsel %vm386, %v3768, %v3767
        %v3770 = vrot.slane %v3425, 1
        %v3771 = vsel %vm389, %v3770, %v3769
        %v3772 = vrot.slane %v3427, 7
        %v3773 = vsel %vm371, %v3772, %v3426
        %v3774 = vrot.slane %v3428, 6
        %v3775 = vsel %vm374, %v3774, %v3773
        %v3776 = vrot.slane %v3429, 5
        %v3777 = vsel %vm377, %v3776, %v3775
        %v3778 = vrot.slane %v3430, 4
        %v3779 = vsel %vm380, %v3778, %v3777
        %v3780 = vrot.slane %v3431, 3
        %v3781 = vsel %vm383, %v3780, %v3779
        %v3782 = vrot.slane %v3432, 2
        %v3783 = vsel %vm386, %v3782, %v3781
        %v3784 = vrot.slane %v3433, 1
        %v3785 = vsel %vm389, %v3784, %v3783
        %3802 = vxpose.xlu0.b32.start [1/16] %v3575, 128
        %3803 = vxpose.xlu0.b32.cont [2/16] %v3589, 128
        %3804 = vxpose.xlu0.b32.cont [3/16] %v3603, 128
        %3805 = vxpose.xlu0.b32.cont [4/16] %v3617, 128
        %3806 = vxpose.xlu0.b32.cont [5/16] %v3631, 128
        %3807 = vxpose.xlu0.b32.cont [6/16] %v3645, 128
        %3808 = vxpose.xlu0.b32.cont [7/16] %v3659, 128
        %3809 = vxpose.xlu0.b32.cont [8/16] %v3673, 128
        %3810 = vxpose.xlu0.b32.cont [9/16] %v3687, 128
        %3811 = vxpose.xlu0.b32.cont [10/16] %v3701, 128
        %3812 = vxpose.xlu0.b32.cont [11/16] %v3715, 128
        %3813 = vxpose.xlu0.b32.cont [12/16] %v3729, 128
        %3814 = vxpose.xlu0.b32.cont [13/16] %v3743, 128
        %3815 = vxpose.xlu0.b32.cont [14/16] %v3757, 128
        %3816 = vxpose.xlu0.b32.cont [15/16] %v3771, 128
        %3817 = vxpose.xlu0.b32.end [16/16] %v3785, 128
        %v3818 = vpop.trf.xlu0
        %v3819 = vpop.trf.xlu0
        %v3820 = vpop.trf.xlu0
        %v3821 = vpop.trf.xlu0
        %v3822 = vpop.trf.xlu0
        %v3823 = vpop.trf.xlu0
        %v3824 = vpop.trf.xlu0
        %v3825 = vpop.trf.xlu0
        %v3826 = vpop.trf.xlu0
        %v3827 = vpop.trf.xlu0
        %v3828 = vpop.trf.xlu0
        %v3829 = vpop.trf.xlu0
        %v3830 = vpop.trf.xlu0
        %v3831 = vpop.trf.xlu0
        %v3832 = vpop.trf.xlu0
        %v3833 = vpop.trf.xlu0
        %s3834 = scalar_lea.vmem [#allocation2], 96
        %3835 = vst [vmem:[%s3834] sm:$0xff] %v3818
        %3836 = vst [vmem:[%s3834 + $0x8] sm:$0xff] %v3819
        %v3837 = vld [vmem:[%s113 + $0x7] sm:$0x1]
        %v3838 = vld [vmem:[%s113 + $0x17] sm:$0x1]
        %v3839 = vld [vmem:[%s113 + $0x27] sm:$0x1]
        %v3840 = vld [vmem:[%s113 + $0x37] sm:$0x1]
        %v3841 = vld [vmem:[%s113 + $0x47] sm:$0x1]
        %v3842 = vld [vmem:[%s113 + $0x57] sm:$0x1]
        %v3843 = vld [vmem:[%s113 + $0x67] sm:$0x1]
        %v3844 = vld [vmem:[%s113 + $0x77] sm:$0x1]
        %v3845 = vld [vmem:[%s113 + $0x87] sm:$0x1]
        %v3846 = vld [vmem:[%s113 + $0x97] sm:$0x1]
        %v3847 = vld [vmem:[%s113 + $0xa7] sm:$0x1]
        %v3848 = vld [vmem:[%s113 + $0xb7] sm:$0x1]
        %v3849 = vld [vmem:[%s113 + $0xc7] sm:$0x1]
        %v3850 = vld [vmem:[%s113 + $0xd7] sm:$0x1]
        %v3851 = vld [vmem:[%s113 + $0xe7] sm:$0x1]
        %v3852 = vld [vmem:[%s113 + $0xf7] sm:$0x1]
        %v3853 = vld [vmem:[%s113 + $0x107] sm:$0x1]
        %v3854 = vld [vmem:[%s113 + $0x117] sm:$0x1]
        %v3855 = vld [vmem:[%s113 + $0x127] sm:$0x1]
        %v3856 = vld [vmem:[%s113 + $0x137] sm:$0x1]
        %v3857 = vld [vmem:[%s113 + $0x147] sm:$0x1]
        %v3858 = vld [vmem:[%s113 + $0x157] sm:$0x1]
        %v3859 = vld [vmem:[%s113 + $0x167] sm:$0x1]
        %v3860 = vld [vmem:[%s113 + $0x177] sm:$0x1]
        %v3861 = vld [vmem:[%s113 + $0x187] sm:$0x1]
        %v3862 = vld [vmem:[%s113 + $0x197] sm:$0x1]
        %v3863 = vld [vmem:[%s113 + $0x1a7] sm:$0x1]
        %v3864 = vld [vmem:[%s113 + $0x1b7] sm:$0x1]
        %v3865 = vld [vmem:[%s113 + $0x1c7] sm:$0x1]
        %v3866 = vld [vmem:[%s113 + $0x1d7] sm:$0x1]
        %v3867 = vld [vmem:[%s113 + $0x1e7] sm:$0x1]
        %v3868 = vld [vmem:[%s113 + $0x1f7] sm:$0x1]
        %v3869 = vld [vmem:[%s113 + $0x207] sm:$0x1]
        %v3870 = vld [vmem:[%s113 + $0x217] sm:$0x1]
        %v3871 = vld [vmem:[%s113 + $0x227] sm:$0x1]
        %v3872 = vld [vmem:[%s113 + $0x237] sm:$0x1]
        %v3873 = vld [vmem:[%s113 + $0x247] sm:$0x1]
        %v3874 = vld [vmem:[%s113 + $0x257] sm:$0x1]
        %v3875 = vld [vmem:[%s113 + $0x267] sm:$0x1]
        %v3876 = vld [vmem:[%s113 + $0x277] sm:$0x1]
        %v3877 = vld [vmem:[%s113 + $0x287] sm:$0x1]
        %v3878 = vld [vmem:[%s113 + $0x297] sm:$0x1]
        %v3879 = vld [vmem:[%s113 + $0x2a7] sm:$0x1]
        %v3880 = vld [vmem:[%s113 + $0x2b7] sm:$0x1]
        %v3881 = vld [vmem:[%s113 + $0x2c7] sm:$0x1]
        %v3882 = vld [vmem:[%s113 + $0x2d7] sm:$0x1]
        %v3883 = vld [vmem:[%s113 + $0x2e7] sm:$0x1]
        %v3884 = vld [vmem:[%s113 + $0x2f7] sm:$0x1]
        %v3885 = vld [vmem:[%s113 + $0x307] sm:$0x1]
        %v3886 = vld [vmem:[%s113 + $0x317] sm:$0x1]
        %v3887 = vld [vmem:[%s113 + $0x327] sm:$0x1]
        %v3888 = vld [vmem:[%s113 + $0x337] sm:$0x1]
        %v3889 = vld [vmem:[%s113 + $0x347] sm:$0x1]
        %v3890 = vld [vmem:[%s113 + $0x357] sm:$0x1]
        %v3891 = vld [vmem:[%s113 + $0x367] sm:$0x1]
        %v3892 = vld [vmem:[%s113 + $0x377] sm:$0x1]
        %v3893 = vld [vmem:[%s113 + $0x387] sm:$0x1]
        %v3894 = vld [vmem:[%s113 + $0x397] sm:$0x1]
        %v3895 = vld [vmem:[%s113 + $0x3a7] sm:$0x1]
        %v3896 = vld [vmem:[%s113 + $0x3b7] sm:$0x1]
        %v3897 = vld [vmem:[%s113 + $0x3c7] sm:$0x1]
        %v3898 = vld [vmem:[%s113 + $0x3d7] sm:$0x1]
        %v3899 = vld [vmem:[%s113 + $0x3e7] sm:$0x1]
        %v3900 = vld [vmem:[%s113 + $0x3f7] sm:$0x1]
        %v3901 = vld [vmem:[%s113 + $0x407] sm:$0x1]
        %v3902 = vld [vmem:[%s113 + $0x417] sm:$0x1]
        %v3903 = vld [vmem:[%s113 + $0x427] sm:$0x1]
        %v3904 = vld [vmem:[%s113 + $0x437] sm:$0x1]
        %v3905 = vld [vmem:[%s113 + $0x447] sm:$0x1]
        %v3906 = vld [vmem:[%s113 + $0x457] sm:$0x1]
        %v3907 = vld [vmem:[%s113 + $0x467] sm:$0x1]
        %v3908 = vld [vmem:[%s113 + $0x477] sm:$0x1]
        %v3909 = vld [vmem:[%s113 + $0x487] sm:$0x1]
        %v3910 = vld [vmem:[%s113 + $0x497] sm:$0x1]
        %v3911 = vld [vmem:[%s113 + $0x4a7] sm:$0x1]
        %v3912 = vld [vmem:[%s113 + $0x4b7] sm:$0x1]
        %v3913 = vld [vmem:[%s113 + $0x4c7] sm:$0x1]
        %v3914 = vld [vmem:[%s113 + $0x4d7] sm:$0x1]
        %v3915 = vld [vmem:[%s113 + $0x4e7] sm:$0x1]
        %v3916 = vld [vmem:[%s113 + $0x4f7] sm:$0x1]
        %v3917 = vld [vmem:[%s113 + $0x507] sm:$0x1]
        %v3918 = vld [vmem:[%s113 + $0x517] sm:$0x1]
        %v3919 = vld [vmem:[%s113 + $0x527] sm:$0x1]
        %v3920 = vld [vmem:[%s113 + $0x537] sm:$0x1]
        %v3921 = vld [vmem:[%s113 + $0x547] sm:$0x1]
        %v3922 = vld [vmem:[%s113 + $0x557] sm:$0x1]
        %v3923 = vld [vmem:[%s113 + $0x567] sm:$0x1]
        %v3924 = vld [vmem:[%s113 + $0x577] sm:$0x1]
        %v3925 = vld [vmem:[%s113 + $0x587] sm:$0x1]
        %v3926 = vld [vmem:[%s113 + $0x597] sm:$0x1]
        %v3927 = vld [vmem:[%s113 + $0x5a7] sm:$0x1]
        %v3928 = vld [vmem:[%s113 + $0x5b7] sm:$0x1]
        %v3929 = vld [vmem:[%s113 + $0x5c7] sm:$0x1]
        %v3930 = vld [vmem:[%s113 + $0x5d7] sm:$0x1]
        %v3931 = vld [vmem:[%s113 + $0x5e7] sm:$0x1]
        %v3932 = vld [vmem:[%s113 + $0x5f7] sm:$0x1]
        %v3933 = vld [vmem:[%s113 + $0x607] sm:$0x1]
        %v3934 = vld [vmem:[%s113 + $0x617] sm:$0x1]
        %v3935 = vld [vmem:[%s113 + $0x627] sm:$0x1]
        %v3936 = vld [vmem:[%s113 + $0x637] sm:$0x1]
        %v3937 = vld [vmem:[%s113 + $0x647] sm:$0x1]
        %v3938 = vld [vmem:[%s113 + $0x657] sm:$0x1]
        %v3939 = vld [vmem:[%s113 + $0x667] sm:$0x1]
        %v3940 = vld [vmem:[%s113 + $0x677] sm:$0x1]
        %v3941 = vld [vmem:[%s113 + $0x687] sm:$0x1]
        %v3942 = vld [vmem:[%s113 + $0x697] sm:$0x1]
        %v3943 = vld [vmem:[%s113 + $0x6a7] sm:$0x1]
        %v3944 = vld [vmem:[%s113 + $0x6b7] sm:$0x1]
        %v3945 = vld [vmem:[%s113 + $0x6c7] sm:$0x1]
        %v3946 = vld [vmem:[%s113 + $0x6d7] sm:$0x1]
        %v3947 = vld [vmem:[%s113 + $0x6e7] sm:$0x1]
        %v3948 = vld [vmem:[%s113 + $0x6f7] sm:$0x1]
        %v3949 = vld [vmem:[%s113 + $0x707] sm:$0x1]
        %v3950 = vld [vmem:[%s113 + $0x717] sm:$0x1]
        %v3951 = vld [vmem:[%s113 + $0x727] sm:$0x1]
        %v3952 = vld [vmem:[%s113 + $0x737] sm:$0x1]
        %v3953 = vld [vmem:[%s113 + $0x747] sm:$0x1]
        %v3954 = vld [vmem:[%s113 + $0x757] sm:$0x1]
        %v3955 = vld [vmem:[%s113 + $0x767] sm:$0x1]
        %v3956 = vld [vmem:[%s113 + $0x777] sm:$0x1]
        %v3957 = vld [vmem:[%s113 + $0x787] sm:$0x1]
        %v3958 = vld [vmem:[%s113 + $0x797] sm:$0x1]
        %v3959 = vld [vmem:[%s113 + $0x7a7] sm:$0x1]
        %v3960 = vld [vmem:[%s113 + $0x7b7] sm:$0x1]
        %v3961 = vld [vmem:[%s113 + $0x7c7] sm:$0x1]
        %v3962 = vld [vmem:[%s113 + $0x7d7] sm:$0x1]
        %v3963 = vld [vmem:[%s113 + $0x7e7] sm:$0x1]
        %v3964 = vld [vmem:[%s113 + $0x7f7] sm:$0x1]
        %v4093 = vrot.slane %v3838, 7
        %v4094 = vsel %vm371, %v4093, %v3837
        %v4095 = vrot.slane %v3839, 6
        %v4096 = vsel %vm374, %v4095, %v4094
        %v4097 = vrot.slane %v3840, 5
        %v4098 = vsel %vm377, %v4097, %v4096
        %v4099 = vrot.slane %v3841, 4
        %v4100 = vsel %vm380, %v4099, %v4098
        %v4101 = vrot.slane %v3842, 3
        %v4102 = vsel %vm383, %v4101, %v4100
        %v4103 = vrot.slane %v3843, 2
        %v4104 = vsel %vm386, %v4103, %v4102
        %v4105 = vrot.slane %v3844, 1
        %v4106 = vsel %vm389, %v4105, %v4104
        %v4107 = vrot.slane %v3846, 7
        %v4108 = vsel %vm371, %v4107, %v3845
        %v4109 = vrot.slane %v3847, 6
        %v4110 = vsel %vm374, %v4109, %v4108
        %v4111 = vrot.slane %v3848, 5
        %v4112 = vsel %vm377, %v4111, %v4110
        %v4113 = vrot.slane %v3849, 4
        %v4114 = vsel %vm380, %v4113, %v4112
        %v4115 = vrot.slane %v3850, 3
        %v4116 = vsel %vm383, %v4115, %v4114
        %v4117 = vrot.slane %v3851, 2
        %v4118 = vsel %vm386, %v4117, %v4116
        %v4119 = vrot.slane %v3852, 1
        %v4120 = vsel %vm389, %v4119, %v4118
        %v4121 = vrot.slane %v3854, 7
        %v4122 = vsel %vm371, %v4121, %v3853
        %v4123 = vrot.slane %v3855, 6
        %v4124 = vsel %vm374, %v4123, %v4122
        %v4125 = vrot.slane %v3856, 5
        %v4126 = vsel %vm377, %v4125, %v4124
        %v4127 = vrot.slane %v3857, 4
        %v4128 = vsel %vm380, %v4127, %v4126
        %v4129 = vrot.slane %v3858, 3
        %v4130 = vsel %vm383, %v4129, %v4128
        %v4131 = vrot.slane %v3859, 2
        %v4132 = vsel %vm386, %v4131, %v4130
        %v4133 = vrot.slane %v3860, 1
        %v4134 = vsel %vm389, %v4133, %v4132
        %v4135 = vrot.slane %v3862, 7
        %v4136 = vsel %vm371, %v4135, %v3861
        %v4137 = vrot.slane %v3863, 6
        %v4138 = vsel %vm374, %v4137, %v4136
        %v4139 = vrot.slane %v3864, 5
        %v4140 = vsel %vm377, %v4139, %v4138
        %v4141 = vrot.slane %v3865, 4
        %v4142 = vsel %vm380, %v4141, %v4140
        %v4143 = vrot.slane %v3866, 3
        %v4144 = vsel %vm383, %v4143, %v4142
        %v4145 = vrot.slane %v3867, 2
        %v4146 = vsel %vm386, %v4145, %v4144
        %v4147 = vrot.slane %v3868, 1
        %v4148 = vsel %vm389, %v4147, %v4146
        %v4149 = vrot.slane %v3870, 7
        %v4150 = vsel %vm371, %v4149, %v3869
        %v4151 = vrot.slane %v3871, 6
        %v4152 = vsel %vm374, %v4151, %v4150
        %v4153 = vrot.slane %v3872, 5
        %v4154 = vsel %vm377, %v4153, %v4152
        %v4155 = vrot.slane %v3873, 4
        %v4156 = vsel %vm380, %v4155, %v4154
        %v4157 = vrot.slane %v3874, 3
        %v4158 = vsel %vm383, %v4157, %v4156
        %v4159 = vrot.slane %v3875, 2
        %v4160 = vsel %vm386, %v4159, %v4158
        %v4161 = vrot.slane %v3876, 1
        %v4162 = vsel %vm389, %v4161, %v4160
        %v4163 = vrot.slane %v3878, 7
        %v4164 = vsel %vm371, %v4163, %v3877
        %v4165 = vrot.slane %v3879, 6
        %v4166 = vsel %vm374, %v4165, %v4164
        %v4167 = vrot.slane %v3880, 5
        %v4168 = vsel %vm377, %v4167, %v4166
        %v4169 = vrot.slane %v3881, 4
        %v4170 = vsel %vm380, %v4169, %v4168
        %v4171 = vrot.slane %v3882, 3
        %v4172 = vsel %vm383, %v4171, %v4170
        %v4173 = vrot.slane %v3883, 2
        %v4174 = vsel %vm386, %v4173, %v4172
        %v4175 = vrot.slane %v3884, 1
        %v4176 = vsel %vm389, %v4175, %v4174
        %v4177 = vrot.slane %v3886, 7
        %v4178 = vsel %vm371, %v4177, %v3885
        %v4179 = vrot.slane %v3887, 6
        %v4180 = vsel %vm374, %v4179, %v4178
        %v4181 = vrot.slane %v3888, 5
        %v4182 = vsel %vm377, %v4181, %v4180
        %v4183 = vrot.slane %v3889, 4
        %v4184 = vsel %vm380, %v4183, %v4182
        %v4185 = vrot.slane %v3890, 3
        %v4186 = vsel %vm383, %v4185, %v4184
        %v4187 = vrot.slane %v3891, 2
        %v4188 = vsel %vm386, %v4187, %v4186
        %v4189 = vrot.slane %v3892, 1
        %v4190 = vsel %vm389, %v4189, %v4188
        %v4191 = vrot.slane %v3894, 7
        %v4192 = vsel %vm371, %v4191, %v3893
        %v4193 = vrot.slane %v3895, 6
        %v4194 = vsel %vm374, %v4193, %v4192
        %v4195 = vrot.slane %v3896, 5
        %v4196 = vsel %vm377, %v4195, %v4194
        %v4197 = vrot.slane %v3897, 4
        %v4198 = vsel %vm380, %v4197, %v4196
        %v4199 = vrot.slane %v3898, 3
        %v4200 = vsel %vm383, %v4199, %v4198
        %v4201 = vrot.slane %v3899, 2
        %v4202 = vsel %vm386, %v4201, %v4200
        %v4203 = vrot.slane %v3900, 1
        %v4204 = vsel %vm389, %v4203, %v4202
        %v4205 = vrot.slane %v3902, 7
        %v4206 = vsel %vm371, %v4205, %v3901
        %v4207 = vrot.slane %v3903, 6
        %v4208 = vsel %vm374, %v4207, %v4206
        %v4209 = vrot.slane %v3904, 5
        %v4210 = vsel %vm377, %v4209, %v4208
        %v4211 = vrot.slane %v3905, 4
        %v4212 = vsel %vm380, %v4211, %v4210
        %v4213 = vrot.slane %v3906, 3
        %v4214 = vsel %vm383, %v4213, %v4212
        %v4215 = vrot.slane %v3907, 2
        %v4216 = vsel %vm386, %v4215, %v4214
        %v4217 = vrot.slane %v3908, 1
        %v4218 = vsel %vm389, %v4217, %v4216
        %v4219 = vrot.slane %v3910, 7
        %v4220 = vsel %vm371, %v4219, %v3909
        %v4221 = vrot.slane %v3911, 6
        %v4222 = vsel %vm374, %v4221, %v4220
        %v4223 = vrot.slane %v3912, 5
        %v4224 = vsel %vm377, %v4223, %v4222
        %v4225 = vrot.slane %v3913, 4
        %v4226 = vsel %vm380, %v4225, %v4224
        %v4227 = vrot.slane %v3914, 3
        %v4228 = vsel %vm383, %v4227, %v4226
        %v4229 = vrot.slane %v3915, 2
        %v4230 = vsel %vm386, %v4229, %v4228
        %v4231 = vrot.slane %v3916, 1
        %v4232 = vsel %vm389, %v4231, %v4230
        %v4233 = vrot.slane %v3918, 7
        %v4234 = vsel %vm371, %v4233, %v3917
        %v4235 = vrot.slane %v3919, 6
        %v4236 = vsel %vm374, %v4235, %v4234
        %v4237 = vrot.slane %v3920, 5
        %v4238 = vsel %vm377, %v4237, %v4236
        %v4239 = vrot.slane %v3921, 4
        %v4240 = vsel %vm380, %v4239, %v4238
        %v4241 = vrot.slane %v3922, 3
        %v4242 = vsel %vm383, %v4241, %v4240
        %v4243 = vrot.slane %v3923, 2
        %v4244 = vsel %vm386, %v4243, %v4242
        %v4245 = vrot.slane %v3924, 1
        %v4246 = vsel %vm389, %v4245, %v4244
        %v4247 = vrot.slane %v3926, 7
        %v4248 = vsel %vm371, %v4247, %v3925
        %v4249 = vrot.slane %v3927, 6
        %v4250 = vsel %vm374, %v4249, %v4248
        %v4251 = vrot.slane %v3928, 5
        %v4252 = vsel %vm377, %v4251, %v4250
        %v4253 = vrot.slane %v3929, 4
        %v4254 = vsel %vm380, %v4253, %v4252
        %v4255 = vrot.slane %v3930, 3
        %v4256 = vsel %vm383, %v4255, %v4254
        %v4257 = vrot.slane %v3931, 2
        %v4258 = vsel %vm386, %v4257, %v4256
        %v4259 = vrot.slane %v3932, 1
        %v4260 = vsel %vm389, %v4259, %v4258
        %v4261 = vrot.slane %v3934, 7
        %v4262 = vsel %vm371, %v4261, %v3933
        %v4263 = vrot.slane %v3935, 6
        %v4264 = vsel %vm374, %v4263, %v4262
        %v4265 = vrot.slane %v3936, 5
        %v4266 = vsel %vm377, %v4265, %v4264
        %v4267 = vrot.slane %v3937, 4
        %v4268 = vsel %vm380, %v4267, %v4266
        %v4269 = vrot.slane %v3938, 3
        %v4270 = vsel %vm383, %v4269, %v4268
        %v4271 = vrot.slane %v3939, 2
        %v4272 = vsel %vm386, %v4271, %v4270
        %v4273 = vrot.slane %v3940, 1
        %v4274 = vsel %vm389, %v4273, %v4272
        %v4275 = vrot.slane %v3942, 7
        %v4276 = vsel %vm371, %v4275, %v3941
        %v4277 = vrot.slane %v3943, 6
        %v4278 = vsel %vm374, %v4277, %v4276
        %v4279 = vrot.slane %v3944, 5
        %v4280 = vsel %vm377, %v4279, %v4278
        %v4281 = vrot.slane %v3945, 4
        %v4282 = vsel %vm380, %v4281, %v4280
        %v4283 = vrot.slane %v3946, 3
        %v4284 = vsel %vm383, %v4283, %v4282
        %v4285 = vrot.slane %v3947, 2
        %v4286 = vsel %vm386, %v4285, %v4284
        %v4287 = vrot.slane %v3948, 1
        %v4288 = vsel %vm389, %v4287, %v4286
        %v4289 = vrot.slane %v3950, 7
        %v4290 = vsel %vm371, %v4289, %v3949
        %v4291 = vrot.slane %v3951, 6
        %v4292 = vsel %vm374, %v4291, %v4290
        %v4293 = vrot.slane %v3952, 5
        %v4294 = vsel %vm377, %v4293, %v4292
        %v4295 = vrot.slane %v3953, 4
        %v4296 = vsel %vm380, %v4295, %v4294
        %v4297 = vrot.slane %v3954, 3
        %v4298 = vsel %vm383, %v4297, %v4296
        %v4299 = vrot.slane %v3955, 2
        %v4300 = vsel %vm386, %v4299, %v4298
        %v4301 = vrot.slane %v3956, 1
        %v4302 = vsel %vm389, %v4301, %v4300
        %v4303 = vrot.slane %v3958, 7
        %v4304 = vsel %vm371, %v4303, %v3957
        %v4305 = vrot.slane %v3959, 6
        %v4306 = vsel %vm374, %v4305, %v4304
        %v4307 = vrot.slane %v3960, 5
        %v4308 = vsel %vm377, %v4307, %v4306
        %v4309 = vrot.slane %v3961, 4
        %v4310 = vsel %vm380, %v4309, %v4308
        %v4311 = vrot.slane %v3962, 3
        %v4312 = vsel %vm383, %v4311, %v4310
        %v4313 = vrot.slane %v3963, 2
        %v4314 = vsel %vm386, %v4313, %v4312
        %v4315 = vrot.slane %v3964, 1
        %v4316 = vsel %vm389, %v4315, %v4314
        %4333 = vxpose.xlu0.b32.start [1/16] %v4106, 128
        %4334 = vxpose.xlu0.b32.cont [2/16] %v4120, 128
        %4335 = vxpose.xlu0.b32.cont [3/16] %v4134, 128
        %4336 = vxpose.xlu0.b32.cont [4/16] %v4148, 128
        %4337 = vxpose.xlu0.b32.cont [5/16] %v4162, 128
        %4338 = vxpose.xlu0.b32.cont [6/16] %v4176, 128
        %4339 = vxpose.xlu0.b32.cont [7/16] %v4190, 128
        %4340 = vxpose.xlu0.b32.cont [8/16] %v4204, 128
        %4341 = vxpose.xlu0.b32.cont [9/16] %v4218, 128
        %4342 = vxpose.xlu0.b32.cont [10/16] %v4232, 128
        %4343 = vxpose.xlu0.b32.cont [11/16] %v4246, 128
        %4344 = vxpose.xlu0.b32.cont [12/16] %v4260, 128
        %4345 = vxpose.xlu0.b32.cont [13/16] %v4274, 128
        %4346 = vxpose.xlu0.b32.cont [14/16] %v4288, 128
        %4347 = vxpose.xlu0.b32.cont [15/16] %v4302, 128
        %4348 = vxpose.xlu0.b32.end [16/16] %v4316, 128
        %v4349 = vpop.trf.xlu0
        %v4350 = vpop.trf.xlu0
        %v4351 = vpop.trf.xlu0
        %v4352 = vpop.trf.xlu0
        %v4353 = vpop.trf.xlu0
        %v4354 = vpop.trf.xlu0
        %v4355 = vpop.trf.xlu0
        %v4356 = vpop.trf.xlu0
        %v4357 = vpop.trf.xlu0
        %v4358 = vpop.trf.xlu0
        %v4359 = vpop.trf.xlu0
        %v4360 = vpop.trf.xlu0
        %v4361 = vpop.trf.xlu0
        %v4362 = vpop.trf.xlu0
        %v4363 = vpop.trf.xlu0
        %v4364 = vpop.trf.xlu0
        %s4365 = scalar_lea.vmem [#allocation2], 112
        %4366 = vst [vmem:[%s4365] sm:$0xff] %v4349
        %4367 = vst [vmem:[%s4365 + $0x8] sm:$0xff] %v4350
        %v4368 = vld [vmem:[%s113 + $0x8] sm:$0x1]
        %v4369 = vld [vmem:[%s113 + $0x18] sm:$0x1]
        %v4370 = vld [vmem:[%s113 + $0x28] sm:$0x1]
        %v4371 = vld [vmem:[%s113 + $0x38] sm:$0x1]
        %v4372 = vld [vmem:[%s113 + $0x48] sm:$0x1]
        %v4373 = vld [vmem:[%s113 + $0x58] sm:$0x1]
        %v4374 = vld [vmem:[%s113 + $0x68] sm:$0x1]
        %v4375 = vld [vmem:[%s113 + $0x78] sm:$0x1]
        %v4376 = vld [vmem:[%s113 + $0x88] sm:$0x1]
        %v4377 = vld [vmem:[%s113 + $0x98] sm:$0x1]
        %v4378 = vld [vmem:[%s113 + $0xa8] sm:$0x1]
        %v4379 = vld [vmem:[%s113 + $0xb8] sm:$0x1]
        %v4380 = vld [vmem:[%s113 + $0xc8] sm:$0x1]
        %v4381 = vld [vmem:[%s113 + $0xd8] sm:$0x1]
        %v4382 = vld [vmem:[%s113 + $0xe8] sm:$0x1]
        %v4383 = vld [vmem:[%s113 + $0xf8] sm:$0x1]
        %v4384 = vld [vmem:[%s113 + $0x108] sm:$0x1]
        %v4385 = vld [vmem:[%s113 + $0x118] sm:$0x1]
        %v4386 = vld [vmem:[%s113 + $0x128] sm:$0x1]
        %v4387 = vld [vmem:[%s113 + $0x138] sm:$0x1]
        %v4388 = vld [vmem:[%s113 + $0x148] sm:$0x1]
        %v4389 = vld [vmem:[%s113 + $0x158] sm:$0x1]
        %v4390 = vld [vmem:[%s113 + $0x168] sm:$0x1]
        %v4391 = vld [vmem:[%s113 + $0x178] sm:$0x1]
        %v4392 = vld [vmem:[%s113 + $0x188] sm:$0x1]
        %v4393 = vld [vmem:[%s113 + $0x198] sm:$0x1]
        %v4394 = vld [vmem:[%s113 + $0x1a8] sm:$0x1]
        %v4395 = vld [vmem:[%s113 + $0x1b8] sm:$0x1]
        %v4396 = vld [vmem:[%s113 + $0x1c8] sm:$0x1]
        %v4397 = vld [vmem:[%s113 + $0x1d8] sm:$0x1]
        %v4398 = vld [vmem:[%s113 + $0x1e8] sm:$0x1]
        %v4399 = vld [vmem:[%s113 + $0x1f8] sm:$0x1]
        %v4400 = vld [vmem:[%s113 + $0x208] sm:$0x1]
        %v4401 = vld [vmem:[%s113 + $0x218] sm:$0x1]
        %v4402 = vld [vmem:[%s113 + $0x228] sm:$0x1]
        %v4403 = vld [vmem:[%s113 + $0x238] sm:$0x1]
        %v4404 = vld [vmem:[%s113 + $0x248] sm:$0x1]
        %v4405 = vld [vmem:[%s113 + $0x258] sm:$0x1]
        %v4406 = vld [vmem:[%s113 + $0x268] sm:$0x1]
        %v4407 = vld [vmem:[%s113 + $0x278] sm:$0x1]
        %v4408 = vld [vmem:[%s113 + $0x288] sm:$0x1]
        %v4409 = vld [vmem:[%s113 + $0x298] sm:$0x1]
        %v4410 = vld [vmem:[%s113 + $0x2a8] sm:$0x1]
        %v4411 = vld [vmem:[%s113 + $0x2b8] sm:$0x1]
        %v4412 = vld [vmem:[%s113 + $0x2c8] sm:$0x1]
        %v4413 = vld [vmem:[%s113 + $0x2d8] sm:$0x1]
        %v4414 = vld [vmem:[%s113 + $0x2e8] sm:$0x1]
        %v4415 = vld [vmem:[%s113 + $0x2f8] sm:$0x1]
        %v4416 = vld [vmem:[%s113 + $0x308] sm:$0x1]
        %v4417 = vld [vmem:[%s113 + $0x318] sm:$0x1]
        %v4418 = vld [vmem:[%s113 + $0x328] sm:$0x1]
        %v4419 = vld [vmem:[%s113 + $0x338] sm:$0x1]
        %v4420 = vld [vmem:[%s113 + $0x348] sm:$0x1]
        %v4421 = vld [vmem:[%s113 + $0x358] sm:$0x1]
        %v4422 = vld [vmem:[%s113 + $0x368] sm:$0x1]
        %v4423 = vld [vmem:[%s113 + $0x378] sm:$0x1]
        %v4424 = vld [vmem:[%s113 + $0x388] sm:$0x1]
        %v4425 = vld [vmem:[%s113 + $0x398] sm:$0x1]
        %v4426 = vld [vmem:[%s113 + $0x3a8] sm:$0x1]
        %v4427 = vld [vmem:[%s113 + $0x3b8] sm:$0x1]
        %v4428 = vld [vmem:[%s113 + $0x3c8] sm:$0x1]
        %v4429 = vld [vmem:[%s113 + $0x3d8] sm:$0x1]
        %v4430 = vld [vmem:[%s113 + $0x3e8] sm:$0x1]
        %v4431 = vld [vmem:[%s113 + $0x3f8] sm:$0x1]
        %v4432 = vld [vmem:[%s113 + $0x408] sm:$0x1]
        %v4433 = vld [vmem:[%s113 + $0x418] sm:$0x1]
        %v4434 = vld [vmem:[%s113 + $0x428] sm:$0x1]
        %v4435 = vld [vmem:[%s113 + $0x438] sm:$0x1]
        %v4436 = vld [vmem:[%s113 + $0x448] sm:$0x1]
        %v4437 = vld [vmem:[%s113 + $0x458] sm:$0x1]
        %v4438 = vld [vmem:[%s113 + $0x468] sm:$0x1]
        %v4439 = vld [vmem:[%s113 + $0x478] sm:$0x1]
        %v4440 = vld [vmem:[%s113 + $0x488] sm:$0x1]
        %v4441 = vld [vmem:[%s113 + $0x498] sm:$0x1]
        %v4442 = vld [vmem:[%s113 + $0x4a8] sm:$0x1]
        %v4443 = vld [vmem:[%s113 + $0x4b8] sm:$0x1]
        %v4444 = vld [vmem:[%s113 + $0x4c8] sm:$0x1]
        %v4445 = vld [vmem:[%s113 + $0x4d8] sm:$0x1]
        %v4446 = vld [vmem:[%s113 + $0x4e8] sm:$0x1]
        %v4447 = vld [vmem:[%s113 + $0x4f8] sm:$0x1]
        %v4448 = vld [vmem:[%s113 + $0x508] sm:$0x1]
        %v4449 = vld [vmem:[%s113 + $0x518] sm:$0x1]
        %v4450 = vld [vmem:[%s113 + $0x528] sm:$0x1]
        %v4451 = vld [vmem:[%s113 + $0x538] sm:$0x1]
        %v4452 = vld [vmem:[%s113 + $0x548] sm:$0x1]
        %v4453 = vld [vmem:[%s113 + $0x558] sm:$0x1]
        %v4454 = vld [vmem:[%s113 + $0x568] sm:$0x1]
        %v4455 = vld [vmem:[%s113 + $0x578] sm:$0x1]
        %v4456 = vld [vmem:[%s113 + $0x588] sm:$0x1]
        %v4457 = vld [vmem:[%s113 + $0x598] sm:$0x1]
        %v4458 = vld [vmem:[%s113 + $0x5a8] sm:$0x1]
        %v4459 = vld [vmem:[%s113 + $0x5b8] sm:$0x1]
        %v4460 = vld [vmem:[%s113 + $0x5c8] sm:$0x1]
        %v4461 = vld [vmem:[%s113 + $0x5d8] sm:$0x1]
        %v4462 = vld [vmem:[%s113 + $0x5e8] sm:$0x1]
        %v4463 = vld [vmem:[%s113 + $0x5f8] sm:$0x1]
        %v4464 = vld [vmem:[%s113 + $0x608] sm:$0x1]
        %v4465 = vld [vmem:[%s113 + $0x618] sm:$0x1]
        %v4466 = vld [vmem:[%s113 + $0x628] sm:$0x1]
        %v4467 = vld [vmem:[%s113 + $0x638] sm:$0x1]
        %v4468 = vld [vmem:[%s113 + $0x648] sm:$0x1]
        %v4469 = vld [vmem:[%s113 + $0x658] sm:$0x1]
        %v4470 = vld [vmem:[%s113 + $0x668] sm:$0x1]
        %v4471 = vld [vmem:[%s113 + $0x678] sm:$0x1]
        %v4472 = vld [vmem:[%s113 + $0x688] sm:$0x1]
        %v4473 = vld [vmem:[%s113 + $0x698] sm:$0x1]
        %v4474 = vld [vmem:[%s113 + $0x6a8] sm:$0x1]
        %v4475 = vld [vmem:[%s113 + $0x6b8] sm:$0x1]
        %v4476 = vld [vmem:[%s113 + $0x6c8] sm:$0x1]
        %v4477 = vld [vmem:[%s113 + $0x6d8] sm:$0x1]
        %v4478 = vld [vmem:[%s113 + $0x6e8] sm:$0x1]
        %v4479 = vld [vmem:[%s113 + $0x6f8] sm:$0x1]
        %v4480 = vld [vmem:[%s113 + $0x708] sm:$0x1]
        %v4481 = vld [vmem:[%s113 + $0x718] sm:$0x1]
        %v4482 = vld [vmem:[%s113 + $0x728] sm:$0x1]
        %v4483 = vld [vmem:[%s113 + $0x738] sm:$0x1]
        %v4484 = vld [vmem:[%s113 + $0x748] sm:$0x1]
        %v4485 = vld [vmem:[%s113 + $0x758] sm:$0x1]
        %v4486 = vld [vmem:[%s113 + $0x768] sm:$0x1]
        %v4487 = vld [vmem:[%s113 + $0x778] sm:$0x1]
        %v4488 = vld [vmem:[%s113 + $0x788] sm:$0x1]
        %v4489 = vld [vmem:[%s113 + $0x798] sm:$0x1]
        %v4490 = vld [vmem:[%s113 + $0x7a8] sm:$0x1]
        %v4491 = vld [vmem:[%s113 + $0x7b8] sm:$0x1]
        %v4492 = vld [vmem:[%s113 + $0x7c8] sm:$0x1]
        %v4493 = vld [vmem:[%s113 + $0x7d8] sm:$0x1]
        %v4494 = vld [vmem:[%s113 + $0x7e8] sm:$0x1]
        %v4495 = vld [vmem:[%s113 + $0x7f8] sm:$0x1]
        %v4624 = vrot.slane %v4369, 7
        %v4625 = vsel %vm371, %v4624, %v4368
        %v4626 = vrot.slane %v4370, 6
        %v4627 = vsel %vm374, %v4626, %v4625
        %v4628 = vrot.slane %v4371, 5
        %v4629 = vsel %vm377, %v4628, %v4627
        %v4630 = vrot.slane %v4372, 4
        %v4631 = vsel %vm380, %v4630, %v4629
        %v4632 = vrot.slane %v4373, 3
        %v4633 = vsel %vm383, %v4632, %v4631
        %v4634 = vrot.slane %v4374, 2
        %v4635 = vsel %vm386, %v4634, %v4633
        %v4636 = vrot.slane %v4375, 1
        %v4637 = vsel %vm389, %v4636, %v4635
        %v4638 = vrot.slane %v4377, 7
        %v4639 = vsel %vm371, %v4638, %v4376
        %v4640 = vrot.slane %v4378, 6
        %v4641 = vsel %vm374, %v4640, %v4639
        %v4642 = vrot.slane %v4379, 5
        %v4643 = vsel %vm377, %v4642, %v4641
        %v4644 = vrot.slane %v4380, 4
        %v4645 = vsel %vm380, %v4644, %v4643
        %v4646 = vrot.slane %v4381, 3
        %v4647 = vsel %vm383, %v4646, %v4645
        %v4648 = vrot.slane %v4382, 2
        %v4649 = vsel %vm386, %v4648, %v4647
        %v4650 = vrot.slane %v4383, 1
        %v4651 = vsel %vm389, %v4650, %v4649
        %v4652 = vrot.slane %v4385, 7
        %v4653 = vsel %vm371, %v4652, %v4384
        %v4654 = vrot.slane %v4386, 6
        %v4655 = vsel %vm374, %v4654, %v4653
        %v4656 = vrot.slane %v4387, 5
        %v4657 = vsel %vm377, %v4656, %v4655
        %v4658 = vrot.slane %v4388, 4
        %v4659 = vsel %vm380, %v4658, %v4657
        %v4660 = vrot.slane %v4389, 3
        %v4661 = vsel %vm383, %v4660, %v4659
        %v4662 = vrot.slane %v4390, 2
        %v4663 = vsel %vm386, %v4662, %v4661
        %v4664 = vrot.slane %v4391, 1
        %v4665 = vsel %vm389, %v4664, %v4663
        %v4666 = vrot.slane %v4393, 7
        %v4667 = vsel %vm371, %v4666, %v4392
        %v4668 = vrot.slane %v4394, 6
        %v4669 = vsel %vm374, %v4668, %v4667
        %v4670 = vrot.slane %v4395, 5
        %v4671 = vsel %vm377, %v4670, %v4669
        %v4672 = vrot.slane %v4396, 4
        %v4673 = vsel %vm380, %v4672, %v4671
        %v4674 = vrot.slane %v4397, 3
        %v4675 = vsel %vm383, %v4674, %v4673
        %v4676 = vrot.slane %v4398, 2
        %v4677 = vsel %vm386, %v4676, %v4675
        %v4678 = vrot.slane %v4399, 1
        %v4679 = vsel %vm389, %v4678, %v4677
        %v4680 = vrot.slane %v4401, 7
        %v4681 = vsel %vm371, %v4680, %v4400
        %v4682 = vrot.slane %v4402, 6
        %v4683 = vsel %vm374, %v4682, %v4681
        %v4684 = vrot.slane %v4403, 5
        %v4685 = vsel %vm377, %v4684, %v4683
        %v4686 = vrot.slane %v4404, 4
        %v4687 = vsel %vm380, %v4686, %v4685
        %v4688 = vrot.slane %v4405, 3
        %v4689 = vsel %vm383, %v4688, %v4687
        %v4690 = vrot.slane %v4406, 2
        %v4691 = vsel %vm386, %v4690, %v4689
        %v4692 = vrot.slane %v4407, 1
        %v4693 = vsel %vm389, %v4692, %v4691
        %v4694 = vrot.slane %v4409, 7
        %v4695 = vsel %vm371, %v4694, %v4408
        %v4696 = vrot.slane %v4410, 6
        %v4697 = vsel %vm374, %v4696, %v4695
        %v4698 = vrot.slane %v4411, 5
        %v4699 = vsel %vm377, %v4698, %v4697
        %v4700 = vrot.slane %v4412, 4
        %v4701 = vsel %vm380, %v4700, %v4699
        %v4702 = vrot.slane %v4413, 3
        %v4703 = vsel %vm383, %v4702, %v4701
        %v4704 = vrot.slane %v4414, 2
        %v4705 = vsel %vm386, %v4704, %v4703
        %v4706 = vrot.slane %v4415, 1
        %v4707 = vsel %vm389, %v4706, %v4705
        %v4708 = vrot.slane %v4417, 7
        %v4709 = vsel %vm371, %v4708, %v4416
        %v4710 = vrot.slane %v4418, 6
        %v4711 = vsel %vm374, %v4710, %v4709
        %v4712 = vrot.slane %v4419, 5
        %v4713 = vsel %vm377, %v4712, %v4711
        %v4714 = vrot.slane %v4420, 4
        %v4715 = vsel %vm380, %v4714, %v4713
        %v4716 = vrot.slane %v4421, 3
        %v4717 = vsel %vm383, %v4716, %v4715
        %v4718 = vrot.slane %v4422, 2
        %v4719 = vsel %vm386, %v4718, %v4717
        %v4720 = vrot.slane %v4423, 1
        %v4721 = vsel %vm389, %v4720, %v4719
        %v4722 = vrot.slane %v4425, 7
        %v4723 = vsel %vm371, %v4722, %v4424
        %v4724 = vrot.slane %v4426, 6
        %v4725 = vsel %vm374, %v4724, %v4723
        %v4726 = vrot.slane %v4427, 5
        %v4727 = vsel %vm377, %v4726, %v4725
        %v4728 = vrot.slane %v4428, 4
        %v4729 = vsel %vm380, %v4728, %v4727
        %v4730 = vrot.slane %v4429, 3
        %v4731 = vsel %vm383, %v4730, %v4729
        %v4732 = vrot.slane %v4430, 2
        %v4733 = vsel %vm386, %v4732, %v4731
        %v4734 = vrot.slane %v4431, 1
        %v4735 = vsel %vm389, %v4734, %v4733
        %v4736 = vrot.slane %v4433, 7
        %v4737 = vsel %vm371, %v4736, %v4432
        %v4738 = vrot.slane %v4434, 6
        %v4739 = vsel %vm374, %v4738, %v4737
        %v4740 = vrot.slane %v4435, 5
        %v4741 = vsel %vm377, %v4740, %v4739
        %v4742 = vrot.slane %v4436, 4
        %v4743 = vsel %vm380, %v4742, %v4741
        %v4744 = vrot.slane %v4437, 3
        %v4745 = vsel %vm383, %v4744, %v4743
        %v4746 = vrot.slane %v4438, 2
        %v4747 = vsel %vm386, %v4746, %v4745
        %v4748 = vrot.slane %v4439, 1
        %v4749 = vsel %vm389, %v4748, %v4747
        %v4750 = vrot.slane %v4441, 7
        %v4751 = vsel %vm371, %v4750, %v4440
        %v4752 = vrot.slane %v4442, 6
        %v4753 = vsel %vm374, %v4752, %v4751
        %v4754 = vrot.slane %v4443, 5
        %v4755 = vsel %vm377, %v4754, %v4753
        %v4756 = vrot.slane %v4444, 4
        %v4757 = vsel %vm380, %v4756, %v4755
        %v4758 = vrot.slane %v4445, 3
        %v4759 = vsel %vm383, %v4758, %v4757
        %v4760 = vrot.slane %v4446, 2
        %v4761 = vsel %vm386, %v4760, %v4759
        %v4762 = vrot.slane %v4447, 1
        %v4763 = vsel %vm389, %v4762, %v4761
        %v4764 = vrot.slane %v4449, 7
        %v4765 = vsel %vm371, %v4764, %v4448
        %v4766 = vrot.slane %v4450, 6
        %v4767 = vsel %vm374, %v4766, %v4765
        %v4768 = vrot.slane %v4451, 5
        %v4769 = vsel %vm377, %v4768, %v4767
        %v4770 = vrot.slane %v4452, 4
        %v4771 = vsel %vm380, %v4770, %v4769
        %v4772 = vrot.slane %v4453, 3
        %v4773 = vsel %vm383, %v4772, %v4771
        %v4774 = vrot.slane %v4454, 2
        %v4775 = vsel %vm386, %v4774, %v4773
        %v4776 = vrot.slane %v4455, 1
        %v4777 = vsel %vm389, %v4776, %v4775
        %v4778 = vrot.slane %v4457, 7
        %v4779 = vsel %vm371, %v4778, %v4456
        %v4780 = vrot.slane %v4458, 6
        %v4781 = vsel %vm374, %v4780, %v4779
        %v4782 = vrot.slane %v4459, 5
        %v4783 = vsel %vm377, %v4782, %v4781
        %v4784 = vrot.slane %v4460, 4
        %v4785 = vsel %vm380, %v4784, %v4783
        %v4786 = vrot.slane %v4461, 3
        %v4787 = vsel %vm383, %v4786, %v4785
        %v4788 = vrot.slane %v4462, 2
        %v4789 = vsel %vm386, %v4788, %v4787
        %v4790 = vrot.slane %v4463, 1
        %v4791 = vsel %vm389, %v4790, %v4789
        %v4792 = vrot.slane %v4465, 7
        %v4793 = vsel %vm371, %v4792, %v4464
        %v4794 = vrot.slane %v4466, 6
        %v4795 = vsel %vm374, %v4794, %v4793
        %v4796 = vrot.slane %v4467, 5
        %v4797 = vsel %vm377, %v4796, %v4795
        %v4798 = vrot.slane %v4468, 4
        %v4799 = vsel %vm380, %v4798, %v4797
        %v4800 = vrot.slane %v4469, 3
        %v4801 = vsel %vm383, %v4800, %v4799
        %v4802 = vrot.slane %v4470, 2
        %v4803 = vsel %vm386, %v4802, %v4801
        %v4804 = vrot.slane %v4471, 1
        %v4805 = vsel %vm389, %v4804, %v4803
        %v4806 = vrot.slane %v4473, 7
        %v4807 = vsel %vm371, %v4806, %v4472
        %v4808 = vrot.slane %v4474, 6
        %v4809 = vsel %vm374, %v4808, %v4807
        %v4810 = vrot.slane %v4475, 5
        %v4811 = vsel %vm377, %v4810, %v4809
        %v4812 = vrot.slane %v4476, 4
        %v4813 = vsel %vm380, %v4812, %v4811
        %v4814 = vrot.slane %v4477, 3
        %v4815 = vsel %vm383, %v4814, %v4813
        %v4816 = vrot.slane %v4478, 2
        %v4817 = vsel %vm386, %v4816, %v4815
        %v4818 = vrot.slane %v4479, 1
        %v4819 = vsel %vm389, %v4818, %v4817
        %v4820 = vrot.slane %v4481, 7
        %v4821 = vsel %vm371, %v4820, %v4480
        %v4822 = vrot.slane %v4482, 6
        %v4823 = vsel %vm374, %v4822, %v4821
        %v4824 = vrot.slane %v4483, 5
        %v4825 = vsel %vm377, %v4824, %v4823
        %v4826 = vrot.slane %v4484, 4
        %v4827 = vsel %vm380, %v4826, %v4825
        %v4828 = vrot.slane %v4485, 3
        %v4829 = vsel %vm383, %v4828, %v4827
        %v4830 = vrot.slane %v4486, 2
        %v4831 = vsel %vm386, %v4830, %v4829
        %v4832 = vrot.slane %v4487, 1
        %v4833 = vsel %vm389, %v4832, %v4831
        %v4834 = vrot.slane %v4489, 7
        %v4835 = vsel %vm371, %v4834, %v4488
        %v4836 = vrot.slane %v4490, 6
        %v4837 = vsel %vm374, %v4836, %v4835
        %v4838 = vrot.slane %v4491, 5
        %v4839 = vsel %vm377, %v4838, %v4837
        %v4840 = vrot.slane %v4492, 4
        %v4841 = vsel %vm380, %v4840, %v4839
        %v4842 = vrot.slane %v4493, 3
        %v4843 = vsel %vm383, %v4842, %v4841
        %v4844 = vrot.slane %v4494, 2
        %v4845 = vsel %vm386, %v4844, %v4843
        %v4846 = vrot.slane %v4495, 1
        %v4847 = vsel %vm389, %v4846, %v4845
        %4864 = vxpose.xlu0.b32.start [1/16] %v4637, 128
        %4865 = vxpose.xlu0.b32.cont [2/16] %v4651, 128
        %4866 = vxpose.xlu0.b32.cont [3/16] %v4665, 128
        %4867 = vxpose.xlu0.b32.cont [4/16] %v4679, 128
        %4868 = vxpose.xlu0.b32.cont [5/16] %v4693, 128
        %4869 = vxpose.xlu0.b32.cont [6/16] %v4707, 128
        %4870 = vxpose.xlu0.b32.cont [7/16] %v4721, 128
        %4871 = vxpose.xlu0.b32.cont [8/16] %v4735, 128
        %4872 = vxpose.xlu0.b32.cont [9/16] %v4749, 128
        %4873 = vxpose.xlu0.b32.cont [10/16] %v4763, 128
        %4874 = vxpose.xlu0.b32.cont [11/16] %v4777, 128
        %4875 = vxpose.xlu0.b32.cont [12/16] %v4791, 128
        %4876 = vxpose.xlu0.b32.cont [13/16] %v4805, 128
        %4877 = vxpose.xlu0.b32.cont [14/16] %v4819, 128
        %4878 = vxpose.xlu0.b32.cont [15/16] %v4833, 128
        %4879 = vxpose.xlu0.b32.end [16/16] %v4847, 128
        %v4880 = vpop.trf.xlu0
        %v4881 = vpop.trf.xlu0
        %v4882 = vpop.trf.xlu0
        %v4883 = vpop.trf.xlu0
        %v4884 = vpop.trf.xlu0
        %v4885 = vpop.trf.xlu0
        %v4886 = vpop.trf.xlu0
        %v4887 = vpop.trf.xlu0
        %v4888 = vpop.trf.xlu0
        %v4889 = vpop.trf.xlu0
        %v4890 = vpop.trf.xlu0
        %v4891 = vpop.trf.xlu0
        %v4892 = vpop.trf.xlu0
        %v4893 = vpop.trf.xlu0
        %v4894 = vpop.trf.xlu0
        %v4895 = vpop.trf.xlu0
        %s4896 = scalar_lea.vmem [#allocation2], 128
        %4897 = vst [vmem:[%s4896] sm:$0xff] %v4880
        %4898 = vst [vmem:[%s4896 + $0x8] sm:$0xff] %v4881
        %v4899 = vld [vmem:[%s113 + $0x9] sm:$0x1]
        %v4900 = vld [vmem:[%s113 + $0x19] sm:$0x1]
        %v4901 = vld [vmem:[%s113 + $0x29] sm:$0x1]
        %v4902 = vld [vmem:[%s113 + $0x39] sm:$0x1]
        %v4903 = vld [vmem:[%s113 + $0x49] sm:$0x1]
        %v4904 = vld [vmem:[%s113 + $0x59] sm:$0x1]
        %v4905 = vld [vmem:[%s113 + $0x69] sm:$0x1]
        %v4906 = vld [vmem:[%s113 + $0x79] sm:$0x1]
        %v4907 = vld [vmem:[%s113 + $0x89] sm:$0x1]
        %v4908 = vld [vmem:[%s113 + $0x99] sm:$0x1]
        %v4909 = vld [vmem:[%s113 + $0xa9] sm:$0x1]
        %v4910 = vld [vmem:[%s113 + $0xb9] sm:$0x1]
        %v4911 = vld [vmem:[%s113 + $0xc9] sm:$0x1]
        %v4912 = vld [vmem:[%s113 + $0xd9] sm:$0x1]
        %v4913 = vld [vmem:[%s113 + $0xe9] sm:$0x1]
        %v4914 = vld [vmem:[%s113 + $0xf9] sm:$0x1]
        %v4915 = vld [vmem:[%s113 + $0x109] sm:$0x1]
        %v4916 = vld [vmem:[%s113 + $0x119] sm:$0x1]
        %v4917 = vld [vmem:[%s113 + $0x129] sm:$0x1]
        %v4918 = vld [vmem:[%s113 + $0x139] sm:$0x1]
        %v4919 = vld [vmem:[%s113 + $0x149] sm:$0x1]
        %v4920 = vld [vmem:[%s113 + $0x159] sm:$0x1]
        %v4921 = vld [vmem:[%s113 + $0x169] sm:$0x1]
        %v4922 = vld [vmem:[%s113 + $0x179] sm:$0x1]
        %v4923 = vld [vmem:[%s113 + $0x189] sm:$0x1]
        %v4924 = vld [vmem:[%s113 + $0x199] sm:$0x1]
        %v4925 = vld [vmem:[%s113 + $0x1a9] sm:$0x1]
        %v4926 = vld [vmem:[%s113 + $0x1b9] sm:$0x1]
        %v4927 = vld [vmem:[%s113 + $0x1c9] sm:$0x1]
        %v4928 = vld [vmem:[%s113 + $0x1d9] sm:$0x1]
        %v4929 = vld [vmem:[%s113 + $0x1e9] sm:$0x1]
        %v4930 = vld [vmem:[%s113 + $0x1f9] sm:$0x1]
        %v4931 = vld [vmem:[%s113 + $0x209] sm:$0x1]
        %v4932 = vld [vmem:[%s113 + $0x219] sm:$0x1]
        %v4933 = vld [vmem:[%s113 + $0x229] sm:$0x1]
        %v4934 = vld [vmem:[%s113 + $0x239] sm:$0x1]
        %v4935 = vld [vmem:[%s113 + $0x249] sm:$0x1]
        %v4936 = vld [vmem:[%s113 + $0x259] sm:$0x1]
        %v4937 = vld [vmem:[%s113 + $0x269] sm:$0x1]
        %v4938 = vld [vmem:[%s113 + $0x279] sm:$0x1]
        %v4939 = vld [vmem:[%s113 + $0x289] sm:$0x1]
        %v4940 = vld [vmem:[%s113 + $0x299] sm:$0x1]
        %v4941 = vld [vmem:[%s113 + $0x2a9] sm:$0x1]
        %v4942 = vld [vmem:[%s113 + $0x2b9] sm:$0x1]
        %v4943 = vld [vmem:[%s113 + $0x2c9] sm:$0x1]
        %v4944 = vld [vmem:[%s113 + $0x2d9] sm:$0x1]
        %v4945 = vld [vmem:[%s113 + $0x2e9] sm:$0x1]
        %v4946 = vld [vmem:[%s113 + $0x2f9] sm:$0x1]
        %v4947 = vld [vmem:[%s113 + $0x309] sm:$0x1]
        %v4948 = vld [vmem:[%s113 + $0x319] sm:$0x1]
        %v4949 = vld [vmem:[%s113 + $0x329] sm:$0x1]
        %v4950 = vld [vmem:[%s113 + $0x339] sm:$0x1]
        %v4951 = vld [vmem:[%s113 + $0x349] sm:$0x1]
        %v4952 = vld [vmem:[%s113 + $0x359] sm:$0x1]
        %v4953 = vld [vmem:[%s113 + $0x369] sm:$0x1]
        %v4954 = vld [vmem:[%s113 + $0x379] sm:$0x1]
        %v4955 = vld [vmem:[%s113 + $0x389] sm:$0x1]
        %v4956 = vld [vmem:[%s113 + $0x399] sm:$0x1]
        %v4957 = vld [vmem:[%s113 + $0x3a9] sm:$0x1]
        %v4958 = vld [vmem:[%s113 + $0x3b9] sm:$0x1]
        %v4959 = vld [vmem:[%s113 + $0x3c9] sm:$0x1]
        %v4960 = vld [vmem:[%s113 + $0x3d9] sm:$0x1]
        %v4961 = vld [vmem:[%s113 + $0x3e9] sm:$0x1]
        %v4962 = vld [vmem:[%s113 + $0x3f9] sm:$0x1]
        %v4963 = vld [vmem:[%s113 + $0x409] sm:$0x1]
        %v4964 = vld [vmem:[%s113 + $0x419] sm:$0x1]
        %v4965 = vld [vmem:[%s113 + $0x429] sm:$0x1]
        %v4966 = vld [vmem:[%s113 + $0x439] sm:$0x1]
        %v4967 = vld [vmem:[%s113 + $0x449] sm:$0x1]
        %v4968 = vld [vmem:[%s113 + $0x459] sm:$0x1]
        %v4969 = vld [vmem:[%s113 + $0x469] sm:$0x1]
        %v4970 = vld [vmem:[%s113 + $0x479] sm:$0x1]
        %v4971 = vld [vmem:[%s113 + $0x489] sm:$0x1]
        %v4972 = vld [vmem:[%s113 + $0x499] sm:$0x1]
        %v4973 = vld [vmem:[%s113 + $0x4a9] sm:$0x1]
        %v4974 = vld [vmem:[%s113 + $0x4b9] sm:$0x1]
        %v4975 = vld [vmem:[%s113 + $0x4c9] sm:$0x1]
        %v4976 = vld [vmem:[%s113 + $0x4d9] sm:$0x1]
        %v4977 = vld [vmem:[%s113 + $0x4e9] sm:$0x1]
        %v4978 = vld [vmem:[%s113 + $0x4f9] sm:$0x1]
        %v4979 = vld [vmem:[%s113 + $0x509] sm:$0x1]
        %v4980 = vld [vmem:[%s113 + $0x519] sm:$0x1]
        %v4981 = vld [vmem:[%s113 + $0x529] sm:$0x1]
        %v4982 = vld [vmem:[%s113 + $0x539] sm:$0x1]
        %v4983 = vld [vmem:[%s113 + $0x549] sm:$0x1]
        %v4984 = vld [vmem:[%s113 + $0x559] sm:$0x1]
        %v4985 = vld [vmem:[%s113 + $0x569] sm:$0x1]
        %v4986 = vld [vmem:[%s113 + $0x579] sm:$0x1]
        %v4987 = vld [vmem:[%s113 + $0x589] sm:$0x1]
        %v4988 = vld [vmem:[%s113 + $0x599] sm:$0x1]
        %v4989 = vld [vmem:[%s113 + $0x5a9] sm:$0x1]
        %v4990 = vld [vmem:[%s113 + $0x5b9] sm:$0x1]
        %v4991 = vld [vmem:[%s113 + $0x5c9] sm:$0x1]
        %v4992 = vld [vmem:[%s113 + $0x5d9] sm:$0x1]
        %v4993 = vld [vmem:[%s113 + $0x5e9] sm:$0x1]
        %v4994 = vld [vmem:[%s113 + $0x5f9] sm:$0x1]
        %v4995 = vld [vmem:[%s113 + $0x609] sm:$0x1]
        %v4996 = vld [vmem:[%s113 + $0x619] sm:$0x1]
        %v4997 = vld [vmem:[%s113 + $0x629] sm:$0x1]
        %v4998 = vld [vmem:[%s113 + $0x639] sm:$0x1]
        %v4999 = vld [vmem:[%s113 + $0x649] sm:$0x1]
        %v5000 = vld [vmem:[%s113 + $0x659] sm:$0x1]
        %v5001 = vld [vmem:[%s113 + $0x669] sm:$0x1]
        %v5002 = vld [vmem:[%s113 + $0x679] sm:$0x1]
        %v5003 = vld [vmem:[%s113 + $0x689] sm:$0x1]
        %v5004 = vld [vmem:[%s113 + $0x699] sm:$0x1]
        %v5005 = vld [vmem:[%s113 + $0x6a9] sm:$0x1]
        %v5006 = vld [vmem:[%s113 + $0x6b9] sm:$0x1]
        %v5007 = vld [vmem:[%s113 + $0x6c9] sm:$0x1]
        %v5008 = vld [vmem:[%s113 + $0x6d9] sm:$0x1]
        %v5009 = vld [vmem:[%s113 + $0x6e9] sm:$0x1]
        %v5010 = vld [vmem:[%s113 + $0x6f9] sm:$0x1]
        %v5011 = vld [vmem:[%s113 + $0x709] sm:$0x1]
        %v5012 = vld [vmem:[%s113 + $0x719] sm:$0x1]
        %v5013 = vld [vmem:[%s113 + $0x729] sm:$0x1]
        %v5014 = vld [vmem:[%s113 + $0x739] sm:$0x1]
        %v5015 = vld [vmem:[%s113 + $0x749] sm:$0x1]
        %v5016 = vld [vmem:[%s113 + $0x759] sm:$0x1]
        %v5017 = vld [vmem:[%s113 + $0x769] sm:$0x1]
        %v5018 = vld [vmem:[%s113 + $0x779] sm:$0x1]
        %v5019 = vld [vmem:[%s113 + $0x789] sm:$0x1]
        %v5020 = vld [vmem:[%s113 + $0x799] sm:$0x1]
        %v5021 = vld [vmem:[%s113 + $0x7a9] sm:$0x1]
        %v5022 = vld [vmem:[%s113 + $0x7b9] sm:$0x1]
        %v5023 = vld [vmem:[%s113 + $0x7c9] sm:$0x1]
        %v5024 = vld [vmem:[%s113 + $0x7d9] sm:$0x1]
        %v5025 = vld [vmem:[%s113 + $0x7e9] sm:$0x1]
        %v5026 = vld [vmem:[%s113 + $0x7f9] sm:$0x1]
        %v5155 = vrot.slane %v4900, 7
        %v5156 = vsel %vm371, %v5155, %v4899
        %v5157 = vrot.slane %v4901, 6
        %v5158 = vsel %vm374, %v5157, %v5156
        %v5159 = vrot.slane %v4902, 5
        %v5160 = vsel %vm377, %v5159, %v5158
        %v5161 = vrot.slane %v4903, 4
        %v5162 = vsel %vm380, %v5161, %v5160
        %v5163 = vrot.slane %v4904, 3
        %v5164 = vsel %vm383, %v5163, %v5162
        %v5165 = vrot.slane %v4905, 2
        %v5166 = vsel %vm386, %v5165, %v5164
        %v5167 = vrot.slane %v4906, 1
        %v5168 = vsel %vm389, %v5167, %v5166
        %v5169 = vrot.slane %v4908, 7
        %v5170 = vsel %vm371, %v5169, %v4907
        %v5171 = vrot.slane %v4909, 6
        %v5172 = vsel %vm374, %v5171, %v5170
        %v5173 = vrot.slane %v4910, 5
        %v5174 = vsel %vm377, %v5173, %v5172
        %v5175 = vrot.slane %v4911, 4
        %v5176 = vsel %vm380, %v5175, %v5174
        %v5177 = vrot.slane %v4912, 3
        %v5178 = vsel %vm383, %v5177, %v5176
        %v5179 = vrot.slane %v4913, 2
        %v5180 = vsel %vm386, %v5179, %v5178
        %v5181 = vrot.slane %v4914, 1
        %v5182 = vsel %vm389, %v5181, %v5180
        %v5183 = vrot.slane %v4916, 7
        %v5184 = vsel %vm371, %v5183, %v4915
        %v5185 = vrot.slane %v4917, 6
        %v5186 = vsel %vm374, %v5185, %v5184
        %v5187 = vrot.slane %v4918, 5
        %v5188 = vsel %vm377, %v5187, %v5186
        %v5189 = vrot.slane %v4919, 4
        %v5190 = vsel %vm380, %v5189, %v5188
        %v5191 = vrot.slane %v4920, 3
        %v5192 = vsel %vm383, %v5191, %v5190
        %v5193 = vrot.slane %v4921, 2
        %v5194 = vsel %vm386, %v5193, %v5192
        %v5195 = vrot.slane %v4922, 1
        %v5196 = vsel %vm389, %v5195, %v5194
        %v5197 = vrot.slane %v4924, 7
        %v5198 = vsel %vm371, %v5197, %v4923
        %v5199 = vrot.slane %v4925, 6
        %v5200 = vsel %vm374, %v5199, %v5198
        %v5201 = vrot.slane %v4926, 5
        %v5202 = vsel %vm377, %v5201, %v5200
        %v5203 = vrot.slane %v4927, 4
        %v5204 = vsel %vm380, %v5203, %v5202
        %v5205 = vrot.slane %v4928, 3
        %v5206 = vsel %vm383, %v5205, %v5204
        %v5207 = vrot.slane %v4929, 2
        %v5208 = vsel %vm386, %v5207, %v5206
        %v5209 = vrot.slane %v4930, 1
        %v5210 = vsel %vm389, %v5209, %v5208
        %v5211 = vrot.slane %v4932, 7
        %v5212 = vsel %vm371, %v5211, %v4931
        %v5213 = vrot.slane %v4933, 6
        %v5214 = vsel %vm374, %v5213, %v5212
        %v5215 = vrot.slane %v4934, 5
        %v5216 = vsel %vm377, %v5215, %v5214
        %v5217 = vrot.slane %v4935, 4
        %v5218 = vsel %vm380, %v5217, %v5216
        %v5219 = vrot.slane %v4936, 3
        %v5220 = vsel %vm383, %v5219, %v5218
        %v5221 = vrot.slane %v4937, 2
        %v5222 = vsel %vm386, %v5221, %v5220
        %v5223 = vrot.slane %v4938, 1
        %v5224 = vsel %vm389, %v5223, %v5222
        %v5225 = vrot.slane %v4940, 7
        %v5226 = vsel %vm371, %v5225, %v4939
        %v5227 = vrot.slane %v4941, 6
        %v5228 = vsel %vm374, %v5227, %v5226
        %v5229 = vrot.slane %v4942, 5
        %v5230 = vsel %vm377, %v5229, %v5228
        %v5231 = vrot.slane %v4943, 4
        %v5232 = vsel %vm380, %v5231, %v5230
        %v5233 = vrot.slane %v4944, 3
        %v5234 = vsel %vm383, %v5233, %v5232
        %v5235 = vrot.slane %v4945, 2
        %v5236 = vsel %vm386, %v5235, %v5234
        %v5237 = vrot.slane %v4946, 1
        %v5238 = vsel %vm389, %v5237, %v5236
        %v5239 = vrot.slane %v4948, 7
        %v5240 = vsel %vm371, %v5239, %v4947
        %v5241 = vrot.slane %v4949, 6
        %v5242 = vsel %vm374, %v5241, %v5240
        %v5243 = vrot.slane %v4950, 5
        %v5244 = vsel %vm377, %v5243, %v5242
        %v5245 = vrot.slane %v4951, 4
        %v5246 = vsel %vm380, %v5245, %v5244
        %v5247 = vrot.slane %v4952, 3
        %v5248 = vsel %vm383, %v5247, %v5246
        %v5249 = vrot.slane %v4953, 2
        %v5250 = vsel %vm386, %v5249, %v5248
        %v5251 = vrot.slane %v4954, 1
        %v5252 = vsel %vm389, %v5251, %v5250
        %v5253 = vrot.slane %v4956, 7
        %v5254 = vsel %vm371, %v5253, %v4955
        %v5255 = vrot.slane %v4957, 6
        %v5256 = vsel %vm374, %v5255, %v5254
        %v5257 = vrot.slane %v4958, 5
        %v5258 = vsel %vm377, %v5257, %v5256
        %v5259 = vrot.slane %v4959, 4
        %v5260 = vsel %vm380, %v5259, %v5258
        %v5261 = vrot.slane %v4960, 3
        %v5262 = vsel %vm383, %v5261, %v5260
        %v5263 = vrot.slane %v4961, 2
        %v5264 = vsel %vm386, %v5263, %v5262
        %v5265 = vrot.slane %v4962, 1
        %v5266 = vsel %vm389, %v5265, %v5264
        %v5267 = vrot.slane %v4964, 7
        %v5268 = vsel %vm371, %v5267, %v4963
        %v5269 = vrot.slane %v4965, 6
        %v5270 = vsel %vm374, %v5269, %v5268
        %v5271 = vrot.slane %v4966, 5
        %v5272 = vsel %vm377, %v5271, %v5270
        %v5273 = vrot.slane %v4967, 4
        %v5274 = vsel %vm380, %v5273, %v5272
        %v5275 = vrot.slane %v4968, 3
        %v5276 = vsel %vm383, %v5275, %v5274
        %v5277 = vrot.slane %v4969, 2
        %v5278 = vsel %vm386, %v5277, %v5276
        %v5279 = vrot.slane %v4970, 1
        %v5280 = vsel %vm389, %v5279, %v5278
        %v5281 = vrot.slane %v4972, 7
        %v5282 = vsel %vm371, %v5281, %v4971
        %v5283 = vrot.slane %v4973, 6
        %v5284 = vsel %vm374, %v5283, %v5282
        %v5285 = vrot.slane %v4974, 5
        %v5286 = vsel %vm377, %v5285, %v5284
        %v5287 = vrot.slane %v4975, 4
        %v5288 = vsel %vm380, %v5287, %v5286
        %v5289 = vrot.slane %v4976, 3
        %v5290 = vsel %vm383, %v5289, %v5288
        %v5291 = vrot.slane %v4977, 2
        %v5292 = vsel %vm386, %v5291, %v5290
        %v5293 = vrot.slane %v4978, 1
        %v5294 = vsel %vm389, %v5293, %v5292
        %v5295 = vrot.slane %v4980, 7
        %v5296 = vsel %vm371, %v5295, %v4979
        %v5297 = vrot.slane %v4981, 6
        %v5298 = vsel %vm374, %v5297, %v5296
        %v5299 = vrot.slane %v4982, 5
        %v5300 = vsel %vm377, %v5299, %v5298
        %v5301 = vrot.slane %v4983, 4
        %v5302 = vsel %vm380, %v5301, %v5300
        %v5303 = vrot.slane %v4984, 3
        %v5304 = vsel %vm383, %v5303, %v5302
        %v5305 = vrot.slane %v4985, 2
        %v5306 = vsel %vm386, %v5305, %v5304
        %v5307 = vrot.slane %v4986, 1
        %v5308 = vsel %vm389, %v5307, %v5306
        %v5309 = vrot.slane %v4988, 7
        %v5310 = vsel %vm371, %v5309, %v4987
        %v5311 = vrot.slane %v4989, 6
        %v5312 = vsel %vm374, %v5311, %v5310
        %v5313 = vrot.slane %v4990, 5
        %v5314 = vsel %vm377, %v5313, %v5312
        %v5315 = vrot.slane %v4991, 4
        %v5316 = vsel %vm380, %v5315, %v5314
        %v5317 = vrot.slane %v4992, 3
        %v5318 = vsel %vm383, %v5317, %v5316
        %v5319 = vrot.slane %v4993, 2
        %v5320 = vsel %vm386, %v5319, %v5318
        %v5321 = vrot.slane %v4994, 1
        %v5322 = vsel %vm389, %v5321, %v5320
        %v5323 = vrot.slane %v4996, 7
        %v5324 = vsel %vm371, %v5323, %v4995
        %v5325 = vrot.slane %v4997, 6
        %v5326 = vsel %vm374, %v5325, %v5324
        %v5327 = vrot.slane %v4998, 5
        %v5328 = vsel %vm377, %v5327, %v5326
        %v5329 = vrot.slane %v4999, 4
        %v5330 = vsel %vm380, %v5329, %v5328
        %v5331 = vrot.slane %v5000, 3
        %v5332 = vsel %vm383, %v5331, %v5330
        %v5333 = vrot.slane %v5001, 2
        %v5334 = vsel %vm386, %v5333, %v5332
        %v5335 = vrot.slane %v5002, 1
        %v5336 = vsel %vm389, %v5335, %v5334
        %v5337 = vrot.slane %v5004, 7
        %v5338 = vsel %vm371, %v5337, %v5003
        %v5339 = vrot.slane %v5005, 6
        %v5340 = vsel %vm374, %v5339, %v5338
        %v5341 = vrot.slane %v5006, 5
        %v5342 = vsel %vm377, %v5341, %v5340
        %v5343 = vrot.slane %v5007, 4
        %v5344 = vsel %vm380, %v5343, %v5342
        %v5345 = vrot.slane %v5008, 3
        %v5346 = vsel %vm383, %v5345, %v5344
        %v5347 = vrot.slane %v5009, 2
        %v5348 = vsel %vm386, %v5347, %v5346
        %v5349 = vrot.slane %v5010, 1
        %v5350 = vsel %vm389, %v5349, %v5348
        %v5351 = vrot.slane %v5012, 7
        %v5352 = vsel %vm371, %v5351, %v5011
        %v5353 = vrot.slane %v5013, 6
        %v5354 = vsel %vm374, %v5353, %v5352
        %v5355 = vrot.slane %v5014, 5
        %v5356 = vsel %vm377, %v5355, %v5354
        %v5357 = vrot.slane %v5015, 4
        %v5358 = vsel %vm380, %v5357, %v5356
        %v5359 = vrot.slane %v5016, 3
        %v5360 = vsel %vm383, %v5359, %v5358
        %v5361 = vrot.slane %v5017, 2
        %v5362 = vsel %vm386, %v5361, %v5360
        %v5363 = vrot.slane %v5018, 1
        %v5364 = vsel %vm389, %v5363, %v5362
        %v5365 = vrot.slane %v5020, 7
        %v5366 = vsel %vm371, %v5365, %v5019
        %v5367 = vrot.slane %v5021, 6
        %v5368 = vsel %vm374, %v5367, %v5366
        %v5369 = vrot.slane %v5022, 5
        %v5370 = vsel %vm377, %v5369, %v5368
        %v5371 = vrot.slane %v5023, 4
        %v5372 = vsel %vm380, %v5371, %v5370
        %v5373 = vrot.slane %v5024, 3
        %v5374 = vsel %vm383, %v5373, %v5372
        %v5375 = vrot.slane %v5025, 2
        %v5376 = vsel %vm386, %v5375, %v5374
        %v5377 = vrot.slane %v5026, 1
        %v5378 = vsel %vm389, %v5377, %v5376
        %5395 = vxpose.xlu0.b32.start [1/16] %v5168, 128
        %5396 = vxpose.xlu0.b32.cont [2/16] %v5182, 128
        %5397 = vxpose.xlu0.b32.cont [3/16] %v5196, 128
        %5398 = vxpose.xlu0.b32.cont [4/16] %v5210, 128
        %5399 = vxpose.xlu0.b32.cont [5/16] %v5224, 128
        %5400 = vxpose.xlu0.b32.cont [6/16] %v5238, 128
        %5401 = vxpose.xlu0.b32.cont [7/16] %v5252, 128
        %5402 = vxpose.xlu0.b32.cont [8/16] %v5266, 128
        %5403 = vxpose.xlu0.b32.cont [9/16] %v5280, 128
        %5404 = vxpose.xlu0.b32.cont [10/16] %v5294, 128
        %5405 = vxpose.xlu0.b32.cont [11/16] %v5308, 128
        %5406 = vxpose.xlu0.b32.cont [12/16] %v5322, 128
        %5407 = vxpose.xlu0.b32.cont [13/16] %v5336, 128
        %5408 = vxpose.xlu0.b32.cont [14/16] %v5350, 128
        %5409 = vxpose.xlu0.b32.cont [15/16] %v5364, 128
        %5410 = vxpose.xlu0.b32.end [16/16] %v5378, 128
        %v5411 = vpop.trf.xlu0
        %v5412 = vpop.trf.xlu0
        %v5413 = vpop.trf.xlu0
        %v5414 = vpop.trf.xlu0
        %v5415 = vpop.trf.xlu0
        %v5416 = vpop.trf.xlu0
        %v5417 = vpop.trf.xlu0
        %v5418 = vpop.trf.xlu0
        %v5419 = vpop.trf.xlu0
        %v5420 = vpop.trf.xlu0
        %v5421 = vpop.trf.xlu0
        %v5422 = vpop.trf.xlu0
        %v5423 = vpop.trf.xlu0
        %v5424 = vpop.trf.xlu0
        %v5425 = vpop.trf.xlu0
        %v5426 = vpop.trf.xlu0
        %s5427 = scalar_lea.vmem [#allocation2], 144
        %5428 = vst [vmem:[%s5427] sm:$0xff] %v5411
        %5429 = vst [vmem:[%s5427 + $0x8] sm:$0xff] %v5412
        %v5430 = vld [vmem:[%s113 + $0xa] sm:$0x1]
        %v5431 = vld [vmem:[%s113 + $0x1a] sm:$0x1]
        %v5432 = vld [vmem:[%s113 + $0x2a] sm:$0x1]
        %v5433 = vld [vmem:[%s113 + $0x3a] sm:$0x1]
        %v5434 = vld [vmem:[%s113 + $0x4a] sm:$0x1]
        %v5435 = vld [vmem:[%s113 + $0x5a] sm:$0x1]
        %v5436 = vld [vmem:[%s113 + $0x6a] sm:$0x1]
        %v5437 = vld [vmem:[%s113 + $0x7a] sm:$0x1]
        %v5438 = vld [vmem:[%s113 + $0x8a] sm:$0x1]
        %v5439 = vld [vmem:[%s113 + $0x9a] sm:$0x1]
        %v5440 = vld [vmem:[%s113 + $0xaa] sm:$0x1]
        %v5441 = vld [vmem:[%s113 + $0xba] sm:$0x1]
        %v5442 = vld [vmem:[%s113 + $0xca] sm:$0x1]
        %v5443 = vld [vmem:[%s113 + $0xda] sm:$0x1]
        %v5444 = vld [vmem:[%s113 + $0xea] sm:$0x1]
        %v5445 = vld [vmem:[%s113 + $0xfa] sm:$0x1]
        %v5446 = vld [vmem:[%s113 + $0x10a] sm:$0x1]
        %v5447 = vld [vmem:[%s113 + $0x11a] sm:$0x1]
        %v5448 = vld [vmem:[%s113 + $0x12a] sm:$0x1]
        %v5449 = vld [vmem:[%s113 + $0x13a] sm:$0x1]
        %v5450 = vld [vmem:[%s113 + $0x14a] sm:$0x1]
        %v5451 = vld [vmem:[%s113 + $0x15a] sm:$0x1]
        %v5452 = vld [vmem:[%s113 + $0x16a] sm:$0x1]
        %v5453 = vld [vmem:[%s113 + $0x17a] sm:$0x1]
        %v5454 = vld [vmem:[%s113 + $0x18a] sm:$0x1]
        %v5455 = vld [vmem:[%s113 + $0x19a] sm:$0x1]
        %v5456 = vld [vmem:[%s113 + $0x1aa] sm:$0x1]
        %v5457 = vld [vmem:[%s113 + $0x1ba] sm:$0x1]
        %v5458 = vld [vmem:[%s113 + $0x1ca] sm:$0x1]
        %v5459 = vld [vmem:[%s113 + $0x1da] sm:$0x1]
        %v5460 = vld [vmem:[%s113 + $0x1ea] sm:$0x1]
        %v5461 = vld [vmem:[%s113 + $0x1fa] sm:$0x1]
        %v5462 = vld [vmem:[%s113 + $0x20a] sm:$0x1]
        %v5463 = vld [vmem:[%s113 + $0x21a] sm:$0x1]
        %v5464 = vld [vmem:[%s113 + $0x22a] sm:$0x1]
        %v5465 = vld [vmem:[%s113 + $0x23a] sm:$0x1]
        %v5466 = vld [vmem:[%s113 + $0x24a] sm:$0x1]
        %v5467 = vld [vmem:[%s113 + $0x25a] sm:$0x1]
        %v5468 = vld [vmem:[%s113 + $0x26a] sm:$0x1]
        %v5469 = vld [vmem:[%s113 + $0x27a] sm:$0x1]
        %v5470 = vld [vmem:[%s113 + $0x28a] sm:$0x1]
        %v5471 = vld [vmem:[%s113 + $0x29a] sm:$0x1]
        %v5472 = vld [vmem:[%s113 + $0x2aa] sm:$0x1]
        %v5473 = vld [vmem:[%s113 + $0x2ba] sm:$0x1]
        %v5474 = vld [vmem:[%s113 + $0x2ca] sm:$0x1]
        %v5475 = vld [vmem:[%s113 + $0x2da] sm:$0x1]
        %v5476 = vld [vmem:[%s113 + $0x2ea] sm:$0x1]
        %v5477 = vld [vmem:[%s113 + $0x2fa] sm:$0x1]
        %v5478 = vld [vmem:[%s113 + $0x30a] sm:$0x1]
        %v5479 = vld [vmem:[%s113 + $0x31a] sm:$0x1]
        %v5480 = vld [vmem:[%s113 + $0x32a] sm:$0x1]
        %v5481 = vld [vmem:[%s113 + $0x33a] sm:$0x1]
        %v5482 = vld [vmem:[%s113 + $0x34a] sm:$0x1]
        %v5483 = vld [vmem:[%s113 + $0x35a] sm:$0x1]
        %v5484 = vld [vmem:[%s113 + $0x36a] sm:$0x1]
        %v5485 = vld [vmem:[%s113 + $0x37a] sm:$0x1]
        %v5486 = vld [vmem:[%s113 + $0x38a] sm:$0x1]
        %v5487 = vld [vmem:[%s113 + $0x39a] sm:$0x1]
        %v5488 = vld [vmem:[%s113 + $0x3aa] sm:$0x1]
        %v5489 = vld [vmem:[%s113 + $0x3ba] sm:$0x1]
        %v5490 = vld [vmem:[%s113 + $0x3ca] sm:$0x1]
        %v5491 = vld [vmem:[%s113 + $0x3da] sm:$0x1]
        %v5492 = vld [vmem:[%s113 + $0x3ea] sm:$0x1]
        %v5493 = vld [vmem:[%s113 + $0x3fa] sm:$0x1]
        %v5494 = vld [vmem:[%s113 + $0x40a] sm:$0x1]
        %v5495 = vld [vmem:[%s113 + $0x41a] sm:$0x1]
        %v5496 = vld [vmem:[%s113 + $0x42a] sm:$0x1]
        %v5497 = vld [vmem:[%s113 + $0x43a] sm:$0x1]
        %v5498 = vld [vmem:[%s113 + $0x44a] sm:$0x1]
        %v5499 = vld [vmem:[%s113 + $0x45a] sm:$0x1]
        %v5500 = vld [vmem:[%s113 + $0x46a] sm:$0x1]
        %v5501 = vld [vmem:[%s113 + $0x47a] sm:$0x1]
        %v5502 = vld [vmem:[%s113 + $0x48a] sm:$0x1]
        %v5503 = vld [vmem:[%s113 + $0x49a] sm:$0x1]
        %v5504 = vld [vmem:[%s113 + $0x4aa] sm:$0x1]
        %v5505 = vld [vmem:[%s113 + $0x4ba] sm:$0x1]
        %v5506 = vld [vmem:[%s113 + $0x4ca] sm:$0x1]
        %v5507 = vld [vmem:[%s113 + $0x4da] sm:$0x1]
        %v5508 = vld [vmem:[%s113 + $0x4ea] sm:$0x1]
        %v5509 = vld [vmem:[%s113 + $0x4fa] sm:$0x1]
        %v5510 = vld [vmem:[%s113 + $0x50a] sm:$0x1]
        %v5511 = vld [vmem:[%s113 + $0x51a] sm:$0x1]
        %v5512 = vld [vmem:[%s113 + $0x52a] sm:$0x1]
        %v5513 = vld [vmem:[%s113 + $0x53a] sm:$0x1]
        %v5514 = vld [vmem:[%s113 + $0x54a] sm:$0x1]
        %v5515 = vld [vmem:[%s113 + $0x55a] sm:$0x1]
        %v5516 = vld [vmem:[%s113 + $0x56a] sm:$0x1]
        %v5517 = vld [vmem:[%s113 + $0x57a] sm:$0x1]
        %v5518 = vld [vmem:[%s113 + $0x58a] sm:$0x1]
        %v5519 = vld [vmem:[%s113 + $0x59a] sm:$0x1]
        %v5520 = vld [vmem:[%s113 + $0x5aa] sm:$0x1]
        %v5521 = vld [vmem:[%s113 + $0x5ba] sm:$0x1]
        %v5522 = vld [vmem:[%s113 + $0x5ca] sm:$0x1]
        %v5523 = vld [vmem:[%s113 + $0x5da] sm:$0x1]
        %v5524 = vld [vmem:[%s113 + $0x5ea] sm:$0x1]
        %v5525 = vld [vmem:[%s113 + $0x5fa] sm:$0x1]
        %v5526 = vld [vmem:[%s113 + $0x60a] sm:$0x1]
        %v5527 = vld [vmem:[%s113 + $0x61a] sm:$0x1]
        %v5528 = vld [vmem:[%s113 + $0x62a] sm:$0x1]
        %v5529 = vld [vmem:[%s113 + $0x63a] sm:$0x1]
        %v5530 = vld [vmem:[%s113 + $0x64a] sm:$0x1]
        %v5531 = vld [vmem:[%s113 + $0x65a] sm:$0x1]
        %v5532 = vld [vmem:[%s113 + $0x66a] sm:$0x1]
        %v5533 = vld [vmem:[%s113 + $0x67a] sm:$0x1]
        %v5534 = vld [vmem:[%s113 + $0x68a] sm:$0x1]
        %v5535 = vld [vmem:[%s113 + $0x69a] sm:$0x1]
        %v5536 = vld [vmem:[%s113 + $0x6aa] sm:$0x1]
        %v5537 = vld [vmem:[%s113 + $0x6ba] sm:$0x1]
        %v5538 = vld [vmem:[%s113 + $0x6ca] sm:$0x1]
        %v5539 = vld [vmem:[%s113 + $0x6da] sm:$0x1]
        %v5540 = vld [vmem:[%s113 + $0x6ea] sm:$0x1]
        %v5541 = vld [vmem:[%s113 + $0x6fa] sm:$0x1]
        %v5542 = vld [vmem:[%s113 + $0x70a] sm:$0x1]
        %v5543 = vld [vmem:[%s113 + $0x71a] sm:$0x1]
        %v5544 = vld [vmem:[%s113 + $0x72a] sm:$0x1]
        %v5545 = vld [vmem:[%s113 + $0x73a] sm:$0x1]
        %v5546 = vld [vmem:[%s113 + $0x74a] sm:$0x1]
        %v5547 = vld [vmem:[%s113 + $0x75a] sm:$0x1]
        %v5548 = vld [vmem:[%s113 + $0x76a] sm:$0x1]
        %v5549 = vld [vmem:[%s113 + $0x77a] sm:$0x1]
        %v5550 = vld [vmem:[%s113 + $0x78a] sm:$0x1]
        %v5551 = vld [vmem:[%s113 + $0x79a] sm:$0x1]
        %v5552 = vld [vmem:[%s113 + $0x7aa] sm:$0x1]
        %v5553 = vld [vmem:[%s113 + $0x7ba] sm:$0x1]
        %v5554 = vld [vmem:[%s113 + $0x7ca] sm:$0x1]
        %v5555 = vld [vmem:[%s113 + $0x7da] sm:$0x1]
        %v5556 = vld [vmem:[%s113 + $0x7ea] sm:$0x1]
        %v5557 = vld [vmem:[%s113 + $0x7fa] sm:$0x1]
        %v5686 = vrot.slane %v5431, 7
        %v5687 = vsel %vm371, %v5686, %v5430
        %v5688 = vrot.slane %v5432, 6
        %v5689 = vsel %vm374, %v5688, %v5687
        %v5690 = vrot.slane %v5433, 5
        %v5691 = vsel %vm377, %v5690, %v5689
        %v5692 = vrot.slane %v5434, 4
        %v5693 = vsel %vm380, %v5692, %v5691
        %v5694 = vrot.slane %v5435, 3
        %v5695 = vsel %vm383, %v5694, %v5693
        %v5696 = vrot.slane %v5436, 2
        %v5697 = vsel %vm386, %v5696, %v5695
        %v5698 = vrot.slane %v5437, 1
        %v5699 = vsel %vm389, %v5698, %v5697
        %v5700 = vrot.slane %v5439, 7
        %v5701 = vsel %vm371, %v5700, %v5438
        %v5702 = vrot.slane %v5440, 6
        %v5703 = vsel %vm374, %v5702, %v5701
        %v5704 = vrot.slane %v5441, 5
        %v5705 = vsel %vm377, %v5704, %v5703
        %v5706 = vrot.slane %v5442, 4
        %v5707 = vsel %vm380, %v5706, %v5705
        %v5708 = vrot.slane %v5443, 3
        %v5709 = vsel %vm383, %v5708, %v5707
        %v5710 = vrot.slane %v5444, 2
        %v5711 = vsel %vm386, %v5710, %v5709
        %v5712 = vrot.slane %v5445, 1
        %v5713 = vsel %vm389, %v5712, %v5711
        %v5714 = vrot.slane %v5447, 7
        %v5715 = vsel %vm371, %v5714, %v5446
        %v5716 = vrot.slane %v5448, 6
        %v5717 = vsel %vm374, %v5716, %v5715
        %v5718 = vrot.slane %v5449, 5
        %v5719 = vsel %vm377, %v5718, %v5717
        %v5720 = vrot.slane %v5450, 4
        %v5721 = vsel %vm380, %v5720, %v5719
        %v5722 = vrot.slane %v5451, 3
        %v5723 = vsel %vm383, %v5722, %v5721
        %v5724 = vrot.slane %v5452, 2
        %v5725 = vsel %vm386, %v5724, %v5723
        %v5726 = vrot.slane %v5453, 1
        %v5727 = vsel %vm389, %v5726, %v5725
        %v5728 = vrot.slane %v5455, 7
        %v5729 = vsel %vm371, %v5728, %v5454
        %v5730 = vrot.slane %v5456, 6
        %v5731 = vsel %vm374, %v5730, %v5729
        %v5732 = vrot.slane %v5457, 5
        %v5733 = vsel %vm377, %v5732, %v5731
        %v5734 = vrot.slane %v5458, 4
        %v5735 = vsel %vm380, %v5734, %v5733
        %v5736 = vrot.slane %v5459, 3
        %v5737 = vsel %vm383, %v5736, %v5735
        %v5738 = vrot.slane %v5460, 2
        %v5739 = vsel %vm386, %v5738, %v5737
        %v5740 = vrot.slane %v5461, 1
        %v5741 = vsel %vm389, %v5740, %v5739
        %v5742 = vrot.slane %v5463, 7
        %v5743 = vsel %vm371, %v5742, %v5462
        %v5744 = vrot.slane %v5464, 6
        %v5745 = vsel %vm374, %v5744, %v5743
        %v5746 = vrot.slane %v5465, 5
        %v5747 = vsel %vm377, %v5746, %v5745
        %v5748 = vrot.slane %v5466, 4
        %v5749 = vsel %vm380, %v5748, %v5747
        %v5750 = vrot.slane %v5467, 3
        %v5751 = vsel %vm383, %v5750, %v5749
        %v5752 = vrot.slane %v5468, 2
        %v5753 = vsel %vm386, %v5752, %v5751
        %v5754 = vrot.slane %v5469, 1
        %v5755 = vsel %vm389, %v5754, %v5753
        %v5756 = vrot.slane %v5471, 7
        %v5757 = vsel %vm371, %v5756, %v5470
        %v5758 = vrot.slane %v5472, 6
        %v5759 = vsel %vm374, %v5758, %v5757
        %v5760 = vrot.slane %v5473, 5
        %v5761 = vsel %vm377, %v5760, %v5759
        %v5762 = vrot.slane %v5474, 4
        %v5763 = vsel %vm380, %v5762, %v5761
        %v5764 = vrot.slane %v5475, 3
        %v5765 = vsel %vm383, %v5764, %v5763
        %v5766 = vrot.slane %v5476, 2
        %v5767 = vsel %vm386, %v5766, %v5765
        %v5768 = vrot.slane %v5477, 1
        %v5769 = vsel %vm389, %v5768, %v5767
        %v5770 = vrot.slane %v5479, 7
        %v5771 = vsel %vm371, %v5770, %v5478
        %v5772 = vrot.slane %v5480, 6
        %v5773 = vsel %vm374, %v5772, %v5771
        %v5774 = vrot.slane %v5481, 5
        %v5775 = vsel %vm377, %v5774, %v5773
        %v5776 = vrot.slane %v5482, 4
        %v5777 = vsel %vm380, %v5776, %v5775
        %v5778 = vrot.slane %v5483, 3
        %v5779 = vsel %vm383, %v5778, %v5777
        %v5780 = vrot.slane %v5484, 2
        %v5781 = vsel %vm386, %v5780, %v5779
        %v5782 = vrot.slane %v5485, 1
        %v5783 = vsel %vm389, %v5782, %v5781
        %v5784 = vrot.slane %v5487, 7
        %v5785 = vsel %vm371, %v5784, %v5486
        %v5786 = vrot.slane %v5488, 6
        %v5787 = vsel %vm374, %v5786, %v5785
        %v5788 = vrot.slane %v5489, 5
        %v5789 = vsel %vm377, %v5788, %v5787
        %v5790 = vrot.slane %v5490, 4
        %v5791 = vsel %vm380, %v5790, %v5789
        %v5792 = vrot.slane %v5491, 3
        %v5793 = vsel %vm383, %v5792, %v5791
        %v5794 = vrot.slane %v5492, 2
        %v5795 = vsel %vm386, %v5794, %v5793
        %v5796 = vrot.slane %v5493, 1
        %v5797 = vsel %vm389, %v5796, %v5795
        %v5798 = vrot.slane %v5495, 7
        %v5799 = vsel %vm371, %v5798, %v5494
        %v5800 = vrot.slane %v5496, 6
        %v5801 = vsel %vm374, %v5800, %v5799
        %v5802 = vrot.slane %v5497, 5
        %v5803 = vsel %vm377, %v5802, %v5801
        %v5804 = vrot.slane %v5498, 4
        %v5805 = vsel %vm380, %v5804, %v5803
        %v5806 = vrot.slane %v5499, 3
        %v5807 = vsel %vm383, %v5806, %v5805
        %v5808 = vrot.slane %v5500, 2
        %v5809 = vsel %vm386, %v5808, %v5807
        %v5810 = vrot.slane %v5501, 1
        %v5811 = vsel %vm389, %v5810, %v5809
        %v5812 = vrot.slane %v5503, 7
        %v5813 = vsel %vm371, %v5812, %v5502
        %v5814 = vrot.slane %v5504, 6
        %v5815 = vsel %vm374, %v5814, %v5813
        %v5816 = vrot.slane %v5505, 5
        %v5817 = vsel %vm377, %v5816, %v5815
        %v5818 = vrot.slane %v5506, 4
        %v5819 = vsel %vm380, %v5818, %v5817
        %v5820 = vrot.slane %v5507, 3
        %v5821 = vsel %vm383, %v5820, %v5819
        %v5822 = vrot.slane %v5508, 2
        %v5823 = vsel %vm386, %v5822, %v5821
        %v5824 = vrot.slane %v5509, 1
        %v5825 = vsel %vm389, %v5824, %v5823
        %v5826 = vrot.slane %v5511, 7
        %v5827 = vsel %vm371, %v5826, %v5510
        %v5828 = vrot.slane %v5512, 6
        %v5829 = vsel %vm374, %v5828, %v5827
        %v5830 = vrot.slane %v5513, 5
        %v5831 = vsel %vm377, %v5830, %v5829
        %v5832 = vrot.slane %v5514, 4
        %v5833 = vsel %vm380, %v5832, %v5831
        %v5834 = vrot.slane %v5515, 3
        %v5835 = vsel %vm383, %v5834, %v5833
        %v5836 = vrot.slane %v5516, 2
        %v5837 = vsel %vm386, %v5836, %v5835
        %v5838 = vrot.slane %v5517, 1
        %v5839 = vsel %vm389, %v5838, %v5837
        %v5840 = vrot.slane %v5519, 7
        %v5841 = vsel %vm371, %v5840, %v5518
        %v5842 = vrot.slane %v5520, 6
        %v5843 = vsel %vm374, %v5842, %v5841
        %v5844 = vrot.slane %v5521, 5
        %v5845 = vsel %vm377, %v5844, %v5843
        %v5846 = vrot.slane %v5522, 4
        %v5847 = vsel %vm380, %v5846, %v5845
        %v5848 = vrot.slane %v5523, 3
        %v5849 = vsel %vm383, %v5848, %v5847
        %v5850 = vrot.slane %v5524, 2
        %v5851 = vsel %vm386, %v5850, %v5849
        %v5852 = vrot.slane %v5525, 1
        %v5853 = vsel %vm389, %v5852, %v5851
        %v5854 = vrot.slane %v5527, 7
        %v5855 = vsel %vm371, %v5854, %v5526
        %v5856 = vrot.slane %v5528, 6
        %v5857 = vsel %vm374, %v5856, %v5855
        %v5858 = vrot.slane %v5529, 5
        %v5859 = vsel %vm377, %v5858, %v5857
        %v5860 = vrot.slane %v5530, 4
        %v5861 = vsel %vm380, %v5860, %v5859
        %v5862 = vrot.slane %v5531, 3
        %v5863 = vsel %vm383, %v5862, %v5861
        %v5864 = vrot.slane %v5532, 2
        %v5865 = vsel %vm386, %v5864, %v5863
        %v5866 = vrot.slane %v5533, 1
        %v5867 = vsel %vm389, %v5866, %v5865
        %v5868 = vrot.slane %v5535, 7
        %v5869 = vsel %vm371, %v5868, %v5534
        %v5870 = vrot.slane %v5536, 6
        %v5871 = vsel %vm374, %v5870, %v5869
        %v5872 = vrot.slane %v5537, 5
        %v5873 = vsel %vm377, %v5872, %v5871
        %v5874 = vrot.slane %v5538, 4
        %v5875 = vsel %vm380, %v5874, %v5873
        %v5876 = vrot.slane %v5539, 3
        %v5877 = vsel %vm383, %v5876, %v5875
        %v5878 = vrot.slane %v5540, 2
        %v5879 = vsel %vm386, %v5878, %v5877
        %v5880 = vrot.slane %v5541, 1
        %v5881 = vsel %vm389, %v5880, %v5879
        %v5882 = vrot.slane %v5543, 7
        %v5883 = vsel %vm371, %v5882, %v5542
        %v5884 = vrot.slane %v5544, 6
        %v5885 = vsel %vm374, %v5884, %v5883
        %v5886 = vrot.slane %v5545, 5
        %v5887 = vsel %vm377, %v5886, %v5885
        %v5888 = vrot.slane %v5546, 4
        %v5889 = vsel %vm380, %v5888, %v5887
        %v5890 = vrot.slane %v5547, 3
        %v5891 = vsel %vm383, %v5890, %v5889
        %v5892 = vrot.slane %v5548, 2
        %v5893 = vsel %vm386, %v5892, %v5891
        %v5894 = vrot.slane %v5549, 1
        %v5895 = vsel %vm389, %v5894, %v5893
        %v5896 = vrot.slane %v5551, 7
        %v5897 = vsel %vm371, %v5896, %v5550
        %v5898 = vrot.slane %v5552, 6
        %v5899 = vsel %vm374, %v5898, %v5897
        %v5900 = vrot.slane %v5553, 5
        %v5901 = vsel %vm377, %v5900, %v5899
        %v5902 = vrot.slane %v5554, 4
        %v5903 = vsel %vm380, %v5902, %v5901
        %v5904 = vrot.slane %v5555, 3
        %v5905 = vsel %vm383, %v5904, %v5903
        %v5906 = vrot.slane %v5556, 2
        %v5907 = vsel %vm386, %v5906, %v5905
        %v5908 = vrot.slane %v5557, 1
        %v5909 = vsel %vm389, %v5908, %v5907
        %5926 = vxpose.xlu0.b32.start [1/16] %v5699, 128
        %5927 = vxpose.xlu0.b32.cont [2/16] %v5713, 128
        %5928 = vxpose.xlu0.b32.cont [3/16] %v5727, 128
        %5929 = vxpose.xlu0.b32.cont [4/16] %v5741, 128
        %5930 = vxpose.xlu0.b32.cont [5/16] %v5755, 128
        %5931 = vxpose.xlu0.b32.cont [6/16] %v5769, 128
        %5932 = vxpose.xlu0.b32.cont [7/16] %v5783, 128
        %5933 = vxpose.xlu0.b32.cont [8/16] %v5797, 128
        %5934 = vxpose.xlu0.b32.cont [9/16] %v5811, 128
        %5935 = vxpose.xlu0.b32.cont [10/16] %v5825, 128
        %5936 = vxpose.xlu0.b32.cont [11/16] %v5839, 128
        %5937 = vxpose.xlu0.b32.cont [12/16] %v5853, 128
        %5938 = vxpose.xlu0.b32.cont [13/16] %v5867, 128
        %5939 = vxpose.xlu0.b32.cont [14/16] %v5881, 128
        %5940 = vxpose.xlu0.b32.cont [15/16] %v5895, 128
        %5941 = vxpose.xlu0.b32.end [16/16] %v5909, 128
        %v5942 = vpop.trf.xlu0
        %v5943 = vpop.trf.xlu0
        %v5944 = vpop.trf.xlu0
        %v5945 = vpop.trf.xlu0
        %v5946 = vpop.trf.xlu0
        %v5947 = vpop.trf.xlu0
        %v5948 = vpop.trf.xlu0
        %v5949 = vpop.trf.xlu0
        %v5950 = vpop.trf.xlu0
        %v5951 = vpop.trf.xlu0
        %v5952 = vpop.trf.xlu0
        %v5953 = vpop.trf.xlu0
        %v5954 = vpop.trf.xlu0
        %v5955 = vpop.trf.xlu0
        %v5956 = vpop.trf.xlu0
        %v5957 = vpop.trf.xlu0
        %s5958 = scalar_lea.vmem [#allocation2], 160
        %5959 = vst [vmem:[%s5958] sm:$0xff] %v5942
        %5960 = vst [vmem:[%s5958 + $0x8] sm:$0xff] %v5943
        %v5961 = vld [vmem:[%s113 + $0xb] sm:$0x1]
        %v5962 = vld [vmem:[%s113 + $0x1b] sm:$0x1]
        %v5963 = vld [vmem:[%s113 + $0x2b] sm:$0x1]
        %v5964 = vld [vmem:[%s113 + $0x3b] sm:$0x1]
        %v5965 = vld [vmem:[%s113 + $0x4b] sm:$0x1]
        %v5966 = vld [vmem:[%s113 + $0x5b] sm:$0x1]
        %v5967 = vld [vmem:[%s113 + $0x6b] sm:$0x1]
        %v5968 = vld [vmem:[%s113 + $0x7b] sm:$0x1]
        %v5969 = vld [vmem:[%s113 + $0x8b] sm:$0x1]
        %v5970 = vld [vmem:[%s113 + $0x9b] sm:$0x1]
        %v5971 = vld [vmem:[%s113 + $0xab] sm:$0x1]
        %v5972 = vld [vmem:[%s113 + $0xbb] sm:$0x1]
        %v5973 = vld [vmem:[%s113 + $0xcb] sm:$0x1]
        %v5974 = vld [vmem:[%s113 + $0xdb] sm:$0x1]
        %v5975 = vld [vmem:[%s113 + $0xeb] sm:$0x1]
        %v5976 = vld [vmem:[%s113 + $0xfb] sm:$0x1]
        %v5977 = vld [vmem:[%s113 + $0x10b] sm:$0x1]
        %v5978 = vld [vmem:[%s113 + $0x11b] sm:$0x1]
        %v5979 = vld [vmem:[%s113 + $0x12b] sm:$0x1]
        %v5980 = vld [vmem:[%s113 + $0x13b] sm:$0x1]
        %v5981 = vld [vmem:[%s113 + $0x14b] sm:$0x1]
        %v5982 = vld [vmem:[%s113 + $0x15b] sm:$0x1]
        %v5983 = vld [vmem:[%s113 + $0x16b] sm:$0x1]
        %v5984 = vld [vmem:[%s113 + $0x17b] sm:$0x1]
        %v5985 = vld [vmem:[%s113 + $0x18b] sm:$0x1]
        %v5986 = vld [vmem:[%s113 + $0x19b] sm:$0x1]
        %v5987 = vld [vmem:[%s113 + $0x1ab] sm:$0x1]
        %v5988 = vld [vmem:[%s113 + $0x1bb] sm:$0x1]
        %v5989 = vld [vmem:[%s113 + $0x1cb] sm:$0x1]
        %v5990 = vld [vmem:[%s113 + $0x1db] sm:$0x1]
        %v5991 = vld [vmem:[%s113 + $0x1eb] sm:$0x1]
        %v5992 = vld [vmem:[%s113 + $0x1fb] sm:$0x1]
        %v5993 = vld [vmem:[%s113 + $0x20b] sm:$0x1]
        %v5994 = vld [vmem:[%s113 + $0x21b] sm:$0x1]
        %v5995 = vld [vmem:[%s113 + $0x22b] sm:$0x1]
        %v5996 = vld [vmem:[%s113 + $0x23b] sm:$0x1]
        %v5997 = vld [vmem:[%s113 + $0x24b] sm:$0x1]
        %v5998 = vld [vmem:[%s113 + $0x25b] sm:$0x1]
        %v5999 = vld [vmem:[%s113 + $0x26b] sm:$0x1]
        %v6000 = vld [vmem:[%s113 + $0x27b] sm:$0x1]
        %v6001 = vld [vmem:[%s113 + $0x28b] sm:$0x1]
        %v6002 = vld [vmem:[%s113 + $0x29b] sm:$0x1]
        %v6003 = vld [vmem:[%s113 + $0x2ab] sm:$0x1]
        %v6004 = vld [vmem:[%s113 + $0x2bb] sm:$0x1]
        %v6005 = vld [vmem:[%s113 + $0x2cb] sm:$0x1]
        %v6006 = vld [vmem:[%s113 + $0x2db] sm:$0x1]
        %v6007 = vld [vmem:[%s113 + $0x2eb] sm:$0x1]
        %v6008 = vld [vmem:[%s113 + $0x2fb] sm:$0x1]
        %v6009 = vld [vmem:[%s113 + $0x30b] sm:$0x1]
        %v6010 = vld [vmem:[%s113 + $0x31b] sm:$0x1]
        %v6011 = vld [vmem:[%s113 + $0x32b] sm:$0x1]
        %v6012 = vld [vmem:[%s113 + $0x33b] sm:$0x1]
        %v6013 = vld [vmem:[%s113 + $0x34b] sm:$0x1]
        %v6014 = vld [vmem:[%s113 + $0x35b] sm:$0x1]
        %v6015 = vld [vmem:[%s113 + $0x36b] sm:$0x1]
        %v6016 = vld [vmem:[%s113 + $0x37b] sm:$0x1]
        %v6017 = vld [vmem:[%s113 + $0x38b] sm:$0x1]
        %v6018 = vld [vmem:[%s113 + $0x39b] sm:$0x1]
        %v6019 = vld [vmem:[%s113 + $0x3ab] sm:$0x1]
        %v6020 = vld [vmem:[%s113 + $0x3bb] sm:$0x1]
        %v6021 = vld [vmem:[%s113 + $0x3cb] sm:$0x1]
        %v6022 = vld [vmem:[%s113 + $0x3db] sm:$0x1]
        %v6023 = vld [vmem:[%s113 + $0x3eb] sm:$0x1]
        %v6024 = vld [vmem:[%s113 + $0x3fb] sm:$0x1]
        %v6025 = vld [vmem:[%s113 + $0x40b] sm:$0x1]
        %v6026 = vld [vmem:[%s113 + $0x41b] sm:$0x1]
        %v6027 = vld [vmem:[%s113 + $0x42b] sm:$0x1]
        %v6028 = vld [vmem:[%s113 + $0x43b] sm:$0x1]
        %v6029 = vld [vmem:[%s113 + $0x44b] sm:$0x1]
        %v6030 = vld [vmem:[%s113 + $0x45b] sm:$0x1]
        %v6031 = vld [vmem:[%s113 + $0x46b] sm:$0x1]
        %v6032 = vld [vmem:[%s113 + $0x47b] sm:$0x1]
        %v6033 = vld [vmem:[%s113 + $0x48b] sm:$0x1]
        %v6034 = vld [vmem:[%s113 + $0x49b] sm:$0x1]
        %v6035 = vld [vmem:[%s113 + $0x4ab] sm:$0x1]
        %v6036 = vld [vmem:[%s113 + $0x4bb] sm:$0x1]
        %v6037 = vld [vmem:[%s113 + $0x4cb] sm:$0x1]
        %v6038 = vld [vmem:[%s113 + $0x4db] sm:$0x1]
        %v6039 = vld [vmem:[%s113 + $0x4eb] sm:$0x1]
        %v6040 = vld [vmem:[%s113 + $0x4fb] sm:$0x1]
        %v6041 = vld [vmem:[%s113 + $0x50b] sm:$0x1]
        %v6042 = vld [vmem:[%s113 + $0x51b] sm:$0x1]
        %v6043 = vld [vmem:[%s113 + $0x52b] sm:$0x1]
        %v6044 = vld [vmem:[%s113 + $0x53b] sm:$0x1]
        %v6045 = vld [vmem:[%s113 + $0x54b] sm:$0x1]
        %v6046 = vld [vmem:[%s113 + $0x55b] sm:$0x1]
        %v6047 = vld [vmem:[%s113 + $0x56b] sm:$0x1]
        %v6048 = vld [vmem:[%s113 + $0x57b] sm:$0x1]
        %v6049 = vld [vmem:[%s113 + $0x58b] sm:$0x1]
        %v6050 = vld [vmem:[%s113 + $0x59b] sm:$0x1]
        %v6051 = vld [vmem:[%s113 + $0x5ab] sm:$0x1]
        %v6052 = vld [vmem:[%s113 + $0x5bb] sm:$0x1]
        %v6053 = vld [vmem:[%s113 + $0x5cb] sm:$0x1]
        %v6054 = vld [vmem:[%s113 + $0x5db] sm:$0x1]
        %v6055 = vld [vmem:[%s113 + $0x5eb] sm:$0x1]
        %v6056 = vld [vmem:[%s113 + $0x5fb] sm:$0x1]
        %v6057 = vld [vmem:[%s113 + $0x60b] sm:$0x1]
        %v6058 = vld [vmem:[%s113 + $0x61b] sm:$0x1]
        %v6059 = vld [vmem:[%s113 + $0x62b] sm:$0x1]
        %v6060 = vld [vmem:[%s113 + $0x63b] sm:$0x1]
        %v6061 = vld [vmem:[%s113 + $0x64b] sm:$0x1]
        %v6062 = vld [vmem:[%s113 + $0x65b] sm:$0x1]
        %v6063 = vld [vmem:[%s113 + $0x66b] sm:$0x1]
        %v6064 = vld [vmem:[%s113 + $0x67b] sm:$0x1]
        %v6065 = vld [vmem:[%s113 + $0x68b] sm:$0x1]
        %v6066 = vld [vmem:[%s113 + $0x69b] sm:$0x1]
        %v6067 = vld [vmem:[%s113 + $0x6ab] sm:$0x1]
        %v6068 = vld [vmem:[%s113 + $0x6bb] sm:$0x1]
        %v6069 = vld [vmem:[%s113 + $0x6cb] sm:$0x1]
        %v6070 = vld [vmem:[%s113 + $0x6db] sm:$0x1]
        %v6071 = vld [vmem:[%s113 + $0x6eb] sm:$0x1]
        %v6072 = vld [vmem:[%s113 + $0x6fb] sm:$0x1]
        %v6073 = vld [vmem:[%s113 + $0x70b] sm:$0x1]
        %v6074 = vld [vmem:[%s113 + $0x71b] sm:$0x1]
        %v6075 = vld [vmem:[%s113 + $0x72b] sm:$0x1]
        %v6076 = vld [vmem:[%s113 + $0x73b] sm:$0x1]
        %v6077 = vld [vmem:[%s113 + $0x74b] sm:$0x1]
        %v6078 = vld [vmem:[%s113 + $0x75b] sm:$0x1]
        %v6079 = vld [vmem:[%s113 + $0x76b] sm:$0x1]
        %v6080 = vld [vmem:[%s113 + $0x77b] sm:$0x1]
        %v6081 = vld [vmem:[%s113 + $0x78b] sm:$0x1]
        %v6082 = vld [vmem:[%s113 + $0x79b] sm:$0x1]
        %v6083 = vld [vmem:[%s113 + $0x7ab] sm:$0x1]
        %v6084 = vld [vmem:[%s113 + $0x7bb] sm:$0x1]
        %v6085 = vld [vmem:[%s113 + $0x7cb] sm:$0x1]
        %v6086 = vld [vmem:[%s113 + $0x7db] sm:$0x1]
        %v6087 = vld [vmem:[%s113 + $0x7eb] sm:$0x1]
        %v6088 = vld [vmem:[%s113 + $0x7fb] sm:$0x1]
        %v6217 = vrot.slane %v5962, 7
        %v6218 = vsel %vm371, %v6217, %v5961
        %v6219 = vrot.slane %v5963, 6
        %v6220 = vsel %vm374, %v6219, %v6218
        %v6221 = vrot.slane %v5964, 5
        %v6222 = vsel %vm377, %v6221, %v6220
        %v6223 = vrot.slane %v5965, 4
        %v6224 = vsel %vm380, %v6223, %v6222
        %v6225 = vrot.slane %v5966, 3
        %v6226 = vsel %vm383, %v6225, %v6224
        %v6227 = vrot.slane %v5967, 2
        %v6228 = vsel %vm386, %v6227, %v6226
        %v6229 = vrot.slane %v5968, 1
        %v6230 = vsel %vm389, %v6229, %v6228
        %v6231 = vrot.slane %v5970, 7
        %v6232 = vsel %vm371, %v6231, %v5969
        %v6233 = vrot.slane %v5971, 6
        %v6234 = vsel %vm374, %v6233, %v6232
        %v6235 = vrot.slane %v5972, 5
        %v6236 = vsel %vm377, %v6235, %v6234
        %v6237 = vrot.slane %v5973, 4
        %v6238 = vsel %vm380, %v6237, %v6236
        %v6239 = vrot.slane %v5974, 3
        %v6240 = vsel %vm383, %v6239, %v6238
        %v6241 = vrot.slane %v5975, 2
        %v6242 = vsel %vm386, %v6241, %v6240
        %v6243 = vrot.slane %v5976, 1
        %v6244 = vsel %vm389, %v6243, %v6242
        %v6245 = vrot.slane %v5978, 7
        %v6246 = vsel %vm371, %v6245, %v5977
        %v6247 = vrot.slane %v5979, 6
        %v6248 = vsel %vm374, %v6247, %v6246
        %v6249 = vrot.slane %v5980, 5
        %v6250 = vsel %vm377, %v6249, %v6248
        %v6251 = vrot.slane %v5981, 4
        %v6252 = vsel %vm380, %v6251, %v6250
        %v6253 = vrot.slane %v5982, 3
        %v6254 = vsel %vm383, %v6253, %v6252
        %v6255 = vrot.slane %v5983, 2
        %v6256 = vsel %vm386, %v6255, %v6254
        %v6257 = vrot.slane %v5984, 1
        %v6258 = vsel %vm389, %v6257, %v6256
        %v6259 = vrot.slane %v5986, 7
        %v6260 = vsel %vm371, %v6259, %v5985
        %v6261 = vrot.slane %v5987, 6
        %v6262 = vsel %vm374, %v6261, %v6260
        %v6263 = vrot.slane %v5988, 5
        %v6264 = vsel %vm377, %v6263, %v6262
        %v6265 = vrot.slane %v5989, 4
        %v6266 = vsel %vm380, %v6265, %v6264
        %v6267 = vrot.slane %v5990, 3
        %v6268 = vsel %vm383, %v6267, %v6266
        %v6269 = vrot.slane %v5991, 2
        %v6270 = vsel %vm386, %v6269, %v6268
        %v6271 = vrot.slane %v5992, 1
        %v6272 = vsel %vm389, %v6271, %v6270
        %v6273 = vrot.slane %v5994, 7
        %v6274 = vsel %vm371, %v6273, %v5993
        %v6275 = vrot.slane %v5995, 6
        %v6276 = vsel %vm374, %v6275, %v6274
        %v6277 = vrot.slane %v5996, 5
        %v6278 = vsel %vm377, %v6277, %v6276
        %v6279 = vrot.slane %v5997, 4
        %v6280 = vsel %vm380, %v6279, %v6278
        %v6281 = vrot.slane %v5998, 3
        %v6282 = vsel %vm383, %v6281, %v6280
        %v6283 = vrot.slane %v5999, 2
        %v6284 = vsel %vm386, %v6283, %v6282
        %v6285 = vrot.slane %v6000, 1
        %v6286 = vsel %vm389, %v6285, %v6284
        %v6287 = vrot.slane %v6002, 7
        %v6288 = vsel %vm371, %v6287, %v6001
        %v6289 = vrot.slane %v6003, 6
        %v6290 = vsel %vm374, %v6289, %v6288
        %v6291 = vrot.slane %v6004, 5
        %v6292 = vsel %vm377, %v6291, %v6290
        %v6293 = vrot.slane %v6005, 4
        %v6294 = vsel %vm380, %v6293, %v6292
        %v6295 = vrot.slane %v6006, 3
        %v6296 = vsel %vm383, %v6295, %v6294
        %v6297 = vrot.slane %v6007, 2
        %v6298 = vsel %vm386, %v6297, %v6296
        %v6299 = vrot.slane %v6008, 1
        %v6300 = vsel %vm389, %v6299, %v6298
        %v6301 = vrot.slane %v6010, 7
        %v6302 = vsel %vm371, %v6301, %v6009
        %v6303 = vrot.slane %v6011, 6
        %v6304 = vsel %vm374, %v6303, %v6302
        %v6305 = vrot.slane %v6012, 5
        %v6306 = vsel %vm377, %v6305, %v6304
        %v6307 = vrot.slane %v6013, 4
        %v6308 = vsel %vm380, %v6307, %v6306
        %v6309 = vrot.slane %v6014, 3
        %v6310 = vsel %vm383, %v6309, %v6308
        %v6311 = vrot.slane %v6015, 2
        %v6312 = vsel %vm386, %v6311, %v6310
        %v6313 = vrot.slane %v6016, 1
        %v6314 = vsel %vm389, %v6313, %v6312
        %v6315 = vrot.slane %v6018, 7
        %v6316 = vsel %vm371, %v6315, %v6017
        %v6317 = vrot.slane %v6019, 6
        %v6318 = vsel %vm374, %v6317, %v6316
        %v6319 = vrot.slane %v6020, 5
        %v6320 = vsel %vm377, %v6319, %v6318
        %v6321 = vrot.slane %v6021, 4
        %v6322 = vsel %vm380, %v6321, %v6320
        %v6323 = vrot.slane %v6022, 3
        %v6324 = vsel %vm383, %v6323, %v6322
        %v6325 = vrot.slane %v6023, 2
        %v6326 = vsel %vm386, %v6325, %v6324
        %v6327 = vrot.slane %v6024, 1
        %v6328 = vsel %vm389, %v6327, %v6326
        %v6329 = vrot.slane %v6026, 7
        %v6330 = vsel %vm371, %v6329, %v6025
        %v6331 = vrot.slane %v6027, 6
        %v6332 = vsel %vm374, %v6331, %v6330
        %v6333 = vrot.slane %v6028, 5
        %v6334 = vsel %vm377, %v6333, %v6332
        %v6335 = vrot.slane %v6029, 4
        %v6336 = vsel %vm380, %v6335, %v6334
        %v6337 = vrot.slane %v6030, 3
        %v6338 = vsel %vm383, %v6337, %v6336
        %v6339 = vrot.slane %v6031, 2
        %v6340 = vsel %vm386, %v6339, %v6338
        %v6341 = vrot.slane %v6032, 1
        %v6342 = vsel %vm389, %v6341, %v6340
        %v6343 = vrot.slane %v6034, 7
        %v6344 = vsel %vm371, %v6343, %v6033
        %v6345 = vrot.slane %v6035, 6
        %v6346 = vsel %vm374, %v6345, %v6344
        %v6347 = vrot.slane %v6036, 5
        %v6348 = vsel %vm377, %v6347, %v6346
        %v6349 = vrot.slane %v6037, 4
        %v6350 = vsel %vm380, %v6349, %v6348
        %v6351 = vrot.slane %v6038, 3
        %v6352 = vsel %vm383, %v6351, %v6350
        %v6353 = vrot.slane %v6039, 2
        %v6354 = vsel %vm386, %v6353, %v6352
        %v6355 = vrot.slane %v6040, 1
        %v6356 = vsel %vm389, %v6355, %v6354
        %v6357 = vrot.slane %v6042, 7
        %v6358 = vsel %vm371, %v6357, %v6041
        %v6359 = vrot.slane %v6043, 6
        %v6360 = vsel %vm374, %v6359, %v6358
        %v6361 = vrot.slane %v6044, 5
        %v6362 = vsel %vm377, %v6361, %v6360
        %v6363 = vrot.slane %v6045, 4
        %v6364 = vsel %vm380, %v6363, %v6362
        %v6365 = vrot.slane %v6046, 3
        %v6366 = vsel %vm383, %v6365, %v6364
        %v6367 = vrot.slane %v6047, 2
        %v6368 = vsel %vm386, %v6367, %v6366
        %v6369 = vrot.slane %v6048, 1
        %v6370 = vsel %vm389, %v6369, %v6368
        %v6371 = vrot.slane %v6050, 7
        %v6372 = vsel %vm371, %v6371, %v6049
        %v6373 = vrot.slane %v6051, 6
        %v6374 = vsel %vm374, %v6373, %v6372
        %v6375 = vrot.slane %v6052, 5
        %v6376 = vsel %vm377, %v6375, %v6374
        %v6377 = vrot.slane %v6053, 4
        %v6378 = vsel %vm380, %v6377, %v6376
        %v6379 = vrot.slane %v6054, 3
        %v6380 = vsel %vm383, %v6379, %v6378
        %v6381 = vrot.slane %v6055, 2
        %v6382 = vsel %vm386, %v6381, %v6380
        %v6383 = vrot.slane %v6056, 1
        %v6384 = vsel %vm389, %v6383, %v6382
        %v6385 = vrot.slane %v6058, 7
        %v6386 = vsel %vm371, %v6385, %v6057
        %v6387 = vrot.slane %v6059, 6
        %v6388 = vsel %vm374, %v6387, %v6386
        %v6389 = vrot.slane %v6060, 5
        %v6390 = vsel %vm377, %v6389, %v6388
        %v6391 = vrot.slane %v6061, 4
        %v6392 = vsel %vm380, %v6391, %v6390
        %v6393 = vrot.slane %v6062, 3
        %v6394 = vsel %vm383, %v6393, %v6392
        %v6395 = vrot.slane %v6063, 2
        %v6396 = vsel %vm386, %v6395, %v6394
        %v6397 = vrot.slane %v6064, 1
        %v6398 = vsel %vm389, %v6397, %v6396
        %v6399 = vrot.slane %v6066, 7
        %v6400 = vsel %vm371, %v6399, %v6065
        %v6401 = vrot.slane %v6067, 6
        %v6402 = vsel %vm374, %v6401, %v6400
        %v6403 = vrot.slane %v6068, 5
        %v6404 = vsel %vm377, %v6403, %v6402
        %v6405 = vrot.slane %v6069, 4
        %v6406 = vsel %vm380, %v6405, %v6404
        %v6407 = vrot.slane %v6070, 3
        %v6408 = vsel %vm383, %v6407, %v6406
        %v6409 = vrot.slane %v6071, 2
        %v6410 = vsel %vm386, %v6409, %v6408
        %v6411 = vrot.slane %v6072, 1
        %v6412 = vsel %vm389, %v6411, %v6410
        %v6413 = vrot.slane %v6074, 7
        %v6414 = vsel %vm371, %v6413, %v6073
        %v6415 = vrot.slane %v6075, 6
        %v6416 = vsel %vm374, %v6415, %v6414
        %v6417 = vrot.slane %v6076, 5
        %v6418 = vsel %vm377, %v6417, %v6416
        %v6419 = vrot.slane %v6077, 4
        %v6420 = vsel %vm380, %v6419, %v6418
        %v6421 = vrot.slane %v6078, 3
        %v6422 = vsel %vm383, %v6421, %v6420
        %v6423 = vrot.slane %v6079, 2
        %v6424 = vsel %vm386, %v6423, %v6422
        %v6425 = vrot.slane %v6080, 1
        %v6426 = vsel %vm389, %v6425, %v6424
        %v6427 = vrot.slane %v6082, 7
        %v6428 = vsel %vm371, %v6427, %v6081
        %v6429 = vrot.slane %v6083, 6
        %v6430 = vsel %vm374, %v6429, %v6428
        %v6431 = vrot.slane %v6084, 5
        %v6432 = vsel %vm377, %v6431, %v6430
        %v6433 = vrot.slane %v6085, 4
        %v6434 = vsel %vm380, %v6433, %v6432
        %v6435 = vrot.slane %v6086, 3
        %v6436 = vsel %vm383, %v6435, %v6434
        %v6437 = vrot.slane %v6087, 2
        %v6438 = vsel %vm386, %v6437, %v6436
        %v6439 = vrot.slane %v6088, 1
        %v6440 = vsel %vm389, %v6439, %v6438
        %6457 = vxpose.xlu0.b32.start [1/16] %v6230, 128
        %6458 = vxpose.xlu0.b32.cont [2/16] %v6244, 128
        %6459 = vxpose.xlu0.b32.cont [3/16] %v6258, 128
        %6460 = vxpose.xlu0.b32.cont [4/16] %v6272, 128
        %6461 = vxpose.xlu0.b32.cont [5/16] %v6286, 128
        %6462 = vxpose.xlu0.b32.cont [6/16] %v6300, 128
        %6463 = vxpose.xlu0.b32.cont [7/16] %v6314, 128
        %6464 = vxpose.xlu0.b32.cont [8/16] %v6328, 128
        %6465 = vxpose.xlu0.b32.cont [9/16] %v6342, 128
        %6466 = vxpose.xlu0.b32.cont [10/16] %v6356, 128
        %6467 = vxpose.xlu0.b32.cont [11/16] %v6370, 128
        %6468 = vxpose.xlu0.b32.cont [12/16] %v6384, 128
        %6469 = vxpose.xlu0.b32.cont [13/16] %v6398, 128
        %6470 = vxpose.xlu0.b32.cont [14/16] %v6412, 128
        %6471 = vxpose.xlu0.b32.cont [15/16] %v6426, 128
        %6472 = vxpose.xlu0.b32.end [16/16] %v6440, 128
        %v6473 = vpop.trf.xlu0
        %v6474 = vpop.trf.xlu0
        %v6475 = vpop.trf.xlu0
        %v6476 = vpop.trf.xlu0
        %v6477 = vpop.trf.xlu0
        %v6478 = vpop.trf.xlu0
        %v6479 = vpop.trf.xlu0
        %v6480 = vpop.trf.xlu0
        %v6481 = vpop.trf.xlu0
        %v6482 = vpop.trf.xlu0
        %v6483 = vpop.trf.xlu0
        %v6484 = vpop.trf.xlu0
        %v6485 = vpop.trf.xlu0
        %v6486 = vpop.trf.xlu0
        %v6487 = vpop.trf.xlu0
        %v6488 = vpop.trf.xlu0
        %s6489 = scalar_lea.vmem [#allocation2], 176
        %6490 = vst [vmem:[%s6489] sm:$0xff] %v6473
        %6491 = vst [vmem:[%s6489 + $0x8] sm:$0xff] %v6474
        %v6492 = vld [vmem:[%s113 + $0xc] sm:$0x1]
        %v6493 = vld [vmem:[%s113 + $0x1c] sm:$0x1]
        %v6494 = vld [vmem:[%s113 + $0x2c] sm:$0x1]
        %v6495 = vld [vmem:[%s113 + $0x3c] sm:$0x1]
        %v6496 = vld [vmem:[%s113 + $0x4c] sm:$0x1]
        %v6497 = vld [vmem:[%s113 + $0x5c] sm:$0x1]
        %v6498 = vld [vmem:[%s113 + $0x6c] sm:$0x1]
        %v6499 = vld [vmem:[%s113 + $0x7c] sm:$0x1]
        %v6500 = vld [vmem:[%s113 + $0x8c] sm:$0x1]
        %v6501 = vld [vmem:[%s113 + $0x9c] sm:$0x1]
        %v6502 = vld [vmem:[%s113 + $0xac] sm:$0x1]
        %v6503 = vld [vmem:[%s113 + $0xbc] sm:$0x1]
        %v6504 = vld [vmem:[%s113 + $0xcc] sm:$0x1]
        %v6505 = vld [vmem:[%s113 + $0xdc] sm:$0x1]
        %v6506 = vld [vmem:[%s113 + $0xec] sm:$0x1]
        %v6507 = vld [vmem:[%s113 + $0xfc] sm:$0x1]
        %v6508 = vld [vmem:[%s113 + $0x10c] sm:$0x1]
        %v6509 = vld [vmem:[%s113 + $0x11c] sm:$0x1]
        %v6510 = vld [vmem:[%s113 + $0x12c] sm:$0x1]
        %v6511 = vld [vmem:[%s113 + $0x13c] sm:$0x1]
        %v6512 = vld [vmem:[%s113 + $0x14c] sm:$0x1]
        %v6513 = vld [vmem:[%s113 + $0x15c] sm:$0x1]
        %v6514 = vld [vmem:[%s113 + $0x16c] sm:$0x1]
        %v6515 = vld [vmem:[%s113 + $0x17c] sm:$0x1]
        %v6516 = vld [vmem:[%s113 + $0x18c] sm:$0x1]
        %v6517 = vld [vmem:[%s113 + $0x19c] sm:$0x1]
        %v6518 = vld [vmem:[%s113 + $0x1ac] sm:$0x1]
        %v6519 = vld [vmem:[%s113 + $0x1bc] sm:$0x1]
        %v6520 = vld [vmem:[%s113 + $0x1cc] sm:$0x1]
        %v6521 = vld [vmem:[%s113 + $0x1dc] sm:$0x1]
        %v6522 = vld [vmem:[%s113 + $0x1ec] sm:$0x1]
        %v6523 = vld [vmem:[%s113 + $0x1fc] sm:$0x1]
        %v6524 = vld [vmem:[%s113 + $0x20c] sm:$0x1]
        %v6525 = vld [vmem:[%s113 + $0x21c] sm:$0x1]
        %v6526 = vld [vmem:[%s113 + $0x22c] sm:$0x1]
        %v6527 = vld [vmem:[%s113 + $0x23c] sm:$0x1]
        %v6528 = vld [vmem:[%s113 + $0x24c] sm:$0x1]
        %v6529 = vld [vmem:[%s113 + $0x25c] sm:$0x1]
        %v6530 = vld [vmem:[%s113 + $0x26c] sm:$0x1]
        %v6531 = vld [vmem:[%s113 + $0x27c] sm:$0x1]
        %v6532 = vld [vmem:[%s113 + $0x28c] sm:$0x1]
        %v6533 = vld [vmem:[%s113 + $0x29c] sm:$0x1]
        %v6534 = vld [vmem:[%s113 + $0x2ac] sm:$0x1]
        %v6535 = vld [vmem:[%s113 + $0x2bc] sm:$0x1]
        %v6536 = vld [vmem:[%s113 + $0x2cc] sm:$0x1]
        %v6537 = vld [vmem:[%s113 + $0x2dc] sm:$0x1]
        %v6538 = vld [vmem:[%s113 + $0x2ec] sm:$0x1]
        %v6539 = vld [vmem:[%s113 + $0x2fc] sm:$0x1]
        %v6540 = vld [vmem:[%s113 + $0x30c] sm:$0x1]
        %v6541 = vld [vmem:[%s113 + $0x31c] sm:$0x1]
        %v6542 = vld [vmem:[%s113 + $0x32c] sm:$0x1]
        %v6543 = vld [vmem:[%s113 + $0x33c] sm:$0x1]
        %v6544 = vld [vmem:[%s113 + $0x34c] sm:$0x1]
        %v6545 = vld [vmem:[%s113 + $0x35c] sm:$0x1]
        %v6546 = vld [vmem:[%s113 + $0x36c] sm:$0x1]
        %v6547 = vld [vmem:[%s113 + $0x37c] sm:$0x1]
        %v6548 = vld [vmem:[%s113 + $0x38c] sm:$0x1]
        %v6549 = vld [vmem:[%s113 + $0x39c] sm:$0x1]
        %v6550 = vld [vmem:[%s113 + $0x3ac] sm:$0x1]
        %v6551 = vld [vmem:[%s113 + $0x3bc] sm:$0x1]
        %v6552 = vld [vmem:[%s113 + $0x3cc] sm:$0x1]
        %v6553 = vld [vmem:[%s113 + $0x3dc] sm:$0x1]
        %v6554 = vld [vmem:[%s113 + $0x3ec] sm:$0x1]
        %v6555 = vld [vmem:[%s113 + $0x3fc] sm:$0x1]
        %v6556 = vld [vmem:[%s113 + $0x40c] sm:$0x1]
        %v6557 = vld [vmem:[%s113 + $0x41c] sm:$0x1]
        %v6558 = vld [vmem:[%s113 + $0x42c] sm:$0x1]
        %v6559 = vld [vmem:[%s113 + $0x43c] sm:$0x1]
        %v6560 = vld [vmem:[%s113 + $0x44c] sm:$0x1]
        %v6561 = vld [vmem:[%s113 + $0x45c] sm:$0x1]
        %v6562 = vld [vmem:[%s113 + $0x46c] sm:$0x1]
        %v6563 = vld [vmem:[%s113 + $0x47c] sm:$0x1]
        %v6564 = vld [vmem:[%s113 + $0x48c] sm:$0x1]
        %v6565 = vld [vmem:[%s113 + $0x49c] sm:$0x1]
        %v6566 = vld [vmem:[%s113 + $0x4ac] sm:$0x1]
        %v6567 = vld [vmem:[%s113 + $0x4bc] sm:$0x1]
        %v6568 = vld [vmem:[%s113 + $0x4cc] sm:$0x1]
        %v6569 = vld [vmem:[%s113 + $0x4dc] sm:$0x1]
        %v6570 = vld [vmem:[%s113 + $0x4ec] sm:$0x1]
        %v6571 = vld [vmem:[%s113 + $0x4fc] sm:$0x1]
        %v6572 = vld [vmem:[%s113 + $0x50c] sm:$0x1]
        %v6573 = vld [vmem:[%s113 + $0x51c] sm:$0x1]
        %v6574 = vld [vmem:[%s113 + $0x52c] sm:$0x1]
        %v6575 = vld [vmem:[%s113 + $0x53c] sm:$0x1]
        %v6576 = vld [vmem:[%s113 + $0x54c] sm:$0x1]
        %v6577 = vld [vmem:[%s113 + $0x55c] sm:$0x1]
        %v6578 = vld [vmem:[%s113 + $0x56c] sm:$0x1]
        %v6579 = vld [vmem:[%s113 + $0x57c] sm:$0x1]
        %v6580 = vld [vmem:[%s113 + $0x58c] sm:$0x1]
        %v6581 = vld [vmem:[%s113 + $0x59c] sm:$0x1]
        %v6582 = vld [vmem:[%s113 + $0x5ac] sm:$0x1]
        %v6583 = vld [vmem:[%s113 + $0x5bc] sm:$0x1]
        %v6584 = vld [vmem:[%s113 + $0x5cc] sm:$0x1]
        %v6585 = vld [vmem:[%s113 + $0x5dc] sm:$0x1]
        %v6586 = vld [vmem:[%s113 + $0x5ec] sm:$0x1]
        %v6587 = vld [vmem:[%s113 + $0x5fc] sm:$0x1]
        %v6588 = vld [vmem:[%s113 + $0x60c] sm:$0x1]
        %v6589 = vld [vmem:[%s113 + $0x61c] sm:$0x1]
        %v6590 = vld [vmem:[%s113 + $0x62c] sm:$0x1]
        %v6591 = vld [vmem:[%s113 + $0x63c] sm:$0x1]
        %v6592 = vld [vmem:[%s113 + $0x64c] sm:$0x1]
        %v6593 = vld [vmem:[%s113 + $0x65c] sm:$0x1]
        %v6594 = vld [vmem:[%s113 + $0x66c] sm:$0x1]
        %v6595 = vld [vmem:[%s113 + $0x67c] sm:$0x1]
        %v6596 = vld [vmem:[%s113 + $0x68c] sm:$0x1]
        %v6597 = vld [vmem:[%s113 + $0x69c] sm:$0x1]
        %v6598 = vld [vmem:[%s113 + $0x6ac] sm:$0x1]
        %v6599 = vld [vmem:[%s113 + $0x6bc] sm:$0x1]
        %v6600 = vld [vmem:[%s113 + $0x6cc] sm:$0x1]
        %v6601 = vld [vmem:[%s113 + $0x6dc] sm:$0x1]
        %v6602 = vld [vmem:[%s113 + $0x6ec] sm:$0x1]
        %v6603 = vld [vmem:[%s113 + $0x6fc] sm:$0x1]
        %v6604 = vld [vmem:[%s113 + $0x70c] sm:$0x1]
        %v6605 = vld [vmem:[%s113 + $0x71c] sm:$0x1]
        %v6606 = vld [vmem:[%s113 + $0x72c] sm:$0x1]
        %v6607 = vld [vmem:[%s113 + $0x73c] sm:$0x1]
        %v6608 = vld [vmem:[%s113 + $0x74c] sm:$0x1]
        %v6609 = vld [vmem:[%s113 + $0x75c] sm:$0x1]
        %v6610 = vld [vmem:[%s113 + $0x76c] sm:$0x1]
        %v6611 = vld [vmem:[%s113 + $0x77c] sm:$0x1]
        %v6612 = vld [vmem:[%s113 + $0x78c] sm:$0x1]
        %v6613 = vld [vmem:[%s113 + $0x79c] sm:$0x1]
        %v6614 = vld [vmem:[%s113 + $0x7ac] sm:$0x1]
        %v6615 = vld [vmem:[%s113 + $0x7bc] sm:$0x1]
        %v6616 = vld [vmem:[%s113 + $0x7cc] sm:$0x1]
        %v6617 = vld [vmem:[%s113 + $0x7dc] sm:$0x1]
        %v6618 = vld [vmem:[%s113 + $0x7ec] sm:$0x1]
        %v6619 = vld [vmem:[%s113 + $0x7fc] sm:$0x1]
        %v6748 = vrot.slane %v6493, 7
        %v6749 = vsel %vm371, %v6748, %v6492
        %v6750 = vrot.slane %v6494, 6
        %v6751 = vsel %vm374, %v6750, %v6749
        %v6752 = vrot.slane %v6495, 5
        %v6753 = vsel %vm377, %v6752, %v6751
        %v6754 = vrot.slane %v6496, 4
        %v6755 = vsel %vm380, %v6754, %v6753
        %v6756 = vrot.slane %v6497, 3
        %v6757 = vsel %vm383, %v6756, %v6755
        %v6758 = vrot.slane %v6498, 2
        %v6759 = vsel %vm386, %v6758, %v6757
        %v6760 = vrot.slane %v6499, 1
        %v6761 = vsel %vm389, %v6760, %v6759
        %v6762 = vrot.slane %v6501, 7
        %v6763 = vsel %vm371, %v6762, %v6500
        %v6764 = vrot.slane %v6502, 6
        %v6765 = vsel %vm374, %v6764, %v6763
        %v6766 = vrot.slane %v6503, 5
        %v6767 = vsel %vm377, %v6766, %v6765
        %v6768 = vrot.slane %v6504, 4
        %v6769 = vsel %vm380, %v6768, %v6767
        %v6770 = vrot.slane %v6505, 3
        %v6771 = vsel %vm383, %v6770, %v6769
        %v6772 = vrot.slane %v6506, 2
        %v6773 = vsel %vm386, %v6772, %v6771
        %v6774 = vrot.slane %v6507, 1
        %v6775 = vsel %vm389, %v6774, %v6773
        %v6776 = vrot.slane %v6509, 7
        %v6777 = vsel %vm371, %v6776, %v6508
        %v6778 = vrot.slane %v6510, 6
        %v6779 = vsel %vm374, %v6778, %v6777
        %v6780 = vrot.slane %v6511, 5
        %v6781 = vsel %vm377, %v6780, %v6779
        %v6782 = vrot.slane %v6512, 4
        %v6783 = vsel %vm380, %v6782, %v6781
        %v6784 = vrot.slane %v6513, 3
        %v6785 = vsel %vm383, %v6784, %v6783
        %v6786 = vrot.slane %v6514, 2
        %v6787 = vsel %vm386, %v6786, %v6785
        %v6788 = vrot.slane %v6515, 1
        %v6789 = vsel %vm389, %v6788, %v6787
        %v6790 = vrot.slane %v6517, 7
        %v6791 = vsel %vm371, %v6790, %v6516
        %v6792 = vrot.slane %v6518, 6
        %v6793 = vsel %vm374, %v6792, %v6791
        %v6794 = vrot.slane %v6519, 5
        %v6795 = vsel %vm377, %v6794, %v6793
        %v6796 = vrot.slane %v6520, 4
        %v6797 = vsel %vm380, %v6796, %v6795
        %v6798 = vrot.slane %v6521, 3
        %v6799 = vsel %vm383, %v6798, %v6797
        %v6800 = vrot.slane %v6522, 2
        %v6801 = vsel %vm386, %v6800, %v6799
        %v6802 = vrot.slane %v6523, 1
        %v6803 = vsel %vm389, %v6802, %v6801
        %v6804 = vrot.slane %v6525, 7
        %v6805 = vsel %vm371, %v6804, %v6524
        %v6806 = vrot.slane %v6526, 6
        %v6807 = vsel %vm374, %v6806, %v6805
        %v6808 = vrot.slane %v6527, 5
        %v6809 = vsel %vm377, %v6808, %v6807
        %v6810 = vrot.slane %v6528, 4
        %v6811 = vsel %vm380, %v6810, %v6809
        %v6812 = vrot.slane %v6529, 3
        %v6813 = vsel %vm383, %v6812, %v6811
        %v6814 = vrot.slane %v6530, 2
        %v6815 = vsel %vm386, %v6814, %v6813
        %v6816 = vrot.slane %v6531, 1
        %v6817 = vsel %vm389, %v6816, %v6815
        %v6818 = vrot.slane %v6533, 7
        %v6819 = vsel %vm371, %v6818, %v6532
        %v6820 = vrot.slane %v6534, 6
        %v6821 = vsel %vm374, %v6820, %v6819
        %v6822 = vrot.slane %v6535, 5
        %v6823 = vsel %vm377, %v6822, %v6821
        %v6824 = vrot.slane %v6536, 4
        %v6825 = vsel %vm380, %v6824, %v6823
        %v6826 = vrot.slane %v6537, 3
        %v6827 = vsel %vm383, %v6826, %v6825
        %v6828 = vrot.slane %v6538, 2
        %v6829 = vsel %vm386, %v6828, %v6827
        %v6830 = vrot.slane %v6539, 1
        %v6831 = vsel %vm389, %v6830, %v6829
        %v6832 = vrot.slane %v6541, 7
        %v6833 = vsel %vm371, %v6832, %v6540
        %v6834 = vrot.slane %v6542, 6
        %v6835 = vsel %vm374, %v6834, %v6833
        %v6836 = vrot.slane %v6543, 5
        %v6837 = vsel %vm377, %v6836, %v6835
        %v6838 = vrot.slane %v6544, 4
        %v6839 = vsel %vm380, %v6838, %v6837
        %v6840 = vrot.slane %v6545, 3
        %v6841 = vsel %vm383, %v6840, %v6839
        %v6842 = vrot.slane %v6546, 2
        %v6843 = vsel %vm386, %v6842, %v6841
        %v6844 = vrot.slane %v6547, 1
        %v6845 = vsel %vm389, %v6844, %v6843
        %v6846 = vrot.slane %v6549, 7
        %v6847 = vsel %vm371, %v6846, %v6548
        %v6848 = vrot.slane %v6550, 6
        %v6849 = vsel %vm374, %v6848, %v6847
        %v6850 = vrot.slane %v6551, 5
        %v6851 = vsel %vm377, %v6850, %v6849
        %v6852 = vrot.slane %v6552, 4
        %v6853 = vsel %vm380, %v6852, %v6851
        %v6854 = vrot.slane %v6553, 3
        %v6855 = vsel %vm383, %v6854, %v6853
        %v6856 = vrot.slane %v6554, 2
        %v6857 = vsel %vm386, %v6856, %v6855
        %v6858 = vrot.slane %v6555, 1
        %v6859 = vsel %vm389, %v6858, %v6857
        %v6860 = vrot.slane %v6557, 7
        %v6861 = vsel %vm371, %v6860, %v6556
        %v6862 = vrot.slane %v6558, 6
        %v6863 = vsel %vm374, %v6862, %v6861
        %v6864 = vrot.slane %v6559, 5
        %v6865 = vsel %vm377, %v6864, %v6863
        %v6866 = vrot.slane %v6560, 4
        %v6867 = vsel %vm380, %v6866, %v6865
        %v6868 = vrot.slane %v6561, 3
        %v6869 = vsel %vm383, %v6868, %v6867
        %v6870 = vrot.slane %v6562, 2
        %v6871 = vsel %vm386, %v6870, %v6869
        %v6872 = vrot.slane %v6563, 1
        %v6873 = vsel %vm389, %v6872, %v6871
        %v6874 = vrot.slane %v6565, 7
        %v6875 = vsel %vm371, %v6874, %v6564
        %v6876 = vrot.slane %v6566, 6
        %v6877 = vsel %vm374, %v6876, %v6875
        %v6878 = vrot.slane %v6567, 5
        %v6879 = vsel %vm377, %v6878, %v6877
        %v6880 = vrot.slane %v6568, 4
        %v6881 = vsel %vm380, %v6880, %v6879
        %v6882 = vrot.slane %v6569, 3
        %v6883 = vsel %vm383, %v6882, %v6881
        %v6884 = vrot.slane %v6570, 2
        %v6885 = vsel %vm386, %v6884, %v6883
        %v6886 = vrot.slane %v6571, 1
        %v6887 = vsel %vm389, %v6886, %v6885
        %v6888 = vrot.slane %v6573, 7
        %v6889 = vsel %vm371, %v6888, %v6572
        %v6890 = vrot.slane %v6574, 6
        %v6891 = vsel %vm374, %v6890, %v6889
        %v6892 = vrot.slane %v6575, 5
        %v6893 = vsel %vm377, %v6892, %v6891
        %v6894 = vrot.slane %v6576, 4
        %v6895 = vsel %vm380, %v6894, %v6893
        %v6896 = vrot.slane %v6577, 3
        %v6897 = vsel %vm383, %v6896, %v6895
        %v6898 = vrot.slane %v6578, 2
        %v6899 = vsel %vm386, %v6898, %v6897
        %v6900 = vrot.slane %v6579, 1
        %v6901 = vsel %vm389, %v6900, %v6899
        %v6902 = vrot.slane %v6581, 7
        %v6903 = vsel %vm371, %v6902, %v6580
        %v6904 = vrot.slane %v6582, 6
        %v6905 = vsel %vm374, %v6904, %v6903
        %v6906 = vrot.slane %v6583, 5
        %v6907 = vsel %vm377, %v6906, %v6905
        %v6908 = vrot.slane %v6584, 4
        %v6909 = vsel %vm380, %v6908, %v6907
        %v6910 = vrot.slane %v6585, 3
        %v6911 = vsel %vm383, %v6910, %v6909
        %v6912 = vrot.slane %v6586, 2
        %v6913 = vsel %vm386, %v6912, %v6911
        %v6914 = vrot.slane %v6587, 1
        %v6915 = vsel %vm389, %v6914, %v6913
        %v6916 = vrot.slane %v6589, 7
        %v6917 = vsel %vm371, %v6916, %v6588
        %v6918 = vrot.slane %v6590, 6
        %v6919 = vsel %vm374, %v6918, %v6917
        %v6920 = vrot.slane %v6591, 5
        %v6921 = vsel %vm377, %v6920, %v6919
        %v6922 = vrot.slane %v6592, 4
        %v6923 = vsel %vm380, %v6922, %v6921
        %v6924 = vrot.slane %v6593, 3
        %v6925 = vsel %vm383, %v6924, %v6923
        %v6926 = vrot.slane %v6594, 2
        %v6927 = vsel %vm386, %v6926, %v6925
        %v6928 = vrot.slane %v6595, 1
        %v6929 = vsel %vm389, %v6928, %v6927
        %v6930 = vrot.slane %v6597, 7
        %v6931 = vsel %vm371, %v6930, %v6596
        %v6932 = vrot.slane %v6598, 6
        %v6933 = vsel %vm374, %v6932, %v6931
        %v6934 = vrot.slane %v6599, 5
        %v6935 = vsel %vm377, %v6934, %v6933
        %v6936 = vrot.slane %v6600, 4
        %v6937 = vsel %vm380, %v6936, %v6935
        %v6938 = vrot.slane %v6601, 3
        %v6939 = vsel %vm383, %v6938, %v6937
        %v6940 = vrot.slane %v6602, 2
        %v6941 = vsel %vm386, %v6940, %v6939
        %v6942 = vrot.slane %v6603, 1
        %v6943 = vsel %vm389, %v6942, %v6941
        %v6944 = vrot.slane %v6605, 7
        %v6945 = vsel %vm371, %v6944, %v6604
        %v6946 = vrot.slane %v6606, 6
        %v6947 = vsel %vm374, %v6946, %v6945
        %v6948 = vrot.slane %v6607, 5
        %v6949 = vsel %vm377, %v6948, %v6947
        %v6950 = vrot.slane %v6608, 4
        %v6951 = vsel %vm380, %v6950, %v6949
        %v6952 = vrot.slane %v6609, 3
        %v6953 = vsel %vm383, %v6952, %v6951
        %v6954 = vrot.slane %v6610, 2
        %v6955 = vsel %vm386, %v6954, %v6953
        %v6956 = vrot.slane %v6611, 1
        %v6957 = vsel %vm389, %v6956, %v6955
        %v6958 = vrot.slane %v6613, 7
        %v6959 = vsel %vm371, %v6958, %v6612
        %v6960 = vrot.slane %v6614, 6
        %v6961 = vsel %vm374, %v6960, %v6959
        %v6962 = vrot.slane %v6615, 5
        %v6963 = vsel %vm377, %v6962, %v6961
        %v6964 = vrot.slane %v6616, 4
        %v6965 = vsel %vm380, %v6964, %v6963
        %v6966 = vrot.slane %v6617, 3
        %v6967 = vsel %vm383, %v6966, %v6965
        %v6968 = vrot.slane %v6618, 2
        %v6969 = vsel %vm386, %v6968, %v6967
        %v6970 = vrot.slane %v6619, 1
        %v6971 = vsel %vm389, %v6970, %v6969
        %6988 = vxpose.xlu0.b32.start [1/16] %v6761, 128
        %6989 = vxpose.xlu0.b32.cont [2/16] %v6775, 128
        %6990 = vxpose.xlu0.b32.cont [3/16] %v6789, 128
        %6991 = vxpose.xlu0.b32.cont [4/16] %v6803, 128
        %6992 = vxpose.xlu0.b32.cont [5/16] %v6817, 128
        %6993 = vxpose.xlu0.b32.cont [6/16] %v6831, 128
        %6994 = vxpose.xlu0.b32.cont [7/16] %v6845, 128
        %6995 = vxpose.xlu0.b32.cont [8/16] %v6859, 128
        %6996 = vxpose.xlu0.b32.cont [9/16] %v6873, 128
        %6997 = vxpose.xlu0.b32.cont [10/16] %v6887, 128
        %6998 = vxpose.xlu0.b32.cont [11/16] %v6901, 128
        %6999 = vxpose.xlu0.b32.cont [12/16] %v6915, 128
        %7000 = vxpose.xlu0.b32.cont [13/16] %v6929, 128
        %7001 = vxpose.xlu0.b32.cont [14/16] %v6943, 128
        %7002 = vxpose.xlu0.b32.cont [15/16] %v6957, 128
        %7003 = vxpose.xlu0.b32.end [16/16] %v6971, 128
        %v7004 = vpop.trf.xlu0
        %v7005 = vpop.trf.xlu0
        %v7006 = vpop.trf.xlu0
        %v7007 = vpop.trf.xlu0
        %v7008 = vpop.trf.xlu0
        %v7009 = vpop.trf.xlu0
        %v7010 = vpop.trf.xlu0
        %v7011 = vpop.trf.xlu0
        %v7012 = vpop.trf.xlu0
        %v7013 = vpop.trf.xlu0
        %v7014 = vpop.trf.xlu0
        %v7015 = vpop.trf.xlu0
        %v7016 = vpop.trf.xlu0
        %v7017 = vpop.trf.xlu0
        %v7018 = vpop.trf.xlu0
        %v7019 = vpop.trf.xlu0
        %s7020 = scalar_lea.vmem [#allocation2], 192
        %7021 = vst [vmem:[%s7020] sm:$0xff] %v7004
        %7022 = vst [vmem:[%s7020 + $0x8] sm:$0xff] %v7005
        %v7023 = vld [vmem:[%s113 + $0xd] sm:$0x1]
        %v7024 = vld [vmem:[%s113 + $0x1d] sm:$0x1]
        %v7025 = vld [vmem:[%s113 + $0x2d] sm:$0x1]
        %v7026 = vld [vmem:[%s113 + $0x3d] sm:$0x1]
        %v7027 = vld [vmem:[%s113 + $0x4d] sm:$0x1]
        %v7028 = vld [vmem:[%s113 + $0x5d] sm:$0x1]
        %v7029 = vld [vmem:[%s113 + $0x6d] sm:$0x1]
        %v7030 = vld [vmem:[%s113 + $0x7d] sm:$0x1]
        %v7031 = vld [vmem:[%s113 + $0x8d] sm:$0x1]
        %v7032 = vld [vmem:[%s113 + $0x9d] sm:$0x1]
        %v7033 = vld [vmem:[%s113 + $0xad] sm:$0x1]
        %v7034 = vld [vmem:[%s113 + $0xbd] sm:$0x1]
        %v7035 = vld [vmem:[%s113 + $0xcd] sm:$0x1]
        %v7036 = vld [vmem:[%s113 + $0xdd] sm:$0x1]
        %v7037 = vld [vmem:[%s113 + $0xed] sm:$0x1]
        %v7038 = vld [vmem:[%s113 + $0xfd] sm:$0x1]
        %v7039 = vld [vmem:[%s113 + $0x10d] sm:$0x1]
        %v7040 = vld [vmem:[%s113 + $0x11d] sm:$0x1]
        %v7041 = vld [vmem:[%s113 + $0x12d] sm:$0x1]
        %v7042 = vld [vmem:[%s113 + $0x13d] sm:$0x1]
        %v7043 = vld [vmem:[%s113 + $0x14d] sm:$0x1]
        %v7044 = vld [vmem:[%s113 + $0x15d] sm:$0x1]
        %v7045 = vld [vmem:[%s113 + $0x16d] sm:$0x1]
        %v7046 = vld [vmem:[%s113 + $0x17d] sm:$0x1]
        %v7047 = vld [vmem:[%s113 + $0x18d] sm:$0x1]
        %v7048 = vld [vmem:[%s113 + $0x19d] sm:$0x1]
        %v7049 = vld [vmem:[%s113 + $0x1ad] sm:$0x1]
        %v7050 = vld [vmem:[%s113 + $0x1bd] sm:$0x1]
        %v7051 = vld [vmem:[%s113 + $0x1cd] sm:$0x1]
        %v7052 = vld [vmem:[%s113 + $0x1dd] sm:$0x1]
        %v7053 = vld [vmem:[%s113 + $0x1ed] sm:$0x1]
        %v7054 = vld [vmem:[%s113 + $0x1fd] sm:$0x1]
        %v7055 = vld [vmem:[%s113 + $0x20d] sm:$0x1]
        %v7056 = vld [vmem:[%s113 + $0x21d] sm:$0x1]
        %v7057 = vld [vmem:[%s113 + $0x22d] sm:$0x1]
        %v7058 = vld [vmem:[%s113 + $0x23d] sm:$0x1]
        %v7059 = vld [vmem:[%s113 + $0x24d] sm:$0x1]
        %v7060 = vld [vmem:[%s113 + $0x25d] sm:$0x1]
        %v7061 = vld [vmem:[%s113 + $0x26d] sm:$0x1]
        %v7062 = vld [vmem:[%s113 + $0x27d] sm:$0x1]
        %v7063 = vld [vmem:[%s113 + $0x28d] sm:$0x1]
        %v7064 = vld [vmem:[%s113 + $0x29d] sm:$0x1]
        %v7065 = vld [vmem:[%s113 + $0x2ad] sm:$0x1]
        %v7066 = vld [vmem:[%s113 + $0x2bd] sm:$0x1]
        %v7067 = vld [vmem:[%s113 + $0x2cd] sm:$0x1]
        %v7068 = vld [vmem:[%s113 + $0x2dd] sm:$0x1]
        %v7069 = vld [vmem:[%s113 + $0x2ed] sm:$0x1]
        %v7070 = vld [vmem:[%s113 + $0x2fd] sm:$0x1]
        %v7071 = vld [vmem:[%s113 + $0x30d] sm:$0x1]
        %v7072 = vld [vmem:[%s113 + $0x31d] sm:$0x1]
        %v7073 = vld [vmem:[%s113 + $0x32d] sm:$0x1]
        %v7074 = vld [vmem:[%s113 + $0x33d] sm:$0x1]
        %v7075 = vld [vmem:[%s113 + $0x34d] sm:$0x1]
        %v7076 = vld [vmem:[%s113 + $0x35d] sm:$0x1]
        %v7077 = vld [vmem:[%s113 + $0x36d] sm:$0x1]
        %v7078 = vld [vmem:[%s113 + $0x37d] sm:$0x1]
        %v7079 = vld [vmem:[%s113 + $0x38d] sm:$0x1]
        %v7080 = vld [vmem:[%s113 + $0x39d] sm:$0x1]
        %v7081 = vld [vmem:[%s113 + $0x3ad] sm:$0x1]
        %v7082 = vld [vmem:[%s113 + $0x3bd] sm:$0x1]
        %v7083 = vld [vmem:[%s113 + $0x3cd] sm:$0x1]
        %v7084 = vld [vmem:[%s113 + $0x3dd] sm:$0x1]
        %v7085 = vld [vmem:[%s113 + $0x3ed] sm:$0x1]
        %v7086 = vld [vmem:[%s113 + $0x3fd] sm:$0x1]
        %v7087 = vld [vmem:[%s113 + $0x40d] sm:$0x1]
        %v7088 = vld [vmem:[%s113 + $0x41d] sm:$0x1]
        %v7089 = vld [vmem:[%s113 + $0x42d] sm:$0x1]
        %v7090 = vld [vmem:[%s113 + $0x43d] sm:$0x1]
        %v7091 = vld [vmem:[%s113 + $0x44d] sm:$0x1]
        %v7092 = vld [vmem:[%s113 + $0x45d] sm:$0x1]
        %v7093 = vld [vmem:[%s113 + $0x46d] sm:$0x1]
        %v7094 = vld [vmem:[%s113 + $0x47d] sm:$0x1]
        %v7095 = vld [vmem:[%s113 + $0x48d] sm:$0x1]
        %v7096 = vld [vmem:[%s113 + $0x49d] sm:$0x1]
        %v7097 = vld [vmem:[%s113 + $0x4ad] sm:$0x1]
        %v7098 = vld [vmem:[%s113 + $0x4bd] sm:$0x1]
        %v7099 = vld [vmem:[%s113 + $0x4cd] sm:$0x1]
        %v7100 = vld [vmem:[%s113 + $0x4dd] sm:$0x1]
        %v7101 = vld [vmem:[%s113 + $0x4ed] sm:$0x1]
        %v7102 = vld [vmem:[%s113 + $0x4fd] sm:$0x1]
        %v7103 = vld [vmem:[%s113 + $0x50d] sm:$0x1]
        %v7104 = vld [vmem:[%s113 + $0x51d] sm:$0x1]
        %v7105 = vld [vmem:[%s113 + $0x52d] sm:$0x1]
        %v7106 = vld [vmem:[%s113 + $0x53d] sm:$0x1]
        %v7107 = vld [vmem:[%s113 + $0x54d] sm:$0x1]
        %v7108 = vld [vmem:[%s113 + $0x55d] sm:$0x1]
        %v7109 = vld [vmem:[%s113 + $0x56d] sm:$0x1]
        %v7110 = vld [vmem:[%s113 + $0x57d] sm:$0x1]
        %v7111 = vld [vmem:[%s113 + $0x58d] sm:$0x1]
        %v7112 = vld [vmem:[%s113 + $0x59d] sm:$0x1]
        %v7113 = vld [vmem:[%s113 + $0x5ad] sm:$0x1]
        %v7114 = vld [vmem:[%s113 + $0x5bd] sm:$0x1]
        %v7115 = vld [vmem:[%s113 + $0x5cd] sm:$0x1]
        %v7116 = vld [vmem:[%s113 + $0x5dd] sm:$0x1]
        %v7117 = vld [vmem:[%s113 + $0x5ed] sm:$0x1]
        %v7118 = vld [vmem:[%s113 + $0x5fd] sm:$0x1]
        %v7119 = vld [vmem:[%s113 + $0x60d] sm:$0x1]
        %v7120 = vld [vmem:[%s113 + $0x61d] sm:$0x1]
        %v7121 = vld [vmem:[%s113 + $0x62d] sm:$0x1]
        %v7122 = vld [vmem:[%s113 + $0x63d] sm:$0x1]
        %v7123 = vld [vmem:[%s113 + $0x64d] sm:$0x1]
        %v7124 = vld [vmem:[%s113 + $0x65d] sm:$0x1]
        %v7125 = vld [vmem:[%s113 + $0x66d] sm:$0x1]
        %v7126 = vld [vmem:[%s113 + $0x67d] sm:$0x1]
        %v7127 = vld [vmem:[%s113 + $0x68d] sm:$0x1]
        %v7128 = vld [vmem:[%s113 + $0x69d] sm:$0x1]
        %v7129 = vld [vmem:[%s113 + $0x6ad] sm:$0x1]
        %v7130 = vld [vmem:[%s113 + $0x6bd] sm:$0x1]
        %v7131 = vld [vmem:[%s113 + $0x6cd] sm:$0x1]
        %v7132 = vld [vmem:[%s113 + $0x6dd] sm:$0x1]
        %v7133 = vld [vmem:[%s113 + $0x6ed] sm:$0x1]
        %v7134 = vld [vmem:[%s113 + $0x6fd] sm:$0x1]
        %v7135 = vld [vmem:[%s113 + $0x70d] sm:$0x1]
        %v7136 = vld [vmem:[%s113 + $0x71d] sm:$0x1]
        %v7137 = vld [vmem:[%s113 + $0x72d] sm:$0x1]
        %v7138 = vld [vmem:[%s113 + $0x73d] sm:$0x1]
        %v7139 = vld [vmem:[%s113 + $0x74d] sm:$0x1]
        %v7140 = vld [vmem:[%s113 + $0x75d] sm:$0x1]
        %v7141 = vld [vmem:[%s113 + $0x76d] sm:$0x1]
        %v7142 = vld [vmem:[%s113 + $0x77d] sm:$0x1]
        %v7143 = vld [vmem:[%s113 + $0x78d] sm:$0x1]
        %v7144 = vld [vmem:[%s113 + $0x79d] sm:$0x1]
        %v7145 = vld [vmem:[%s113 + $0x7ad] sm:$0x1]
        %v7146 = vld [vmem:[%s113 + $0x7bd] sm:$0x1]
        %v7147 = vld [vmem:[%s113 + $0x7cd] sm:$0x1]
        %v7148 = vld [vmem:[%s113 + $0x7dd] sm:$0x1]
        %v7149 = vld [vmem:[%s113 + $0x7ed] sm:$0x1]
        %v7150 = vld [vmem:[%s113 + $0x7fd] sm:$0x1]
        %v7279 = vrot.slane %v7024, 7
        %v7280 = vsel %vm371, %v7279, %v7023
        %v7281 = vrot.slane %v7025, 6
        %v7282 = vsel %vm374, %v7281, %v7280
        %v7283 = vrot.slane %v7026, 5
        %v7284 = vsel %vm377, %v7283, %v7282
        %v7285 = vrot.slane %v7027, 4
        %v7286 = vsel %vm380, %v7285, %v7284
        %v7287 = vrot.slane %v7028, 3
        %v7288 = vsel %vm383, %v7287, %v7286
        %v7289 = vrot.slane %v7029, 2
        %v7290 = vsel %vm386, %v7289, %v7288
        %v7291 = vrot.slane %v7030, 1
        %v7292 = vsel %vm389, %v7291, %v7290
        %v7293 = vrot.slane %v7032, 7
        %v7294 = vsel %vm371, %v7293, %v7031
        %v7295 = vrot.slane %v7033, 6
        %v7296 = vsel %vm374, %v7295, %v7294
        %v7297 = vrot.slane %v7034, 5
        %v7298 = vsel %vm377, %v7297, %v7296
        %v7299 = vrot.slane %v7035, 4
        %v7300 = vsel %vm380, %v7299, %v7298
        %v7301 = vrot.slane %v7036, 3
        %v7302 = vsel %vm383, %v7301, %v7300
        %v7303 = vrot.slane %v7037, 2
        %v7304 = vsel %vm386, %v7303, %v7302
        %v7305 = vrot.slane %v7038, 1
        %v7306 = vsel %vm389, %v7305, %v7304
        %v7307 = vrot.slane %v7040, 7
        %v7308 = vsel %vm371, %v7307, %v7039
        %v7309 = vrot.slane %v7041, 6
        %v7310 = vsel %vm374, %v7309, %v7308
        %v7311 = vrot.slane %v7042, 5
        %v7312 = vsel %vm377, %v7311, %v7310
        %v7313 = vrot.slane %v7043, 4
        %v7314 = vsel %vm380, %v7313, %v7312
        %v7315 = vrot.slane %v7044, 3
        %v7316 = vsel %vm383, %v7315, %v7314
        %v7317 = vrot.slane %v7045, 2
        %v7318 = vsel %vm386, %v7317, %v7316
        %v7319 = vrot.slane %v7046, 1
        %v7320 = vsel %vm389, %v7319, %v7318
        %v7321 = vrot.slane %v7048, 7
        %v7322 = vsel %vm371, %v7321, %v7047
        %v7323 = vrot.slane %v7049, 6
        %v7324 = vsel %vm374, %v7323, %v7322
        %v7325 = vrot.slane %v7050, 5
        %v7326 = vsel %vm377, %v7325, %v7324
        %v7327 = vrot.slane %v7051, 4
        %v7328 = vsel %vm380, %v7327, %v7326
        %v7329 = vrot.slane %v7052, 3
        %v7330 = vsel %vm383, %v7329, %v7328
        %v7331 = vrot.slane %v7053, 2
        %v7332 = vsel %vm386, %v7331, %v7330
        %v7333 = vrot.slane %v7054, 1
        %v7334 = vsel %vm389, %v7333, %v7332
        %v7335 = vrot.slane %v7056, 7
        %v7336 = vsel %vm371, %v7335, %v7055
        %v7337 = vrot.slane %v7057, 6
        %v7338 = vsel %vm374, %v7337, %v7336
        %v7339 = vrot.slane %v7058, 5
        %v7340 = vsel %vm377, %v7339, %v7338
        %v7341 = vrot.slane %v7059, 4
        %v7342 = vsel %vm380, %v7341, %v7340
        %v7343 = vrot.slane %v7060, 3
        %v7344 = vsel %vm383, %v7343, %v7342
        %v7345 = vrot.slane %v7061, 2
        %v7346 = vsel %vm386, %v7345, %v7344
        %v7347 = vrot.slane %v7062, 1
        %v7348 = vsel %vm389, %v7347, %v7346
        %v7349 = vrot.slane %v7064, 7
        %v7350 = vsel %vm371, %v7349, %v7063
        %v7351 = vrot.slane %v7065, 6
        %v7352 = vsel %vm374, %v7351, %v7350
        %v7353 = vrot.slane %v7066, 5
        %v7354 = vsel %vm377, %v7353, %v7352
        %v7355 = vrot.slane %v7067, 4
        %v7356 = vsel %vm380, %v7355, %v7354
        %v7357 = vrot.slane %v7068, 3
        %v7358 = vsel %vm383, %v7357, %v7356
        %v7359 = vrot.slane %v7069, 2
        %v7360 = vsel %vm386, %v7359, %v7358
        %v7361 = vrot.slane %v7070, 1
        %v7362 = vsel %vm389, %v7361, %v7360
        %v7363 = vrot.slane %v7072, 7
        %v7364 = vsel %vm371, %v7363, %v7071
        %v7365 = vrot.slane %v7073, 6
        %v7366 = vsel %vm374, %v7365, %v7364
        %v7367 = vrot.slane %v7074, 5
        %v7368 = vsel %vm377, %v7367, %v7366
        %v7369 = vrot.slane %v7075, 4
        %v7370 = vsel %vm380, %v7369, %v7368
        %v7371 = vrot.slane %v7076, 3
        %v7372 = vsel %vm383, %v7371, %v7370
        %v7373 = vrot.slane %v7077, 2
        %v7374 = vsel %vm386, %v7373, %v7372
        %v7375 = vrot.slane %v7078, 1
        %v7376 = vsel %vm389, %v7375, %v7374
        %v7377 = vrot.slane %v7080, 7
        %v7378 = vsel %vm371, %v7377, %v7079
        %v7379 = vrot.slane %v7081, 6
        %v7380 = vsel %vm374, %v7379, %v7378
        %v7381 = vrot.slane %v7082, 5
        %v7382 = vsel %vm377, %v7381, %v7380
        %v7383 = vrot.slane %v7083, 4
        %v7384 = vsel %vm380, %v7383, %v7382
        %v7385 = vrot.slane %v7084, 3
        %v7386 = vsel %vm383, %v7385, %v7384
        %v7387 = vrot.slane %v7085, 2
        %v7388 = vsel %vm386, %v7387, %v7386
        %v7389 = vrot.slane %v7086, 1
        %v7390 = vsel %vm389, %v7389, %v7388
        %v7391 = vrot.slane %v7088, 7
        %v7392 = vsel %vm371, %v7391, %v7087
        %v7393 = vrot.slane %v7089, 6
        %v7394 = vsel %vm374, %v7393, %v7392
        %v7395 = vrot.slane %v7090, 5
        %v7396 = vsel %vm377, %v7395, %v7394
        %v7397 = vrot.slane %v7091, 4
        %v7398 = vsel %vm380, %v7397, %v7396
        %v7399 = vrot.slane %v7092, 3
        %v7400 = vsel %vm383, %v7399, %v7398
        %v7401 = vrot.slane %v7093, 2
        %v7402 = vsel %vm386, %v7401, %v7400
        %v7403 = vrot.slane %v7094, 1
        %v7404 = vsel %vm389, %v7403, %v7402
        %v7405 = vrot.slane %v7096, 7
        %v7406 = vsel %vm371, %v7405, %v7095
        %v7407 = vrot.slane %v7097, 6
        %v7408 = vsel %vm374, %v7407, %v7406
        %v7409 = vrot.slane %v7098, 5
        %v7410 = vsel %vm377, %v7409, %v7408
        %v7411 = vrot.slane %v7099, 4
        %v7412 = vsel %vm380, %v7411, %v7410
        %v7413 = vrot.slane %v7100, 3
        %v7414 = vsel %vm383, %v7413, %v7412
        %v7415 = vrot.slane %v7101, 2
        %v7416 = vsel %vm386, %v7415, %v7414
        %v7417 = vrot.slane %v7102, 1
        %v7418 = vsel %vm389, %v7417, %v7416
        %v7419 = vrot.slane %v7104, 7
        %v7420 = vsel %vm371, %v7419, %v7103
        %v7421 = vrot.slane %v7105, 6
        %v7422 = vsel %vm374, %v7421, %v7420
        %v7423 = vrot.slane %v7106, 5
        %v7424 = vsel %vm377, %v7423, %v7422
        %v7425 = vrot.slane %v7107, 4
        %v7426 = vsel %vm380, %v7425, %v7424
        %v7427 = vrot.slane %v7108, 3
        %v7428 = vsel %vm383, %v7427, %v7426
        %v7429 = vrot.slane %v7109, 2
        %v7430 = vsel %vm386, %v7429, %v7428
        %v7431 = vrot.slane %v7110, 1
        %v7432 = vsel %vm389, %v7431, %v7430
        %v7433 = vrot.slane %v7112, 7
        %v7434 = vsel %vm371, %v7433, %v7111
        %v7435 = vrot.slane %v7113, 6
        %v7436 = vsel %vm374, %v7435, %v7434
        %v7437 = vrot.slane %v7114, 5
        %v7438 = vsel %vm377, %v7437, %v7436
        %v7439 = vrot.slane %v7115, 4
        %v7440 = vsel %vm380, %v7439, %v7438
        %v7441 = vrot.slane %v7116, 3
        %v7442 = vsel %vm383, %v7441, %v7440
        %v7443 = vrot.slane %v7117, 2
        %v7444 = vsel %vm386, %v7443, %v7442
        %v7445 = vrot.slane %v7118, 1
        %v7446 = vsel %vm389, %v7445, %v7444
        %v7447 = vrot.slane %v7120, 7
        %v7448 = vsel %vm371, %v7447, %v7119
        %v7449 = vrot.slane %v7121, 6
        %v7450 = vsel %vm374, %v7449, %v7448
        %v7451 = vrot.slane %v7122, 5
        %v7452 = vsel %vm377, %v7451, %v7450
        %v7453 = vrot.slane %v7123, 4
        %v7454 = vsel %vm380, %v7453, %v7452
        %v7455 = vrot.slane %v7124, 3
        %v7456 = vsel %vm383, %v7455, %v7454
        %v7457 = vrot.slane %v7125, 2
        %v7458 = vsel %vm386, %v7457, %v7456
        %v7459 = vrot.slane %v7126, 1
        %v7460 = vsel %vm389, %v7459, %v7458
        %v7461 = vrot.slane %v7128, 7
        %v7462 = vsel %vm371, %v7461, %v7127
        %v7463 = vrot.slane %v7129, 6
        %v7464 = vsel %vm374, %v7463, %v7462
        %v7465 = vrot.slane %v7130, 5
        %v7466 = vsel %vm377, %v7465, %v7464
        %v7467 = vrot.slane %v7131, 4
        %v7468 = vsel %vm380, %v7467, %v7466
        %v7469 = vrot.slane %v7132, 3
        %v7470 = vsel %vm383, %v7469, %v7468
        %v7471 = vrot.slane %v7133, 2
        %v7472 = vsel %vm386, %v7471, %v7470
        %v7473 = vrot.slane %v7134, 1
        %v7474 = vsel %vm389, %v7473, %v7472
        %v7475 = vrot.slane %v7136, 7
        %v7476 = vsel %vm371, %v7475, %v7135
        %v7477 = vrot.slane %v7137, 6
        %v7478 = vsel %vm374, %v7477, %v7476
        %v7479 = vrot.slane %v7138, 5
        %v7480 = vsel %vm377, %v7479, %v7478
        %v7481 = vrot.slane %v7139, 4
        %v7482 = vsel %vm380, %v7481, %v7480
        %v7483 = vrot.slane %v7140, 3
        %v7484 = vsel %vm383, %v7483, %v7482
        %v7485 = vrot.slane %v7141, 2
        %v7486 = vsel %vm386, %v7485, %v7484
        %v7487 = vrot.slane %v7142, 1
        %v7488 = vsel %vm389, %v7487, %v7486
        %v7489 = vrot.slane %v7144, 7
        %v7490 = vsel %vm371, %v7489, %v7143
        %v7491 = vrot.slane %v7145, 6
        %v7492 = vsel %vm374, %v7491, %v7490
        %v7493 = vrot.slane %v7146, 5
        %v7494 = vsel %vm377, %v7493, %v7492
        %v7495 = vrot.slane %v7147, 4
        %v7496 = vsel %vm380, %v7495, %v7494
        %v7497 = vrot.slane %v7148, 3
        %v7498 = vsel %vm383, %v7497, %v7496
        %v7499 = vrot.slane %v7149, 2
        %v7500 = vsel %vm386, %v7499, %v7498
        %v7501 = vrot.slane %v7150, 1
        %v7502 = vsel %vm389, %v7501, %v7500
        %7519 = vxpose.xlu0.b32.start [1/16] %v7292, 128
        %7520 = vxpose.xlu0.b32.cont [2/16] %v7306, 128
        %7521 = vxpose.xlu0.b32.cont [3/16] %v7320, 128
        %7522 = vxpose.xlu0.b32.cont [4/16] %v7334, 128
        %7523 = vxpose.xlu0.b32.cont [5/16] %v7348, 128
        %7524 = vxpose.xlu0.b32.cont [6/16] %v7362, 128
        %7525 = vxpose.xlu0.b32.cont [7/16] %v7376, 128
        %7526 = vxpose.xlu0.b32.cont [8/16] %v7390, 128
        %7527 = vxpose.xlu0.b32.cont [9/16] %v7404, 128
        %7528 = vxpose.xlu0.b32.cont [10/16] %v7418, 128
        %7529 = vxpose.xlu0.b32.cont [11/16] %v7432, 128
        %7530 = vxpose.xlu0.b32.cont [12/16] %v7446, 128
        %7531 = vxpose.xlu0.b32.cont [13/16] %v7460, 128
        %7532 = vxpose.xlu0.b32.cont [14/16] %v7474, 128
        %7533 = vxpose.xlu0.b32.cont [15/16] %v7488, 128
        %7534 = vxpose.xlu0.b32.end [16/16] %v7502, 128
        %v7535 = vpop.trf.xlu0
        %v7536 = vpop.trf.xlu0
        %v7537 = vpop.trf.xlu0
        %v7538 = vpop.trf.xlu0
        %v7539 = vpop.trf.xlu0
        %v7540 = vpop.trf.xlu0
        %v7541 = vpop.trf.xlu0
        %v7542 = vpop.trf.xlu0
        %v7543 = vpop.trf.xlu0
        %v7544 = vpop.trf.xlu0
        %v7545 = vpop.trf.xlu0
        %v7546 = vpop.trf.xlu0
        %v7547 = vpop.trf.xlu0
        %v7548 = vpop.trf.xlu0
        %v7549 = vpop.trf.xlu0
        %v7550 = vpop.trf.xlu0
        %s7551 = scalar_lea.vmem [#allocation2], 208
        %7552 = vst [vmem:[%s7551] sm:$0xff] %v7535
        %7553 = vst [vmem:[%s7551 + $0x8] sm:$0xff] %v7536
        %v7554 = vld [vmem:[%s113 + $0xe] sm:$0x1]
        %v7555 = vld [vmem:[%s113 + $0x1e] sm:$0x1]
        %v7556 = vld [vmem:[%s113 + $0x2e] sm:$0x1]
        %v7557 = vld [vmem:[%s113 + $0x3e] sm:$0x1]
        %v7558 = vld [vmem:[%s113 + $0x4e] sm:$0x1]
        %v7559 = vld [vmem:[%s113 + $0x5e] sm:$0x1]
        %v7560 = vld [vmem:[%s113 + $0x6e] sm:$0x1]
        %v7561 = vld [vmem:[%s113 + $0x7e] sm:$0x1]
        %v7562 = vld [vmem:[%s113 + $0x8e] sm:$0x1]
        %v7563 = vld [vmem:[%s113 + $0x9e] sm:$0x1]
        %v7564 = vld [vmem:[%s113 + $0xae] sm:$0x1]
        %v7565 = vld [vmem:[%s113 + $0xbe] sm:$0x1]
        %v7566 = vld [vmem:[%s113 + $0xce] sm:$0x1]
        %v7567 = vld [vmem:[%s113 + $0xde] sm:$0x1]
        %v7568 = vld [vmem:[%s113 + $0xee] sm:$0x1]
        %v7569 = vld [vmem:[%s113 + $0xfe] sm:$0x1]
        %v7570 = vld [vmem:[%s113 + $0x10e] sm:$0x1]
        %v7571 = vld [vmem:[%s113 + $0x11e] sm:$0x1]
        %v7572 = vld [vmem:[%s113 + $0x12e] sm:$0x1]
        %v7573 = vld [vmem:[%s113 + $0x13e] sm:$0x1]
        %v7574 = vld [vmem:[%s113 + $0x14e] sm:$0x1]
        %v7575 = vld [vmem:[%s113 + $0x15e] sm:$0x1]
        %v7576 = vld [vmem:[%s113 + $0x16e] sm:$0x1]
        %v7577 = vld [vmem:[%s113 + $0x17e] sm:$0x1]
        %v7578 = vld [vmem:[%s113 + $0x18e] sm:$0x1]
        %v7579 = vld [vmem:[%s113 + $0x19e] sm:$0x1]
        %v7580 = vld [vmem:[%s113 + $0x1ae] sm:$0x1]
        %v7581 = vld [vmem:[%s113 + $0x1be] sm:$0x1]
        %v7582 = vld [vmem:[%s113 + $0x1ce] sm:$0x1]
        %v7583 = vld [vmem:[%s113 + $0x1de] sm:$0x1]
        %v7584 = vld [vmem:[%s113 + $0x1ee] sm:$0x1]
        %v7585 = vld [vmem:[%s113 + $0x1fe] sm:$0x1]
        %v7586 = vld [vmem:[%s113 + $0x20e] sm:$0x1]
        %v7587 = vld [vmem:[%s113 + $0x21e] sm:$0x1]
        %v7588 = vld [vmem:[%s113 + $0x22e] sm:$0x1]
        %v7589 = vld [vmem:[%s113 + $0x23e] sm:$0x1]
        %v7590 = vld [vmem:[%s113 + $0x24e] sm:$0x1]
        %v7591 = vld [vmem:[%s113 + $0x25e] sm:$0x1]
        %v7592 = vld [vmem:[%s113 + $0x26e] sm:$0x1]
        %v7593 = vld [vmem:[%s113 + $0x27e] sm:$0x1]
        %v7594 = vld [vmem:[%s113 + $0x28e] sm:$0x1]
        %v7595 = vld [vmem:[%s113 + $0x29e] sm:$0x1]
        %v7596 = vld [vmem:[%s113 + $0x2ae] sm:$0x1]
        %v7597 = vld [vmem:[%s113 + $0x2be] sm:$0x1]
        %v7598 = vld [vmem:[%s113 + $0x2ce] sm:$0x1]
        %v7599 = vld [vmem:[%s113 + $0x2de] sm:$0x1]
        %v7600 = vld [vmem:[%s113 + $0x2ee] sm:$0x1]
        %v7601 = vld [vmem:[%s113 + $0x2fe] sm:$0x1]
        %v7602 = vld [vmem:[%s113 + $0x30e] sm:$0x1]
        %v7603 = vld [vmem:[%s113 + $0x31e] sm:$0x1]
        %v7604 = vld [vmem:[%s113 + $0x32e] sm:$0x1]
        %v7605 = vld [vmem:[%s113 + $0x33e] sm:$0x1]
        %v7606 = vld [vmem:[%s113 + $0x34e] sm:$0x1]
        %v7607 = vld [vmem:[%s113 + $0x35e] sm:$0x1]
        %v7608 = vld [vmem:[%s113 + $0x36e] sm:$0x1]
        %v7609 = vld [vmem:[%s113 + $0x37e] sm:$0x1]
        %v7610 = vld [vmem:[%s113 + $0x38e] sm:$0x1]
        %v7611 = vld [vmem:[%s113 + $0x39e] sm:$0x1]
        %v7612 = vld [vmem:[%s113 + $0x3ae] sm:$0x1]
        %v7613 = vld [vmem:[%s113 + $0x3be] sm:$0x1]
        %v7614 = vld [vmem:[%s113 + $0x3ce] sm:$0x1]
        %v7615 = vld [vmem:[%s113 + $0x3de] sm:$0x1]
        %v7616 = vld [vmem:[%s113 + $0x3ee] sm:$0x1]
        %v7617 = vld [vmem:[%s113 + $0x3fe] sm:$0x1]
        %v7618 = vld [vmem:[%s113 + $0x40e] sm:$0x1]
        %v7619 = vld [vmem:[%s113 + $0x41e] sm:$0x1]
        %v7620 = vld [vmem:[%s113 + $0x42e] sm:$0x1]
        %v7621 = vld [vmem:[%s113 + $0x43e] sm:$0x1]
        %v7622 = vld [vmem:[%s113 + $0x44e] sm:$0x1]
        %v7623 = vld [vmem:[%s113 + $0x45e] sm:$0x1]
        %v7624 = vld [vmem:[%s113 + $0x46e] sm:$0x1]
        %v7625 = vld [vmem:[%s113 + $0x47e] sm:$0x1]
        %v7626 = vld [vmem:[%s113 + $0x48e] sm:$0x1]
        %v7627 = vld [vmem:[%s113 + $0x49e] sm:$0x1]
        %v7628 = vld [vmem:[%s113 + $0x4ae] sm:$0x1]
        %v7629 = vld [vmem:[%s113 + $0x4be] sm:$0x1]
        %v7630 = vld [vmem:[%s113 + $0x4ce] sm:$0x1]
        %v7631 = vld [vmem:[%s113 + $0x4de] sm:$0x1]
        %v7632 = vld [vmem:[%s113 + $0x4ee] sm:$0x1]
        %v7633 = vld [vmem:[%s113 + $0x4fe] sm:$0x1]
        %v7634 = vld [vmem:[%s113 + $0x50e] sm:$0x1]
        %v7635 = vld [vmem:[%s113 + $0x51e] sm:$0x1]
        %v7636 = vld [vmem:[%s113 + $0x52e] sm:$0x1]
        %v7637 = vld [vmem:[%s113 + $0x53e] sm:$0x1]
        %v7638 = vld [vmem:[%s113 + $0x54e] sm:$0x1]
        %v7639 = vld [vmem:[%s113 + $0x55e] sm:$0x1]
        %v7640 = vld [vmem:[%s113 + $0x56e] sm:$0x1]
        %v7641 = vld [vmem:[%s113 + $0x57e] sm:$0x1]
        %v7642 = vld [vmem:[%s113 + $0x58e] sm:$0x1]
        %v7643 = vld [vmem:[%s113 + $0x59e] sm:$0x1]
        %v7644 = vld [vmem:[%s113 + $0x5ae] sm:$0x1]
        %v7645 = vld [vmem:[%s113 + $0x5be] sm:$0x1]
        %v7646 = vld [vmem:[%s113 + $0x5ce] sm:$0x1]
        %v7647 = vld [vmem:[%s113 + $0x5de] sm:$0x1]
        %v7648 = vld [vmem:[%s113 + $0x5ee] sm:$0x1]
        %v7649 = vld [vmem:[%s113 + $0x5fe] sm:$0x1]
        %v7650 = vld [vmem:[%s113 + $0x60e] sm:$0x1]
        %v7651 = vld [vmem:[%s113 + $0x61e] sm:$0x1]
        %v7652 = vld [vmem:[%s113 + $0x62e] sm:$0x1]
        %v7653 = vld [vmem:[%s113 + $0x63e] sm:$0x1]
        %v7654 = vld [vmem:[%s113 + $0x64e] sm:$0x1]
        %v7655 = vld [vmem:[%s113 + $0x65e] sm:$0x1]
        %v7656 = vld [vmem:[%s113 + $0x66e] sm:$0x1]
        %v7657 = vld [vmem:[%s113 + $0x67e] sm:$0x1]
        %v7658 = vld [vmem:[%s113 + $0x68e] sm:$0x1]
        %v7659 = vld [vmem:[%s113 + $0x69e] sm:$0x1]
        %v7660 = vld [vmem:[%s113 + $0x6ae] sm:$0x1]
        %v7661 = vld [vmem:[%s113 + $0x6be] sm:$0x1]
        %v7662 = vld [vmem:[%s113 + $0x6ce] sm:$0x1]
        %v7663 = vld [vmem:[%s113 + $0x6de] sm:$0x1]
        %v7664 = vld [vmem:[%s113 + $0x6ee] sm:$0x1]
        %v7665 = vld [vmem:[%s113 + $0x6fe] sm:$0x1]
        %v7666 = vld [vmem:[%s113 + $0x70e] sm:$0x1]
        %v7667 = vld [vmem:[%s113 + $0x71e] sm:$0x1]
        %v7668 = vld [vmem:[%s113 + $0x72e] sm:$0x1]
        %v7669 = vld [vmem:[%s113 + $0x73e] sm:$0x1]
        %v7670 = vld [vmem:[%s113 + $0x74e] sm:$0x1]
        %v7671 = vld [vmem:[%s113 + $0x75e] sm:$0x1]
        %v7672 = vld [vmem:[%s113 + $0x76e] sm:$0x1]
        %v7673 = vld [vmem:[%s113 + $0x77e] sm:$0x1]
        %v7674 = vld [vmem:[%s113 + $0x78e] sm:$0x1]
        %v7675 = vld [vmem:[%s113 + $0x79e] sm:$0x1]
        %v7676 = vld [vmem:[%s113 + $0x7ae] sm:$0x1]
        %v7677 = vld [vmem:[%s113 + $0x7be] sm:$0x1]
        %v7678 = vld [vmem:[%s113 + $0x7ce] sm:$0x1]
        %v7679 = vld [vmem:[%s113 + $0x7de] sm:$0x1]
        %v7680 = vld [vmem:[%s113 + $0x7ee] sm:$0x1]
        %v7681 = vld [vmem:[%s113 + $0x7fe] sm:$0x1]
        %v7810 = vrot.slane %v7555, 7
        %v7811 = vsel %vm371, %v7810, %v7554
        %v7812 = vrot.slane %v7556, 6
        %v7813 = vsel %vm374, %v7812, %v7811
        %v7814 = vrot.slane %v7557, 5
        %v7815 = vsel %vm377, %v7814, %v7813
        %v7816 = vrot.slane %v7558, 4
        %v7817 = vsel %vm380, %v7816, %v7815
        %v7818 = vrot.slane %v7559, 3
        %v7819 = vsel %vm383, %v7818, %v7817
        %v7820 = vrot.slane %v7560, 2
        %v7821 = vsel %vm386, %v7820, %v7819
        %v7822 = vrot.slane %v7561, 1
        %v7823 = vsel %vm389, %v7822, %v7821
        %v7824 = vrot.slane %v7563, 7
        %v7825 = vsel %vm371, %v7824, %v7562
        %v7826 = vrot.slane %v7564, 6
        %v7827 = vsel %vm374, %v7826, %v7825
        %v7828 = vrot.slane %v7565, 5
        %v7829 = vsel %vm377, %v7828, %v7827
        %v7830 = vrot.slane %v7566, 4
        %v7831 = vsel %vm380, %v7830, %v7829
        %v7832 = vrot.slane %v7567, 3
        %v7833 = vsel %vm383, %v7832, %v7831
        %v7834 = vrot.slane %v7568, 2
        %v7835 = vsel %vm386, %v7834, %v7833
        %v7836 = vrot.slane %v7569, 1
        %v7837 = vsel %vm389, %v7836, %v7835
        %v7838 = vrot.slane %v7571, 7
        %v7839 = vsel %vm371, %v7838, %v7570
        %v7840 = vrot.slane %v7572, 6
        %v7841 = vsel %vm374, %v7840, %v7839
        %v7842 = vrot.slane %v7573, 5
        %v7843 = vsel %vm377, %v7842, %v7841
        %v7844 = vrot.slane %v7574, 4
        %v7845 = vsel %vm380, %v7844, %v7843
        %v7846 = vrot.slane %v7575, 3
        %v7847 = vsel %vm383, %v7846, %v7845
        %v7848 = vrot.slane %v7576, 2
        %v7849 = vsel %vm386, %v7848, %v7847
        %v7850 = vrot.slane %v7577, 1
        %v7851 = vsel %vm389, %v7850, %v7849
        %v7852 = vrot.slane %v7579, 7
        %v7853 = vsel %vm371, %v7852, %v7578
        %v7854 = vrot.slane %v7580, 6
        %v7855 = vsel %vm374, %v7854, %v7853
        %v7856 = vrot.slane %v7581, 5
        %v7857 = vsel %vm377, %v7856, %v7855
        %v7858 = vrot.slane %v7582, 4
        %v7859 = vsel %vm380, %v7858, %v7857
        %v7860 = vrot.slane %v7583, 3
        %v7861 = vsel %vm383, %v7860, %v7859
        %v7862 = vrot.slane %v7584, 2
        %v7863 = vsel %vm386, %v7862, %v7861
        %v7864 = vrot.slane %v7585, 1
        %v7865 = vsel %vm389, %v7864, %v7863
        %v7866 = vrot.slane %v7587, 7
        %v7867 = vsel %vm371, %v7866, %v7586
        %v7868 = vrot.slane %v7588, 6
        %v7869 = vsel %vm374, %v7868, %v7867
        %v7870 = vrot.slane %v7589, 5
        %v7871 = vsel %vm377, %v7870, %v7869
        %v7872 = vrot.slane %v7590, 4
        %v7873 = vsel %vm380, %v7872, %v7871
        %v7874 = vrot.slane %v7591, 3
        %v7875 = vsel %vm383, %v7874, %v7873
        %v7876 = vrot.slane %v7592, 2
        %v7877 = vsel %vm386, %v7876, %v7875
        %v7878 = vrot.slane %v7593, 1
        %v7879 = vsel %vm389, %v7878, %v7877
        %v7880 = vrot.slane %v7595, 7
        %v7881 = vsel %vm371, %v7880, %v7594
        %v7882 = vrot.slane %v7596, 6
        %v7883 = vsel %vm374, %v7882, %v7881
        %v7884 = vrot.slane %v7597, 5
        %v7885 = vsel %vm377, %v7884, %v7883
        %v7886 = vrot.slane %v7598, 4
        %v7887 = vsel %vm380, %v7886, %v7885
        %v7888 = vrot.slane %v7599, 3
        %v7889 = vsel %vm383, %v7888, %v7887
        %v7890 = vrot.slane %v7600, 2
        %v7891 = vsel %vm386, %v7890, %v7889
        %v7892 = vrot.slane %v7601, 1
        %v7893 = vsel %vm389, %v7892, %v7891
        %v7894 = vrot.slane %v7603, 7
        %v7895 = vsel %vm371, %v7894, %v7602
        %v7896 = vrot.slane %v7604, 6
        %v7897 = vsel %vm374, %v7896, %v7895
        %v7898 = vrot.slane %v7605, 5
        %v7899 = vsel %vm377, %v7898, %v7897
        %v7900 = vrot.slane %v7606, 4
        %v7901 = vsel %vm380, %v7900, %v7899
        %v7902 = vrot.slane %v7607, 3
        %v7903 = vsel %vm383, %v7902, %v7901
        %v7904 = vrot.slane %v7608, 2
        %v7905 = vsel %vm386, %v7904, %v7903
        %v7906 = vrot.slane %v7609, 1
        %v7907 = vsel %vm389, %v7906, %v7905
        %v7908 = vrot.slane %v7611, 7
        %v7909 = vsel %vm371, %v7908, %v7610
        %v7910 = vrot.slane %v7612, 6
        %v7911 = vsel %vm374, %v7910, %v7909
        %v7912 = vrot.slane %v7613, 5
        %v7913 = vsel %vm377, %v7912, %v7911
        %v7914 = vrot.slane %v7614, 4
        %v7915 = vsel %vm380, %v7914, %v7913
        %v7916 = vrot.slane %v7615, 3
        %v7917 = vsel %vm383, %v7916, %v7915
        %v7918 = vrot.slane %v7616, 2
        %v7919 = vsel %vm386, %v7918, %v7917
        %v7920 = vrot.slane %v7617, 1
        %v7921 = vsel %vm389, %v7920, %v7919
        %v7922 = vrot.slane %v7619, 7
        %v7923 = vsel %vm371, %v7922, %v7618
        %v7924 = vrot.slane %v7620, 6
        %v7925 = vsel %vm374, %v7924, %v7923
        %v7926 = vrot.slane %v7621, 5
        %v7927 = vsel %vm377, %v7926, %v7925
        %v7928 = vrot.slane %v7622, 4
        %v7929 = vsel %vm380, %v7928, %v7927
        %v7930 = vrot.slane %v7623, 3
        %v7931 = vsel %vm383, %v7930, %v7929
        %v7932 = vrot.slane %v7624, 2
        %v7933 = vsel %vm386, %v7932, %v7931
        %v7934 = vrot.slane %v7625, 1
        %v7935 = vsel %vm389, %v7934, %v7933
        %v7936 = vrot.slane %v7627, 7
        %v7937 = vsel %vm371, %v7936, %v7626
        %v7938 = vrot.slane %v7628, 6
        %v7939 = vsel %vm374, %v7938, %v7937
        %v7940 = vrot.slane %v7629, 5
        %v7941 = vsel %vm377, %v7940, %v7939
        %v7942 = vrot.slane %v7630, 4
        %v7943 = vsel %vm380, %v7942, %v7941
        %v7944 = vrot.slane %v7631, 3
        %v7945 = vsel %vm383, %v7944, %v7943
        %v7946 = vrot.slane %v7632, 2
        %v7947 = vsel %vm386, %v7946, %v7945
        %v7948 = vrot.slane %v7633, 1
        %v7949 = vsel %vm389, %v7948, %v7947
        %v7950 = vrot.slane %v7635, 7
        %v7951 = vsel %vm371, %v7950, %v7634
        %v7952 = vrot.slane %v7636, 6
        %v7953 = vsel %vm374, %v7952, %v7951
        %v7954 = vrot.slane %v7637, 5
        %v7955 = vsel %vm377, %v7954, %v7953
        %v7956 = vrot.slane %v7638, 4
        %v7957 = vsel %vm380, %v7956, %v7955
        %v7958 = vrot.slane %v7639, 3
        %v7959 = vsel %vm383, %v7958, %v7957
        %v7960 = vrot.slane %v7640, 2
        %v7961 = vsel %vm386, %v7960, %v7959
        %v7962 = vrot.slane %v7641, 1
        %v7963 = vsel %vm389, %v7962, %v7961
        %v7964 = vrot.slane %v7643, 7
        %v7965 = vsel %vm371, %v7964, %v7642
        %v7966 = vrot.slane %v7644, 6
        %v7967 = vsel %vm374, %v7966, %v7965
        %v7968 = vrot.slane %v7645, 5
        %v7969 = vsel %vm377, %v7968, %v7967
        %v7970 = vrot.slane %v7646, 4
        %v7971 = vsel %vm380, %v7970, %v7969
        %v7972 = vrot.slane %v7647, 3
        %v7973 = vsel %vm383, %v7972, %v7971
        %v7974 = vrot.slane %v7648, 2
        %v7975 = vsel %vm386, %v7974, %v7973
        %v7976 = vrot.slane %v7649, 1
        %v7977 = vsel %vm389, %v7976, %v7975
        %v7978 = vrot.slane %v7651, 7
        %v7979 = vsel %vm371, %v7978, %v7650
        %v7980 = vrot.slane %v7652, 6
        %v7981 = vsel %vm374, %v7980, %v7979
        %v7982 = vrot.slane %v7653, 5
        %v7983 = vsel %vm377, %v7982, %v7981
        %v7984 = vrot.slane %v7654, 4
        %v7985 = vsel %vm380, %v7984, %v7983
        %v7986 = vrot.slane %v7655, 3
        %v7987 = vsel %vm383, %v7986, %v7985
        %v7988 = vrot.slane %v7656, 2
        %v7989 = vsel %vm386, %v7988, %v7987
        %v7990 = vrot.slane %v7657, 1
        %v7991 = vsel %vm389, %v7990, %v7989
        %v7992 = vrot.slane %v7659, 7
        %v7993 = vsel %vm371, %v7992, %v7658
        %v7994 = vrot.slane %v7660, 6
        %v7995 = vsel %vm374, %v7994, %v7993
        %v7996 = vrot.slane %v7661, 5
        %v7997 = vsel %vm377, %v7996, %v7995
        %v7998 = vrot.slane %v7662, 4
        %v7999 = vsel %vm380, %v7998, %v7997
        %v8000 = vrot.slane %v7663, 3
        %v8001 = vsel %vm383, %v8000, %v7999
        %v8002 = vrot.slane %v7664, 2
        %v8003 = vsel %vm386, %v8002, %v8001
        %v8004 = vrot.slane %v7665, 1
        %v8005 = vsel %vm389, %v8004, %v8003
        %v8006 = vrot.slane %v7667, 7
        %v8007 = vsel %vm371, %v8006, %v7666
        %v8008 = vrot.slane %v7668, 6
        %v8009 = vsel %vm374, %v8008, %v8007
        %v8010 = vrot.slane %v7669, 5
        %v8011 = vsel %vm377, %v8010, %v8009
        %v8012 = vrot.slane %v7670, 4
        %v8013 = vsel %vm380, %v8012, %v8011
        %v8014 = vrot.slane %v7671, 3
        %v8015 = vsel %vm383, %v8014, %v8013
        %v8016 = vrot.slane %v7672, 2
        %v8017 = vsel %vm386, %v8016, %v8015
        %v8018 = vrot.slane %v7673, 1
        %v8019 = vsel %vm389, %v8018, %v8017
        %v8020 = vrot.slane %v7675, 7
        %v8021 = vsel %vm371, %v8020, %v7674
        %v8022 = vrot.slane %v7676, 6
        %v8023 = vsel %vm374, %v8022, %v8021
        %v8024 = vrot.slane %v7677, 5
        %v8025 = vsel %vm377, %v8024, %v8023
        %v8026 = vrot.slane %v7678, 4
        %v8027 = vsel %vm380, %v8026, %v8025
        %v8028 = vrot.slane %v7679, 3
        %v8029 = vsel %vm383, %v8028, %v8027
        %v8030 = vrot.slane %v7680, 2
        %v8031 = vsel %vm386, %v8030, %v8029
        %v8032 = vrot.slane %v7681, 1
        %v8033 = vsel %vm389, %v8032, %v8031
        %8050 = vxpose.xlu0.b32.start [1/16] %v7823, 128
        %8051 = vxpose.xlu0.b32.cont [2/16] %v7837, 128
        %8052 = vxpose.xlu0.b32.cont [3/16] %v7851, 128
        %8053 = vxpose.xlu0.b32.cont [4/16] %v7865, 128
        %8054 = vxpose.xlu0.b32.cont [5/16] %v7879, 128
        %8055 = vxpose.xlu0.b32.cont [6/16] %v7893, 128
        %8056 = vxpose.xlu0.b32.cont [7/16] %v7907, 128
        %8057 = vxpose.xlu0.b32.cont [8/16] %v7921, 128
        %8058 = vxpose.xlu0.b32.cont [9/16] %v7935, 128
        %8059 = vxpose.xlu0.b32.cont [10/16] %v7949, 128
        %8060 = vxpose.xlu0.b32.cont [11/16] %v7963, 128
        %8061 = vxpose.xlu0.b32.cont [12/16] %v7977, 128
        %8062 = vxpose.xlu0.b32.cont [13/16] %v7991, 128
        %8063 = vxpose.xlu0.b32.cont [14/16] %v8005, 128
        %8064 = vxpose.xlu0.b32.cont [15/16] %v8019, 128
        %8065 = vxpose.xlu0.b32.end [16/16] %v8033, 128
        %v8066 = vpop.trf.xlu0
        %v8067 = vpop.trf.xlu0
        %v8068 = vpop.trf.xlu0
        %v8069 = vpop.trf.xlu0
        %v8070 = vpop.trf.xlu0
        %v8071 = vpop.trf.xlu0
        %v8072 = vpop.trf.xlu0
        %v8073 = vpop.trf.xlu0
        %v8074 = vpop.trf.xlu0
        %v8075 = vpop.trf.xlu0
        %v8076 = vpop.trf.xlu0
        %v8077 = vpop.trf.xlu0
        %v8078 = vpop.trf.xlu0
        %v8079 = vpop.trf.xlu0
        %v8080 = vpop.trf.xlu0
        %v8081 = vpop.trf.xlu0
        %s8082 = scalar_lea.vmem [#allocation2], 224
        %8083 = vst [vmem:[%s8082] sm:$0xff] %v8066
        %8084 = vst [vmem:[%s8082 + $0x8] sm:$0xff] %v8067
        %v8085 = vld [vmem:[%s113 + $0xf] sm:$0x1]
        %v8086 = vld [vmem:[%s113 + $0x1f] sm:$0x1]
        %v8087 = vld [vmem:[%s113 + $0x2f] sm:$0x1]
        %v8088 = vld [vmem:[%s113 + $0x3f] sm:$0x1]
        %v8089 = vld [vmem:[%s113 + $0x4f] sm:$0x1]
        %v8090 = vld [vmem:[%s113 + $0x5f] sm:$0x1]
        %v8091 = vld [vmem:[%s113 + $0x6f] sm:$0x1]
        %v8092 = vld [vmem:[%s113 + $0x7f] sm:$0x1]
        %v8093 = vld [vmem:[%s113 + $0x8f] sm:$0x1]
        %v8094 = vld [vmem:[%s113 + $0x9f] sm:$0x1]
        %v8095 = vld [vmem:[%s113 + $0xaf] sm:$0x1]
        %v8096 = vld [vmem:[%s113 + $0xbf] sm:$0x1]
        %v8097 = vld [vmem:[%s113 + $0xcf] sm:$0x1]
        %v8098 = vld [vmem:[%s113 + $0xdf] sm:$0x1]
        %v8099 = vld [vmem:[%s113 + $0xef] sm:$0x1]
        %v8100 = vld [vmem:[%s113 + $0xff] sm:$0x1]
        %v8101 = vld [vmem:[%s113 + $0x10f] sm:$0x1]
        %v8102 = vld [vmem:[%s113 + $0x11f] sm:$0x1]
        %v8103 = vld [vmem:[%s113 + $0x12f] sm:$0x1]
        %v8104 = vld [vmem:[%s113 + $0x13f] sm:$0x1]
        %v8105 = vld [vmem:[%s113 + $0x14f] sm:$0x1]
        %v8106 = vld [vmem:[%s113 + $0x15f] sm:$0x1]
        %v8107 = vld [vmem:[%s113 + $0x16f] sm:$0x1]
        %v8108 = vld [vmem:[%s113 + $0x17f] sm:$0x1]
        %v8109 = vld [vmem:[%s113 + $0x18f] sm:$0x1]
        %v8110 = vld [vmem:[%s113 + $0x19f] sm:$0x1]
        %v8111 = vld [vmem:[%s113 + $0x1af] sm:$0x1]
        %v8112 = vld [vmem:[%s113 + $0x1bf] sm:$0x1]
        %v8113 = vld [vmem:[%s113 + $0x1cf] sm:$0x1]
        %v8114 = vld [vmem:[%s113 + $0x1df] sm:$0x1]
        %v8115 = vld [vmem:[%s113 + $0x1ef] sm:$0x1]
        %v8116 = vld [vmem:[%s113 + $0x1ff] sm:$0x1]
        %v8117 = vld [vmem:[%s113 + $0x20f] sm:$0x1]
        %v8118 = vld [vmem:[%s113 + $0x21f] sm:$0x1]
        %v8119 = vld [vmem:[%s113 + $0x22f] sm:$0x1]
        %v8120 = vld [vmem:[%s113 + $0x23f] sm:$0x1]
        %v8121 = vld [vmem:[%s113 + $0x24f] sm:$0x1]
        %v8122 = vld [vmem:[%s113 + $0x25f] sm:$0x1]
        %v8123 = vld [vmem:[%s113 + $0x26f] sm:$0x1]
        %v8124 = vld [vmem:[%s113 + $0x27f] sm:$0x1]
        %v8125 = vld [vmem:[%s113 + $0x28f] sm:$0x1]
        %v8126 = vld [vmem:[%s113 + $0x29f] sm:$0x1]
        %v8127 = vld [vmem:[%s113 + $0x2af] sm:$0x1]
        %v8128 = vld [vmem:[%s113 + $0x2bf] sm:$0x1]
        %v8129 = vld [vmem:[%s113 + $0x2cf] sm:$0x1]
        %v8130 = vld [vmem:[%s113 + $0x2df] sm:$0x1]
        %v8131 = vld [vmem:[%s113 + $0x2ef] sm:$0x1]
        %v8132 = vld [vmem:[%s113 + $0x2ff] sm:$0x1]
        %v8133 = vld [vmem:[%s113 + $0x30f] sm:$0x1]
        %v8134 = vld [vmem:[%s113 + $0x31f] sm:$0x1]
        %v8135 = vld [vmem:[%s113 + $0x32f] sm:$0x1]
        %v8136 = vld [vmem:[%s113 + $0x33f] sm:$0x1]
        %v8137 = vld [vmem:[%s113 + $0x34f] sm:$0x1]
        %v8138 = vld [vmem:[%s113 + $0x35f] sm:$0x1]
        %v8139 = vld [vmem:[%s113 + $0x36f] sm:$0x1]
        %v8140 = vld [vmem:[%s113 + $0x37f] sm:$0x1]
        %v8141 = vld [vmem:[%s113 + $0x38f] sm:$0x1]
        %v8142 = vld [vmem:[%s113 + $0x39f] sm:$0x1]
        %v8143 = vld [vmem:[%s113 + $0x3af] sm:$0x1]
        %v8144 = vld [vmem:[%s113 + $0x3bf] sm:$0x1]
        %v8145 = vld [vmem:[%s113 + $0x3cf] sm:$0x1]
        %v8146 = vld [vmem:[%s113 + $0x3df] sm:$0x1]
        %v8147 = vld [vmem:[%s113 + $0x3ef] sm:$0x1]
        %v8148 = vld [vmem:[%s113 + $0x3ff] sm:$0x1]
        %v8149 = vld [vmem:[%s113 + $0x40f] sm:$0x1]
        %v8150 = vld [vmem:[%s113 + $0x41f] sm:$0x1]
        %v8151 = vld [vmem:[%s113 + $0x42f] sm:$0x1]
        %v8152 = vld [vmem:[%s113 + $0x43f] sm:$0x1]
        %v8153 = vld [vmem:[%s113 + $0x44f] sm:$0x1]
        %v8154 = vld [vmem:[%s113 + $0x45f] sm:$0x1]
        %v8155 = vld [vmem:[%s113 + $0x46f] sm:$0x1]
        %v8156 = vld [vmem:[%s113 + $0x47f] sm:$0x1]
        %v8157 = vld [vmem:[%s113 + $0x48f] sm:$0x1]
        %v8158 = vld [vmem:[%s113 + $0x49f] sm:$0x1]
        %v8159 = vld [vmem:[%s113 + $0x4af] sm:$0x1]
        %v8160 = vld [vmem:[%s113 + $0x4bf] sm:$0x1]
        %v8161 = vld [vmem:[%s113 + $0x4cf] sm:$0x1]
        %v8162 = vld [vmem:[%s113 + $0x4df] sm:$0x1]
        %v8163 = vld [vmem:[%s113 + $0x4ef] sm:$0x1]
        %v8164 = vld [vmem:[%s113 + $0x4ff] sm:$0x1]
        %v8165 = vld [vmem:[%s113 + $0x50f] sm:$0x1]
        %v8166 = vld [vmem:[%s113 + $0x51f] sm:$0x1]
        %v8167 = vld [vmem:[%s113 + $0x52f] sm:$0x1]
        %v8168 = vld [vmem:[%s113 + $0x53f] sm:$0x1]
        %v8169 = vld [vmem:[%s113 + $0x54f] sm:$0x1]
        %v8170 = vld [vmem:[%s113 + $0x55f] sm:$0x1]
        %v8171 = vld [vmem:[%s113 + $0x56f] sm:$0x1]
        %v8172 = vld [vmem:[%s113 + $0x57f] sm:$0x1]
        %v8173 = vld [vmem:[%s113 + $0x58f] sm:$0x1]
        %v8174 = vld [vmem:[%s113 + $0x59f] sm:$0x1]
        %v8175 = vld [vmem:[%s113 + $0x5af] sm:$0x1]
        %v8176 = vld [vmem:[%s113 + $0x5bf] sm:$0x1]
        %v8177 = vld [vmem:[%s113 + $0x5cf] sm:$0x1]
        %v8178 = vld [vmem:[%s113 + $0x5df] sm:$0x1]
        %v8179 = vld [vmem:[%s113 + $0x5ef] sm:$0x1]
        %v8180 = vld [vmem:[%s113 + $0x5ff] sm:$0x1]
        %v8181 = vld [vmem:[%s113 + $0x60f] sm:$0x1]
        %v8182 = vld [vmem:[%s113 + $0x61f] sm:$0x1]
        %v8183 = vld [vmem:[%s113 + $0x62f] sm:$0x1]
        %v8184 = vld [vmem:[%s113 + $0x63f] sm:$0x1]
        %v8185 = vld [vmem:[%s113 + $0x64f] sm:$0x1]
        %v8186 = vld [vmem:[%s113 + $0x65f] sm:$0x1]
        %v8187 = vld [vmem:[%s113 + $0x66f] sm:$0x1]
        %v8188 = vld [vmem:[%s113 + $0x67f] sm:$0x1]
        %v8189 = vld [vmem:[%s113 + $0x68f] sm:$0x1]
        %v8190 = vld [vmem:[%s113 + $0x69f] sm:$0x1]
        %v8191 = vld [vmem:[%s113 + $0x6af] sm:$0x1]
        %v8192 = vld [vmem:[%s113 + $0x6bf] sm:$0x1]
        %v8193 = vld [vmem:[%s113 + $0x6cf] sm:$0x1]
        %v8194 = vld [vmem:[%s113 + $0x6df] sm:$0x1]
        %v8195 = vld [vmem:[%s113 + $0x6ef] sm:$0x1]
        %v8196 = vld [vmem:[%s113 + $0x6ff] sm:$0x1]
        %v8197 = vld [vmem:[%s113 + $0x70f] sm:$0x1]
        %v8198 = vld [vmem:[%s113 + $0x71f] sm:$0x1]
        %v8199 = vld [vmem:[%s113 + $0x72f] sm:$0x1]
        %v8200 = vld [vmem:[%s113 + $0x73f] sm:$0x1]
        %v8201 = vld [vmem:[%s113 + $0x74f] sm:$0x1]
        %v8202 = vld [vmem:[%s113 + $0x75f] sm:$0x1]
        %v8203 = vld [vmem:[%s113 + $0x76f] sm:$0x1]
        %v8204 = vld [vmem:[%s113 + $0x77f] sm:$0x1]
        %v8205 = vld [vmem:[%s113 + $0x78f] sm:$0x1]
        %v8206 = vld [vmem:[%s113 + $0x79f] sm:$0x1]
        %v8207 = vld [vmem:[%s113 + $0x7af] sm:$0x1]
        %v8208 = vld [vmem:[%s113 + $0x7bf] sm:$0x1]
        %v8209 = vld [vmem:[%s113 + $0x7cf] sm:$0x1]
        %v8210 = vld [vmem:[%s113 + $0x7df] sm:$0x1]
        %v8211 = vld [vmem:[%s113 + $0x7ef] sm:$0x1]
        %v8212 = vld [vmem:[%s113 + $0x7ff] sm:$0x1]
        %v8341 = vrot.slane %v8086, 7
        %v8342 = vsel %vm371, %v8341, %v8085
        %v8343 = vrot.slane %v8087, 6
        %v8344 = vsel %vm374, %v8343, %v8342
        %v8345 = vrot.slane %v8088, 5
        %v8346 = vsel %vm377, %v8345, %v8344
        %v8347 = vrot.slane %v8089, 4
        %v8348 = vsel %vm380, %v8347, %v8346
        %v8349 = vrot.slane %v8090, 3
        %v8350 = vsel %vm383, %v8349, %v8348
        %v8351 = vrot.slane %v8091, 2
        %v8352 = vsel %vm386, %v8351, %v8350
        %v8353 = vrot.slane %v8092, 1
        %v8354 = vsel %vm389, %v8353, %v8352
        %v8355 = vrot.slane %v8094, 7
        %v8356 = vsel %vm371, %v8355, %v8093
        %v8357 = vrot.slane %v8095, 6
        %v8358 = vsel %vm374, %v8357, %v8356
        %v8359 = vrot.slane %v8096, 5
        %v8360 = vsel %vm377, %v8359, %v8358
        %v8361 = vrot.slane %v8097, 4
        %v8362 = vsel %vm380, %v8361, %v8360
        %v8363 = vrot.slane %v8098, 3
        %v8364 = vsel %vm383, %v8363, %v8362
        %v8365 = vrot.slane %v8099, 2
        %v8366 = vsel %vm386, %v8365, %v8364
        %v8367 = vrot.slane %v8100, 1
        %v8368 = vsel %vm389, %v8367, %v8366
        %v8369 = vrot.slane %v8102, 7
        %v8370 = vsel %vm371, %v8369, %v8101
        %v8371 = vrot.slane %v8103, 6
        %v8372 = vsel %vm374, %v8371, %v8370
        %v8373 = vrot.slane %v8104, 5
        %v8374 = vsel %vm377, %v8373, %v8372
        %v8375 = vrot.slane %v8105, 4
        %v8376 = vsel %vm380, %v8375, %v8374
        %v8377 = vrot.slane %v8106, 3
        %v8378 = vsel %vm383, %v8377, %v8376
        %v8379 = vrot.slane %v8107, 2
        %v8380 = vsel %vm386, %v8379, %v8378
        %v8381 = vrot.slane %v8108, 1
        %v8382 = vsel %vm389, %v8381, %v8380
        %v8383 = vrot.slane %v8110, 7
        %v8384 = vsel %vm371, %v8383, %v8109
        %v8385 = vrot.slane %v8111, 6
        %v8386 = vsel %vm374, %v8385, %v8384
        %v8387 = vrot.slane %v8112, 5
        %v8388 = vsel %vm377, %v8387, %v8386
        %v8389 = vrot.slane %v8113, 4
        %v8390 = vsel %vm380, %v8389, %v8388
        %v8391 = vrot.slane %v8114, 3
        %v8392 = vsel %vm383, %v8391, %v8390
        %v8393 = vrot.slane %v8115, 2
        %v8394 = vsel %vm386, %v8393, %v8392
        %v8395 = vrot.slane %v8116, 1
        %v8396 = vsel %vm389, %v8395, %v8394
        %v8397 = vrot.slane %v8118, 7
        %v8398 = vsel %vm371, %v8397, %v8117
        %v8399 = vrot.slane %v8119, 6
        %v8400 = vsel %vm374, %v8399, %v8398
        %v8401 = vrot.slane %v8120, 5
        %v8402 = vsel %vm377, %v8401, %v8400
        %v8403 = vrot.slane %v8121, 4
        %v8404 = vsel %vm380, %v8403, %v8402
        %v8405 = vrot.slane %v8122, 3
        %v8406 = vsel %vm383, %v8405, %v8404
        %v8407 = vrot.slane %v8123, 2
        %v8408 = vsel %vm386, %v8407, %v8406
        %v8409 = vrot.slane %v8124, 1
        %v8410 = vsel %vm389, %v8409, %v8408
        %v8411 = vrot.slane %v8126, 7
        %v8412 = vsel %vm371, %v8411, %v8125
        %v8413 = vrot.slane %v8127, 6
        %v8414 = vsel %vm374, %v8413, %v8412
        %v8415 = vrot.slane %v8128, 5
        %v8416 = vsel %vm377, %v8415, %v8414
        %v8417 = vrot.slane %v8129, 4
        %v8418 = vsel %vm380, %v8417, %v8416
        %v8419 = vrot.slane %v8130, 3
        %v8420 = vsel %vm383, %v8419, %v8418
        %v8421 = vrot.slane %v8131, 2
        %v8422 = vsel %vm386, %v8421, %v8420
        %v8423 = vrot.slane %v8132, 1
        %v8424 = vsel %vm389, %v8423, %v8422
        %v8425 = vrot.slane %v8134, 7
        %v8426 = vsel %vm371, %v8425, %v8133
        %v8427 = vrot.slane %v8135, 6
        %v8428 = vsel %vm374, %v8427, %v8426
        %v8429 = vrot.slane %v8136, 5
        %v8430 = vsel %vm377, %v8429, %v8428
        %v8431 = vrot.slane %v8137, 4
        %v8432 = vsel %vm380, %v8431, %v8430
        %v8433 = vrot.slane %v8138, 3
        %v8434 = vsel %vm383, %v8433, %v8432
        %v8435 = vrot.slane %v8139, 2
        %v8436 = vsel %vm386, %v8435, %v8434
        %v8437 = vrot.slane %v8140, 1
        %v8438 = vsel %vm389, %v8437, %v8436
        %v8439 = vrot.slane %v8142, 7
        %v8440 = vsel %vm371, %v8439, %v8141
        %v8441 = vrot.slane %v8143, 6
        %v8442 = vsel %vm374, %v8441, %v8440
        %v8443 = vrot.slane %v8144, 5
        %v8444 = vsel %vm377, %v8443, %v8442
        %v8445 = vrot.slane %v8145, 4
        %v8446 = vsel %vm380, %v8445, %v8444
        %v8447 = vrot.slane %v8146, 3
        %v8448 = vsel %vm383, %v8447, %v8446
        %v8449 = vrot.slane %v8147, 2
        %v8450 = vsel %vm386, %v8449, %v8448
        %v8451 = vrot.slane %v8148, 1
        %v8452 = vsel %vm389, %v8451, %v8450
        %v8453 = vrot.slane %v8150, 7
        %v8454 = vsel %vm371, %v8453, %v8149
        %v8455 = vrot.slane %v8151, 6
        %v8456 = vsel %vm374, %v8455, %v8454
        %v8457 = vrot.slane %v8152, 5
        %v8458 = vsel %vm377, %v8457, %v8456
        %v8459 = vrot.slane %v8153, 4
        %v8460 = vsel %vm380, %v8459, %v8458
        %v8461 = vrot.slane %v8154, 3
        %v8462 = vsel %vm383, %v8461, %v8460
        %v8463 = vrot.slane %v8155, 2
        %v8464 = vsel %vm386, %v8463, %v8462
        %v8465 = vrot.slane %v8156, 1
        %v8466 = vsel %vm389, %v8465, %v8464
        %v8467 = vrot.slane %v8158, 7
        %v8468 = vsel %vm371, %v8467, %v8157
        %v8469 = vrot.slane %v8159, 6
        %v8470 = vsel %vm374, %v8469, %v8468
        %v8471 = vrot.slane %v8160, 5
        %v8472 = vsel %vm377, %v8471, %v8470
        %v8473 = vrot.slane %v8161, 4
        %v8474 = vsel %vm380, %v8473, %v8472
        %v8475 = vrot.slane %v8162, 3
        %v8476 = vsel %vm383, %v8475, %v8474
        %v8477 = vrot.slane %v8163, 2
        %v8478 = vsel %vm386, %v8477, %v8476
        %v8479 = vrot.slane %v8164, 1
        %v8480 = vsel %vm389, %v8479, %v8478
        %v8481 = vrot.slane %v8166, 7
        %v8482 = vsel %vm371, %v8481, %v8165
        %v8483 = vrot.slane %v8167, 6
        %v8484 = vsel %vm374, %v8483, %v8482
        %v8485 = vrot.slane %v8168, 5
        %v8486 = vsel %vm377, %v8485, %v8484
        %v8487 = vrot.slane %v8169, 4
        %v8488 = vsel %vm380, %v8487, %v8486
        %v8489 = vrot.slane %v8170, 3
        %v8490 = vsel %vm383, %v8489, %v8488
        %v8491 = vrot.slane %v8171, 2
        %v8492 = vsel %vm386, %v8491, %v8490
        %v8493 = vrot.slane %v8172, 1
        %v8494 = vsel %vm389, %v8493, %v8492
        %v8495 = vrot.slane %v8174, 7
        %v8496 = vsel %vm371, %v8495, %v8173
        %v8497 = vrot.slane %v8175, 6
        %v8498 = vsel %vm374, %v8497, %v8496
        %v8499 = vrot.slane %v8176, 5
        %v8500 = vsel %vm377, %v8499, %v8498
        %v8501 = vrot.slane %v8177, 4
        %v8502 = vsel %vm380, %v8501, %v8500
        %v8503 = vrot.slane %v8178, 3
        %v8504 = vsel %vm383, %v8503, %v8502
        %v8505 = vrot.slane %v8179, 2
        %v8506 = vsel %vm386, %v8505, %v8504
        %v8507 = vrot.slane %v8180, 1
        %v8508 = vsel %vm389, %v8507, %v8506
        %v8509 = vrot.slane %v8182, 7
        %v8510 = vsel %vm371, %v8509, %v8181
        %v8511 = vrot.slane %v8183, 6
        %v8512 = vsel %vm374, %v8511, %v8510
        %v8513 = vrot.slane %v8184, 5
        %v8514 = vsel %vm377, %v8513, %v8512
        %v8515 = vrot.slane %v8185, 4
        %v8516 = vsel %vm380, %v8515, %v8514
        %v8517 = vrot.slane %v8186, 3
        %v8518 = vsel %vm383, %v8517, %v8516
        %v8519 = vrot.slane %v8187, 2
        %v8520 = vsel %vm386, %v8519, %v8518
        %v8521 = vrot.slane %v8188, 1
        %v8522 = vsel %vm389, %v8521, %v8520
        %v8523 = vrot.slane %v8190, 7
        %v8524 = vsel %vm371, %v8523, %v8189
        %v8525 = vrot.slane %v8191, 6
        %v8526 = vsel %vm374, %v8525, %v8524
        %v8527 = vrot.slane %v8192, 5
        %v8528 = vsel %vm377, %v8527, %v8526
        %v8529 = vrot.slane %v8193, 4
        %v8530 = vsel %vm380, %v8529, %v8528
        %v8531 = vrot.slane %v8194, 3
        %v8532 = vsel %vm383, %v8531, %v8530
        %v8533 = vrot.slane %v8195, 2
        %v8534 = vsel %vm386, %v8533, %v8532
        %v8535 = vrot.slane %v8196, 1
        %v8536 = vsel %vm389, %v8535, %v8534
        %v8537 = vrot.slane %v8198, 7
        %v8538 = vsel %vm371, %v8537, %v8197
        %v8539 = vrot.slane %v8199, 6
        %v8540 = vsel %vm374, %v8539, %v8538
        %v8541 = vrot.slane %v8200, 5
        %v8542 = vsel %vm377, %v8541, %v8540
        %v8543 = vrot.slane %v8201, 4
        %v8544 = vsel %vm380, %v8543, %v8542
        %v8545 = vrot.slane %v8202, 3
        %v8546 = vsel %vm383, %v8545, %v8544
        %v8547 = vrot.slane %v8203, 2
        %v8548 = vsel %vm386, %v8547, %v8546
        %v8549 = vrot.slane %v8204, 1
        %v8550 = vsel %vm389, %v8549, %v8548
        %v8551 = vrot.slane %v8206, 7
        %v8552 = vsel %vm371, %v8551, %v8205
        %v8553 = vrot.slane %v8207, 6
        %v8554 = vsel %vm374, %v8553, %v8552
        %v8555 = vrot.slane %v8208, 5
        %v8556 = vsel %vm377, %v8555, %v8554
        %v8557 = vrot.slane %v8209, 4
        %v8558 = vsel %vm380, %v8557, %v8556
        %v8559 = vrot.slane %v8210, 3
        %v8560 = vsel %vm383, %v8559, %v8558
        %v8561 = vrot.slane %v8211, 2
        %v8562 = vsel %vm386, %v8561, %v8560
        %v8563 = vrot.slane %v8212, 1
        %v8564 = vsel %vm389, %v8563, %v8562
        %8581 = vxpose.xlu0.b32.start [1/16] %v8354, 128
        %8582 = vxpose.xlu0.b32.cont [2/16] %v8368, 128
        %8583 = vxpose.xlu0.b32.cont [3/16] %v8382, 128
        %8584 = vxpose.xlu0.b32.cont [4/16] %v8396, 128
        %8585 = vxpose.xlu0.b32.cont [5/16] %v8410, 128
        %8586 = vxpose.xlu0.b32.cont [6/16] %v8424, 128
        %8587 = vxpose.xlu0.b32.cont [7/16] %v8438, 128
        %8588 = vxpose.xlu0.b32.cont [8/16] %v8452, 128
        %8589 = vxpose.xlu0.b32.cont [9/16] %v8466, 128
        %8590 = vxpose.xlu0.b32.cont [10/16] %v8480, 128
        %8591 = vxpose.xlu0.b32.cont [11/16] %v8494, 128
        %8592 = vxpose.xlu0.b32.cont [12/16] %v8508, 128
        %8593 = vxpose.xlu0.b32.cont [13/16] %v8522, 128
        %8594 = vxpose.xlu0.b32.cont [14/16] %v8536, 128
        %8595 = vxpose.xlu0.b32.cont [15/16] %v8550, 128
        %8596 = vxpose.xlu0.b32.end [16/16] %v8564, 128
        %v8597 = vpop.trf.xlu0
        %v8598 = vpop.trf.xlu0
        %v8599 = vpop.trf.xlu0
        %v8600 = vpop.trf.xlu0
        %v8601 = vpop.trf.xlu0
        %v8602 = vpop.trf.xlu0
        %v8603 = vpop.trf.xlu0
        %v8604 = vpop.trf.xlu0
        %v8605 = vpop.trf.xlu0
        %v8606 = vpop.trf.xlu0
        %v8607 = vpop.trf.xlu0
        %v8608 = vpop.trf.xlu0
        %v8609 = vpop.trf.xlu0
        %v8610 = vpop.trf.xlu0
        %v8611 = vpop.trf.xlu0
        %v8612 = vpop.trf.xlu0
        %s8613 = scalar_lea.vmem [#allocation2], 240
        %8614 = vst [vmem:[%s8613] sm:$0xff] %v8597
        %8615 = vst [vmem:[%s8613 + $0x8] sm:$0xff] %v8598
        %v8616 = vld [vmem:[#allocation2] sm:$0xff]
        %v8617 = vld [vmem:[#allocation2 + $0x8] sm:$0xff]
        %v8618 = vld [vmem:[%s1179] sm:$0xff]
        %v8619 = vld [vmem:[%s1179 + $0x8] sm:$0xff]
        %v8620 = vmax.f32 %v8616, %v8618
        %v8621 = vmax.f32 %v8617, %v8619
        %v8622 = vld [vmem:[%s1710] sm:$0xff]
        %v8623 = vld [vmem:[%s1710 + $0x8] sm:$0xff]
        %v8624 = vmax.f32 %v8620, %v8622
        %v8625 = vmax.f32 %v8621, %v8623
        %v8626 = vld [vmem:[%s2241] sm:$0xff]
        %v8627 = vld [vmem:[%s2241 + $0x8] sm:$0xff]
        %v8628 = vmax.f32 %v8624, %v8626
        %v8629 = vmax.f32 %v8625, %v8627
        %v8630 = vld [vmem:[%s2772] sm:$0xff]
        %v8631 = vld [vmem:[%s2772 + $0x8] sm:$0xff]
        %v8632 = vmax.f32 %v8628, %v8630
        %v8633 = vmax.f32 %v8629, %v8631
        %v8634 = vld [vmem:[%s3303] sm:$0xff]
        %v8635 = vld [vmem:[%s3303 + $0x8] sm:$0xff]
        %v8636 = vmax.f32 %v8632, %v8634
        %v8637 = vmax.f32 %v8633, %v8635
        %v8638 = vld [vmem:[%s3834] sm:$0xff]
        %v8639 = vld [vmem:[%s3834 + $0x8] sm:$0xff]
        %v8640 = vmax.f32 %v8636, %v8638
        %v8641 = vmax.f32 %v8637, %v8639
        %v8642 = vld [vmem:[%s4365] sm:$0xff]
        %v8643 = vld [vmem:[%s4365 + $0x8] sm:$0xff]
        %v8644 = vmax.f32 %v8640, %v8642
        %v8645 = vmax.f32 %v8641, %v8643
        %v8646 = vld [vmem:[%s4896] sm:$0xff]
        %v8647 = vld [vmem:[%s4896 + $0x8] sm:$0xff]
        %v8648 = vmax.f32 %v8644, %v8646
        %v8649 = vmax.f32 %v8645, %v8647
        %v8650 = vld [vmem:[%s5427] sm:$0xff]
        %v8651 = vld [vmem:[%s5427 + $0x8] sm:$0xff]
        %v8652 = vmax.f32 %v8648, %v8650
        %v8653 = vmax.f32 %v8649, %v8651
        %v8654 = vld [vmem:[%s5958] sm:$0xff]
        %v8655 = vld [vmem:[%s5958 + $0x8] sm:$0xff]
        %v8656 = vmax.f32 %v8652, %v8654
        %v8657 = vmax.f32 %v8653, %v8655
        %v8658 = vld [vmem:[%s6489] sm:$0xff]
        %v8659 = vld [vmem:[%s6489 + $0x8] sm:$0xff]
        %v8660 = vmax.f32 %v8656, %v8658
        %v8661 = vmax.f32 %v8657, %v8659
        %v8662 = vld [vmem:[%s7020] sm:$0xff]
        %v8663 = vld [vmem:[%s7020 + $0x8] sm:$0xff]
        %v8664 = vmax.f32 %v8660, %v8662
        %v8665 = vmax.f32 %v8661, %v8663
        %v8666 = vld [vmem:[%s7551] sm:$0xff]
        %v8667 = vld [vmem:[%s7551 + $0x8] sm:$0xff]
        %v8668 = vmax.f32 %v8664, %v8666
        %v8669 = vmax.f32 %v8665, %v8667
        %v8670 = vld [vmem:[%s8082] sm:$0xff]
        %v8671 = vld [vmem:[%s8082 + $0x8] sm:$0xff]
        %v8672 = vmax.f32 %v8668, %v8670
        %v8673 = vmax.f32 %v8669, %v8671
        %v8674 = vld [vmem:[%s8613] sm:$0xff]
        %v8675 = vld [vmem:[%s8613 + $0x8] sm:$0xff]
        %v8676 = vmax.f32 %v8672, %v8674
        %v8677 = vmax.f32 %v8673, %v8675
        %v8678 = vmax.f32 %v8676, %v8677
        %v8679 = vrot.slane %v8678, 4
        %v8680 = vmax.f32 %v8678, %v8679
        %v8681 = vrot.slane %v8680, 2
        %v8682 = vmax.f32 %v8680, %v8681
        %v8683 = vrot.slane %v8682, 1
        %v8684 = vmax.f32 %v8682, %v8683
        %v8685 = vmul.f32 %v8684, %v8684
        %8686 = vadd.xlane.f32.xlu0 %v8685
        %v8687 = vpop.xlane.xlu0 %8686
        %v8688 = vrsqrt.pop %v8687
        %v8689 = vmul.f32 %v8687, %v8688
        %vm8690 = vcmp.eq.f32.partialorder %v8687, inf
        %v8691 = vsel %vm8690, %v8687, %v8689
        %vm8692 = vcmp.eq.f32.partialorder %v8687, 0.0
        %v8693 = vand.u32 %v8687, 2147483648
        %v8694 = vsel %vm8692, %v8693, %v8691
        %v8695 = vadd.f32 %v8694, 1e-06
        %v8696 = vrcp.pop %v8695
        %v8697 = vmul.f32 2.0, %v8696
        %v8698 = vmul.f32 %v8684, %v8697
        %v8699 = vadd.f32 %v8698, 0.0
        %vm8700 = vcmask 1041408
        %v8701 = vsel %vm8700, %v8653, -inf
        %v8702 = vmax.f32 %v8652, %v8701
        %v8703 = vrot.slane %v8702, 4
        %v8704 = vmax.f32 %v8702, %v8703
        %v8705 = vrot.slane %v8704, 2
        %v8706 = vmax.f32 %v8704, %v8705
        %v8707 = vrot.slane %v8706, 1
        %v8708 = vmax.f32 %v8706, %v8707
        %v8709 = vmul.f32 %v8708, %v8708
        %8710 = vadd.xlane.f32.xlu0 %v8709
        %v8711 = vpop.xlane.xlu0 %8710
        %v8712 = vrsqrt.pop %v8711
        %v8713 = vmul.f32 %v8711, %v8712
        %vm8714 = vcmp.eq.f32.partialorder %v8711, inf
        %v8715 = vsel %vm8714, %v8711, %v8713
        %vm8716 = vcmp.eq.f32.partialorder %v8711, 0.0
        %v8717 = vand.u32 %v8711, 2147483648
        %v8718 = vsel %vm8716, %v8717, %v8715
        %v8719 = vadd.f32 %v8718, 1e-06
        %v8720 = vrcp.pop %v8719
        %v8721 = vmul.f32 1.0, %v8720
        %v8722 = vmul.f32 %v8708, %v8721
        %v8723 = vadd.f32 %v8699, %v8722
        %vm8724 = vcmask 1047558
        %v8725 = vsel %vm8724, %v8652, -inf
        %v8726 = vmax.f32 %v8725, %v8653
        %v8727 = vrot.slane %v8726, 4
        %v8728 = vmax.f32 %v8726, %v8727
        %v8729 = vrot.slane %v8728, 2
        %v8730 = vmax.f32 %v8728, %v8729
        %v8731 = vrot.slane %v8730, 1
        %v8732 = vmax.f32 %v8730, %v8731
        %v8733 = vmul.f32 %v8732, %v8732
        %8734 = vadd.xlane.f32.xlu0 %v8733
        %v8735 = vpop.xlane.xlu0 %8734
        %v8736 = vrsqrt.pop %v8735
        %v8737 = vmul.f32 %v8735, %v8736
        %vm8738 = vcmp.eq.f32.partialorder %v8735, inf
        %v8739 = vsel %vm8738, %v8735, %v8737
        %vm8740 = vcmp.eq.f32.partialorder %v8735, 0.0
        %v8741 = vand.u32 %v8735, 2147483648
        %v8742 = vsel %vm8740, %v8741, %v8739
        %v8743 = vadd.f32 %v8742, 1e-06
        %v8744 = vrcp.pop %v8743
        %v8745 = vmul.f32 1.0, %v8744
        %v8746 = vmul.f32 %v8732, %v8745
        %v8747 = vadd.f32 %v8723, %v8746
        %v8748 = vmax.f32 %v8638, %v8642
        %v8749 = vmax.f32 %v8639, %v8643
        %v8750 = vmax.f32 %v8748, %v8646
        %v8751 = vmax.f32 %v8749, %v8647
        %v8752 = vmax.f32 %v8750, %v8650
        %v8753 = vmax.f32 %v8751, %v8651
        %v8754 = vmax.f32 %v8752, %v8654
        %v8755 = vmax.f32 %v8753, %v8655
        %v8756 = vmax.f32 %v8754, %v8658
        %v8757 = vmax.f32 %v8755, %v8659
        %v8758 = vmax.f32 %v8756, %v8662
        %v8759 = vmax.f32 %v8757, %v8663
        %v8760 = vmax.f32 %v8758, %v8666
        %v8761 = vmax.f32 %v8759, %v8667
        %v8762 = vmax.f32 %v8760, %v8670
        %v8763 = vmax.f32 %v8761, %v8671
        %v8764 = vmax.f32 %v8762, %v8674
        %v8765 = vmax.f32 %v8763, %v8675
        %v8766 = vsel %vm8700, %v8765, -inf
        %v8767 = vmax.f32 %v8764, %v8766
        %v8768 = vrot.slane %v8767, 4
        %v8769 = vmax.f32 %v8767, %v8768
        %v8770 = vrot.slane %v8769, 2
        %v8771 = vmax.f32 %v8769, %v8770
        %v8772 = vrot.slane %v8771, 1
        %v8773 = vmax.f32 %v8771, %v8772
        %v8774 = vmul.f32 %v8773, %v8773
        %8775 = vadd.xlane.f32.xlu0 %v8774
        %v8776 = vpop.xlane.xlu0 %8775
        %v8777 = vrsqrt.pop %v8776
        %v8778 = vmul.f32 %v8776, %v8777
        %vm8779 = vcmp.eq.f32.partialorder %v8776, inf
        %v8780 = vsel %vm8779, %v8776, %v8778
        %vm8781 = vcmp.eq.f32.partialorder %v8776, 0.0
        %v8782 = vand.u32 %v8776, 2147483648
        %v8783 = vsel %vm8781, %v8782, %v8780
        %v8784 = vadd.f32 %v8783, 1e-06
        %v8785 = vrcp.pop %v8784
        %v8786 = vmul.f32 1.0, %v8785
        %v8787 = vmul.f32 %v8773, %v8786
        %v8788 = vadd.f32 %v8747, %v8787
        %v8789 = vsel %vm8724, %v8764, -inf
        %v8790 = vmax.f32 %v8789, %v8765
        %v8791 = vrot.slane %v8790, 4
        %v8792 = vmax.f32 %v8790, %v8791
        %v8793 = vrot.slane %v8792, 2
        %v8794 = vmax.f32 %v8792, %v8793
        %v8795 = vrot.slane %v8794, 1
        %v8796 = vmax.f32 %v8794, %v8795
        %v8797 = vmul.f32 %v8796, %v8796
        %8798 = vadd.xlane.f32.xlu0 %v8797
        %v8799 = vpop.xlane.xlu0 %8798
        %v8800 = vrsqrt.pop %v8799
        %v8801 = vmul.f32 %v8799, %v8800
        %vm8802 = vcmp.eq.f32.partialorder %v8799, inf
        %v8803 = vsel %vm8802, %v8799, %v8801
        %vm8804 = vcmp.eq.f32.partialorder %v8799, 0.0
        %v8805 = vand.u32 %v8799, 2147483648
        %v8806 = vsel %vm8804, %v8805, %v8803
        %v8807 = vadd.f32 %v8806, 1e-06
        %v8808 = vrcp.pop %v8807
        %v8809 = vmul.f32 1.0, %v8808
        %v8810 = vmul.f32 %v8796, %v8809
        %v8811 = vadd.f32 %v8788, %v8810
        %v8812 = vrot.slane %v8644, 4
        %v8813 = vmax.f32 %v8644, %v8812
        %v8814 = vrot.slane %v8813, 2
        %v8815 = vmax.f32 %v8813, %v8814
        %v8816 = vrot.slane %v8815, 1
        %v8817 = vmax.f32 %v8815, %v8816
        %v8818 = vmul.f32 %v8817, %v8817
        %8819 = vadd.xlane.f32.xlu0 %v8818
        %v8820 = vpop.xlane.xlu0 %8819
        %v8821 = vrsqrt.pop %v8820
        %v8822 = vmul.f32 %v8820, %v8821
        %vm8823 = vcmp.eq.f32.partialorder %v8820, inf
        %v8824 = vsel %vm8823, %v8820, %v8822
        %vm8825 = vcmp.eq.f32.partialorder %v8820, 0.0
        %v8826 = vand.u32 %v8820, 2147483648
        %v8827 = vsel %vm8825, %v8826, %v8824
        %v8828 = vadd.f32 %v8827, 1e-06
        %v8829 = vrcp.pop %v8828
        %v8830 = vmul.f32 1.0, %v8829
        %v8831 = vmul.f32 %v8817, %v8830
        %v8832 = vadd.f32 %v8811, %v8831
        %vm8833 = vcmask 1047556
        %v8834 = vsel %vm8833, %v8644, -inf
        %vm8835 = vcmask 1043456
        %v8836 = vsel %vm8835, %v8645, -inf
        %v8837 = vmax.f32 %v8834, %v8836
        %v8838 = vrot.slane %v8837, 4
        %v8839 = vmax.f32 %v8837, %v8838
        %v8840 = vrot.slane %v8839, 2
        %v8841 = vmax.f32 %v8839, %v8840
        %v8842 = vrot.slane %v8841, 1
        %v8843 = vmax.f32 %v8841, %v8842
        %v8844 = vmul.f32 %v8843, %v8843
        %8845 = vadd.xlane.f32.xlu0 %v8844
        %v8846 = vpop.xlane.xlu0 %8845
        %v8847 = vrsqrt.pop %v8846
        %v8848 = vmul.f32 %v8846, %v8847
        %vm8849 = vcmp.eq.f32.partialorder %v8846, inf
        %v8850 = vsel %vm8849, %v8846, %v8848
        %vm8851 = vcmp.eq.f32.partialorder %v8846, 0.0
        %v8852 = vand.u32 %v8846, 2147483648
        %v8853 = vsel %vm8851, %v8852, %v8850
        %v8854 = vadd.f32 %v8853, 1e-06
        %v8855 = vrcp.pop %v8854
        %v8856 = vmul.f32 1.0, %v8855
        %v8857 = vmul.f32 %v8843, %v8856
        %v8858 = vadd.f32 %v8832, %v8857
        %v8859 = vrot.slane %v8645, 4
        %v8860 = vmax.f32 %v8645, %v8859
        %v8861 = vrot.slane %v8860, 2
        %v8862 = vmax.f32 %v8860, %v8861
        %v8863 = vrot.slane %v8862, 1
        %v8864 = vmax.f32 %v8862, %v8863
        %v8865 = vmul.f32 %v8864, %v8864
        %8866 = vadd.xlane.f32.xlu0 %v8865
        %v8867 = vpop.xlane.xlu0 %8866
        %v8868 = vrsqrt.pop %v8867
        %v8869 = vmul.f32 %v8867, %v8868
        %vm8870 = vcmp.eq.f32.partialorder %v8867, inf
        %v8871 = vsel %vm8870, %v8867, %v8869
        %vm8872 = vcmp.eq.f32.partialorder %v8867, 0.0
        %v8873 = vand.u32 %v8867, 2147483648
        %v8874 = vsel %vm8872, %v8873, %v8871
        %v8875 = vadd.f32 %v8874, 1e-06
        %v8876 = vrcp.pop %v8875
        %v8877 = vmul.f32 1.0, %v8876
        %v8878 = vmul.f32 %v8864, %v8877
        %v8879 = vadd.f32 %v8858, %v8878
        %v8880 = vmax.f32 %v8630, %v8634
        %v8881 = vmax.f32 %v8631, %v8635
        %v8882 = vmax.f32 %v8880, %v8638
        %v8883 = vmax.f32 %v8881, %v8639
        %v8884 = vmax.f32 %v8882, %v8642
        %v8885 = vmax.f32 %v8883, %v8643
        %v8886 = vmax.f32 %v8884, %v8646
        %v8887 = vmax.f32 %v8885, %v8647
        %v8888 = vmax.f32 %v8886, %v8650
        %v8889 = vmax.f32 %v8887, %v8651
        %v8890 = vmax.f32 %v8888, %v8654
        %v8891 = vmax.f32 %v8889, %v8655
        %v8892 = vmax.f32 %v8890, %v8658
        %v8893 = vmax.f32 %v8891, %v8659
        %v8894 = vrot.slane %v8892, 4
        %v8895 = vmax.f32 %v8892, %v8894
        %v8896 = vrot.slane %v8895, 2
        %v8897 = vmax.f32 %v8895, %v8896
        %v8898 = vrot.slane %v8897, 1
        %v8899 = vmax.f32 %v8897, %v8898
        %v8900 = vmul.f32 %v8899, %v8899
        %8901 = vadd.xlane.f32.xlu0 %v8900
        %v8902 = vpop.xlane.xlu0 %8901
        %v8903 = vrsqrt.pop %v8902
        %v8904 = vmul.f32 %v8902, %v8903
        %vm8905 = vcmp.eq.f32.partialorder %v8902, inf
        %v8906 = vsel %vm8905, %v8902, %v8904
        %vm8907 = vcmp.eq.f32.partialorder %v8902, 0.0
        %v8908 = vand.u32 %v8902, 2147483648
        %v8909 = vsel %vm8907, %v8908, %v8906
        %v8910 = vadd.f32 %v8909, 1e-06
        %v8911 = vrcp.pop %v8910
        %v8912 = vmul.f32 1.0, %v8911
        %v8913 = vmul.f32 %v8899, %v8912
        %v8914 = vadd.f32 %v8879, %v8913
        %v8915 = vsel %vm8833, %v8892, -inf
        %v8916 = vsel %vm8835, %v8893, -inf
        %v8917 = vmax.f32 %v8915, %v8916
        %v8918 = vrot.slane %v8917, 4
        %v8919 = vmax.f32 %v8917, %v8918
        %v8920 = vrot.slane %v8919, 2
        %v8921 = vmax.f32 %v8919, %v8920
        %v8922 = vrot.slane %v8921, 1
        %v8923 = vmax.f32 %v8921, %v8922
        %v8924 = vmul.f32 %v8923, %v8923
        %8925 = vadd.xlane.f32.xlu0 %v8924
        %v8926 = vpop.xlane.xlu0 %8925
        %v8927 = vrsqrt.pop %v8926
        %v8928 = vmul.f32 %v8926, %v8927
        %vm8929 = vcmp.eq.f32.partialorder %v8926, inf
        %v8930 = vsel %vm8929, %v8926, %v8928
        %vm8931 = vcmp.eq.f32.partialorder %v8926, 0.0
        %v8932 = vand.u32 %v8926, 2147483648
        %v8933 = vsel %vm8931, %v8932, %v8930
        %v8934 = vadd.f32 %v8933, 1e-06
        %v8935 = vrcp.pop %v8934
        %v8936 = vmul.f32 1.0, %v8935
        %v8937 = vmul.f32 %v8923, %v8936
        %v8938 = vadd.f32 %v8914, %v8937
        %v8939 = vrot.slane %v8893, 4
        %v8940 = vmax.f32 %v8893, %v8939
        %v8941 = vrot.slane %v8940, 2
        %v8942 = vmax.f32 %v8940, %v8941
        %v8943 = vrot.slane %v8942, 1
        %v8944 = vmax.f32 %v8942, %v8943
        %v8945 = vmul.f32 %v8944, %v8944
        %8946 = vadd.xlane.f32.xlu0 %v8945
        %v8947 = vpop.xlane.xlu0 %8946
        %v8948 = vrsqrt.pop %v8947
        %v8949 = vmul.f32 %v8947, %v8948
        %vm8950 = vcmp.eq.f32.partialorder %v8947, inf
        %v8951 = vsel %vm8950, %v8947, %v8949
        %vm8952 = vcmp.eq.f32.partialorder %v8947, 0.0
        %v8953 = vand.u32 %v8947, 2147483648
        %v8954 = vsel %vm8952, %v8953, %v8951
        %v8955 = vadd.f32 %v8954, 1e-06
        %v8956 = vrcp.pop %v8955
        %v8957 = vmul.f32 1.0, %v8956
        %v8958 = vmul.f32 %v8944, %v8957
        %v8959 = vadd.f32 %v8938, %v8958
        %v8960 = vmax.f32 %v8646, %v8650
        %v8961 = vmax.f32 %v8647, %v8651
        %v8962 = vmax.f32 %v8960, %v8654
        %v8963 = vmax.f32 %v8961, %v8655
        %v8964 = vmax.f32 %v8962, %v8658
        %v8965 = vmax.f32 %v8963, %v8659
        %v8966 = vmax.f32 %v8964, %v8662
        %v8967 = vmax.f32 %v8965, %v8663
        %v8968 = vmax.f32 %v8966, %v8666
        %v8969 = vmax.f32 %v8967, %v8667
        %v8970 = vmax.f32 %v8968, %v8670
        %v8971 = vmax.f32 %v8969, %v8671
        %v8972 = vmax.f32 %v8970, %v8674
        %v8973 = vmax.f32 %v8971, %v8675
        %v8974 = vrot.slane %v8972, 4
        %v8975 = vmax.f32 %v8972, %v8974
        %v8976 = vrot.slane %v8975, 2
        %v8977 = vmax.f32 %v8975, %v8976
        %v8978 = vrot.slane %v8977, 1
        %v8979 = vmax.f32 %v8977, %v8978
        %v8980 = vmul.f32 %v8979, %v8979
        %8981 = vadd.xlane.f32.xlu0 %v8980
        %v8982 = vpop.xlane.xlu0 %8981
        %v8983 = vrsqrt.pop %v8982
        %v8984 = vmul.f32 %v8982, %v8983
        %vm8985 = vcmp.eq.f32.partialorder %v8982, inf
        %v8986 = vsel %vm8985, %v8982, %v8984
        %vm8987 = vcmp.eq.f32.partialorder %v8982, 0.0
        %v8988 = vand.u32 %v8982, 2147483648
        %v8989 = vsel %vm8987, %v8988, %v8986
        %v8990 = vadd.f32 %v8989, 1e-06
        %v8991 = vrcp.pop %v8990
        %v8992 = vmul.f32 1.0, %v8991
        %v8993 = vmul.f32 %v8979, %v8992
        %v8994 = vadd.f32 %v8959, %v8993
        %v8995 = vsel %vm8833, %v8972, -inf
        %v8996 = vsel %vm8835, %v8973, -inf
        %v8997 = vmax.f32 %v8995, %v8996
        %v8998 = vrot.slane %v8997, 4
        %v8999 = vmax.f32 %v8997, %v8998
        %v9000 = vrot.slane %v8999, 2
        %v9001 = vmax.f32 %v8999, %v9000
        %v9002 = vrot.slane %v9001, 1
        %v9003 = vmax.f32 %v9001, %v9002
        %v9004 = vmul.f32 %v9003, %v9003
        %9005 = vadd.xlane.f32.xlu0 %v9004
        %v9006 = vpop.xlane.xlu0 %9005
        %v9007 = vrsqrt.pop %v9006
        %v9008 = vmul.f32 %v9006, %v9007
        %vm9009 = vcmp.eq.f32.partialorder %v9006, inf
        %v9010 = vsel %vm9009, %v9006, %v9008
        %vm9011 = vcmp.eq.f32.partialorder %v9006, 0.0
        %v9012 = vand.u32 %v9006, 2147483648
        %v9013 = vsel %vm9011, %v9012, %v9010
        %v9014 = vadd.f32 %v9013, 1e-06
        %v9015 = vrcp.pop %v9014
        %v9016 = vmul.f32 1.0, %v9015
        %v9017 = vmul.f32 %v9003, %v9016
        %v9018 = vadd.f32 %v8994, %v9017
        %v9019 = vrot.slane %v8973, 4
        %v9020 = vmax.f32 %v8973, %v9019
        %v9021 = vrot.slane %v9020, 2
        %v9022 = vmax.f32 %v9020, %v9021
        %v9023 = vrot.slane %v9022, 1
        %v9024 = vmax.f32 %v9022, %v9023
        %v9025 = vmul.f32 %v9024, %v9024
        %9026 = vadd.xlane.f32.xlu0 %v9025
        %v9027 = vpop.xlane.xlu0 %9026
        %v9028 = vrsqrt.pop %v9027
        %v9029 = vmul.f32 %v9027, %v9028
        %vm9030 = vcmp.eq.f32.partialorder %v9027, inf
        %v9031 = vsel %vm9030, %v9027, %v9029
        %vm9032 = vcmp.eq.f32.partialorder %v9027, 0.0
        %v9033 = vand.u32 %v9027, 2147483648
        %v9034 = vsel %vm9032, %v9033, %v9031
        %v9035 = vadd.f32 %v9034, 1e-06
        %v9036 = vrcp.pop %v9035
        %v9037 = vmul.f32 1.0, %v9036
        %v9038 = vmul.f32 %v9024, %v9037
        %v9039 = vadd.f32 %v9018, %v9038
        %9040 = vst [vmem:[%s108] sm:$0x1] %v9039
        %s9041 = sand.u32 %s49, 1
        %s9042 = scalar_lea.sflag [#allocation4], %s9041
        %s9043 = sand.u32 %s49, 1
        %s9044 = scalar_lea.vmem [#allocation3], %s9043
        // Predicated region
        $region25: #{tpu_custom_call.1} parent=23 // pred_check
          %p9045 = pneg %p59
        $region26: #{tpu_custom_call.1} parent=23 // pred_check_branch
          %9047 = sbr.rel (%p9045) target = $region28
        $region27: #{tpu_custom_call.1} parent=23 // pred_region
          %s9049 = ssub.s32 16, 16
          %9050 = vsyncadd %s9042, %s9049
          %s9051 = smul.addr %s15, 16
          %s9052 = scalar_lea.hbm %s1, %s9051
          %s9054 = sshll.u32 %s9044, 4
          %s9055 = int_to_ptr.vmem [resolvable:$true] %s9054
          %9057 = dma.vmem_to_hbm [thread:$0]  %s9055, 16, %s9052, %s9042
        $region28: #{tpu_custom_call.1} parent=23 // pred_fallthru
          _
      $region24: #{tpu_custom_call.1} parent=5 // pred_fallthru
        _
      %p9058 = scmp.le.s32.totalorder 2, %s10
      // Predicated region
      $region29: #{tpu_custom_call.1} parent=5 // pred_check
        %p9059 = pneg %p9058
      $region30: #{tpu_custom_call.1} parent=5 // pred_check_branch
        %9061 = sbr.rel (%p9059) target = $region32
      $region31: #{tpu_custom_call.1} parent=5 // pred_region
        %s9062 = ssub.s32 %s10, 2
        // Predicated region
        $region33: #{tpu_custom_call.1} parent=31 // pred_check
          %p9063 = pneg %p65
        $region34: #{tpu_custom_call.1} parent=31 // pred_check_branch
          %9065 = sbr.rel (%p9063) target = $region36
        $region35: #{tpu_custom_call.1} parent=31 // pred_region
          %s9066 = sand.u32 %s50, 1
          %s9067 = scalar_lea.sflag [#allocation4], %s9066
          %s9068 = sand.u32 %s50, 1
          %s9069 = scalar_lea.vmem [#allocation3], %s9068
          %9070 = dma.done %s9067, 16
        $region36: #{tpu_custom_call.1} parent=31 // pred_fallthru
          _
      $region32: #{tpu_custom_call.1} parent=5 // pred_fallthru
        _
    $region6: #{tpu_custom_call.1} parent=1 // loop_footer
      %s14 = sadd.s32 1, %s10
    $region7: #{tpu_custom_call.1} parent=1 // loop_footer_branch
      %9 = sbr.rel target = $region3
    $region8: #{tpu_custom_call.1} parent=1 // loop_exit
      _
    %9071 = vsyncpa [#allocation4], 1
    %s9072 = scalar_lea.sflag [#allocation4], 1
    %9073 = vsyncpa %s9072, 1

</llo_original>
